<compile_context>
chip_gen: v7x
topology: tpu7x:2x2x1
jax: 0.10.0
libtpu: 0.0.40
codegen_flags: <defaults>
</compile_context>

<pallas_src>
import numpy as np
import jax
import jax.numpy as jnp
from jax.experimental import pallas as pl
from jax.experimental.pallas import tpu as pltpu

V = 6890            # SMPL vertex count (fixed by the model)
V_PAD = 6912        # padded to a multiple of 128 (54 * 128)
N = 3 * V_PAD       # 20736 : coordinate-major flattened axis (c*V_PAD + v)
TN = 10368          # blend tile along N (81*128) -> 2 grid steps
NJ = 24             # joints
N_BETA = 10
N_POSE = 207        # 23 * 9 pose-blend coefficients
K_RAW = N_BETA + N_POSE + 1   # [beta | lrotmin | constant-1 (v_template)]
K_PAD = 224                   # padded contraction dim (multiple of 16)

# standard SMPL kinematic tree; PARENT[i-1] = parent of joint i (i = 1..23)
_PARENTS_FULL = [-1, 0, 0, 0, 1, 2, 3, 4, 5, 6, 7, 8, 9, 9, 9,
                 12, 13, 14, 16, 17, 18, 19, 20, 21]
PARENT = _PARENTS_FULL[1:]

# tree-depth levels; SMPL joint ids are sorted by depth -> contiguous ranges
_depth = [0] * NJ
for _i in range(1, NJ):
    _depth[_i] = _depth[PARENT[_i - 1]] + 1
LEVEL_SLICES = []
for _d in range(max(_depth) + 1):
    _idx = [i for i in range(NJ) if _depth[i] == _d]
    assert _idx == list(range(_idx[0], _idx[-1] + 1))
    LEVEL_SLICES.append((_idx[0], _idx[-1] + 1))


# ----------------------------- Pallas kernels ------------------------------

def blend_kernel(coef_ref, basis_ref, out_ref):
    # coef_ref  : (B, K_PAD)  bf16   [beta | lrotmin | 1 | 0-pad]
    # basis_ref : (K_PAD, TN) bf16   [shapedirs ; posedirs ; v_template ; 0-pad]
    # out_ref   : (B, TN)     f32    v_posed, coordinate-major flat layout
    out_ref[...] = jnp.dot(coef_ref[...], basis_ref[...],
                           preferred_element_type=jnp.float32)


def skin_kernel(vp_ref, w_ref, g_ref, out_ref):
    # vp_ref : (3, V_PAD)  f32   v_posed for one batch element (coord-major)
    # w_ref  : (24, V_PAD) bf16  skinning weights (transposed, padded); resident
    # g_ref  : (12, 24)    f32   global transforms, row r = 4*c + q
    # out_ref: (3, V_PAD)  f32
    w = w_ref[...].astype(jnp.float32)
    # t[4c+q, v] = sum_j W[v, j] * G[j, c, q]   (the classic blended transform)
    t = jnp.dot(g_ref[...], w, preferred_element_type=jnp.float32)   # (12, V_PAD)
    vp = vp_ref[...]
    rows = []
    for c in range(3):
        r = (t[4 * c + 0:4 * c + 1, :] * vp[0:1, :]
             + t[4 * c + 1:4 * c + 2, :] * vp[1:2, :]
             + t[4 * c + 2:4 * c + 3, :] * vp[2:3, :]
             + t[4 * c + 3:4 * c + 4, :])
        rows.append(r)
    out_ref[...] = jnp.concatenate(rows, axis=0)                     # single store


def blend_call(coef, basis):
    B = coef.shape[0]
    cost = pl.CostEstimate(
        flops=2 * B * K_PAD * N,
        transcendentals=0,
        bytes_accessed=K_PAD * N * 2 + B * K_PAD * 2 + B * N * 4)
    return pl.pallas_call(
        blend_kernel,
        out_shape=jax.ShapeDtypeStruct((B, N), jnp.float32),
        grid=(N // TN,),
        in_specs=[
            pl.BlockSpec((B, K_PAD), lambda n: (0, 0)),
            pl.BlockSpec((K_PAD, TN), lambda n: (0, n)),
        ],
        out_specs=pl.BlockSpec((B, TN), lambda n: (0, n)),
        compiler_params=pltpu.CompilerParams(
            dimension_semantics=("parallel",)),
        cost_estimate=cost,
    )(coef, basis)


def skin_call(v_posed3, weights_T, g_flat):
    B = v_posed3.shape[0]
    cost = pl.CostEstimate(
        flops=B * (2 * 12 * NJ * V_PAD + 9 * 3 * V_PAD),
        transcendentals=0,
        bytes_accessed=NJ * V_PAD * 2 + B * (2 * 3 * V_PAD * 4 + 12 * NJ * 4))
    return pl.pallas_call(
        skin_kernel,
        out_shape=jax.ShapeDtypeStruct((B, 3, V_PAD), jnp.float32),
        grid=(B,),
        in_specs=[
            pl.BlockSpec((None, 3, V_PAD), lambda b: (b, 0, 0)),
            pl.BlockSpec((NJ, V_PAD), lambda b: (0, 0)),     # constant -> resident
            pl.BlockSpec((None, 12, NJ), lambda b: (b, 0, 0)),
        ],
        out_specs=pl.BlockSpec((None, 3, V_PAD), lambda b: (b, 0, 0)),
        compiler_params=pltpu.CompilerParams(
            dimension_semantics=("parallel",)),
        cost_estimate=cost,
    )(v_posed3, weights_T, g_flat)


# ------------------------- JAX glue (small math) ---------------------------

def quat2mat_jnp(quat):
    nq = quat / jnp.linalg.norm(quat, axis=1, keepdims=True)
    w, x, y, z = nq[:, 0], nq[:, 1], nq[:, 2], nq[:, 3]
    w2, x2, y2, z2 = w * w, x * x, y * y, z * z
    wx, wy, wz = w * x, w * y, w * z
    xy, xz, yz = x * y, x * z, y * z
    rot = jnp.stack([w2 + x2 - y2 - z2, 2 * xy - 2 * wz, 2 * wy + 2 * xz,
                     2 * wz + 2 * xy, w2 - x2 + y2 - z2, 2 * yz - 2 * wx,
                     2 * xz - 2 * wy, 2 * wx + 2 * yz, w2 - x2 - y2 + z2],
                    axis=1).reshape(-1, 3, 3)
    return rot


def rodrigues_jnp(theta):
    l1norm = jnp.linalg.norm(theta + 1e-8, axis=1)
    angle = l1norm[:, None]
    normalized = theta / angle
    angle = angle * 0.5
    quat = jnp.concatenate([jnp.cos(angle), jnp.sin(angle) * normalized], axis=1)
    return quat2mat_jnp(quat)


def smpl_forward(pose, beta, prep):
    B = pose.shape[0]
    # Rodrigues (tiny) in plain JAX
    R = rodrigues_jnp(pose.reshape(-1, 3)).reshape(B, NJ, 3, 3)
    lrotmin = (R[:, 1:] - jnp.eye(3, dtype=R.dtype)).reshape(B, N_POSE)

    # Joint regression folded into the shape basis (exactly Jr @ v_shaped).
    J = (beta @ prep["j_from_beta"]).reshape(B, NJ, 3) + prep["j_template"][None]

    # Pallas kernel 1: fused blend-shape matmul (coordinate-major, lane-dense)
    ones = jnp.ones((B, 1), jnp.float32)
    zpad = jnp.zeros((B, K_PAD - K_RAW), jnp.float32)
    coef = jnp.concatenate([beta, lrotmin, ones, zpad], axis=1).astype(jnp.bfloat16)
    v_posed3 = blend_call(coef, prep["basis"]).reshape(B, 3, V_PAD)

    # Kinematic chain, batched by tree depth (8 batched 4x4 matmuls).
    # TODO(synk): tiny data-dependent 4x4 chain stays in plain JAX.
    parent_arr = jnp.asarray(np.array(PARENT, np.int32))
    J_rel = J.at[:, 1:].set(J[:, 1:] - J[:, parent_arr])
    top = jnp.concatenate([R, J_rel[..., None]], axis=-1)               # (B,24,3,4)
    bottom = jnp.broadcast_to(
        jnp.array([0.0, 0.0, 0.0, 1.0], jnp.float32)[None, None, None, :],
        (B, NJ, 1, 4))
    G_local = jnp.concatenate([top, bottom], axis=2)                    # (B,24,4,4)

    Gg = G_local
    for (s, e) in LEVEL_SLICES[1:]:
        par = np.array(PARENT[s - 1:e - 1], np.int32)
        Gg = Gg.at[:, s:e].set(jnp.matmul(Gg[:, par], G_local[:, s:e]))

    # Remove the rest-pose contribution: last column -= G[..., :3] @ J
    corr = jnp.einsum("bjpq,bjq->bjp", Gg[..., :3], J)                  # (B,24,4)
    rot = Gg[:, :, :3, :3]                                              # (B,24,3,3)
    trans = Gg[:, :, :3, 3] - corr[:, :, :3]                            # (B,24,3)
    g_full = jnp.concatenate([rot, trans[..., None]], axis=-1)          # (B,24,3,4)
    g_flat = jnp.transpose(g_full, (0, 2, 3, 1)).reshape(B, 12, NJ)     # (B,12,24)

    # Pallas kernel 2: linear blend skinning (vertices on the 128-lane axis)
    v3 = skin_call(v_posed3, prep["weights_T"], g_flat)                 # (B,3,V_PAD)
    return jnp.transpose(v3[:, :, :V], (0, 2, 1))                       # (B,V,3)


smpl_forward_jit = jax.jit(smpl_forward)


# ------------------------ parameter setup / reference ----------------------

def build_smpl_params(key):
    ks = jax.random.split(key, 5)
    v_template = jax.random.uniform(ks[0], (V, 3), jnp.float32, -1.0, 1.0)
    shapedirs = 0.03 * jax.random.normal(ks[1], (V, 3, N_BETA), jnp.float32)
    posedirs = 0.01 * jax.random.normal(ks[2], (V, 3, N_POSE), jnp.float32)
    jr_raw = jax.random.uniform(ks[3], (NJ, V), jnp.float32) ** 8
    J_regressor = jr_raw / jnp.sum(jr_raw, axis=1, keepdims=True)
    w_raw = jax.random.uniform(ks[4], (V, NJ), jnp.float32)
    weights = jax.nn.softmax(6.0 * w_raw, axis=1)
    return dict(v_template=v_template, shapedirs=shapedirs, posedirs=posedirs,
                J_regressor=J_regressor, weights=weights)


def prep_padded(params):
    sd = np.asarray(params["shapedirs"], np.float64)     # (V, 3, 10)
    pd = np.asarray(params["posedirs"], np.float64)      # (V, 3, 207)
    vt = np.asarray(params["v_template"], np.float64)    # (V, 3)
    jr = np.asarray(params["J_regressor"], np.float64)   # (24, V)
    w = np.asarray(params["weights"], np.float64)        # (V, 24)

    # fused blend basis, coordinate-major (flat index = c*V_PAD + v):
    # rows = [shapedirs(10) ; posedirs(207) ; v_template(1) ; zero pad]
    basis = np.zeros((K_PAD, N), np.float32)
    for c in range(3):
        s = c * V_PAD
        basis[:N_BETA, s:s + V] = sd[:, c, :].T
        basis[N_BETA:N_BETA + N_POSE, s:s + V] = pd[:, c, :].T
        basis[N_BETA + N_POSE, s:s + V] = vt[:, c]

    w_T = np.zeros((NJ, V_PAD), np.float32)
    w_T[:, :V] = w.T

    # J = Jr @ v_shaped is linear in beta: fold the regression into shapedirs.
    j_from_beta = np.einsum("jv,vck->kjc", jr, sd).reshape(N_BETA, NJ * 3)
    j_template = jr @ vt                                   # (24, 3)

    return dict(basis=jnp.asarray(basis, jnp.bfloat16),
                weights_T=jnp.asarray(w_T, jnp.bfloat16),
                j_from_beta=jnp.asarray(j_from_beta, jnp.float32),
                j_template=jnp.asarray(j_template, jnp.float32))


def _rodrigues_np(theta):
    l1norm = np.linalg.norm(theta + 1e-8, axis=1)
    angle = l1norm[:, None]
    normalized = theta / angle
    angle = angle * 0.5
    quat = np.concatenate([np.cos(angle), np.sin(angle) * normalized], axis=1)
    nq = quat / np.linalg.norm(quat, axis=1, keepdims=True)
    w, x, y, z = nq[:, 0], nq[:, 1], nq[:, 2], nq[:, 3]
    w2, x2, y2, z2 = w * w, x * x, y * y, z * z
    wx, wy, wz = w * x, w * y, w * z
    xy, xz, yz = x * y, x * z, y * z
    return np.stack([w2 + x2 - y2 - z2, 2 * xy - 2 * wz, 2 * wy + 2 * xz,
                     2 * wz + 2 * xy, w2 - x2 + y2 - z2, 2 * yz - 2 * wx,
                     2 * xz - 2 * wy, 2 * wx + 2 * yz, w2 - x2 - y2 + z2],
                    axis=1).reshape(-1, 3, 3)


def smpl_ref_np(pose, beta, P):
    """float64 numpy port of the original torch forward (ground truth)."""
    B = pose.shape[0]
    vt, sd, pd = P["v_template"], P["shapedirs"], P["posedirs"]
    Jr, W = P["J_regressor"], P["weights"]
    v_shaped = (sd.reshape(-1, N_BETA) @ beta.T).T.reshape(B, V, 3) + vt[None]
    J = np.einsum("jv,bvc->bjc", Jr, v_shaped)
    R = _rodrigues_np(pose.reshape(-1, 3)).reshape(B, NJ, 3, 3)
    lrotmin = (R[:, 1:] - np.eye(3)).reshape(B, -1)
    v_posed = v_shaped + (pd.reshape(-1, N_POSE) @ lrotmin.T).T.reshape(B, V, 3)
    J_ = J.copy(); J_[:, 1:] = J[:, 1:] - J[:, PARENT]
    G_ = np.concatenate([R, J_[..., None]], axis=-1)
    pad = np.tile(np.array([0, 0, 0, 1.0])[None, None, None, :], (B, NJ, 1, 1))
    G_ = np.concatenate([G_, pad], axis=2)
    G = [G_[:, 0]]
    for i in range(1, NJ):
        G.append(G[PARENT[i - 1]] @ G_[:, i])
    G = np.stack(G, axis=1)
    rest = np.concatenate([J, np.zeros((B, NJ, 1))], axis=2).reshape(B, NJ, 4, 1)
    rest = np.concatenate([np.zeros((B, NJ, 4, 3)), rest], axis=-1)
    G = G - G @ rest
    T = np.einsum("vj,bjpq->bvpq", W, G)
    h = np.concatenate([v_posed, np.ones((B, V, 1))], axis=-1)
    return np.einsum("bvpq,bvq->bvp", T, h)[..., :3]


# --------------------------------- main -------------------------------------

if __name__ == "__main__":
    B = 2
    key = jax.random.PRNGKey(0)
    k_param, k_pose, k_beta = jax.random.split(key, 3)

    params = build_smpl_params(k_param)
    prep = prep_padded(params)

    pose = 0.3 * jax.random.normal(k_pose, (B, NJ * 3), jnp.float32)   # (2, 72)
    beta = jax.random.normal(k_beta, (B, N_BETA), jnp.float32)         # (2, 10)

    v = smpl_forward_jit(pose, beta, prep)
    v = jax.block_until_ready(v)
    assert v.shape == (B, V, 3) and v.dtype == jnp.float32

    params_np = {k: np.asarray(val, np.float64) for k, val in params.items()}
    v_ref = smpl_ref_np(np.asarray(pose, np.float64),
                        np.asarray(beta, np.float64), params_np)
    if not np.allclose(np.asarray(v, np.float64), v_ref, rtol=5e-2, atol=5e-2):
        raise AssertionError(
            "mismatch, max abs err = %g"
            % np.max(np.abs(np.asarray(v, np.float64) - v_ref)))
    print("KERNEL_OK")
</pallas_src>

<mosaic_0001>
module attributes {stable_mosaic.version = 11 : i64} {
  func.func @skin_kernel(%arg0: i32, %arg1: memref<1x3x6912xf32, #tpu.memory_space<vmem>>, %arg2: memref<24x6912xbf16, #tpu.memory_space<vmem>>, %arg3: memref<1x12x24xf32, #tpu.memory_space<vmem>>, %arg4: memref<1x3x6912xf32, #tpu.memory_space<vmem>>) attributes {dimension_semantics = [#tpu.dimension_semantics<parallel>], iteration_bounds = array<i64: 2>, scalar_prefetch = 0 : i64, scratch_operands = 0 : i64, tpu.core_type = #tpu.core_type<tc>, window_params = [{transform_indices = @transform_0, window_bounds = array<i64: 1, 3, 6912>}, {pipeline_mode = #tpu.pipeline_mode<synchronous>, transform_indices = @transform_1, window_bounds = array<i64: 24, 6912>}, {transform_indices = @transform_2, window_bounds = array<i64: 1, 12, 24>}, {transform_indices = @transform_3, window_bounds = array<i64: 1, 3, 6912>}]} {
    %c0 = arith.constant 0 : index
    %c0_0 = arith.constant 0 : index
    %0 = vector.load %arg2[%c0, %c0_0] : memref<24x6912xbf16, #tpu.memory_space<vmem>>, vector<24x6912xbf16>
    %1 = arith.extf %0 : vector<24x6912xbf16> to vector<24x6912xf32>
    %c0_1 = arith.constant 0 : index
    %c0_2 = arith.constant 0 : index
    %c0_3 = arith.constant 0 : index
    %2 = vector.load %arg3[%c0_1, %c0_2, %c0_3] : memref<1x12x24xf32, #tpu.memory_space<vmem>>, vector<1x12x24xf32>
    %3 = vector.shape_cast %2 : vector<1x12x24xf32> to vector<12x24xf32>
    %cst = arith.constant dense<0.000000e+00> : vector<12x6912xf32>
    %4 = tpu.matmul %3, %1, %cst {dimension_numbers = #tpu.dot_dimension_numbers<[1], [0], [0], [1], [0, 0, 1, 1], [], []>} : vector<12x24xf32>, vector<24x6912xf32>, vector<12x6912xf32> -> vector<12x6912xf32>
    %c0_4 = arith.constant 0 : index
    %c0_5 = arith.constant 0 : index
    %c0_6 = arith.constant 0 : index
    %5 = vector.load %arg1[%c0_4, %c0_5, %c0_6] : memref<1x3x6912xf32, #tpu.memory_space<vmem>>, vector<1x3x6912xf32>
    %6 = vector.shape_cast %5 : vector<1x3x6912xf32> to vector<3x6912xf32>
    %7 = vector.extract_strided_slice %4 {offsets = [0, 0], sizes = [1, 6912], strides = [1, 1]} : vector<12x6912xf32> to vector<1x6912xf32>
    %8 = vector.extract_strided_slice %6 {offsets = [0, 0], sizes = [1, 6912], strides = [1, 1]} : vector<3x6912xf32> to vector<1x6912xf32>
    %9 = arith.mulf %7, %8 : vector<1x6912xf32>
    %10 = vector.extract_strided_slice %4 {offsets = [1, 0], sizes = [1, 6912], strides = [1, 1]} : vector<12x6912xf32> to vector<1x6912xf32>
    %11 = vector.extract_strided_slice %6 {offsets = [1, 0], sizes = [1, 6912], strides = [1, 1]} : vector<3x6912xf32> to vector<1x6912xf32>
    %12 = arith.mulf %10, %11 : vector<1x6912xf32>
    %13 = arith.addf %9, %12 : vector<1x6912xf32>
    %14 = vector.extract_strided_slice %4 {offsets = [2, 0], sizes = [1, 6912], strides = [1, 1]} : vector<12x6912xf32> to vector<1x6912xf32>
    %15 = vector.extract_strided_slice %6 {offsets = [2, 0], sizes = [1, 6912], strides = [1, 1]} : vector<3x6912xf32> to vector<1x6912xf32>
    %16 = arith.mulf %14, %15 : vector<1x6912xf32>
    %17 = arith.addf %13, %16 : vector<1x6912xf32>
    %18 = vector.extract_strided_slice %4 {offsets = [3, 0], sizes = [1, 6912], strides = [1, 1]} : vector<12x6912xf32> to vector<1x6912xf32>
    %19 = arith.addf %17, %18 : vector<1x6912xf32>
    %20 = vector.extract_strided_slice %4 {offsets = [4, 0], sizes = [1, 6912], strides = [1, 1]} : vector<12x6912xf32> to vector<1x6912xf32>
    %21 = vector.extract_strided_slice %6 {offsets = [0, 0], sizes = [1, 6912], strides = [1, 1]} : vector<3x6912xf32> to vector<1x6912xf32>
    %22 = arith.mulf %20, %21 : vector<1x6912xf32>
    %23 = vector.extract_strided_slice %4 {offsets = [5, 0], sizes = [1, 6912], strides = [1, 1]} : vector<12x6912xf32> to vector<1x6912xf32>
    %24 = vector.extract_strided_slice %6 {offsets = [1, 0], sizes = [1, 6912], strides = [1, 1]} : vector<3x6912xf32> to vector<1x6912xf32>
    %25 = arith.mulf %23, %24 : vector<1x6912xf32>
    %26 = arith.addf %22, %25 : vector<1x6912xf32>
    %27 = vector.extract_strided_slice %4 {offsets = [6, 0], sizes = [1, 6912], strides = [1, 1]} : vector<12x6912xf32> to vector<1x6912xf32>
    %28 = vector.extract_strided_slice %6 {offsets = [2, 0], sizes = [1, 6912], strides = [1, 1]} : vector<3x6912xf32> to vector<1x6912xf32>
    %29 = arith.mulf %27, %28 : vector<1x6912xf32>
    %30 = arith.addf %26, %29 : vector<1x6912xf32>
    %31 = vector.extract_strided_slice %4 {offsets = [7, 0], sizes = [1, 6912], strides = [1, 1]} : vector<12x6912xf32> to vector<1x6912xf32>
    %32 = arith.addf %30, %31 : vector<1x6912xf32>
    %33 = vector.extract_strided_slice %4 {offsets = [8, 0], sizes = [1, 6912], strides = [1, 1]} : vector<12x6912xf32> to vector<1x6912xf32>
    %34 = vector.extract_strided_slice %6 {offsets = [0, 0], sizes = [1, 6912], strides = [1, 1]} : vector<3x6912xf32> to vector<1x6912xf32>
    %35 = arith.mulf %33, %34 : vector<1x6912xf32>
    %36 = vector.extract_strided_slice %4 {offsets = [9, 0], sizes = [1, 6912], strides = [1, 1]} : vector<12x6912xf32> to vector<1x6912xf32>
    %37 = vector.extract_strided_slice %6 {offsets = [1, 0], sizes = [1, 6912], strides = [1, 1]} : vector<3x6912xf32> to vector<1x6912xf32>
    %38 = arith.mulf %36, %37 : vector<1x6912xf32>
    %39 = arith.addf %35, %38 : vector<1x6912xf32>
    %40 = vector.extract_strided_slice %4 {offsets = [10, 0], sizes = [1, 6912], strides = [1, 1]} : vector<12x6912xf32> to vector<1x6912xf32>
    %41 = vector.extract_strided_slice %6 {offsets = [2, 0], sizes = [1, 6912], strides = [1, 1]} : vector<3x6912xf32> to vector<1x6912xf32>
    %42 = arith.mulf %40, %41 : vector<1x6912xf32>
    %43 = arith.addf %39, %42 : vector<1x6912xf32>
    %44 = vector.extract_strided_slice %4 {offsets = [11, 0], sizes = [1, 6912], strides = [1, 1]} : vector<12x6912xf32> to vector<1x6912xf32>
    %45 = arith.addf %43, %44 : vector<1x6912xf32>
    %46 = tpu.concatenate %19, %32, %45 in 0 : vector<1x6912xf32>, vector<1x6912xf32>, vector<1x6912xf32> -> vector<3x6912xf32>
    %c0_7 = arith.constant 0 : index
    %c0_8 = arith.constant 0 : index
    %c0_9 = arith.constant 0 : index
    %47 = vector.load %arg4[%c0_7, %c0_8, %c0_9] : memref<1x3x6912xf32, #tpu.memory_space<vmem>>, vector<1x3x6912xf32>
    %48 = vector.shape_cast %47 : vector<1x3x6912xf32> to vector<3x6912xf32>
    %49 = vector.shape_cast %46 : vector<3x6912xf32> to vector<1x3x6912xf32>
    tpu.vector_store %arg4[%c0_7, %c0_8, %c0_9], %49 {strides = array<i32>} : memref<1x3x6912xf32, #tpu.memory_space<vmem>>, vector<1x3x6912xf32>,
    return
  }
  func.func @transform_0(%arg0: i32) -> (i32, i32, i32) {
    %c0_i32 = arith.constant 0 : i32
    %c0_i32_0 = arith.constant 0 : i32
    %c0_i32_1 = arith.constant 0 : i32
    return %arg0, %c0_i32, %c0_i32_0 : i32, i32, i32
  }
  func.func @transform_1(%arg0: i32) -> (i32, i32) {
    %c0_i32 = arith.constant 0 : i32
    %c0_i32_0 = arith.constant 0 : i32
    %c0_i32_1 = arith.constant 0 : i32
    return %c0_i32, %c0_i32_0 : i32, i32
  }
  func.func @transform_2(%arg0: i32) -> (i32, i32, i32) {
    %c0_i32 = arith.constant 0 : i32
    %c0_i32_0 = arith.constant 0 : i32
    %c0_i32_1 = arith.constant 0 : i32
    return %arg0, %c0_i32, %c0_i32_0 : i32, i32, i32
  }
  func.func @transform_3(%arg0: i32) -> (i32, i32, i32) {
    %c0_i32 = arith.constant 0 : i32
    %c0_i32_0 = arith.constant 0 : i32
    %c0_i32_1 = arith.constant 0 : i32
    return %arg0, %c0_i32, %c0_i32_0 : i32, i32, i32
  }
}

module attributes {stable_mosaic.version = 11 : i64} {
  func.func @blend_kernel(%arg0: i32, %arg1: memref<2x224xbf16, #tpu.memory_space<vmem>>, %arg2: memref<224x10368xbf16, #tpu.memory_space<vmem>>, %arg3: memref<2x10368xf32, #tpu.memory_space<vmem>>) attributes {dimension_semantics = [#tpu.dimension_semantics<parallel>], iteration_bounds = array<i64: 2>, scalar_prefetch = 0 : i64, scratch_operands = 0 : i64, tpu.core_type = #tpu.core_type<tc>, window_params = [{pipeline_mode = #tpu.pipeline_mode<synchronous>, transform_indices = @transform_0, window_bounds = array<i64: 2, 224>}, {transform_indices = @transform_1, window_bounds = array<i64: 224, 10368>}, {transform_indices = @transform_2, window_bounds = array<i64: 2, 10368>}]} {
    %c0 = arith.constant 0 : index
    %c0_0 = arith.constant 0 : index
    %0 = vector.load %arg1[%c0, %c0_0] : memref<2x224xbf16, #tpu.memory_space<vmem>>, vector<2x224xbf16>
    %c0_1 = arith.constant 0 : index
    %c0_2 = arith.constant 0 : index
    %1 = vector.load %arg2[%c0_1, %c0_2] : memref<224x10368xbf16, #tpu.memory_space<vmem>>, vector<224x10368xbf16>
    %cst = arith.constant dense<0.000000e+00> : vector<2x10368xf32>
    %2 = tpu.matmul %0, %1, %cst {dimension_numbers = #tpu.dot_dimension_numbers<[1], [0], [0], [1], [0, 0, 1, 1], [], []>} : vector<2x224xbf16>, vector<224x10368xbf16>, vector<2x10368xf32> -> vector<2x10368xf32>
    %c0_3 = arith.constant 0 : index
    %c0_4 = arith.constant 0 : index
    %3 = vector.load %arg3[%c0_3, %c0_4] : memref<2x10368xf32, #tpu.memory_space<vmem>>, vector<2x10368xf32>
    tpu.vector_store %arg3[%c0_3, %c0_4], %2 {strides = array<i32>} : memref<2x10368xf32, #tpu.memory_space<vmem>>, vector<2x10368xf32>,
    return
  }
  func.func @transform_0(%arg0: i32) -> (i32, i32) {
    %c0_i32 = arith.constant 0 : i32
    %c0_i32_0 = arith.constant 0 : i32
    %c0_i32_1 = arith.constant 0 : i32
    return %c0_i32, %c0_i32_0 : i32, i32
  }
  func.func @transform_1(%arg0: i32) -> (i32, i32) {
    %c0_i32 = arith.constant 0 : i32
    %c0_i32_0 = arith.constant 0 : i32
    return %c0_i32, %arg0 : i32, i32
  }
  func.func @transform_2(%arg0: i32) -> (i32, i32) {
    %c0_i32 = arith.constant 0 : i32
    %c0_i32_0 = arith.constant 0 : i32
    return %c0_i32, %arg0 : i32, i32
  }
}

</mosaic_0001>

<llo_original>
// kernel: smpl_forward.3
$region0: #{smpl_forward.3}
  #allocation0 [shape = 'u32[]', space=smem, size = 0x4, offset = 0x4, fixed_abs, tag = 'smem constant byte address 0x4 - core index']
  #allocation1 [shape = 'u32[144,128]{1,0:T(1,128)}', space=vmem, size = 0x12000, scoped, tag = 'internal scratch']
  %s0 = inlined_call_operand.vmem [shape: f32[2,3,6912], index: 0, kind: input, shape index: {}]
  %s1 = inlined_call_operand.vmem [shape: bf16[24,6912], index: 1, kind: input, shape index: {}]
  %s2 = inlined_call_operand.vmem [shape: f32[2,12,24], index: 2, kind: input, shape index: {}]
  %s3 = inlined_call_operand.vmem [shape: f32[2,3,6912], index: 3, kind: output, shape index: {}]
  %s4 = sld [smem:[#allocation0]]
  $region45: #{smpl_forward.3} parent=0
    _
  %s6 = ssub.s32 1, %s4
  %s7 = scalar_select 0, %s6, %s4
  loop: start=0, step=1, limit=4
  $region2: #{smpl_forward.3} parent=0 // loop_pre_header
    _
  $region3: #{smpl_forward.3} parent=0 // loop_header
    %s9 = sphi 0, %s13
    %p10 = scmp.ge.s32.totalorder %s9, 4
    %s19 = sphi 0, %s21
    %s22 = sphi 0, %s19
    %s23 = sphi 0, %s22
    %s39 = sphi 0, %s23
    %s43 = sphi 0, %s43
    %s45 = sphi 0, %s43
    %s46 = sphi 0, %s45
    %s60 = sphi 0, %s46
    %s66 = sphi 0, %s68
    %s69 = sphi 0, %s66
    %s70 = sphi 0, %s69
    %s86 = sphi 0, %s70
    %s92 = sphi 0, %s94
    %s95 = sphi 0, %s92
    %s96 = sphi 0, %s95
    %s112 = sphi 0, %s96
  $region4: #{smpl_forward.3} parent=0 // loop_header_branch
    %12 = sbr.rel (%p10) target = $region8
  $region5: #{smpl_forward.3} parent=0 // loop_body
    %s14 = ssub.s32 %s9, 1
    %s15 = ssub.s32 %s9, 2
    %s16 = sadd.s32 %s9, 1
    %s17 = ssub.s32 %s9, %s16
    %p18 = scmp.eq.s32.totalorder %s17, 0
    %s20 = sadd.s32 %s19, 1
    %s21 = scalar_select %p18, %s19, %s20
    %p24 = pneg %p18
    %p25 = scmp.eq.s32.totalorder %s9, 1
    %p26 = por %p24, %p25
    %p27 = scmp.ne.s32.totalorder %s19, %s22
    %p28 = scmp.eq.s32.totalorder %s9, 0
    %p29 = por %p27, %p28
    %p30 = scmp.ne.s32.totalorder %s19, %s22
    %p31 = scmp.eq.s32.totalorder %s14, 1
    %p32 = por %p30, %p31
    %p33 = scmp.ne.s32.totalorder %s22, %s23
    %p34 = scmp.eq.s32.totalorder %s14, 0
    %p35 = por %p33, %p34
    %p36 = scmp.ne.s32.totalorder %s22, %s23
    %p37 = scmp.eq.s32.totalorder %s15, 1
    %p38 = por %p36, %p37
    %p40 = scmp.ne.s32.totalorder %s23, %s39
    %p41 = scmp.eq.s32.totalorder %s15, 0
    %p42 = por %p40, %p41
    %s44 = sadd.s32 %s43, 1
    %p47 = scmp.eq.s32.totalorder %s9, 1
    %p48 = scmp.ne.s32.totalorder %s43, %s45
    %p49 = scmp.eq.s32.totalorder %s9, 0
    %p50 = por %p48, %p49
    %p51 = scmp.ne.s32.totalorder %s43, %s45
    %p52 = scmp.eq.s32.totalorder %s14, 1
    %p53 = por %p51, %p52
    %p54 = scmp.ne.s32.totalorder %s45, %s46
    %p55 = scmp.eq.s32.totalorder %s14, 0
    %p56 = por %p54, %p55
    %p57 = scmp.ne.s32.totalorder %s45, %s46
    %p58 = scmp.eq.s32.totalorder %s15, 1
    %p59 = por %p57, %p58
    %p61 = scmp.ne.s32.totalorder %s46, %s60
    %p62 = scmp.eq.s32.totalorder %s15, 0
    %p63 = por %p61, %p62
    %s64 = ssub.s32 %s9, %s16
    %p65 = scmp.eq.s32.totalorder %s64, 0
    %s67 = sadd.s32 %s66, 1
    %s68 = scalar_select %p65, %s66, %s67
    %p71 = pneg %p65
    %p72 = scmp.eq.s32.totalorder %s9, 1
    %p73 = por %p71, %p72
    %p74 = scmp.ne.s32.totalorder %s66, %s69
    %p75 = scmp.eq.s32.totalorder %s9, 0
    %p76 = por %p74, %p75
    %p77 = scmp.ne.s32.totalorder %s66, %s69
    %p78 = scmp.eq.s32.totalorder %s14, 1
    %p79 = por %p77, %p78
    %p80 = scmp.ne.s32.totalorder %s69, %s70
    %p81 = scmp.eq.s32.totalorder %s14, 0
    %p82 = por %p80, %p81
    %p83 = scmp.ne.s32.totalorder %s69, %s70
    %p84 = scmp.eq.s32.totalorder %s15, 1
    %p85 = por %p83, %p84
    %p87 = scmp.ne.s32.totalorder %s70, %s86
    %p88 = scmp.eq.s32.totalorder %s15, 0
    %p89 = por %p87, %p88
    %s90 = ssub.s32 %s9, %s16
    %p91 = scmp.eq.s32.totalorder %s90, 0
    %s93 = sadd.s32 %s92, 1
    %s94 = scalar_select %p91, %s92, %s93
    %p97 = pneg %p91
    %p98 = scmp.eq.s32.totalorder %s9, 1
    %p99 = por %p97, %p98
    %p100 = scmp.ne.s32.totalorder %s92, %s95
    %p101 = scmp.eq.s32.totalorder %s9, 0
    %p102 = por %p100, %p101
    %p103 = scmp.ne.s32.totalorder %s92, %s95
    %p104 = scmp.eq.s32.totalorder %s14, 1
    %p105 = por %p103, %p104
    %p106 = scmp.ne.s32.totalorder %s95, %s96
    %p107 = scmp.eq.s32.totalorder %s14, 0
    %p108 = por %p106, %p107
    %p109 = scmp.ne.s32.totalorder %s95, %s96
    %p110 = scmp.eq.s32.totalorder %s15, 1
    %p111 = por %p109, %p110
    %p113 = scmp.ne.s32.totalorder %s96, %s112
    %p114 = scmp.eq.s32.totalorder %s15, 0
    %p115 = por %p113, %p114
    %p116 = scmp.le.s32.totalorder 1, %s9
    %p117 = scmp.lt.s32.totalorder %s9, 3
    %p118 = pnand %p116, %p117
    %p119 = pneg %p118
    // Predicated region
    $region9: #{smpl_forward.3} parent=5 // pred_check
      _
    $region10: #{smpl_forward.3} parent=5 // pred_check_branch
      %121 = sbr.rel (%p118) target = $region12
    $region11: #{smpl_forward.3} parent=5 // pred_region
      %s122 = ssub.s32 %s9, 1
      // Predicated region
      $region13: #{smpl_forward.3} parent=11 // pred_check
        %p123 = pneg %p56
      $region14: #{smpl_forward.3} parent=11 // pred_check_branch
        %125 = sbr.rel (%p123) target = $region16
      $region15: #{smpl_forward.3} parent=11 // pred_region
        _
      $region16: #{smpl_forward.3} parent=11 // pred_fallthru
        _
    $region12: #{smpl_forward.3} parent=5 // pred_fallthru
      _
    %p126 = scmp.lt.s32.totalorder %s9, 2
    // Predicated region
    $region17: #{smpl_forward.3} parent=5 // pred_check
      %p127 = pneg %p126
    $region18: #{smpl_forward.3} parent=5 // pred_check_branch
      %129 = sbr.rel (%p127) target = $region20
    $region19: #{smpl_forward.3} parent=5 // pred_region
      // Predicated region
      $region21: #{smpl_forward.3} parent=19 // pred_check
        %p130 = pneg %p29
      $region22: #{smpl_forward.3} parent=19 // pred_check_branch
        %132 = sbr.rel (%p130) target = $region24
      $region23: #{smpl_forward.3} parent=19 // pred_region
        %p133 = scmp.lt.s32.totalorder %s9, 1
        %s134 = scalar_select %p133, %s9, 1
        %s135 = smul.addr %s134, 54
        %s136 = smul.addr %s135, 4
        %s137 = scalar_lea.vmem %s0, %s136
      $region24: #{smpl_forward.3} parent=19 // pred_fallthru
        _
      // Predicated region
      $region25: #{smpl_forward.3} parent=19 // pred_check
        %p138 = pneg %p76
      $region26: #{smpl_forward.3} parent=19 // pred_check_branch
        %140 = sbr.rel (%p138) target = $region28
      $region27: #{smpl_forward.3} parent=19 // pred_region
        %p141 = scmp.lt.s32.totalorder %s9, 1
        %s142 = scalar_select %p141, %s9, 1
        %s143 = smul.addr %s142, 2
        %s144 = smul.addr %s143, 8
        %s145 = scalar_lea.vmem %s2, %s144
      $region28: #{smpl_forward.3} parent=19 // pred_fallthru
        _
    $region20: #{smpl_forward.3} parent=5 // pred_fallthru
      _
    %p146 = scmp.le.s32.totalorder 1, %s9
    %p147 = scmp.lt.s32.totalorder %s9, 3
    %p148 = pnand %p146, %p147
    %p149 = pneg %p148
    // Predicated region
    $region29: #{smpl_forward.3} parent=5 // pred_check
      _
    $region30: #{smpl_forward.3} parent=5 // pred_check_branch
      %151 = sbr.rel (%p148) target = $region32
    $region31: #{smpl_forward.3} parent=5 // pred_region
      %s152 = ssub.s32 %s9, 1
      %p153 = scmp.lt.s32.totalorder %s14, 1
      %s154 = scalar_select %p153, %s14, 1
      %s155 = smul.addr %s154, 54
      %s156 = smul.addr %s155, 4
      %s157 = scalar_lea.vmem %s0, %s156
      %p158 = pneg %p35
      %p159 = pneg %p32
      %p160 = pneg %p56
      %p161 = pneg %p53
      %p162 = scmp.lt.s32.totalorder %s14, 1
      %s163 = scalar_select %p162, %s14, 1
      %s164 = smul.addr %s163, 2
      %s165 = smul.addr %s164, 8
      %s166 = scalar_lea.vmem %s2, %s165
      %p167 = pneg %p82
      %p168 = pneg %p79
      %p169 = pneg %p108
      %p170 = pneg %p105
      %p171 = scmp.lt.s32.totalorder %s14, 1
      %s172 = scalar_select %p171, %s14, 1
      %s173 = smul.addr %s172, 54
      %s174 = smul.addr %s173, 4
      %s175 = scalar_lea.vmem %s3, %s174
      %p176 = scmp.lt.s32.totalorder %s14, 1
      %s177 = scalar_select %p176, %s14, 1
      %s178 = smul.addr %s177, 54
      %s179 = smul.addr %s178, 4
      %s180 = scalar_lea.vmem %s0, %s179
      %p181 = scmp.lt.s32.totalorder %s14, 1
      %s182 = scalar_select %p181, %s14, 1
      %s183 = smul.addr %s182, 2
      %s184 = smul.addr %s183, 8
      %s185 = scalar_lea.vmem %s2, %s184
      %p186 = scmp.lt.s32.totalorder %s14, 1
      %s187 = scalar_select %p186, %s14, 1
      %s188 = smul.addr %s187, 54
      %s189 = smul.addr %s188, 4
      %s190 = scalar_lea.vmem %s3, %s189
      %v191 = vld [vmem:[%s1] sm:$0xff]
      %v192 = vld [vmem:[%s1 + $0x8] sm:$0xff]
      %v193 = vld [vmem:[%s1 + $0x10] sm:$0xff]
      %v194 = vld [vmem:[%s1 + $0x18] sm:$0xff]
      %v195 = vld [vmem:[%s1 + $0x20] sm:$0xff]
      %v196 = vld [vmem:[%s1 + $0x28] sm:$0xff]
      %v197 = vld [vmem:[%s1 + $0x30] sm:$0xff]
      %v198 = vld [vmem:[%s1 + $0x38] sm:$0xff]
      %v199 = vld [vmem:[%s1 + $0x40] sm:$0xff]
      %v200 = vld [vmem:[%s1 + $0x48] sm:$0xff]
      %v201 = vld [vmem:[%s1 + $0x50] sm:$0xff]
      %v202 = vld [vmem:[%s1 + $0x58] sm:$0xff]
      %v203 = vld [vmem:[%s1 + $0x60] sm:$0xff]
      %v204 = vld [vmem:[%s1 + $0x68] sm:$0xff]
      %v205 = vld [vmem:[%s1 + $0x70] sm:$0xff]
      %v206 = vld [vmem:[%s1 + $0x78] sm:$0xff]
      %v207 = vld [vmem:[%s1 + $0x80] sm:$0xff]
      %v208 = vld [vmem:[%s1 + $0x88] sm:$0xff]
      %v209 = vld [vmem:[%s1 + $0x90] sm:$0xff]
      %v210 = vld [vmem:[%s1 + $0x98] sm:$0xff]
      %v211 = vld [vmem:[%s1 + $0xa0] sm:$0xff]
      %v212 = vld [vmem:[%s1 + $0xa8] sm:$0xff]
      %v213 = vld [vmem:[%s1 + $0xb0] sm:$0xff]
      %v214 = vld [vmem:[%s1 + $0xb8] sm:$0xff]
      %v215 = vld [vmem:[%s1 + $0xc0] sm:$0xff]
      %v216 = vld [vmem:[%s1 + $0xc8] sm:$0xff]
      %v217 = vld [vmem:[%s1 + $0xd0] sm:$0xff]
      %v218 = vld [vmem:[%s1 + $0xd8] sm:$0xff]
      %v219 = vld [vmem:[%s1 + $0xe0] sm:$0xff]
      %v220 = vld [vmem:[%s1 + $0xe8] sm:$0xff]
      %v221 = vld [vmem:[%s1 + $0xf0] sm:$0xff]
      %v222 = vld [vmem:[%s1 + $0xf8] sm:$0xff]
      %v223 = vld [vmem:[%s1 + $0x100] sm:$0xff]
      %v224 = vld [vmem:[%s1 + $0x108] sm:$0xff]
      %v225 = vld [vmem:[%s1 + $0x110] sm:$0xff]
      %v226 = vld [vmem:[%s1 + $0x118] sm:$0xff]
      %v227 = vld [vmem:[%s1 + $0x120] sm:$0xff]
      %v228 = vld [vmem:[%s1 + $0x128] sm:$0xff]
      %v229 = vld [vmem:[%s1 + $0x130] sm:$0xff]
      %v230 = vld [vmem:[%s1 + $0x138] sm:$0xff]
      %v231 = vld [vmem:[%s1 + $0x140] sm:$0xff]
      %v232 = vld [vmem:[%s1 + $0x148] sm:$0xff]
      %v233 = vld [vmem:[%s1 + $0x150] sm:$0xff]
      %v234 = vld [vmem:[%s1 + $0x158] sm:$0xff]
      %v235 = vld [vmem:[%s1 + $0x160] sm:$0xff]
      %v236 = vld [vmem:[%s1 + $0x168] sm:$0xff]
      %v237 = vld [vmem:[%s1 + $0x170] sm:$0xff]
      %v238 = vld [vmem:[%s1 + $0x178] sm:$0xff]
      %v239 = vld [vmem:[%s1 + $0x180] sm:$0xff]
      %v240 = vld [vmem:[%s1 + $0x188] sm:$0xff]
      %v241 = vld [vmem:[%s1 + $0x190] sm:$0xff]
      %v242 = vld [vmem:[%s1 + $0x198] sm:$0xff]
      %v243 = vld [vmem:[%s1 + $0x1a0] sm:$0xff]
      %v244 = vld [vmem:[%s1 + $0x1a8] sm:$0xff]
      %v245 = vld [vmem:[%s1 + $0x1b0] sm:$0xff]
      %v246 = vld [vmem:[%s1 + $0x1b8] sm:$0xff]
      %v247 = vld [vmem:[%s1 + $0x1c0] sm:$0xff]
      %v248 = vld [vmem:[%s1 + $0x1c8] sm:$0xff]
      %v249 = vld [vmem:[%s1 + $0x1d0] sm:$0xff]
      %v250 = vld [vmem:[%s1 + $0x1d8] sm:$0xff]
      %v251 = vld [vmem:[%s1 + $0x1e0] sm:$0xff]
      %v252 = vld [vmem:[%s1 + $0x1e8] sm:$0xff]
      %v253 = vld [vmem:[%s1 + $0x1f0] sm:$0xff]
      %v254 = vld [vmem:[%s1 + $0x1f8] sm:$0xff]
      %v255 = vld [vmem:[%s1 + $0x200] sm:$0xff]
      %v256 = vld [vmem:[%s1 + $0x208] sm:$0xff]
      %v257 = vld [vmem:[%s1 + $0x210] sm:$0xff]
      %v258 = vld [vmem:[%s1 + $0x218] sm:$0xff]
      %v259 = vld [vmem:[%s1 + $0x220] sm:$0xff]
      %v260 = vld [vmem:[%s1 + $0x228] sm:$0xff]
      %v261 = vld [vmem:[%s1 + $0x230] sm:$0xff]
      %v262 = vld [vmem:[%s1 + $0x238] sm:$0xff]
      %v263 = vld [vmem:[%s1 + $0x240] sm:$0xff]
      %v264 = vld [vmem:[%s1 + $0x248] sm:$0xff]
      %v265 = vld [vmem:[%s1 + $0x250] sm:$0xff]
      %v266 = vld [vmem:[%s1 + $0x258] sm:$0xff]
      %v267 = vld [vmem:[%s1 + $0x260] sm:$0xff]
      %v268 = vld [vmem:[%s1 + $0x268] sm:$0xff]
      %v269 = vld [vmem:[%s1 + $0x270] sm:$0xff]
      %v270 = vld [vmem:[%s1 + $0x278] sm:$0xff]
      %v271 = vld [vmem:[%s1 + $0x280] sm:$0xff]
      %v272 = vunpack.c.l.bf16 %v191
      %v273 = vunpack.c.h.bf16 %v191
      %v274 = vunpack.c.l.bf16 %v192
      %v275 = vunpack.c.h.bf16 %v192
      %v276 = vunpack.c.l.bf16 %v193
      %v277 = vunpack.c.h.bf16 %v193
      %v278 = vunpack.c.l.bf16 %v194
      %v279 = vunpack.c.h.bf16 %v194
      %v280 = vunpack.c.l.bf16 %v195
      %v281 = vunpack.c.h.bf16 %v195
      %v282 = vunpack.c.l.bf16 %v196
      %v283 = vunpack.c.h.bf16 %v196
      %v284 = vunpack.c.l.bf16 %v197
      %v285 = vunpack.c.h.bf16 %v197
      %v286 = vunpack.c.l.bf16 %v198
      %v287 = vunpack.c.h.bf16 %v198
      %v288 = vunpack.c.l.bf16 %v199
      %v289 = vunpack.c.h.bf16 %v199
      %v290 = vunpack.c.l.bf16 %v200
      %v291 = vunpack.c.h.bf16 %v200
      %v292 = vunpack.c.l.bf16 %v201
      %v293 = vunpack.c.h.bf16 %v201
      %v294 = vunpack.c.l.bf16 %v202
      %v295 = vunpack.c.h.bf16 %v202
      %v296 = vunpack.c.l.bf16 %v203
      %v297 = vunpack.c.h.bf16 %v203
      %v298 = vunpack.c.l.bf16 %v204
      %v299 = vunpack.c.h.bf16 %v204
      %v300 = vunpack.c.l.bf16 %v205
      %v301 = vunpack.c.h.bf16 %v205
      %v302 = vunpack.c.l.bf16 %v206
      %v303 = vunpack.c.h.bf16 %v206
      %v304 = vunpack.c.l.bf16 %v207
      %v305 = vunpack.c.h.bf16 %v207
      %v306 = vunpack.c.l.bf16 %v208
      %v307 = vunpack.c.h.bf16 %v208
      %v308 = vunpack.c.l.bf16 %v209
      %v309 = vunpack.c.h.bf16 %v209
      %v310 = vunpack.c.l.bf16 %v210
      %v311 = vunpack.c.h.bf16 %v210
      %v312 = vunpack.c.l.bf16 %v211
      %v313 = vunpack.c.h.bf16 %v211
      %v314 = vunpack.c.l.bf16 %v212
      %v315 = vunpack.c.h.bf16 %v212
      %v316 = vunpack.c.l.bf16 %v213
      %v317 = vunpack.c.h.bf16 %v213
      %v318 = vunpack.c.l.bf16 %v214
      %v319 = vunpack.c.h.bf16 %v214
      %v320 = vunpack.c.l.bf16 %v215
      %v321 = vunpack.c.h.bf16 %v215
      %v322 = vunpack.c.l.bf16 %v216
      %v323 = vunpack.c.h.bf16 %v216
      %v324 = vunpack.c.l.bf16 %v217
      %v325 = vunpack.c.h.bf16 %v217
      %v326 = vunpack.c.l.bf16 %v218
      %v327 = vunpack.c.h.bf16 %v218
      %v328 = vunpack.c.l.bf16 %v219
      %v329 = vunpack.c.h.bf16 %v219
      %v330 = vunpack.c.l.bf16 %v220
      %v331 = vunpack.c.h.bf16 %v220
      %v332 = vunpack.c.l.bf16 %v221
      %v333 = vunpack.c.h.bf16 %v221
      %v334 = vunpack.c.l.bf16 %v222
      %v335 = vunpack.c.h.bf16 %v222
      %v336 = vunpack.c.l.bf16 %v223
      %v337 = vunpack.c.h.bf16 %v223
      %v338 = vunpack.c.l.bf16 %v224
      %v339 = vunpack.c.h.bf16 %v224
      %v340 = vunpack.c.l.bf16 %v225
      %v341 = vunpack.c.h.bf16 %v225
      %v342 = vunpack.c.l.bf16 %v226
      %v343 = vunpack.c.h.bf16 %v226
      %v344 = vunpack.c.l.bf16 %v227
      %v345 = vunpack.c.h.bf16 %v227
      %v346 = vunpack.c.l.bf16 %v228
      %v347 = vunpack.c.h.bf16 %v228
      %v348 = vunpack.c.l.bf16 %v229
      %v349 = vunpack.c.h.bf16 %v229
      %v350 = vunpack.c.l.bf16 %v230
      %v351 = vunpack.c.h.bf16 %v230
      %v352 = vunpack.c.l.bf16 %v231
      %v353 = vunpack.c.h.bf16 %v231
      %v354 = vunpack.c.l.bf16 %v232
      %v355 = vunpack.c.h.bf16 %v232
      %v356 = vunpack.c.l.bf16 %v233
      %v357 = vunpack.c.h.bf16 %v233
      %v358 = vunpack.c.l.bf16 %v234
      %v359 = vunpack.c.h.bf16 %v234
      %v360 = vunpack.c.l.bf16 %v235
      %v361 = vunpack.c.h.bf16 %v235
      %v362 = vunpack.c.l.bf16 %v236
      %v363 = vunpack.c.h.bf16 %v236
      %v364 = vunpack.c.l.bf16 %v237
      %v365 = vunpack.c.h.bf16 %v237
      %v366 = vunpack.c.l.bf16 %v238
      %v367 = vunpack.c.h.bf16 %v238
      %v368 = vunpack.c.l.bf16 %v239
      %v369 = vunpack.c.h.bf16 %v239
      %v370 = vunpack.c.l.bf16 %v240
      %v371 = vunpack.c.h.bf16 %v240
      %v372 = vunpack.c.l.bf16 %v241
      %v373 = vunpack.c.h.bf16 %v241
      %v374 = vunpack.c.l.bf16 %v242
      %v375 = vunpack.c.h.bf16 %v242
      %v376 = vunpack.c.l.bf16 %v243
      %v377 = vunpack.c.h.bf16 %v243
      %v378 = vunpack.c.l.bf16 %v244
      %v379 = vunpack.c.h.bf16 %v244
      %v380 = vunpack.c.l.bf16 %v245
      %v381 = vunpack.c.h.bf16 %v245
      %v382 = vunpack.c.l.bf16 %v246
      %v383 = vunpack.c.h.bf16 %v246
      %v384 = vunpack.c.l.bf16 %v247
      %v385 = vunpack.c.h.bf16 %v247
      %v386 = vunpack.c.l.bf16 %v248
      %v387 = vunpack.c.h.bf16 %v248
      %v388 = vunpack.c.l.bf16 %v249
      %v389 = vunpack.c.h.bf16 %v249
      %v390 = vunpack.c.l.bf16 %v250
      %v391 = vunpack.c.h.bf16 %v250
      %v392 = vunpack.c.l.bf16 %v251
      %v393 = vunpack.c.h.bf16 %v251
      %v394 = vunpack.c.l.bf16 %v252
      %v395 = vunpack.c.h.bf16 %v252
      %v396 = vunpack.c.l.bf16 %v253
      %v397 = vunpack.c.h.bf16 %v253
      %v398 = vunpack.c.l.bf16 %v254
      %v399 = vunpack.c.h.bf16 %v254
      %v400 = vunpack.c.l.bf16 %v255
      %v401 = vunpack.c.h.bf16 %v255
      %v402 = vunpack.c.l.bf16 %v256
      %v403 = vunpack.c.h.bf16 %v256
      %v404 = vunpack.c.l.bf16 %v257
      %v405 = vunpack.c.h.bf16 %v257
      %v406 = vunpack.c.l.bf16 %v258
      %v407 = vunpack.c.h.bf16 %v258
      %v408 = vunpack.c.l.bf16 %v259
      %v409 = vunpack.c.h.bf16 %v259
      %v410 = vunpack.c.l.bf16 %v260
      %v411 = vunpack.c.h.bf16 %v260
      %v412 = vunpack.c.l.bf16 %v261
      %v413 = vunpack.c.h.bf16 %v261
      %v414 = vunpack.c.l.bf16 %v262
      %v415 = vunpack.c.h.bf16 %v262
      %v416 = vunpack.c.l.bf16 %v263
      %v417 = vunpack.c.h.bf16 %v263
      %v418 = vunpack.c.l.bf16 %v264
      %v419 = vunpack.c.h.bf16 %v264
      %v420 = vunpack.c.l.bf16 %v265
      %v421 = vunpack.c.h.bf16 %v265
      %v422 = vunpack.c.l.bf16 %v266
      %v423 = vunpack.c.h.bf16 %v266
      %v424 = vunpack.c.l.bf16 %v267
      %v425 = vunpack.c.h.bf16 %v267
      %v426 = vunpack.c.l.bf16 %v268
      %v427 = vunpack.c.h.bf16 %v268
      %v428 = vunpack.c.l.bf16 %v269
      %v429 = vunpack.c.h.bf16 %v269
      %v430 = vunpack.c.l.bf16 %v270
      %v431 = vunpack.c.h.bf16 %v270
      %v432 = vunpack.c.l.bf16 %v271
      %v433 = vunpack.c.h.bf16 %v271
      %v434 = vld [vmem:[%s185] sm:$0xff]
      %v435 = vld [vmem:[%s185 + $0x8] sm:$0xf]
      %vm436 = vcmask 195584
      %v438 = vsel %vm436, %v434, 0
      %v441 = vsel %vm436, %v435, 0
      %443 = vmatprep.subr.mxu0 %v273
      %444 = vmatpush1.msra.mxu0 %v272
      %445 = vmatprep.subr.mxu0 %v327
      %446 = vmatpush1.msra.mxu0 %v326
      %447 = vmatprep.subr.mxu0 %v381
      %448 = vmatpush1.msra.mxu0 %v380
      %449 = vmatprep.subr.mxu0 0.0
      %450 = vmatpush1.msra.mxu0 0.0
      %451 = vmatprep.subr.mxu0 0.0
      %452 = vmatpush1.msra.mxu0 0.0
      %453 = vmatprep.subr.mxu0 0.0
      %454 = vmatpush1.msra.mxu0 0.0
      %455 = vmatprep.subr.mxu0 0.0
      %456 = vmatpush1.msra.mxu0 0.0
      %457 = vmatprep.subr.mxu0 0.0
      %458 = vmatpush1.msra.mxu0 0.0
      %459 = vmatprep.subr.mxu0 0.0
      %460 = vmatpush1.msra.mxu0 0.0
      %461 = vmatprep.subr.mxu0 0.0
      %462 = vmatpush1.msra.mxu0 0.0
      %463 = vmatprep.subr.mxu0 0.0
      %464 = vmatpush1.msra.mxu0 0.0
      %465 = vmatprep.subr.mxu0 0.0
      %466 = vmatpush1.msra.mxu0 0.0
      %467 = vmatprep.subr.mxu0 0.0
      %468 = vmatpush1.msra.mxu0 0.0
      %469 = vmatprep.subr.mxu0 0.0
      %470 = vmatpush1.msra.mxu0 0.0
      %471 = vmatprep.subr.mxu0 0.0
      %472 = vmatpush1.msra.mxu0 0.0
      %473 = vmatprep.subr.mxu0 0.0
      %474 = vmatpush1.msra.mxu0 0.0
      %475 = vmatprep.subr.mxu0 0.0
      %476 = vmatpush1.msra.mxu0 0.0
      %477 = vmatprep.subr.mxu0 0.0
      %478 = vmatpush1.msra.mxu0 0.0
      %479 = vmatprep.subr.mxu0 0.0
      %480 = vmatpush1.msra.mxu0 0.0
      %481 = vmatprep.subr.mxu0 0.0
      %482 = vmatpush1.msra.mxu0 0.0
      %483 = vmatprep.subr.mxu0 0.0
      %484 = vmatpush1.msra.mxu0 0.0
      %485 = vmatprep.subr.mxu0 0.0
      %486 = vmatpush1.msra.mxu0 0.0
      %487 = vmatprep.subr.mxu0 0.0
      %488 = vmatpush1.msra.mxu0 0.0
      %489 = vmatprep.subr.mxu0 0.0
      %490 = vmatpush1.msra.mxu0 0.0
      %491 = vmatprep.subr.mxu0 0.0
      %492 = vmatpush1.msra.mxu0 0.0
      %493 = vmatprep.subr.mxu0 0.0
      %494 = vmatpush1.msra.mxu0 0.0
      %495 = vmatprep.subr.mxu0 0.0
      %496 = vmatpush1.msra.mxu0 0.0
      %497 = vmatprep.subr.mxu0 0.0
      %498 = vmatpush1.msra.mxu0 0.0
      %499 = vmatprep.subr.mxu0 0.0
      %500 = vmatpush1.msra.mxu0 0.0
      %501 = vmatprep.subr.mxu0 0.0
      %502 = vmatpush1.msra.mxu0 0.0
      %503 = vmatprep.subr.mxu0 0.0
      %504 = vmatpush1.msra.mxu0 0.0
      %505 = vmatprep.subr.mxu0 0.0
      %506 = vmatpush1.msra.mxu0 0.0
      %507 = vmatprep.mubr.f32.mxu0 0.0
      %508 = vmatmul.mubr.f32.gmra.mrb[0].mxu0 %v438
      %v509 = vpop.f32.mrb[0].mxu0
      %v510 = vadd.f32 0.0, %v509
      %v511 = vpop.f32.mrb[0].mxu0
      %v512 = vadd.f32 0.0, %v511
      %513 = vmatprep.mubr.f32.mxu0 0.0
      %514 = vmatmul.mubr.f32.gmra.mrb[0].mxu0 %v441
      %v515 = vpop.f32.mrb[0].mxu0
      %v516 = vadd.f32 0.0, %v515
      %v517 = vpop.f32.mrb[0].mxu0
      %v518 = vadd.f32 0.0, %v517
      %519 = vdwg.mxu0
      %520 = vmatprep.subr.mxu0 %v275
      %521 = vmatpush1.msra.mxu0 %v274
      %522 = vmatprep.subr.mxu0 %v329
      %523 = vmatpush1.msra.mxu0 %v328
      %524 = vmatprep.subr.mxu0 %v383
      %525 = vmatpush1.msra.mxu0 %v382
      %526 = vmatprep.subr.mxu0 0.0
      %527 = vmatpush1.msra.mxu0 0.0
      %528 = vmatprep.subr.mxu0 0.0
      %529 = vmatpush1.msra.mxu0 0.0
      %530 = vmatprep.subr.mxu0 0.0
      %531 = vmatpush1.msra.mxu0 0.0
      %532 = vmatprep.subr.mxu0 0.0
      %533 = vmatpush1.msra.mxu0 0.0
      %534 = vmatprep.subr.mxu0 0.0
      %535 = vmatpush1.msra.mxu0 0.0
      %536 = vmatprep.subr.mxu0 0.0
      %537 = vmatpush1.msra.mxu0 0.0
      %538 = vmatprep.subr.mxu0 0.0
      %539 = vmatpush1.msra.mxu0 0.0
      %540 = vmatprep.subr.mxu0 0.0
      %541 = vmatpush1.msra.mxu0 0.0
      %542 = vmatprep.subr.mxu0 0.0
      %543 = vmatpush1.msra.mxu0 0.0
      %544 = vmatprep.subr.mxu0 0.0
      %545 = vmatpush1.msra.mxu0 0.0
      %546 = vmatprep.subr.mxu0 0.0
      %547 = vmatpush1.msra.mxu0 0.0
      %548 = vmatprep.subr.mxu0 0.0
      %549 = vmatpush1.msra.mxu0 0.0
      %550 = vmatprep.subr.mxu0 0.0
      %551 = vmatpush1.msra.mxu0 0.0
      %552 = vmatprep.subr.mxu0 0.0
      %553 = vmatpush1.msra.mxu0 0.0
      %554 = vmatprep.subr.mxu0 0.0
      %555 = vmatpush1.msra.mxu0 0.0
      %556 = vmatprep.subr.mxu0 0.0
      %557 = vmatpush1.msra.mxu0 0.0
      %558 = vmatprep.subr.mxu0 0.0
      %559 = vmatpush1.msra.mxu0 0.0
      %560 = vmatprep.subr.mxu0 0.0
      %561 = vmatpush1.msra.mxu0 0.0
      %562 = vmatprep.subr.mxu0 0.0
      %563 = vmatpush1.msra.mxu0 0.0
      %564 = vmatprep.subr.mxu0 0.0
      %565 = vmatpush1.msra.mxu0 0.0
      %566 = vmatprep.subr.mxu0 0.0
      %567 = vmatpush1.msra.mxu0 0.0
      %568 = vmatprep.subr.mxu0 0.0
      %569 = vmatpush1.msra.mxu0 0.0
      %570 = vmatprep.subr.mxu0 0.0
      %571 = vmatpush1.msra.mxu0 0.0
      %572 = vmatprep.subr.mxu0 0.0
      %573 = vmatpush1.msra.mxu0 0.0
      %574 = vmatprep.subr.mxu0 0.0
      %575 = vmatpush1.msra.mxu0 0.0
      %576 = vmatprep.subr.mxu0 0.0
      %577 = vmatpush1.msra.mxu0 0.0
      %578 = vmatprep.subr.mxu0 0.0
      %579 = vmatpush1.msra.mxu0 0.0
      %580 = vmatprep.subr.mxu0 0.0
      %581 = vmatpush1.msra.mxu0 0.0
      %582 = vmatprep.subr.mxu0 0.0
      %583 = vmatpush1.msra.mxu0 0.0
      %584 = vmatprep.mubr.f32.mxu0 0.0
      %585 = vmatmul.mubr.f32.gmra.mrb[0].mxu0 %v438
      %v586 = vpop.f32.mrb[0].mxu0
      %v587 = vadd.f32 0.0, %v586
      %v588 = vpop.f32.mrb[0].mxu0
      %v589 = vadd.f32 0.0, %v588
      %590 = vmatprep.mubr.f32.mxu0 0.0
      %591 = vmatmul.mubr.f32.gmra.mrb[0].mxu0 %v441
      %v592 = vpop.f32.mrb[0].mxu0
      %v593 = vadd.f32 0.0, %v592
      %v594 = vpop.f32.mrb[0].mxu0
      %v595 = vadd.f32 0.0, %v594
      %596 = vdwg.mxu0
      %597 = vmatprep.subr.mxu0 %v277
      %598 = vmatpush1.msra.mxu0 %v276
      %599 = vmatprep.subr.mxu0 %v331
      %600 = vmatpush1.msra.mxu0 %v330
      %601 = vmatprep.subr.mxu0 %v385
      %602 = vmatpush1.msra.mxu0 %v384
      %603 = vmatprep.subr.mxu0 0.0
      %604 = vmatpush1.msra.mxu0 0.0
      %605 = vmatprep.subr.mxu0 0.0
      %606 = vmatpush1.msra.mxu0 0.0
      %607 = vmatprep.subr.mxu0 0.0
      %608 = vmatpush1.msra.mxu0 0.0
      %609 = vmatprep.subr.mxu0 0.0
      %610 = vmatpush1.msra.mxu0 0.0
      %611 = vmatprep.subr.mxu0 0.0
      %612 = vmatpush1.msra.mxu0 0.0
      %613 = vmatprep.subr.mxu0 0.0
      %614 = vmatpush1.msra.mxu0 0.0
      %615 = vmatprep.subr.mxu0 0.0
      %616 = vmatpush1.msra.mxu0 0.0
      %617 = vmatprep.subr.mxu0 0.0
      %618 = vmatpush1.msra.mxu0 0.0
      %619 = vmatprep.subr.mxu0 0.0
      %620 = vmatpush1.msra.mxu0 0.0
      %621 = vmatprep.subr.mxu0 0.0
      %622 = vmatpush1.msra.mxu0 0.0
      %623 = vmatprep.subr.mxu0 0.0
      %624 = vmatpush1.msra.mxu0 0.0
      %625 = vmatprep.subr.mxu0 0.0
      %626 = vmatpush1.msra.mxu0 0.0
      %627 = vmatprep.subr.mxu0 0.0
      %628 = vmatpush1.msra.mxu0 0.0
      %629 = vmatprep.subr.mxu0 0.0
      %630 = vmatpush1.msra.mxu0 0.0
      %631 = vmatprep.subr.mxu0 0.0
      %632 = vmatpush1.msra.mxu0 0.0
      %633 = vmatprep.subr.mxu0 0.0
      %634 = vmatpush1.msra.mxu0 0.0
      %635 = vmatprep.subr.mxu0 0.0
      %636 = vmatpush1.msra.mxu0 0.0
      %637 = vmatprep.subr.mxu0 0.0
      %638 = vmatpush1.msra.mxu0 0.0
      %639 = vmatprep.subr.mxu0 0.0
      %640 = vmatpush1.msra.mxu0 0.0
      %641 = vmatprep.subr.mxu0 0.0
      %642 = vmatpush1.msra.mxu0 0.0
      %643 = vmatprep.subr.mxu0 0.0
      %644 = vmatpush1.msra.mxu0 0.0
      %645 = vmatprep.subr.mxu0 0.0
      %646 = vmatpush1.msra.mxu0 0.0
      %647 = vmatprep.subr.mxu0 0.0
      %648 = vmatpush1.msra.mxu0 0.0
      %649 = vmatprep.subr.mxu0 0.0
      %650 = vmatpush1.msra.mxu0 0.0
      %651 = vmatprep.subr.mxu0 0.0
      %652 = vmatpush1.msra.mxu0 0.0
      %653 = vmatprep.subr.mxu0 0.0
      %654 = vmatpush1.msra.mxu0 0.0
      %655 = vmatprep.subr.mxu0 0.0
      %656 = vmatpush1.msra.mxu0 0.0
      %657 = vmatprep.subr.mxu0 0.0
      %658 = vmatpush1.msra.mxu0 0.0
      %659 = vmatprep.subr.mxu0 0.0
      %660 = vmatpush1.msra.mxu0 0.0
      %661 = vmatprep.mubr.f32.mxu0 0.0
      %662 = vmatmul.mubr.f32.gmra.mrb[0].mxu0 %v438
      %v663 = vpop.f32.mrb[0].mxu0
      %v664 = vadd.f32 0.0, %v663
      %v665 = vpop.f32.mrb[0].mxu0
      %v666 = vadd.f32 0.0, %v665
      %667 = vmatprep.mubr.f32.mxu0 0.0
      %668 = vmatmul.mubr.f32.gmra.mrb[0].mxu0 %v441
      %v669 = vpop.f32.mrb[0].mxu0
      %v670 = vadd.f32 0.0, %v669
      %v671 = vpop.f32.mrb[0].mxu0
      %v672 = vadd.f32 0.0, %v671
      %673 = vdwg.mxu0
      %674 = vmatprep.subr.mxu0 %v279
      %675 = vmatpush1.msra.mxu0 %v278
      %676 = vmatprep.subr.mxu0 %v333
      %677 = vmatpush1.msra.mxu0 %v332
      %678 = vmatprep.subr.mxu0 %v387
      %679 = vmatpush1.msra.mxu0 %v386
      %680 = vmatprep.subr.mxu0 0.0
      %681 = vmatpush1.msra.mxu0 0.0
      %682 = vmatprep.subr.mxu0 0.0
      %683 = vmatpush1.msra.mxu0 0.0
      %684 = vmatprep.subr.mxu0 0.0
      %685 = vmatpush1.msra.mxu0 0.0
      %686 = vmatprep.subr.mxu0 0.0
      %687 = vmatpush1.msra.mxu0 0.0
      %688 = vmatprep.subr.mxu0 0.0
      %689 = vmatpush1.msra.mxu0 0.0
      %690 = vmatprep.subr.mxu0 0.0
      %691 = vmatpush1.msra.mxu0 0.0
      %692 = vmatprep.subr.mxu0 0.0
      %693 = vmatpush1.msra.mxu0 0.0
      %694 = vmatprep.subr.mxu0 0.0
      %695 = vmatpush1.msra.mxu0 0.0
      %696 = vmatprep.subr.mxu0 0.0
      %697 = vmatpush1.msra.mxu0 0.0
      %698 = vmatprep.subr.mxu0 0.0
      %699 = vmatpush1.msra.mxu0 0.0
      %700 = vmatprep.subr.mxu0 0.0
      %701 = vmatpush1.msra.mxu0 0.0
      %702 = vmatprep.subr.mxu0 0.0
      %703 = vmatpush1.msra.mxu0 0.0
      %704 = vmatprep.subr.mxu0 0.0
      %705 = vmatpush1.msra.mxu0 0.0
      %706 = vmatprep.subr.mxu0 0.0
      %707 = vmatpush1.msra.mxu0 0.0
      %708 = vmatprep.subr.mxu0 0.0
      %709 = vmatpush1.msra.mxu0 0.0
      %710 = vmatprep.subr.mxu0 0.0
      %711 = vmatpush1.msra.mxu0 0.0
      %712 = vmatprep.subr.mxu0 0.0
      %713 = vmatpush1.msra.mxu0 0.0
      %714 = vmatprep.subr.mxu0 0.0
      %715 = vmatpush1.msra.mxu0 0.0
      %716 = vmatprep.subr.mxu0 0.0
      %717 = vmatpush1.msra.mxu0 0.0
      %718 = vmatprep.subr.mxu0 0.0
      %719 = vmatpush1.msra.mxu0 0.0
      %720 = vmatprep.subr.mxu0 0.0
      %721 = vmatpush1.msra.mxu0 0.0
      %722 = vmatprep.subr.mxu0 0.0
      %723 = vmatpush1.msra.mxu0 0.0
      %724 = vmatprep.subr.mxu0 0.0
      %725 = vmatpush1.msra.mxu0 0.0
      %726 = vmatprep.subr.mxu0 0.0
      %727 = vmatpush1.msra.mxu0 0.0
      %728 = vmatprep.subr.mxu0 0.0
      %729 = vmatpush1.msra.mxu0 0.0
      %730 = vmatprep.subr.mxu0 0.0
      %731 = vmatpush1.msra.mxu0 0.0
      %732 = vmatprep.subr.mxu0 0.0
      %733 = vmatpush1.msra.mxu0 0.0
      %734 = vmatprep.subr.mxu0 0.0
      %735 = vmatpush1.msra.mxu0 0.0
      %736 = vmatprep.subr.mxu0 0.0
      %737 = vmatpush1.msra.mxu0 0.0
      %738 = vmatprep.mubr.f32.mxu0 0.0
      %739 = vmatmul.mubr.f32.gmra.mrb[0].mxu0 %v438
      %v740 = vpop.f32.mrb[0].mxu0
      %v741 = vadd.f32 0.0, %v740
      %v742 = vpop.f32.mrb[0].mxu0
      %v743 = vadd.f32 0.0, %v742
      %744 = vmatprep.mubr.f32.mxu0 0.0
      %745 = vmatmul.mubr.f32.gmra.mrb[0].mxu0 %v441
      %v746 = vpop.f32.mrb[0].mxu0
      %v747 = vadd.f32 0.0, %v746
      %v748 = vpop.f32.mrb[0].mxu0
      %v749 = vadd.f32 0.0, %v748
      %750 = vdwg.mxu0
      %751 = vmatprep.subr.mxu0 %v281
      %752 = vmatpush1.msra.mxu0 %v280
      %753 = vmatprep.subr.mxu0 %v335
      %754 = vmatpush1.msra.mxu0 %v334
      %755 = vmatprep.subr.mxu0 %v389
      %756 = vmatpush1.msra.mxu0 %v388
      %757 = vmatprep.subr.mxu0 0.0
      %758 = vmatpush1.msra.mxu0 0.0
      %759 = vmatprep.subr.mxu0 0.0
      %760 = vmatpush1.msra.mxu0 0.0
      %761 = vmatprep.subr.mxu0 0.0
      %762 = vmatpush1.msra.mxu0 0.0
      %763 = vmatprep.subr.mxu0 0.0
      %764 = vmatpush1.msra.mxu0 0.0
      %765 = vmatprep.subr.mxu0 0.0
      %766 = vmatpush1.msra.mxu0 0.0
      %767 = vmatprep.subr.mxu0 0.0
      %768 = vmatpush1.msra.mxu0 0.0
      %769 = vmatprep.subr.mxu0 0.0
      %770 = vmatpush1.msra.mxu0 0.0
      %771 = vmatprep.subr.mxu0 0.0
      %772 = vmatpush1.msra.mxu0 0.0
      %773 = vmatprep.subr.mxu0 0.0
      %774 = vmatpush1.msra.mxu0 0.0
      %775 = vmatprep.subr.mxu0 0.0
      %776 = vmatpush1.msra.mxu0 0.0
      %777 = vmatprep.subr.mxu0 0.0
      %778 = vmatpush1.msra.mxu0 0.0
      %779 = vmatprep.subr.mxu0 0.0
      %780 = vmatpush1.msra.mxu0 0.0
      %781 = vmatprep.subr.mxu0 0.0
      %782 = vmatpush1.msra.mxu0 0.0
      %783 = vmatprep.subr.mxu0 0.0
      %784 = vmatpush1.msra.mxu0 0.0
      %785 = vmatprep.subr.mxu0 0.0
      %786 = vmatpush1.msra.mxu0 0.0
      %787 = vmatprep.subr.mxu0 0.0
      %788 = vmatpush1.msra.mxu0 0.0
      %789 = vmatprep.subr.mxu0 0.0
      %790 = vmatpush1.msra.mxu0 0.0
      %791 = vmatprep.subr.mxu0 0.0
      %792 = vmatpush1.msra.mxu0 0.0
      %793 = vmatprep.subr.mxu0 0.0
      %794 = vmatpush1.msra.mxu0 0.0
      %795 = vmatprep.subr.mxu0 0.0
      %796 = vmatpush1.msra.mxu0 0.0
      %797 = vmatprep.subr.mxu0 0.0
      %798 = vmatpush1.msra.mxu0 0.0
      %799 = vmatprep.subr.mxu0 0.0
      %800 = vmatpush1.msra.mxu0 0.0
      %801 = vmatprep.subr.mxu0 0.0
      %802 = vmatpush1.msra.mxu0 0.0
      %803 = vmatprep.subr.mxu0 0.0
      %804 = vmatpush1.msra.mxu0 0.0
      %805 = vmatprep.subr.mxu0 0.0
      %806 = vmatpush1.msra.mxu0 0.0
      %807 = vmatprep.subr.mxu0 0.0
      %808 = vmatpush1.msra.mxu0 0.0
      %809 = vmatprep.subr.mxu0 0.0
      %810 = vmatpush1.msra.mxu0 0.0
      %811 = vmatprep.subr.mxu0 0.0
      %812 = vmatpush1.msra.mxu0 0.0
      %813 = vmatprep.subr.mxu0 0.0
      %814 = vmatpush1.msra.mxu0 0.0
      %815 = vmatprep.mubr.f32.mxu0 0.0
      %816 = vmatmul.mubr.f32.gmra.mrb[0].mxu0 %v438
      %v817 = vpop.f32.mrb[0].mxu0
      %v818 = vadd.f32 0.0, %v817
      %v819 = vpop.f32.mrb[0].mxu0
      %v820 = vadd.f32 0.0, %v819
      %821 = vmatprep.mubr.f32.mxu0 0.0
      %822 = vmatmul.mubr.f32.gmra.mrb[0].mxu0 %v441
      %v823 = vpop.f32.mrb[0].mxu0
      %v824 = vadd.f32 0.0, %v823
      %v825 = vpop.f32.mrb[0].mxu0
      %v826 = vadd.f32 0.0, %v825
      %827 = vdwg.mxu0
      %828 = vmatprep.subr.mxu0 %v283
      %829 = vmatpush1.msra.mxu0 %v282
      %830 = vmatprep.subr.mxu0 %v337
      %831 = vmatpush1.msra.mxu0 %v336
      %832 = vmatprep.subr.mxu0 %v391
      %833 = vmatpush1.msra.mxu0 %v390
      %834 = vmatprep.subr.mxu0 0.0
      %835 = vmatpush1.msra.mxu0 0.0
      %836 = vmatprep.subr.mxu0 0.0
      %837 = vmatpush1.msra.mxu0 0.0
      %838 = vmatprep.subr.mxu0 0.0
      %839 = vmatpush1.msra.mxu0 0.0
      %840 = vmatprep.subr.mxu0 0.0
      %841 = vmatpush1.msra.mxu0 0.0
      %842 = vmatprep.subr.mxu0 0.0
      %843 = vmatpush1.msra.mxu0 0.0
      %844 = vmatprep.subr.mxu0 0.0
      %845 = vmatpush1.msra.mxu0 0.0
      %846 = vmatprep.subr.mxu0 0.0
      %847 = vmatpush1.msra.mxu0 0.0
      %848 = vmatprep.subr.mxu0 0.0
      %849 = vmatpush1.msra.mxu0 0.0
      %850 = vmatprep.subr.mxu0 0.0
      %851 = vmatpush1.msra.mxu0 0.0
      %852 = vmatprep.subr.mxu0 0.0
      %853 = vmatpush1.msra.mxu0 0.0
      %854 = vmatprep.subr.mxu0 0.0
      %855 = vmatpush1.msra.mxu0 0.0
      %856 = vmatprep.subr.mxu0 0.0
      %857 = vmatpush1.msra.mxu0 0.0
      %858 = vmatprep.subr.mxu0 0.0
      %859 = vmatpush1.msra.mxu0 0.0
      %860 = vmatprep.subr.mxu0 0.0
      %861 = vmatpush1.msra.mxu0 0.0
      %862 = vmatprep.subr.mxu0 0.0
      %863 = vmatpush1.msra.mxu0 0.0
      %864 = vmatprep.subr.mxu0 0.0
      %865 = vmatpush1.msra.mxu0 0.0
      %866 = vmatprep.subr.mxu0 0.0
      %867 = vmatpush1.msra.mxu0 0.0
      %868 = vmatprep.subr.mxu0 0.0
      %869 = vmatpush1.msra.mxu0 0.0
      %870 = vmatprep.subr.mxu0 0.0
      %871 = vmatpush1.msra.mxu0 0.0
      %872 = vmatprep.subr.mxu0 0.0
      %873 = vmatpush1.msra.mxu0 0.0
      %874 = vmatprep.subr.mxu0 0.0
      %875 = vmatpush1.msra.mxu0 0.0
      %876 = vmatprep.subr.mxu0 0.0
      %877 = vmatpush1.msra.mxu0 0.0
      %878 = vmatprep.subr.mxu0 0.0
      %879 = vmatpush1.msra.mxu0 0.0
      %880 = vmatprep.subr.mxu0 0.0
      %881 = vmatpush1.msra.mxu0 0.0
      %882 = vmatprep.subr.mxu0 0.0
      %883 = vmatpush1.msra.mxu0 0.0
      %884 = vmatprep.subr.mxu0 0.0
      %885 = vmatpush1.msra.mxu0 0.0
      %886 = vmatprep.subr.mxu0 0.0
      %887 = vmatpush1.msra.mxu0 0.0
      %888 = vmatprep.subr.mxu0 0.0
      %889 = vmatpush1.msra.mxu0 0.0
      %890 = vmatprep.subr.mxu0 0.0
      %891 = vmatpush1.msra.mxu0 0.0
      %892 = vmatprep.mubr.f32.mxu0 0.0
      %893 = vmatmul.mubr.f32.gmra.mrb[0].mxu0 %v438
      %v894 = vpop.f32.mrb[0].mxu0
      %v895 = vadd.f32 0.0, %v894
      %v896 = vpop.f32.mrb[0].mxu0
      %v897 = vadd.f32 0.0, %v896
      %898 = vmatprep.mubr.f32.mxu0 0.0
      %899 = vmatmul.mubr.f32.gmra.mrb[0].mxu0 %v441
      %v900 = vpop.f32.mrb[0].mxu0
      %v901 = vadd.f32 0.0, %v900
      %v902 = vpop.f32.mrb[0].mxu0
      %v903 = vadd.f32 0.0, %v902
      %904 = vdwg.mxu0
      %905 = vmatprep.subr.mxu0 %v285
      %906 = vmatpush1.msra.mxu0 %v284
      %907 = vmatprep.subr.mxu0 %v339
      %908 = vmatpush1.msra.mxu0 %v338
      %909 = vmatprep.subr.mxu0 %v393
      %910 = vmatpush1.msra.mxu0 %v392
      %911 = vmatprep.subr.mxu0 0.0
      %912 = vmatpush1.msra.mxu0 0.0
      %913 = vmatprep.subr.mxu0 0.0
      %914 = vmatpush1.msra.mxu0 0.0
      %915 = vmatprep.subr.mxu0 0.0
      %916 = vmatpush1.msra.mxu0 0.0
      %917 = vmatprep.subr.mxu0 0.0
      %918 = vmatpush1.msra.mxu0 0.0
      %919 = vmatprep.subr.mxu0 0.0
      %920 = vmatpush1.msra.mxu0 0.0
      %921 = vmatprep.subr.mxu0 0.0
      %922 = vmatpush1.msra.mxu0 0.0
      %923 = vmatprep.subr.mxu0 0.0
      %924 = vmatpush1.msra.mxu0 0.0
      %925 = vmatprep.subr.mxu0 0.0
      %926 = vmatpush1.msra.mxu0 0.0
      %927 = vmatprep.subr.mxu0 0.0
      %928 = vmatpush1.msra.mxu0 0.0
      %929 = vmatprep.subr.mxu0 0.0
      %930 = vmatpush1.msra.mxu0 0.0
      %931 = vmatprep.subr.mxu0 0.0
      %932 = vmatpush1.msra.mxu0 0.0
      %933 = vmatprep.subr.mxu0 0.0
      %934 = vmatpush1.msra.mxu0 0.0
      %935 = vmatprep.subr.mxu0 0.0
      %936 = vmatpush1.msra.mxu0 0.0
      %937 = vmatprep.subr.mxu0 0.0
      %938 = vmatpush1.msra.mxu0 0.0
      %939 = vmatprep.subr.mxu0 0.0
      %940 = vmatpush1.msra.mxu0 0.0
      %941 = vmatprep.subr.mxu0 0.0
      %942 = vmatpush1.msra.mxu0 0.0
      %943 = vmatprep.subr.mxu0 0.0
      %944 = vmatpush1.msra.mxu0 0.0
      %945 = vmatprep.subr.mxu0 0.0
      %946 = vmatpush1.msra.mxu0 0.0
      %947 = vmatprep.subr.mxu0 0.0
      %948 = vmatpush1.msra.mxu0 0.0
      %949 = vmatprep.subr.mxu0 0.0
      %950 = vmatpush1.msra.mxu0 0.0
      %951 = vmatprep.subr.mxu0 0.0
      %952 = vmatpush1.msra.mxu0 0.0
      %953 = vmatprep.subr.mxu0 0.0
      %954 = vmatpush1.msra.mxu0 0.0
      %955 = vmatprep.subr.mxu0 0.0
      %956 = vmatpush1.msra.mxu0 0.0
      %957 = vmatprep.subr.mxu0 0.0
      %958 = vmatpush1.msra.mxu0 0.0
      %959 = vmatprep.subr.mxu0 0.0
      %960 = vmatpush1.msra.mxu0 0.0
      %961 = vmatprep.subr.mxu0 0.0
      %962 = vmatpush1.msra.mxu0 0.0
      %963 = vmatprep.subr.mxu0 0.0
      %964 = vmatpush1.msra.mxu0 0.0
      %965 = vmatprep.subr.mxu0 0.0
      %966 = vmatpush1.msra.mxu0 0.0
      %967 = vmatprep.subr.mxu0 0.0
      %968 = vmatpush1.msra.mxu0 0.0
      %969 = vmatprep.mubr.f32.mxu0 0.0
      %970 = vmatmul.mubr.f32.gmra.mrb[0].mxu0 %v438
      %v971 = vpop.f32.mrb[0].mxu0
      %v972 = vadd.f32 0.0, %v971
      %v973 = vpop.f32.mrb[0].mxu0
      %v974 = vadd.f32 0.0, %v973
      %975 = vmatprep.mubr.f32.mxu0 0.0
      %976 = vmatmul.mubr.f32.gmra.mrb[0].mxu0 %v441
      %v977 = vpop.f32.mrb[0].mxu0
      %v978 = vadd.f32 0.0, %v977
      %v979 = vpop.f32.mrb[0].mxu0
      %v980 = vadd.f32 0.0, %v979
      %981 = vdwg.mxu0
      %982 = vmatprep.subr.mxu0 %v287
      %983 = vmatpush1.msra.mxu0 %v286
      %984 = vmatprep.subr.mxu0 %v341
      %985 = vmatpush1.msra.mxu0 %v340
      %986 = vmatprep.subr.mxu0 %v395
      %987 = vmatpush1.msra.mxu0 %v394
      %988 = vmatprep.subr.mxu0 0.0
      %989 = vmatpush1.msra.mxu0 0.0
      %990 = vmatprep.subr.mxu0 0.0
      %991 = vmatpush1.msra.mxu0 0.0
      %992 = vmatprep.subr.mxu0 0.0
      %993 = vmatpush1.msra.mxu0 0.0
      %994 = vmatprep.subr.mxu0 0.0
      %995 = vmatpush1.msra.mxu0 0.0
      %996 = vmatprep.subr.mxu0 0.0
      %997 = vmatpush1.msra.mxu0 0.0
      %998 = vmatprep.subr.mxu0 0.0
      %999 = vmatpush1.msra.mxu0 0.0
      %1000 = vmatprep.subr.mxu0 0.0
      %1001 = vmatpush1.msra.mxu0 0.0
      %1002 = vmatprep.subr.mxu0 0.0
      %1003 = vmatpush1.msra.mxu0 0.0
      %1004 = vmatprep.subr.mxu0 0.0
      %1005 = vmatpush1.msra.mxu0 0.0
      %1006 = vmatprep.subr.mxu0 0.0
      %1007 = vmatpush1.msra.mxu0 0.0
      %1008 = vmatprep.subr.mxu0 0.0
      %1009 = vmatpush1.msra.mxu0 0.0
      %1010 = vmatprep.subr.mxu0 0.0
      %1011 = vmatpush1.msra.mxu0 0.0
      %1012 = vmatprep.subr.mxu0 0.0
      %1013 = vmatpush1.msra.mxu0 0.0
      %1014 = vmatprep.subr.mxu0 0.0
      %1015 = vmatpush1.msra.mxu0 0.0
      %1016 = vmatprep.subr.mxu0 0.0
      %1017 = vmatpush1.msra.mxu0 0.0
      %1018 = vmatprep.subr.mxu0 0.0
      %1019 = vmatpush1.msra.mxu0 0.0
      %1020 = vmatprep.subr.mxu0 0.0
      %1021 = vmatpush1.msra.mxu0 0.0
      %1022 = vmatprep.subr.mxu0 0.0
      %1023 = vmatpush1.msra.mxu0 0.0
      %1024 = vmatprep.subr.mxu0 0.0
      %1025 = vmatpush1.msra.mxu0 0.0
      %1026 = vmatprep.subr.mxu0 0.0
      %1027 = vmatpush1.msra.mxu0 0.0
      %1028 = vmatprep.subr.mxu0 0.0
      %1029 = vmatpush1.msra.mxu0 0.0
      %1030 = vmatprep.subr.mxu0 0.0
      %1031 = vmatpush1.msra.mxu0 0.0
      %1032 = vmatprep.subr.mxu0 0.0
      %1033 = vmatpush1.msra.mxu0 0.0
      %1034 = vmatprep.subr.mxu0 0.0
      %1035 = vmatpush1.msra.mxu0 0.0
      %1036 = vmatprep.subr.mxu0 0.0
      %1037 = vmatpush1.msra.mxu0 0.0
      %1038 = vmatprep.subr.mxu0 0.0
      %1039 = vmatpush1.msra.mxu0 0.0
      %1040 = vmatprep.subr.mxu0 0.0
      %1041 = vmatpush1.msra.mxu0 0.0
      %1042 = vmatprep.subr.mxu0 0.0
      %1043 = vmatpush1.msra.mxu0 0.0
      %1044 = vmatprep.subr.mxu0 0.0
      %1045 = vmatpush1.msra.mxu0 0.0
      %1046 = vmatprep.mubr.f32.mxu0 0.0
      %1047 = vmatmul.mubr.f32.gmra.mrb[0].mxu0 %v438
      %v1048 = vpop.f32.mrb[0].mxu0
      %v1049 = vadd.f32 0.0, %v1048
      %v1050 = vpop.f32.mrb[0].mxu0
      %v1051 = vadd.f32 0.0, %v1050
      %1052 = vmatprep.mubr.f32.mxu0 0.0
      %1053 = vmatmul.mubr.f32.gmra.mrb[0].mxu0 %v441
      %v1054 = vpop.f32.mrb[0].mxu0
      %v1055 = vadd.f32 0.0, %v1054
      %v1056 = vpop.f32.mrb[0].mxu0
      %v1057 = vadd.f32 0.0, %v1056
      %1058 = vdwg.mxu0
      %1059 = vmatprep.subr.mxu0 %v289
      %1060 = vmatpush1.msra.mxu0 %v288
      %1061 = vmatprep.subr.mxu0 %v343
      %1062 = vmatpush1.msra.mxu0 %v342
      %1063 = vmatprep.subr.mxu0 %v397
      %1064 = vmatpush1.msra.mxu0 %v396
      %1065 = vmatprep.subr.mxu0 0.0
      %1066 = vmatpush1.msra.mxu0 0.0
      %1067 = vmatprep.subr.mxu0 0.0
      %1068 = vmatpush1.msra.mxu0 0.0
      %1069 = vmatprep.subr.mxu0 0.0
      %1070 = vmatpush1.msra.mxu0 0.0
      %1071 = vmatprep.subr.mxu0 0.0
      %1072 = vmatpush1.msra.mxu0 0.0
      %1073 = vmatprep.subr.mxu0 0.0
      %1074 = vmatpush1.msra.mxu0 0.0
      %1075 = vmatprep.subr.mxu0 0.0
      %1076 = vmatpush1.msra.mxu0 0.0
      %1077 = vmatprep.subr.mxu0 0.0
      %1078 = vmatpush1.msra.mxu0 0.0
      %1079 = vmatprep.subr.mxu0 0.0
      %1080 = vmatpush1.msra.mxu0 0.0
      %1081 = vmatprep.subr.mxu0 0.0
      %1082 = vmatpush1.msra.mxu0 0.0
      %1083 = vmatprep.subr.mxu0 0.0
      %1084 = vmatpush1.msra.mxu0 0.0
      %1085 = vmatprep.subr.mxu0 0.0
      %1086 = vmatpush1.msra.mxu0 0.0
      %1087 = vmatprep.subr.mxu0 0.0
      %1088 = vmatpush1.msra.mxu0 0.0
      %1089 = vmatprep.subr.mxu0 0.0
      %1090 = vmatpush1.msra.mxu0 0.0
      %1091 = vmatprep.subr.mxu0 0.0
      %1092 = vmatpush1.msra.mxu0 0.0
      %1093 = vmatprep.subr.mxu0 0.0
      %1094 = vmatpush1.msra.mxu0 0.0
      %1095 = vmatprep.subr.mxu0 0.0
      %1096 = vmatpush1.msra.mxu0 0.0
      %1097 = vmatprep.subr.mxu0 0.0
      %1098 = vmatpush1.msra.mxu0 0.0
      %1099 = vmatprep.subr.mxu0 0.0
      %1100 = vmatpush1.msra.mxu0 0.0
      %1101 = vmatprep.subr.mxu0 0.0
      %1102 = vmatpush1.msra.mxu0 0.0
      %1103 = vmatprep.subr.mxu0 0.0
      %1104 = vmatpush1.msra.mxu0 0.0
      %1105 = vmatprep.subr.mxu0 0.0
      %1106 = vmatpush1.msra.mxu0 0.0
      %1107 = vmatprep.subr.mxu0 0.0
      %1108 = vmatpush1.msra.mxu0 0.0
      %1109 = vmatprep.subr.mxu0 0.0
      %1110 = vmatpush1.msra.mxu0 0.0
      %1111 = vmatprep.subr.mxu0 0.0
      %1112 = vmatpush1.msra.mxu0 0.0
      %1113 = vmatprep.subr.mxu0 0.0
      %1114 = vmatpush1.msra.mxu0 0.0
      %1115 = vmatprep.subr.mxu0 0.0
      %1116 = vmatpush1.msra.mxu0 0.0
      %1117 = vmatprep.subr.mxu0 0.0
      %1118 = vmatpush1.msra.mxu0 0.0
      %1119 = vmatprep.subr.mxu0 0.0
      %1120 = vmatpush1.msra.mxu0 0.0
      %1121 = vmatprep.subr.mxu0 0.0
      %1122 = vmatpush1.msra.mxu0 0.0
      %1123 = vmatprep.mubr.f32.mxu0 0.0
      %1124 = vmatmul.mubr.f32.gmra.mrb[0].mxu0 %v438
      %v1125 = vpop.f32.mrb[0].mxu0
      %v1126 = vadd.f32 0.0, %v1125
      %v1127 = vpop.f32.mrb[0].mxu0
      %v1128 = vadd.f32 0.0, %v1127
      %1129 = vmatprep.mubr.f32.mxu0 0.0
      %1130 = vmatmul.mubr.f32.gmra.mrb[0].mxu0 %v441
      %v1131 = vpop.f32.mrb[0].mxu0
      %v1132 = vadd.f32 0.0, %v1131
      %v1133 = vpop.f32.mrb[0].mxu0
      %v1134 = vadd.f32 0.0, %v1133
      %1135 = vdwg.mxu0
      %1136 = vmatprep.subr.mxu0 %v291
      %1137 = vmatpush1.msra.mxu0 %v290
      %1138 = vmatprep.subr.mxu0 %v345
      %1139 = vmatpush1.msra.mxu0 %v344
      %1140 = vmatprep.subr.mxu0 %v399
      %1141 = vmatpush1.msra.mxu0 %v398
      %1142 = vmatprep.subr.mxu0 0.0
      %1143 = vmatpush1.msra.mxu0 0.0
      %1144 = vmatprep.subr.mxu0 0.0
      %1145 = vmatpush1.msra.mxu0 0.0
      %1146 = vmatprep.subr.mxu0 0.0
      %1147 = vmatpush1.msra.mxu0 0.0
      %1148 = vmatprep.subr.mxu0 0.0
      %1149 = vmatpush1.msra.mxu0 0.0
      %1150 = vmatprep.subr.mxu0 0.0
      %1151 = vmatpush1.msra.mxu0 0.0
      %1152 = vmatprep.subr.mxu0 0.0
      %1153 = vmatpush1.msra.mxu0 0.0
      %1154 = vmatprep.subr.mxu0 0.0
      %1155 = vmatpush1.msra.mxu0 0.0
      %1156 = vmatprep.subr.mxu0 0.0
      %1157 = vmatpush1.msra.mxu0 0.0
      %1158 = vmatprep.subr.mxu0 0.0
      %1159 = vmatpush1.msra.mxu0 0.0
      %1160 = vmatprep.subr.mxu0 0.0
      %1161 = vmatpush1.msra.mxu0 0.0
      %1162 = vmatprep.subr.mxu0 0.0
      %1163 = vmatpush1.msra.mxu0 0.0
      %1164 = vmatprep.subr.mxu0 0.0
      %1165 = vmatpush1.msra.mxu0 0.0
      %1166 = vmatprep.subr.mxu0 0.0
      %1167 = vmatpush1.msra.mxu0 0.0
      %1168 = vmatprep.subr.mxu0 0.0
      %1169 = vmatpush1.msra.mxu0 0.0
      %1170 = vmatprep.subr.mxu0 0.0
      %1171 = vmatpush1.msra.mxu0 0.0
      %1172 = vmatprep.subr.mxu0 0.0
      %1173 = vmatpush1.msra.mxu0 0.0
      %1174 = vmatprep.subr.mxu0 0.0
      %1175 = vmatpush1.msra.mxu0 0.0
      %1176 = vmatprep.subr.mxu0 0.0
      %1177 = vmatpush1.msra.mxu0 0.0
      %1178 = vmatprep.subr.mxu0 0.0
      %1179 = vmatpush1.msra.mxu0 0.0
      %1180 = vmatprep.subr.mxu0 0.0
      %1181 = vmatpush1.msra.mxu0 0.0
      %1182 = vmatprep.subr.mxu0 0.0
      %1183 = vmatpush1.msra.mxu0 0.0
      %1184 = vmatprep.subr.mxu0 0.0
      %1185 = vmatpush1.msra.mxu0 0.0
      %1186 = vmatprep.subr.mxu0 0.0
      %1187 = vmatpush1.msra.mxu0 0.0
      %1188 = vmatprep.subr.mxu0 0.0
      %1189 = vmatpush1.msra.mxu0 0.0
      %1190 = vmatprep.subr.mxu0 0.0
      %1191 = vmatpush1.msra.mxu0 0.0
      %1192 = vmatprep.subr.mxu0 0.0
      %1193 = vmatpush1.msra.mxu0 0.0
      %1194 = vmatprep.subr.mxu0 0.0
      %1195 = vmatpush1.msra.mxu0 0.0
      %1196 = vmatprep.subr.mxu0 0.0
      %1197 = vmatpush1.msra.mxu0 0.0
      %1198 = vmatprep.subr.mxu0 0.0
      %1199 = vmatpush1.msra.mxu0 0.0
      %1200 = vmatprep.mubr.f32.mxu0 0.0
      %1201 = vmatmul.mubr.f32.gmra.mrb[0].mxu0 %v438
      %v1202 = vpop.f32.mrb[0].mxu0
      %v1203 = vadd.f32 0.0, %v1202
      %v1204 = vpop.f32.mrb[0].mxu0
      %v1205 = vadd.f32 0.0, %v1204
      %1206 = vmatprep.mubr.f32.mxu0 0.0
      %1207 = vmatmul.mubr.f32.gmra.mrb[0].mxu0 %v441
      %v1208 = vpop.f32.mrb[0].mxu0
      %v1209 = vadd.f32 0.0, %v1208
      %v1210 = vpop.f32.mrb[0].mxu0
      %v1211 = vadd.f32 0.0, %v1210
      %1212 = vdwg.mxu0
      %1213 = vmatprep.subr.mxu0 %v293
      %1214 = vmatpush1.msra.mxu0 %v292
      %1215 = vmatprep.subr.mxu0 %v347
      %1216 = vmatpush1.msra.mxu0 %v346
      %1217 = vmatprep.subr.mxu0 %v401
      %1218 = vmatpush1.msra.mxu0 %v400
      %1219 = vmatprep.subr.mxu0 0.0
      %1220 = vmatpush1.msra.mxu0 0.0
      %1221 = vmatprep.subr.mxu0 0.0
      %1222 = vmatpush1.msra.mxu0 0.0
      %1223 = vmatprep.subr.mxu0 0.0
      %1224 = vmatpush1.msra.mxu0 0.0
      %1225 = vmatprep.subr.mxu0 0.0
      %1226 = vmatpush1.msra.mxu0 0.0
      %1227 = vmatprep.subr.mxu0 0.0
      %1228 = vmatpush1.msra.mxu0 0.0
      %1229 = vmatprep.subr.mxu0 0.0
      %1230 = vmatpush1.msra.mxu0 0.0
      %1231 = vmatprep.subr.mxu0 0.0
      %1232 = vmatpush1.msra.mxu0 0.0
      %1233 = vmatprep.subr.mxu0 0.0
      %1234 = vmatpush1.msra.mxu0 0.0
      %1235 = vmatprep.subr.mxu0 0.0
      %1236 = vmatpush1.msra.mxu0 0.0
      %1237 = vmatprep.subr.mxu0 0.0
      %1238 = vmatpush1.msra.mxu0 0.0
      %1239 = vmatprep.subr.mxu0 0.0
      %1240 = vmatpush1.msra.mxu0 0.0
      %1241 = vmatprep.subr.mxu0 0.0
      %1242 = vmatpush1.msra.mxu0 0.0
      %1243 = vmatprep.subr.mxu0 0.0
      %1244 = vmatpush1.msra.mxu0 0.0
      %1245 = vmatprep.subr.mxu0 0.0
      %1246 = vmatpush1.msra.mxu0 0.0
      %1247 = vmatprep.subr.mxu0 0.0
      %1248 = vmatpush1.msra.mxu0 0.0
      %1249 = vmatprep.subr.mxu0 0.0
      %1250 = vmatpush1.msra.mxu0 0.0
      %1251 = vmatprep.subr.mxu0 0.0
      %1252 = vmatpush1.msra.mxu0 0.0
      %1253 = vmatprep.subr.mxu0 0.0
      %1254 = vmatpush1.msra.mxu0 0.0
      %1255 = vmatprep.subr.mxu0 0.0
      %1256 = vmatpush1.msra.mxu0 0.0
      %1257 = vmatprep.subr.mxu0 0.0
      %1258 = vmatpush1.msra.mxu0 0.0
      %1259 = vmatprep.subr.mxu0 0.0
      %1260 = vmatpush1.msra.mxu0 0.0
      %1261 = vmatprep.subr.mxu0 0.0
      %1262 = vmatpush1.msra.mxu0 0.0
      %1263 = vmatprep.subr.mxu0 0.0
      %1264 = vmatpush1.msra.mxu0 0.0
      %1265 = vmatprep.subr.mxu0 0.0
      %1266 = vmatpush1.msra.mxu0 0.0
      %1267 = vmatprep.subr.mxu0 0.0
      %1268 = vmatpush1.msra.mxu0 0.0
      %1269 = vmatprep.subr.mxu0 0.0
      %1270 = vmatpush1.msra.mxu0 0.0
      %1271 = vmatprep.subr.mxu0 0.0
      %1272 = vmatpush1.msra.mxu0 0.0
      %1273 = vmatprep.subr.mxu0 0.0
      %1274 = vmatpush1.msra.mxu0 0.0
      %1275 = vmatprep.subr.mxu0 0.0
      %1276 = vmatpush1.msra.mxu0 0.0
      %1277 = vmatprep.mubr.f32.mxu0 0.0
      %1278 = vmatmul.mubr.f32.gmra.mrb[0].mxu0 %v438
      %v1279 = vpop.f32.mrb[0].mxu0
      %v1280 = vadd.f32 0.0, %v1279
      %v1281 = vpop.f32.mrb[0].mxu0
      %v1282 = vadd.f32 0.0, %v1281
      %1283 = vmatprep.mubr.f32.mxu0 0.0
      %1284 = vmatmul.mubr.f32.gmra.mrb[0].mxu0 %v441
      %v1285 = vpop.f32.mrb[0].mxu0
      %v1286 = vadd.f32 0.0, %v1285
      %v1287 = vpop.f32.mrb[0].mxu0
      %v1288 = vadd.f32 0.0, %v1287
      %1289 = vdwg.mxu0
      %1290 = vmatprep.subr.mxu0 %v295
      %1291 = vmatpush1.msra.mxu0 %v294
      %1292 = vmatprep.subr.mxu0 %v349
      %1293 = vmatpush1.msra.mxu0 %v348
      %1294 = vmatprep.subr.mxu0 %v403
      %1295 = vmatpush1.msra.mxu0 %v402
      %1296 = vmatprep.subr.mxu0 0.0
      %1297 = vmatpush1.msra.mxu0 0.0
      %1298 = vmatprep.subr.mxu0 0.0
      %1299 = vmatpush1.msra.mxu0 0.0
      %1300 = vmatprep.subr.mxu0 0.0
      %1301 = vmatpush1.msra.mxu0 0.0
      %1302 = vmatprep.subr.mxu0 0.0
      %1303 = vmatpush1.msra.mxu0 0.0
      %1304 = vmatprep.subr.mxu0 0.0
      %1305 = vmatpush1.msra.mxu0 0.0
      %1306 = vmatprep.subr.mxu0 0.0
      %1307 = vmatpush1.msra.mxu0 0.0
      %1308 = vmatprep.subr.mxu0 0.0
      %1309 = vmatpush1.msra.mxu0 0.0
      %1310 = vmatprep.subr.mxu0 0.0
      %1311 = vmatpush1.msra.mxu0 0.0
      %1312 = vmatprep.subr.mxu0 0.0
      %1313 = vmatpush1.msra.mxu0 0.0
      %1314 = vmatprep.subr.mxu0 0.0
      %1315 = vmatpush1.msra.mxu0 0.0
      %1316 = vmatprep.subr.mxu0 0.0
      %1317 = vmatpush1.msra.mxu0 0.0
      %1318 = vmatprep.subr.mxu0 0.0
      %1319 = vmatpush1.msra.mxu0 0.0
      %1320 = vmatprep.subr.mxu0 0.0
      %1321 = vmatpush1.msra.mxu0 0.0
      %1322 = vmatprep.subr.mxu0 0.0
      %1323 = vmatpush1.msra.mxu0 0.0
      %1324 = vmatprep.subr.mxu0 0.0
      %1325 = vmatpush1.msra.mxu0 0.0
      %1326 = vmatprep.subr.mxu0 0.0
      %1327 = vmatpush1.msra.mxu0 0.0
      %1328 = vmatprep.subr.mxu0 0.0
      %1329 = vmatpush1.msra.mxu0 0.0
      %1330 = vmatprep.subr.mxu0 0.0
      %1331 = vmatpush1.msra.mxu0 0.0
      %1332 = vmatprep.subr.mxu0 0.0
      %1333 = vmatpush1.msra.mxu0 0.0
      %1334 = vmatprep.subr.mxu0 0.0
      %1335 = vmatpush1.msra.mxu0 0.0
      %1336 = vmatprep.subr.mxu0 0.0
      %1337 = vmatpush1.msra.mxu0 0.0
      %1338 = vmatprep.subr.mxu0 0.0
      %1339 = vmatpush1.msra.mxu0 0.0
      %1340 = vmatprep.subr.mxu0 0.0
      %1341 = vmatpush1.msra.mxu0 0.0
      %1342 = vmatprep.subr.mxu0 0.0
      %1343 = vmatpush1.msra.mxu0 0.0
      %1344 = vmatprep.subr.mxu0 0.0
      %1345 = vmatpush1.msra.mxu0 0.0
      %1346 = vmatprep.subr.mxu0 0.0
      %1347 = vmatpush1.msra.mxu0 0.0
      %1348 = vmatprep.subr.mxu0 0.0
      %1349 = vmatpush1.msra.mxu0 0.0
      %1350 = vmatprep.subr.mxu0 0.0
      %1351 = vmatpush1.msra.mxu0 0.0
      %1352 = vmatprep.subr.mxu0 0.0
      %1353 = vmatpush1.msra.mxu0 0.0
      %1354 = vmatprep.mubr.f32.mxu0 0.0
      %1355 = vmatmul.mubr.f32.gmra.mrb[0].mxu0 %v438
      %v1356 = vpop.f32.mrb[0].mxu0
      %v1357 = vadd.f32 0.0, %v1356
      %v1358 = vpop.f32.mrb[0].mxu0
      %v1359 = vadd.f32 0.0, %v1358
      %1360 = vmatprep.mubr.f32.mxu0 0.0
      %1361 = vmatmul.mubr.f32.gmra.mrb[0].mxu0 %v441
      %v1362 = vpop.f32.mrb[0].mxu0
      %v1363 = vadd.f32 0.0, %v1362
      %v1364 = vpop.f32.mrb[0].mxu0
      %v1365 = vadd.f32 0.0, %v1364
      %1366 = vdwg.mxu0
      %1367 = vmatprep.subr.mxu0 %v297
      %1368 = vmatpush1.msra.mxu0 %v296
      %1369 = vmatprep.subr.mxu0 %v351
      %1370 = vmatpush1.msra.mxu0 %v350
      %1371 = vmatprep.subr.mxu0 %v405
      %1372 = vmatpush1.msra.mxu0 %v404
      %1373 = vmatprep.subr.mxu0 0.0
      %1374 = vmatpush1.msra.mxu0 0.0
      %1375 = vmatprep.subr.mxu0 0.0
      %1376 = vmatpush1.msra.mxu0 0.0
      %1377 = vmatprep.subr.mxu0 0.0
      %1378 = vmatpush1.msra.mxu0 0.0
      %1379 = vmatprep.subr.mxu0 0.0
      %1380 = vmatpush1.msra.mxu0 0.0
      %1381 = vmatprep.subr.mxu0 0.0
      %1382 = vmatpush1.msra.mxu0 0.0
      %1383 = vmatprep.subr.mxu0 0.0
      %1384 = vmatpush1.msra.mxu0 0.0
      %1385 = vmatprep.subr.mxu0 0.0
      %1386 = vmatpush1.msra.mxu0 0.0
      %1387 = vmatprep.subr.mxu0 0.0
      %1388 = vmatpush1.msra.mxu0 0.0
      %1389 = vmatprep.subr.mxu0 0.0
      %1390 = vmatpush1.msra.mxu0 0.0
      %1391 = vmatprep.subr.mxu0 0.0
      %1392 = vmatpush1.msra.mxu0 0.0
      %1393 = vmatprep.subr.mxu0 0.0
      %1394 = vmatpush1.msra.mxu0 0.0
      %1395 = vmatprep.subr.mxu0 0.0
      %1396 = vmatpush1.msra.mxu0 0.0
      %1397 = vmatprep.subr.mxu0 0.0
      %1398 = vmatpush1.msra.mxu0 0.0
      %1399 = vmatprep.subr.mxu0 0.0
      %1400 = vmatpush1.msra.mxu0 0.0
      %1401 = vmatprep.subr.mxu0 0.0
      %1402 = vmatpush1.msra.mxu0 0.0
      %1403 = vmatprep.subr.mxu0 0.0
      %1404 = vmatpush1.msra.mxu0 0.0
      %1405 = vmatprep.subr.mxu0 0.0
      %1406 = vmatpush1.msra.mxu0 0.0
      %1407 = vmatprep.subr.mxu0 0.0
      %1408 = vmatpush1.msra.mxu0 0.0
      %1409 = vmatprep.subr.mxu0 0.0
      %1410 = vmatpush1.msra.mxu0 0.0
      %1411 = vmatprep.subr.mxu0 0.0
      %1412 = vmatpush1.msra.mxu0 0.0
      %1413 = vmatprep.subr.mxu0 0.0
      %1414 = vmatpush1.msra.mxu0 0.0
      %1415 = vmatprep.subr.mxu0 0.0
      %1416 = vmatpush1.msra.mxu0 0.0
      %1417 = vmatprep.subr.mxu0 0.0
      %1418 = vmatpush1.msra.mxu0 0.0
      %1419 = vmatprep.subr.mxu0 0.0
      %1420 = vmatpush1.msra.mxu0 0.0
      %1421 = vmatprep.subr.mxu0 0.0
      %1422 = vmatpush1.msra.mxu0 0.0
      %1423 = vmatprep.subr.mxu0 0.0
      %1424 = vmatpush1.msra.mxu0 0.0
      %1425 = vmatprep.subr.mxu0 0.0
      %1426 = vmatpush1.msra.mxu0 0.0
      %1427 = vmatprep.subr.mxu0 0.0
      %1428 = vmatpush1.msra.mxu0 0.0
      %1429 = vmatprep.subr.mxu0 0.0
      %1430 = vmatpush1.msra.mxu0 0.0
      %1431 = vmatprep.mubr.f32.mxu0 0.0
      %1432 = vmatmul.mubr.f32.gmra.mrb[0].mxu0 %v438
      %v1433 = vpop.f32.mrb[0].mxu0
      %v1434 = vadd.f32 0.0, %v1433
      %v1435 = vpop.f32.mrb[0].mxu0
      %v1436 = vadd.f32 0.0, %v1435
      %1437 = vmatprep.mubr.f32.mxu0 0.0
      %1438 = vmatmul.mubr.f32.gmra.mrb[0].mxu0 %v441
      %v1439 = vpop.f32.mrb[0].mxu0
      %v1440 = vadd.f32 0.0, %v1439
      %v1441 = vpop.f32.mrb[0].mxu0
      %v1442 = vadd.f32 0.0, %v1441
      %1443 = vdwg.mxu0
      %1444 = vmatprep.subr.mxu0 %v299
      %1445 = vmatpush1.msra.mxu0 %v298
      %1446 = vmatprep.subr.mxu0 %v353
      %1447 = vmatpush1.msra.mxu0 %v352
      %1448 = vmatprep.subr.mxu0 %v407
      %1449 = vmatpush1.msra.mxu0 %v406
      %1450 = vmatprep.subr.mxu0 0.0
      %1451 = vmatpush1.msra.mxu0 0.0
      %1452 = vmatprep.subr.mxu0 0.0
      %1453 = vmatpush1.msra.mxu0 0.0
      %1454 = vmatprep.subr.mxu0 0.0
      %1455 = vmatpush1.msra.mxu0 0.0
      %1456 = vmatprep.subr.mxu0 0.0
      %1457 = vmatpush1.msra.mxu0 0.0
      %1458 = vmatprep.subr.mxu0 0.0
      %1459 = vmatpush1.msra.mxu0 0.0
      %1460 = vmatprep.subr.mxu0 0.0
      %1461 = vmatpush1.msra.mxu0 0.0
      %1462 = vmatprep.subr.mxu0 0.0
      %1463 = vmatpush1.msra.mxu0 0.0
      %1464 = vmatprep.subr.mxu0 0.0
      %1465 = vmatpush1.msra.mxu0 0.0
      %1466 = vmatprep.subr.mxu0 0.0
      %1467 = vmatpush1.msra.mxu0 0.0
      %1468 = vmatprep.subr.mxu0 0.0
      %1469 = vmatpush1.msra.mxu0 0.0
      %1470 = vmatprep.subr.mxu0 0.0
      %1471 = vmatpush1.msra.mxu0 0.0
      %1472 = vmatprep.subr.mxu0 0.0
      %1473 = vmatpush1.msra.mxu0 0.0
      %1474 = vmatprep.subr.mxu0 0.0
      %1475 = vmatpush1.msra.mxu0 0.0
      %1476 = vmatprep.subr.mxu0 0.0
      %1477 = vmatpush1.msra.mxu0 0.0
      %1478 = vmatprep.subr.mxu0 0.0
      %1479 = vmatpush1.msra.mxu0 0.0
      %1480 = vmatprep.subr.mxu0 0.0
      %1481 = vmatpush1.msra.mxu0 0.0
      %1482 = vmatprep.subr.mxu0 0.0
      %1483 = vmatpush1.msra.mxu0 0.0
      %1484 = vmatprep.subr.mxu0 0.0
      %1485 = vmatpush1.msra.mxu0 0.0
      %1486 = vmatprep.subr.mxu0 0.0
      %1487 = vmatpush1.msra.mxu0 0.0
      %1488 = vmatprep.subr.mxu0 0.0
      %1489 = vmatpush1.msra.mxu0 0.0
      %1490 = vmatprep.subr.mxu0 0.0
      %1491 = vmatpush1.msra.mxu0 0.0
      %1492 = vmatprep.subr.mxu0 0.0
      %1493 = vmatpush1.msra.mxu0 0.0
      %1494 = vmatprep.subr.mxu0 0.0
      %1495 = vmatpush1.msra.mxu0 0.0
      %1496 = vmatprep.subr.mxu0 0.0
      %1497 = vmatpush1.msra.mxu0 0.0
      %1498 = vmatprep.subr.mxu0 0.0
      %1499 = vmatpush1.msra.mxu0 0.0
      %1500 = vmatprep.subr.mxu0 0.0
      %1501 = vmatpush1.msra.mxu0 0.0
      %1502 = vmatprep.subr.mxu0 0.0
      %1503 = vmatpush1.msra.mxu0 0.0
      %1504 = vmatprep.subr.mxu0 0.0
      %1505 = vmatpush1.msra.mxu0 0.0
      %1506 = vmatprep.subr.mxu0 0.0
      %1507 = vmatpush1.msra.mxu0 0.0
      %1508 = vmatprep.mubr.f32.mxu0 0.0
      %1509 = vmatmul.mubr.f32.gmra.mrb[0].mxu0 %v438
      %v1510 = vpop.f32.mrb[0].mxu0
      %v1511 = vadd.f32 0.0, %v1510
      %v1512 = vpop.f32.mrb[0].mxu0
      %v1513 = vadd.f32 0.0, %v1512
      %1514 = vmatprep.mubr.f32.mxu0 0.0
      %1515 = vmatmul.mubr.f32.gmra.mrb[0].mxu0 %v441
      %v1516 = vpop.f32.mrb[0].mxu0
      %v1517 = vadd.f32 0.0, %v1516
      %v1518 = vpop.f32.mrb[0].mxu0
      %v1519 = vadd.f32 0.0, %v1518
      %1520 = vdwg.mxu0
      %1521 = vmatprep.subr.mxu0 %v301
      %1522 = vmatpush1.msra.mxu0 %v300
      %1523 = vmatprep.subr.mxu0 %v355
      %1524 = vmatpush1.msra.mxu0 %v354
      %1525 = vmatprep.subr.mxu0 %v409
      %1526 = vmatpush1.msra.mxu0 %v408
      %1527 = vmatprep.subr.mxu0 0.0
      %1528 = vmatpush1.msra.mxu0 0.0
      %1529 = vmatprep.subr.mxu0 0.0
      %1530 = vmatpush1.msra.mxu0 0.0
      %1531 = vmatprep.subr.mxu0 0.0
      %1532 = vmatpush1.msra.mxu0 0.0
      %1533 = vmatprep.subr.mxu0 0.0
      %1534 = vmatpush1.msra.mxu0 0.0
      %1535 = vmatprep.subr.mxu0 0.0
      %1536 = vmatpush1.msra.mxu0 0.0
      %1537 = vmatprep.subr.mxu0 0.0
      %1538 = vmatpush1.msra.mxu0 0.0
      %1539 = vmatprep.subr.mxu0 0.0
      %1540 = vmatpush1.msra.mxu0 0.0
      %1541 = vmatprep.subr.mxu0 0.0
      %1542 = vmatpush1.msra.mxu0 0.0
      %1543 = vmatprep.subr.mxu0 0.0
      %1544 = vmatpush1.msra.mxu0 0.0
      %1545 = vmatprep.subr.mxu0 0.0
      %1546 = vmatpush1.msra.mxu0 0.0
      %1547 = vmatprep.subr.mxu0 0.0
      %1548 = vmatpush1.msra.mxu0 0.0
      %1549 = vmatprep.subr.mxu0 0.0
      %1550 = vmatpush1.msra.mxu0 0.0
      %1551 = vmatprep.subr.mxu0 0.0
      %1552 = vmatpush1.msra.mxu0 0.0
      %1553 = vmatprep.subr.mxu0 0.0
      %1554 = vmatpush1.msra.mxu0 0.0
      %1555 = vmatprep.subr.mxu0 0.0
      %1556 = vmatpush1.msra.mxu0 0.0
      %1557 = vmatprep.subr.mxu0 0.0
      %1558 = vmatpush1.msra.mxu0 0.0
      %1559 = vmatprep.subr.mxu0 0.0
      %1560 = vmatpush1.msra.mxu0 0.0
      %1561 = vmatprep.subr.mxu0 0.0
      %1562 = vmatpush1.msra.mxu0 0.0
      %1563 = vmatprep.subr.mxu0 0.0
      %1564 = vmatpush1.msra.mxu0 0.0
      %1565 = vmatprep.subr.mxu0 0.0
      %1566 = vmatpush1.msra.mxu0 0.0
      %1567 = vmatprep.subr.mxu0 0.0
      %1568 = vmatpush1.msra.mxu0 0.0
      %1569 = vmatprep.subr.mxu0 0.0
      %1570 = vmatpush1.msra.mxu0 0.0
      %1571 = vmatprep.subr.mxu0 0.0
      %1572 = vmatpush1.msra.mxu0 0.0
      %1573 = vmatprep.subr.mxu0 0.0
      %1574 = vmatpush1.msra.mxu0 0.0
      %1575 = vmatprep.subr.mxu0 0.0
      %1576 = vmatpush1.msra.mxu0 0.0
      %1577 = vmatprep.subr.mxu0 0.0
      %1578 = vmatpush1.msra.mxu0 0.0
      %1579 = vmatprep.subr.mxu0 0.0
      %1580 = vmatpush1.msra.mxu0 0.0
      %1581 = vmatprep.subr.mxu0 0.0
      %1582 = vmatpush1.msra.mxu0 0.0
      %1583 = vmatprep.subr.mxu0 0.0
      %1584 = vmatpush1.msra.mxu0 0.0
      %1585 = vmatprep.mubr.f32.mxu0 0.0
      %1586 = vmatmul.mubr.f32.gmra.mrb[0].mxu0 %v438
      %v1587 = vpop.f32.mrb[0].mxu0
      %v1588 = vadd.f32 0.0, %v1587
      %v1589 = vpop.f32.mrb[0].mxu0
      %v1590 = vadd.f32 0.0, %v1589
      %1591 = vmatprep.mubr.f32.mxu0 0.0
      %1592 = vmatmul.mubr.f32.gmra.mrb[0].mxu0 %v441
      %v1593 = vpop.f32.mrb[0].mxu0
      %v1594 = vadd.f32 0.0, %v1593
      %v1595 = vpop.f32.mrb[0].mxu0
      %v1596 = vadd.f32 0.0, %v1595
      %1597 = vdwg.mxu0
      %1598 = vmatprep.subr.mxu0 %v303
      %1599 = vmatpush1.msra.mxu0 %v302
      %1600 = vmatprep.subr.mxu0 %v357
      %1601 = vmatpush1.msra.mxu0 %v356
      %1602 = vmatprep.subr.mxu0 %v411
      %1603 = vmatpush1.msra.mxu0 %v410
      %1604 = vmatprep.subr.mxu0 0.0
      %1605 = vmatpush1.msra.mxu0 0.0
      %1606 = vmatprep.subr.mxu0 0.0
      %1607 = vmatpush1.msra.mxu0 0.0
      %1608 = vmatprep.subr.mxu0 0.0
      %1609 = vmatpush1.msra.mxu0 0.0
      %1610 = vmatprep.subr.mxu0 0.0
      %1611 = vmatpush1.msra.mxu0 0.0
      %1612 = vmatprep.subr.mxu0 0.0
      %1613 = vmatpush1.msra.mxu0 0.0
      %1614 = vmatprep.subr.mxu0 0.0
      %1615 = vmatpush1.msra.mxu0 0.0
      %1616 = vmatprep.subr.mxu0 0.0
      %1617 = vmatpush1.msra.mxu0 0.0
      %1618 = vmatprep.subr.mxu0 0.0
      %1619 = vmatpush1.msra.mxu0 0.0
      %1620 = vmatprep.subr.mxu0 0.0
      %1621 = vmatpush1.msra.mxu0 0.0
      %1622 = vmatprep.subr.mxu0 0.0
      %1623 = vmatpush1.msra.mxu0 0.0
      %1624 = vmatprep.subr.mxu0 0.0
      %1625 = vmatpush1.msra.mxu0 0.0
      %1626 = vmatprep.subr.mxu0 0.0
      %1627 = vmatpush1.msra.mxu0 0.0
      %1628 = vmatprep.subr.mxu0 0.0
      %1629 = vmatpush1.msra.mxu0 0.0
      %1630 = vmatprep.subr.mxu0 0.0
      %1631 = vmatpush1.msra.mxu0 0.0
      %1632 = vmatprep.subr.mxu0 0.0
      %1633 = vmatpush1.msra.mxu0 0.0
      %1634 = vmatprep.subr.mxu0 0.0
      %1635 = vmatpush1.msra.mxu0 0.0
      %1636 = vmatprep.subr.mxu0 0.0
      %1637 = vmatpush1.msra.mxu0 0.0
      %1638 = vmatprep.subr.mxu0 0.0
      %1639 = vmatpush1.msra.mxu0 0.0
      %1640 = vmatprep.subr.mxu0 0.0
      %1641 = vmatpush1.msra.mxu0 0.0
      %1642 = vmatprep.subr.mxu0 0.0
      %1643 = vmatpush1.msra.mxu0 0.0
      %1644 = vmatprep.subr.mxu0 0.0
      %1645 = vmatpush1.msra.mxu0 0.0
      %1646 = vmatprep.subr.mxu0 0.0
      %1647 = vmatpush1.msra.mxu0 0.0
      %1648 = vmatprep.subr.mxu0 0.0
      %1649 = vmatpush1.msra.mxu0 0.0
      %1650 = vmatprep.subr.mxu0 0.0
      %1651 = vmatpush1.msra.mxu0 0.0
      %1652 = vmatprep.subr.mxu0 0.0
      %1653 = vmatpush1.msra.mxu0 0.0
      %1654 = vmatprep.subr.mxu0 0.0
      %1655 = vmatpush1.msra.mxu0 0.0
      %1656 = vmatprep.subr.mxu0 0.0
      %1657 = vmatpush1.msra.mxu0 0.0
      %1658 = vmatprep.subr.mxu0 0.0
      %1659 = vmatpush1.msra.mxu0 0.0
      %1660 = vmatprep.subr.mxu0 0.0
      %1661 = vmatpush1.msra.mxu0 0.0
      %1662 = vmatprep.mubr.f32.mxu0 0.0
      %1663 = vmatmul.mubr.f32.gmra.mrb[0].mxu0 %v438
      %v1664 = vpop.f32.mrb[0].mxu0
      %v1665 = vadd.f32 0.0, %v1664
      %v1666 = vpop.f32.mrb[0].mxu0
      %v1667 = vadd.f32 0.0, %v1666
      %1668 = vmatprep.mubr.f32.mxu0 0.0
      %1669 = vmatmul.mubr.f32.gmra.mrb[0].mxu0 %v441
      %v1670 = vpop.f32.mrb[0].mxu0
      %v1671 = vadd.f32 0.0, %v1670
      %v1672 = vpop.f32.mrb[0].mxu0
      %v1673 = vadd.f32 0.0, %v1672
      %1674 = vdwg.mxu0
      %1675 = vmatprep.subr.mxu0 %v305
      %1676 = vmatpush1.msra.mxu0 %v304
      %1677 = vmatprep.subr.mxu0 %v359
      %1678 = vmatpush1.msra.mxu0 %v358
      %1679 = vmatprep.subr.mxu0 %v413
      %1680 = vmatpush1.msra.mxu0 %v412
      %1681 = vmatprep.subr.mxu0 0.0
      %1682 = vmatpush1.msra.mxu0 0.0
      %1683 = vmatprep.subr.mxu0 0.0
      %1684 = vmatpush1.msra.mxu0 0.0
      %1685 = vmatprep.subr.mxu0 0.0
      %1686 = vmatpush1.msra.mxu0 0.0
      %1687 = vmatprep.subr.mxu0 0.0
      %1688 = vmatpush1.msra.mxu0 0.0
      %1689 = vmatprep.subr.mxu0 0.0
      %1690 = vmatpush1.msra.mxu0 0.0
      %1691 = vmatprep.subr.mxu0 0.0
      %1692 = vmatpush1.msra.mxu0 0.0
      %1693 = vmatprep.subr.mxu0 0.0
      %1694 = vmatpush1.msra.mxu0 0.0
      %1695 = vmatprep.subr.mxu0 0.0
      %1696 = vmatpush1.msra.mxu0 0.0
      %1697 = vmatprep.subr.mxu0 0.0
      %1698 = vmatpush1.msra.mxu0 0.0
      %1699 = vmatprep.subr.mxu0 0.0
      %1700 = vmatpush1.msra.mxu0 0.0
      %1701 = vmatprep.subr.mxu0 0.0
      %1702 = vmatpush1.msra.mxu0 0.0
      %1703 = vmatprep.subr.mxu0 0.0
      %1704 = vmatpush1.msra.mxu0 0.0
      %1705 = vmatprep.subr.mxu0 0.0
      %1706 = vmatpush1.msra.mxu0 0.0
      %1707 = vmatprep.subr.mxu0 0.0
      %1708 = vmatpush1.msra.mxu0 0.0
      %1709 = vmatprep.subr.mxu0 0.0
      %1710 = vmatpush1.msra.mxu0 0.0
      %1711 = vmatprep.subr.mxu0 0.0
      %1712 = vmatpush1.msra.mxu0 0.0
      %1713 = vmatprep.subr.mxu0 0.0
      %1714 = vmatpush1.msra.mxu0 0.0
      %1715 = vmatprep.subr.mxu0 0.0
      %1716 = vmatpush1.msra.mxu0 0.0
      %1717 = vmatprep.subr.mxu0 0.0
      %1718 = vmatpush1.msra.mxu0 0.0
      %1719 = vmatprep.subr.mxu0 0.0
      %1720 = vmatpush1.msra.mxu0 0.0
      %1721 = vmatprep.subr.mxu0 0.0
      %1722 = vmatpush1.msra.mxu0 0.0
      %1723 = vmatprep.subr.mxu0 0.0
      %1724 = vmatpush1.msra.mxu0 0.0
      %1725 = vmatprep.subr.mxu0 0.0
      %1726 = vmatpush1.msra.mxu0 0.0
      %1727 = vmatprep.subr.mxu0 0.0
      %1728 = vmatpush1.msra.mxu0 0.0
      %1729 = vmatprep.subr.mxu0 0.0
      %1730 = vmatpush1.msra.mxu0 0.0
      %1731 = vmatprep.subr.mxu0 0.0
      %1732 = vmatpush1.msra.mxu0 0.0
      %1733 = vmatprep.subr.mxu0 0.0
      %1734 = vmatpush1.msra.mxu0 0.0
      %1735 = vmatprep.subr.mxu0 0.0
      %1736 = vmatpush1.msra.mxu0 0.0
      %1737 = vmatprep.subr.mxu0 0.0
      %1738 = vmatpush1.msra.mxu0 0.0
      %1739 = vmatprep.mubr.f32.mxu0 0.0
      %1740 = vmatmul.mubr.f32.gmra.mrb[0].mxu0 %v438
      %v1741 = vpop.f32.mrb[0].mxu0
      %v1742 = vadd.f32 0.0, %v1741
      %v1743 = vpop.f32.mrb[0].mxu0
      %v1744 = vadd.f32 0.0, %v1743
      %1745 = vmatprep.mubr.f32.mxu0 0.0
      %1746 = vmatmul.mubr.f32.gmra.mrb[0].mxu0 %v441
      %v1747 = vpop.f32.mrb[0].mxu0
      %v1748 = vadd.f32 0.0, %v1747
      %v1749 = vpop.f32.mrb[0].mxu0
      %v1750 = vadd.f32 0.0, %v1749
      %1751 = vdwg.mxu0
      %1752 = vmatprep.subr.mxu0 %v307
      %1753 = vmatpush1.msra.mxu0 %v306
      %1754 = vmatprep.subr.mxu0 %v361
      %1755 = vmatpush1.msra.mxu0 %v360
      %1756 = vmatprep.subr.mxu0 %v415
      %1757 = vmatpush1.msra.mxu0 %v414
      %1758 = vmatprep.subr.mxu0 0.0
      %1759 = vmatpush1.msra.mxu0 0.0
      %1760 = vmatprep.subr.mxu0 0.0
      %1761 = vmatpush1.msra.mxu0 0.0
      %1762 = vmatprep.subr.mxu0 0.0
      %1763 = vmatpush1.msra.mxu0 0.0
      %1764 = vmatprep.subr.mxu0 0.0
      %1765 = vmatpush1.msra.mxu0 0.0
      %1766 = vmatprep.subr.mxu0 0.0
      %1767 = vmatpush1.msra.mxu0 0.0
      %1768 = vmatprep.subr.mxu0 0.0
      %1769 = vmatpush1.msra.mxu0 0.0
      %1770 = vmatprep.subr.mxu0 0.0
      %1771 = vmatpush1.msra.mxu0 0.0
      %1772 = vmatprep.subr.mxu0 0.0
      %1773 = vmatpush1.msra.mxu0 0.0
      %1774 = vmatprep.subr.mxu0 0.0
      %1775 = vmatpush1.msra.mxu0 0.0
      %1776 = vmatprep.subr.mxu0 0.0
      %1777 = vmatpush1.msra.mxu0 0.0
      %1778 = vmatprep.subr.mxu0 0.0
      %1779 = vmatpush1.msra.mxu0 0.0
      %1780 = vmatprep.subr.mxu0 0.0
      %1781 = vmatpush1.msra.mxu0 0.0
      %1782 = vmatprep.subr.mxu0 0.0
      %1783 = vmatpush1.msra.mxu0 0.0
      %1784 = vmatprep.subr.mxu0 0.0
      %1785 = vmatpush1.msra.mxu0 0.0
      %1786 = vmatprep.subr.mxu0 0.0
      %1787 = vmatpush1.msra.mxu0 0.0
      %1788 = vmatprep.subr.mxu0 0.0
      %1789 = vmatpush1.msra.mxu0 0.0
      %1790 = vmatprep.subr.mxu0 0.0
      %1791 = vmatpush1.msra.mxu0 0.0
      %1792 = vmatprep.subr.mxu0 0.0
      %1793 = vmatpush1.msra.mxu0 0.0
      %1794 = vmatprep.subr.mxu0 0.0
      %1795 = vmatpush1.msra.mxu0 0.0
      %1796 = vmatprep.subr.mxu0 0.0
      %1797 = vmatpush1.msra.mxu0 0.0
      %1798 = vmatprep.subr.mxu0 0.0
      %1799 = vmatpush1.msra.mxu0 0.0
      %1800 = vmatprep.subr.mxu0 0.0
      %1801 = vmatpush1.msra.mxu0 0.0
      %1802 = vmatprep.subr.mxu0 0.0
      %1803 = vmatpush1.msra.mxu0 0.0
      %1804 = vmatprep.subr.mxu0 0.0
      %1805 = vmatpush1.msra.mxu0 0.0
      %1806 = vmatprep.subr.mxu0 0.0
      %1807 = vmatpush1.msra.mxu0 0.0
      %1808 = vmatprep.subr.mxu0 0.0
      %1809 = vmatpush1.msra.mxu0 0.0
      %1810 = vmatprep.subr.mxu0 0.0
      %1811 = vmatpush1.msra.mxu0 0.0
      %1812 = vmatprep.subr.mxu0 0.0
      %1813 = vmatpush1.msra.mxu0 0.0
      %1814 = vmatprep.subr.mxu0 0.0
      %1815 = vmatpush1.msra.mxu0 0.0
      %1816 = vmatprep.mubr.f32.mxu0 0.0
      %1817 = vmatmul.mubr.f32.gmra.mrb[0].mxu0 %v438
      %v1818 = vpop.f32.mrb[0].mxu0
      %v1819 = vadd.f32 0.0, %v1818
      %v1820 = vpop.f32.mrb[0].mxu0
      %v1821 = vadd.f32 0.0, %v1820
      %1822 = vmatprep.mubr.f32.mxu0 0.0
      %1823 = vmatmul.mubr.f32.gmra.mrb[0].mxu0 %v441
      %v1824 = vpop.f32.mrb[0].mxu0
      %v1825 = vadd.f32 0.0, %v1824
      %v1826 = vpop.f32.mrb[0].mxu0
      %v1827 = vadd.f32 0.0, %v1826
      %1828 = vdwg.mxu0
      %1829 = vmatprep.subr.mxu0 %v309
      %1830 = vmatpush1.msra.mxu0 %v308
      %1831 = vmatprep.subr.mxu0 %v363
      %1832 = vmatpush1.msra.mxu0 %v362
      %1833 = vmatprep.subr.mxu0 %v417
      %1834 = vmatpush1.msra.mxu0 %v416
      %1835 = vmatprep.subr.mxu0 0.0
      %1836 = vmatpush1.msra.mxu0 0.0
      %1837 = vmatprep.subr.mxu0 0.0
      %1838 = vmatpush1.msra.mxu0 0.0
      %1839 = vmatprep.subr.mxu0 0.0
      %1840 = vmatpush1.msra.mxu0 0.0
      %1841 = vmatprep.subr.mxu0 0.0
      %1842 = vmatpush1.msra.mxu0 0.0
      %1843 = vmatprep.subr.mxu0 0.0
      %1844 = vmatpush1.msra.mxu0 0.0
      %1845 = vmatprep.subr.mxu0 0.0
      %1846 = vmatpush1.msra.mxu0 0.0
      %1847 = vmatprep.subr.mxu0 0.0
      %1848 = vmatpush1.msra.mxu0 0.0
      %1849 = vmatprep.subr.mxu0 0.0
      %1850 = vmatpush1.msra.mxu0 0.0
      %1851 = vmatprep.subr.mxu0 0.0
      %1852 = vmatpush1.msra.mxu0 0.0
      %1853 = vmatprep.subr.mxu0 0.0
      %1854 = vmatpush1.msra.mxu0 0.0
      %1855 = vmatprep.subr.mxu0 0.0
      %1856 = vmatpush1.msra.mxu0 0.0
      %1857 = vmatprep.subr.mxu0 0.0
      %1858 = vmatpush1.msra.mxu0 0.0
      %1859 = vmatprep.subr.mxu0 0.0
      %1860 = vmatpush1.msra.mxu0 0.0
      %1861 = vmatprep.subr.mxu0 0.0
      %1862 = vmatpush1.msra.mxu0 0.0
      %1863 = vmatprep.subr.mxu0 0.0
      %1864 = vmatpush1.msra.mxu0 0.0
      %1865 = vmatprep.subr.mxu0 0.0
      %1866 = vmatpush1.msra.mxu0 0.0
      %1867 = vmatprep.subr.mxu0 0.0
      %1868 = vmatpush1.msra.mxu0 0.0
      %1869 = vmatprep.subr.mxu0 0.0
      %1870 = vmatpush1.msra.mxu0 0.0
      %1871 = vmatprep.subr.mxu0 0.0
      %1872 = vmatpush1.msra.mxu0 0.0
      %1873 = vmatprep.subr.mxu0 0.0
      %1874 = vmatpush1.msra.mxu0 0.0
      %1875 = vmatprep.subr.mxu0 0.0
      %1876 = vmatpush1.msra.mxu0 0.0
      %1877 = vmatprep.subr.mxu0 0.0
      %1878 = vmatpush1.msra.mxu0 0.0
      %1879 = vmatprep.subr.mxu0 0.0
      %1880 = vmatpush1.msra.mxu0 0.0
      %1881 = vmatprep.subr.mxu0 0.0
      %1882 = vmatpush1.msra.mxu0 0.0
      %1883 = vmatprep.subr.mxu0 0.0
      %1884 = vmatpush1.msra.mxu0 0.0
      %1885 = vmatprep.subr.mxu0 0.0
      %1886 = vmatpush1.msra.mxu0 0.0
      %1887 = vmatprep.subr.mxu0 0.0
      %1888 = vmatpush1.msra.mxu0 0.0
      %1889 = vmatprep.subr.mxu0 0.0
      %1890 = vmatpush1.msra.mxu0 0.0
      %1891 = vmatprep.subr.mxu0 0.0
      %1892 = vmatpush1.msra.mxu0 0.0
      %1893 = vmatprep.mubr.f32.mxu0 0.0
      %1894 = vmatmul.mubr.f32.gmra.mrb[0].mxu0 %v438
      %v1895 = vpop.f32.mrb[0].mxu0
      %v1896 = vadd.f32 0.0, %v1895
      %v1897 = vpop.f32.mrb[0].mxu0
      %v1898 = vadd.f32 0.0, %v1897
      %1899 = vmatprep.mubr.f32.mxu0 0.0
      %1900 = vmatmul.mubr.f32.gmra.mrb[0].mxu0 %v441
      %v1901 = vpop.f32.mrb[0].mxu0
      %v1902 = vadd.f32 0.0, %v1901
      %v1903 = vpop.f32.mrb[0].mxu0
      %v1904 = vadd.f32 0.0, %v1903
      %1905 = vdwg.mxu0
      %1906 = vmatprep.subr.mxu0 %v311
      %1907 = vmatpush1.msra.mxu0 %v310
      %1908 = vmatprep.subr.mxu0 %v365
      %1909 = vmatpush1.msra.mxu0 %v364
      %1910 = vmatprep.subr.mxu0 %v419
      %1911 = vmatpush1.msra.mxu0 %v418
      %1912 = vmatprep.subr.mxu0 0.0
      %1913 = vmatpush1.msra.mxu0 0.0
      %1914 = vmatprep.subr.mxu0 0.0
      %1915 = vmatpush1.msra.mxu0 0.0
      %1916 = vmatprep.subr.mxu0 0.0
      %1917 = vmatpush1.msra.mxu0 0.0
      %1918 = vmatprep.subr.mxu0 0.0
      %1919 = vmatpush1.msra.mxu0 0.0
      %1920 = vmatprep.subr.mxu0 0.0
      %1921 = vmatpush1.msra.mxu0 0.0
      %1922 = vmatprep.subr.mxu0 0.0
      %1923 = vmatpush1.msra.mxu0 0.0
      %1924 = vmatprep.subr.mxu0 0.0
      %1925 = vmatpush1.msra.mxu0 0.0
      %1926 = vmatprep.subr.mxu0 0.0
      %1927 = vmatpush1.msra.mxu0 0.0
      %1928 = vmatprep.subr.mxu0 0.0
      %1929 = vmatpush1.msra.mxu0 0.0
      %1930 = vmatprep.subr.mxu0 0.0
      %1931 = vmatpush1.msra.mxu0 0.0
      %1932 = vmatprep.subr.mxu0 0.0
      %1933 = vmatpush1.msra.mxu0 0.0
      %1934 = vmatprep.subr.mxu0 0.0
      %1935 = vmatpush1.msra.mxu0 0.0
      %1936 = vmatprep.subr.mxu0 0.0
      %1937 = vmatpush1.msra.mxu0 0.0
      %1938 = vmatprep.subr.mxu0 0.0
      %1939 = vmatpush1.msra.mxu0 0.0
      %1940 = vmatprep.subr.mxu0 0.0
      %1941 = vmatpush1.msra.mxu0 0.0
      %1942 = vmatprep.subr.mxu0 0.0
      %1943 = vmatpush1.msra.mxu0 0.0
      %1944 = vmatprep.subr.mxu0 0.0
      %1945 = vmatpush1.msra.mxu0 0.0
      %1946 = vmatprep.subr.mxu0 0.0
      %1947 = vmatpush1.msra.mxu0 0.0
      %1948 = vmatprep.subr.mxu0 0.0
      %1949 = vmatpush1.msra.mxu0 0.0
      %1950 = vmatprep.subr.mxu0 0.0
      %1951 = vmatpush1.msra.mxu0 0.0
      %1952 = vmatprep.subr.mxu0 0.0
      %1953 = vmatpush1.msra.mxu0 0.0
      %1954 = vmatprep.subr.mxu0 0.0
      %1955 = vmatpush1.msra.mxu0 0.0
      %1956 = vmatprep.subr.mxu0 0.0
      %1957 = vmatpush1.msra.mxu0 0.0
      %1958 = vmatprep.subr.mxu0 0.0
      %1959 = vmatpush1.msra.mxu0 0.0
      %1960 = vmatprep.subr.mxu0 0.0
      %1961 = vmatpush1.msra.mxu0 0.0
      %1962 = vmatprep.subr.mxu0 0.0
      %1963 = vmatpush1.msra.mxu0 0.0
      %1964 = vmatprep.subr.mxu0 0.0
      %1965 = vmatpush1.msra.mxu0 0.0
      %1966 = vmatprep.subr.mxu0 0.0
      %1967 = vmatpush1.msra.mxu0 0.0
      %1968 = vmatprep.subr.mxu0 0.0
      %1969 = vmatpush1.msra.mxu0 0.0
      %1970 = vmatprep.mubr.f32.mxu0 0.0
      %1971 = vmatmul.mubr.f32.gmra.mrb[0].mxu0 %v438
      %v1972 = vpop.f32.mrb[0].mxu0
      %v1973 = vadd.f32 0.0, %v1972
      %v1974 = vpop.f32.mrb[0].mxu0
      %v1975 = vadd.f32 0.0, %v1974
      %1976 = vmatprep.mubr.f32.mxu0 0.0
      %1977 = vmatmul.mubr.f32.gmra.mrb[0].mxu0 %v441
      %v1978 = vpop.f32.mrb[0].mxu0
      %v1979 = vadd.f32 0.0, %v1978
      %v1980 = vpop.f32.mrb[0].mxu0
      %v1981 = vadd.f32 0.0, %v1980
      %1982 = vdwg.mxu0
      %1983 = vmatprep.subr.mxu0 %v313
      %1984 = vmatpush1.msra.mxu0 %v312
      %1985 = vmatprep.subr.mxu0 %v367
      %1986 = vmatpush1.msra.mxu0 %v366
      %1987 = vmatprep.subr.mxu0 %v421
      %1988 = vmatpush1.msra.mxu0 %v420
      %1989 = vmatprep.subr.mxu0 0.0
      %1990 = vmatpush1.msra.mxu0 0.0
      %1991 = vmatprep.subr.mxu0 0.0
      %1992 = vmatpush1.msra.mxu0 0.0
      %1993 = vmatprep.subr.mxu0 0.0
      %1994 = vmatpush1.msra.mxu0 0.0
      %1995 = vmatprep.subr.mxu0 0.0
      %1996 = vmatpush1.msra.mxu0 0.0
      %1997 = vmatprep.subr.mxu0 0.0
      %1998 = vmatpush1.msra.mxu0 0.0
      %1999 = vmatprep.subr.mxu0 0.0
      %2000 = vmatpush1.msra.mxu0 0.0
      %2001 = vmatprep.subr.mxu0 0.0
      %2002 = vmatpush1.msra.mxu0 0.0
      %2003 = vmatprep.subr.mxu0 0.0
      %2004 = vmatpush1.msra.mxu0 0.0
      %2005 = vmatprep.subr.mxu0 0.0
      %2006 = vmatpush1.msra.mxu0 0.0
      %2007 = vmatprep.subr.mxu0 0.0
      %2008 = vmatpush1.msra.mxu0 0.0
      %2009 = vmatprep.subr.mxu0 0.0
      %2010 = vmatpush1.msra.mxu0 0.0
      %2011 = vmatprep.subr.mxu0 0.0
      %2012 = vmatpush1.msra.mxu0 0.0
      %2013 = vmatprep.subr.mxu0 0.0
      %2014 = vmatpush1.msra.mxu0 0.0
      %2015 = vmatprep.subr.mxu0 0.0
      %2016 = vmatpush1.msra.mxu0 0.0
      %2017 = vmatprep.subr.mxu0 0.0
      %2018 = vmatpush1.msra.mxu0 0.0
      %2019 = vmatprep.subr.mxu0 0.0
      %2020 = vmatpush1.msra.mxu0 0.0
      %2021 = vmatprep.subr.mxu0 0.0
      %2022 = vmatpush1.msra.mxu0 0.0
      %2023 = vmatprep.subr.mxu0 0.0
      %2024 = vmatpush1.msra.mxu0 0.0
      %2025 = vmatprep.subr.mxu0 0.0
      %2026 = vmatpush1.msra.mxu0 0.0
      %2027 = vmatprep.subr.mxu0 0.0
      %2028 = vmatpush1.msra.mxu0 0.0
      %2029 = vmatprep.subr.mxu0 0.0
      %2030 = vmatpush1.msra.mxu0 0.0
      %2031 = vmatprep.subr.mxu0 0.0
      %2032 = vmatpush1.msra.mxu0 0.0
      %2033 = vmatprep.subr.mxu0 0.0
      %2034 = vmatpush1.msra.mxu0 0.0
      %2035 = vmatprep.subr.mxu0 0.0
      %2036 = vmatpush1.msra.mxu0 0.0
      %2037 = vmatprep.subr.mxu0 0.0
      %2038 = vmatpush1.msra.mxu0 0.0
      %2039 = vmatprep.subr.mxu0 0.0
      %2040 = vmatpush1.msra.mxu0 0.0
      %2041 = vmatprep.subr.mxu0 0.0
      %2042 = vmatpush1.msra.mxu0 0.0
      %2043 = vmatprep.subr.mxu0 0.0
      %2044 = vmatpush1.msra.mxu0 0.0
      %2045 = vmatprep.subr.mxu0 0.0
      %2046 = vmatpush1.msra.mxu0 0.0
      %2047 = vmatprep.mubr.f32.mxu0 0.0
      %2048 = vmatmul.mubr.f32.gmra.mrb[0].mxu0 %v438
      %v2049 = vpop.f32.mrb[0].mxu0
      %v2050 = vadd.f32 0.0, %v2049
      %v2051 = vpop.f32.mrb[0].mxu0
      %v2052 = vadd.f32 0.0, %v2051
      %2053 = vmatprep.mubr.f32.mxu0 0.0
      %2054 = vmatmul.mubr.f32.gmra.mrb[0].mxu0 %v441
      %v2055 = vpop.f32.mrb[0].mxu0
      %v2056 = vadd.f32 0.0, %v2055
      %v2057 = vpop.f32.mrb[0].mxu0
      %v2058 = vadd.f32 0.0, %v2057
      %2059 = vdwg.mxu0
      %2060 = vmatprep.subr.mxu0 %v315
      %2061 = vmatpush1.msra.mxu0 %v314
      %2062 = vmatprep.subr.mxu0 %v369
      %2063 = vmatpush1.msra.mxu0 %v368
      %2064 = vmatprep.subr.mxu0 %v423
      %2065 = vmatpush1.msra.mxu0 %v422
      %2066 = vmatprep.subr.mxu0 0.0
      %2067 = vmatpush1.msra.mxu0 0.0
      %2068 = vmatprep.subr.mxu0 0.0
      %2069 = vmatpush1.msra.mxu0 0.0
      %2070 = vmatprep.subr.mxu0 0.0
      %2071 = vmatpush1.msra.mxu0 0.0
      %2072 = vmatprep.subr.mxu0 0.0
      %2073 = vmatpush1.msra.mxu0 0.0
      %2074 = vmatprep.subr.mxu0 0.0
      %2075 = vmatpush1.msra.mxu0 0.0
      %2076 = vmatprep.subr.mxu0 0.0
      %2077 = vmatpush1.msra.mxu0 0.0
      %2078 = vmatprep.subr.mxu0 0.0
      %2079 = vmatpush1.msra.mxu0 0.0
      %2080 = vmatprep.subr.mxu0 0.0
      %2081 = vmatpush1.msra.mxu0 0.0
      %2082 = vmatprep.subr.mxu0 0.0
      %2083 = vmatpush1.msra.mxu0 0.0
      %2084 = vmatprep.subr.mxu0 0.0
      %2085 = vmatpush1.msra.mxu0 0.0
      %2086 = vmatprep.subr.mxu0 0.0
      %2087 = vmatpush1.msra.mxu0 0.0
      %2088 = vmatprep.subr.mxu0 0.0
      %2089 = vmatpush1.msra.mxu0 0.0
      %2090 = vmatprep.subr.mxu0 0.0
      %2091 = vmatpush1.msra.mxu0 0.0
      %2092 = vmatprep.subr.mxu0 0.0
      %2093 = vmatpush1.msra.mxu0 0.0
      %2094 = vmatprep.subr.mxu0 0.0
      %2095 = vmatpush1.msra.mxu0 0.0
      %2096 = vmatprep.subr.mxu0 0.0
      %2097 = vmatpush1.msra.mxu0 0.0
      %2098 = vmatprep.subr.mxu0 0.0
      %2099 = vmatpush1.msra.mxu0 0.0
      %2100 = vmatprep.subr.mxu0 0.0
      %2101 = vmatpush1.msra.mxu0 0.0
      %2102 = vmatprep.subr.mxu0 0.0
      %2103 = vmatpush1.msra.mxu0 0.0
      %2104 = vmatprep.subr.mxu0 0.0
      %2105 = vmatpush1.msra.mxu0 0.0
      %2106 = vmatprep.subr.mxu0 0.0
      %2107 = vmatpush1.msra.mxu0 0.0
      %2108 = vmatprep.subr.mxu0 0.0
      %2109 = vmatpush1.msra.mxu0 0.0
      %2110 = vmatprep.subr.mxu0 0.0
      %2111 = vmatpush1.msra.mxu0 0.0
      %2112 = vmatprep.subr.mxu0 0.0
      %2113 = vmatpush1.msra.mxu0 0.0
      %2114 = vmatprep.subr.mxu0 0.0
      %2115 = vmatpush1.msra.mxu0 0.0
      %2116 = vmatprep.subr.mxu0 0.0
      %2117 = vmatpush1.msra.mxu0 0.0
      %2118 = vmatprep.subr.mxu0 0.0
      %2119 = vmatpush1.msra.mxu0 0.0
      %2120 = vmatprep.subr.mxu0 0.0
      %2121 = vmatpush1.msra.mxu0 0.0
      %2122 = vmatprep.subr.mxu0 0.0
      %2123 = vmatpush1.msra.mxu0 0.0
      %2124 = vmatprep.mubr.f32.mxu0 0.0
      %2125 = vmatmul.mubr.f32.gmra.mrb[0].mxu0 %v438
      %v2126 = vpop.f32.mrb[0].mxu0
      %v2127 = vadd.f32 0.0, %v2126
      %v2128 = vpop.f32.mrb[0].mxu0
      %v2129 = vadd.f32 0.0, %v2128
      %2130 = vmatprep.mubr.f32.mxu0 0.0
      %2131 = vmatmul.mubr.f32.gmra.mrb[0].mxu0 %v441
      %v2132 = vpop.f32.mrb[0].mxu0
      %v2133 = vadd.f32 0.0, %v2132
      %v2134 = vpop.f32.mrb[0].mxu0
      %v2135 = vadd.f32 0.0, %v2134
      %2136 = vdwg.mxu0
      %2137 = vmatprep.subr.mxu0 %v317
      %2138 = vmatpush1.msra.mxu0 %v316
      %2139 = vmatprep.subr.mxu0 %v371
      %2140 = vmatpush1.msra.mxu0 %v370
      %2141 = vmatprep.subr.mxu0 %v425
      %2142 = vmatpush1.msra.mxu0 %v424
      %2143 = vmatprep.subr.mxu0 0.0
      %2144 = vmatpush1.msra.mxu0 0.0
      %2145 = vmatprep.subr.mxu0 0.0
      %2146 = vmatpush1.msra.mxu0 0.0
      %2147 = vmatprep.subr.mxu0 0.0
      %2148 = vmatpush1.msra.mxu0 0.0
      %2149 = vmatprep.subr.mxu0 0.0
      %2150 = vmatpush1.msra.mxu0 0.0
      %2151 = vmatprep.subr.mxu0 0.0
      %2152 = vmatpush1.msra.mxu0 0.0
      %2153 = vmatprep.subr.mxu0 0.0
      %2154 = vmatpush1.msra.mxu0 0.0
      %2155 = vmatprep.subr.mxu0 0.0
      %2156 = vmatpush1.msra.mxu0 0.0
      %2157 = vmatprep.subr.mxu0 0.0
      %2158 = vmatpush1.msra.mxu0 0.0
      %2159 = vmatprep.subr.mxu0 0.0
      %2160 = vmatpush1.msra.mxu0 0.0
      %2161 = vmatprep.subr.mxu0 0.0
      %2162 = vmatpush1.msra.mxu0 0.0
      %2163 = vmatprep.subr.mxu0 0.0
      %2164 = vmatpush1.msra.mxu0 0.0
      %2165 = vmatprep.subr.mxu0 0.0
      %2166 = vmatpush1.msra.mxu0 0.0
      %2167 = vmatprep.subr.mxu0 0.0
      %2168 = vmatpush1.msra.mxu0 0.0
      %2169 = vmatprep.subr.mxu0 0.0
      %2170 = vmatpush1.msra.mxu0 0.0
      %2171 = vmatprep.subr.mxu0 0.0
      %2172 = vmatpush1.msra.mxu0 0.0
      %2173 = vmatprep.subr.mxu0 0.0
      %2174 = vmatpush1.msra.mxu0 0.0
      %2175 = vmatprep.subr.mxu0 0.0
      %2176 = vmatpush1.msra.mxu0 0.0
      %2177 = vmatprep.subr.mxu0 0.0
      %2178 = vmatpush1.msra.mxu0 0.0
      %2179 = vmatprep.subr.mxu0 0.0
      %2180 = vmatpush1.msra.mxu0 0.0
      %2181 = vmatprep.subr.mxu0 0.0
      %2182 = vmatpush1.msra.mxu0 0.0
      %2183 = vmatprep.subr.mxu0 0.0
      %2184 = vmatpush1.msra.mxu0 0.0
      %2185 = vmatprep.subr.mxu0 0.0
      %2186 = vmatpush1.msra.mxu0 0.0
      %2187 = vmatprep.subr.mxu0 0.0
      %2188 = vmatpush1.msra.mxu0 0.0
      %2189 = vmatprep.subr.mxu0 0.0
      %2190 = vmatpush1.msra.mxu0 0.0
      %2191 = vmatprep.subr.mxu0 0.0
      %2192 = vmatpush1.msra.mxu0 0.0
      %2193 = vmatprep.subr.mxu0 0.0
      %2194 = vmatpush1.msra.mxu0 0.0
      %2195 = vmatprep.subr.mxu0 0.0
      %2196 = vmatpush1.msra.mxu0 0.0
      %2197 = vmatprep.subr.mxu0 0.0
      %2198 = vmatpush1.msra.mxu0 0.0
      %2199 = vmatprep.subr.mxu0 0.0
      %2200 = vmatpush1.msra.mxu0 0.0
      %2201 = vmatprep.mubr.f32.mxu0 0.0
      %2202 = vmatmul.mubr.f32.gmra.mrb[0].mxu0 %v438
      %v2203 = vpop.f32.mrb[0].mxu0
      %v2204 = vadd.f32 0.0, %v2203
      %v2205 = vpop.f32.mrb[0].mxu0
      %v2206 = vadd.f32 0.0, %v2205
      %2207 = vmatprep.mubr.f32.mxu0 0.0
      %2208 = vmatmul.mubr.f32.gmra.mrb[0].mxu0 %v441
      %v2209 = vpop.f32.mrb[0].mxu0
      %v2210 = vadd.f32 0.0, %v2209
      %v2211 = vpop.f32.mrb[0].mxu0
      %v2212 = vadd.f32 0.0, %v2211
      %2213 = vdwg.mxu0
      %2214 = vmatprep.subr.mxu0 %v319
      %2215 = vmatpush1.msra.mxu0 %v318
      %2216 = vmatprep.subr.mxu0 %v373
      %2217 = vmatpush1.msra.mxu0 %v372
      %2218 = vmatprep.subr.mxu0 %v427
      %2219 = vmatpush1.msra.mxu0 %v426
      %2220 = vmatprep.subr.mxu0 0.0
      %2221 = vmatpush1.msra.mxu0 0.0
      %2222 = vmatprep.subr.mxu0 0.0
      %2223 = vmatpush1.msra.mxu0 0.0
      %2224 = vmatprep.subr.mxu0 0.0
      %2225 = vmatpush1.msra.mxu0 0.0
      %2226 = vmatprep.subr.mxu0 0.0
      %2227 = vmatpush1.msra.mxu0 0.0
      %2228 = vmatprep.subr.mxu0 0.0
      %2229 = vmatpush1.msra.mxu0 0.0
      %2230 = vmatprep.subr.mxu0 0.0
      %2231 = vmatpush1.msra.mxu0 0.0
      %2232 = vmatprep.subr.mxu0 0.0
      %2233 = vmatpush1.msra.mxu0 0.0
      %2234 = vmatprep.subr.mxu0 0.0
      %2235 = vmatpush1.msra.mxu0 0.0
      %2236 = vmatprep.subr.mxu0 0.0
      %2237 = vmatpush1.msra.mxu0 0.0
      %2238 = vmatprep.subr.mxu0 0.0
      %2239 = vmatpush1.msra.mxu0 0.0
      %2240 = vmatprep.subr.mxu0 0.0
      %2241 = vmatpush1.msra.mxu0 0.0
      %2242 = vmatprep.subr.mxu0 0.0
      %2243 = vmatpush1.msra.mxu0 0.0
      %2244 = vmatprep.subr.mxu0 0.0
      %2245 = vmatpush1.msra.mxu0 0.0
      %2246 = vmatprep.subr.mxu0 0.0
      %2247 = vmatpush1.msra.mxu0 0.0
      %2248 = vmatprep.subr.mxu0 0.0
      %2249 = vmatpush1.msra.mxu0 0.0
      %2250 = vmatprep.subr.mxu0 0.0
      %2251 = vmatpush1.msra.mxu0 0.0
      %2252 = vmatprep.subr.mxu0 0.0
      %2253 = vmatpush1.msra.mxu0 0.0
      %2254 = vmatprep.subr.mxu0 0.0
      %2255 = vmatpush1.msra.mxu0 0.0
      %2256 = vmatprep.subr.mxu0 0.0
      %2257 = vmatpush1.msra.mxu0 0.0
      %2258 = vmatprep.subr.mxu0 0.0
      %2259 = vmatpush1.msra.mxu0 0.0
      %2260 = vmatprep.subr.mxu0 0.0
      %2261 = vmatpush1.msra.mxu0 0.0
      %2262 = vmatprep.subr.mxu0 0.0
      %2263 = vmatpush1.msra.mxu0 0.0
      %2264 = vmatprep.subr.mxu0 0.0
      %2265 = vmatpush1.msra.mxu0 0.0
      %2266 = vmatprep.subr.mxu0 0.0
      %2267 = vmatpush1.msra.mxu0 0.0
      %2268 = vmatprep.subr.mxu0 0.0
      %2269 = vmatpush1.msra.mxu0 0.0
      %2270 = vmatprep.subr.mxu0 0.0
      %2271 = vmatpush1.msra.mxu0 0.0
      %2272 = vmatprep.subr.mxu0 0.0
      %2273 = vmatpush1.msra.mxu0 0.0
      %2274 = vmatprep.subr.mxu0 0.0
      %2275 = vmatpush1.msra.mxu0 0.0
      %2276 = vmatprep.subr.mxu0 0.0
      %2277 = vmatpush1.msra.mxu0 0.0
      %2278 = vmatprep.mubr.f32.mxu0 0.0
      %2279 = vmatmul.mubr.f32.gmra.mrb[0].mxu0 %v438
      %v2280 = vpop.f32.mrb[0].mxu0
      %v2281 = vadd.f32 0.0, %v2280
      %v2282 = vpop.f32.mrb[0].mxu0
      %v2283 = vadd.f32 0.0, %v2282
      %2284 = vmatprep.mubr.f32.mxu0 0.0
      %2285 = vmatmul.mubr.f32.gmra.mrb[0].mxu0 %v441
      %v2286 = vpop.f32.mrb[0].mxu0
      %v2287 = vadd.f32 0.0, %v2286
      %v2288 = vpop.f32.mrb[0].mxu0
      %v2289 = vadd.f32 0.0, %v2288
      %2290 = vdwg.mxu0
      %2291 = vmatprep.subr.mxu0 %v321
      %2292 = vmatpush1.msra.mxu0 %v320
      %2293 = vmatprep.subr.mxu0 %v375
      %2294 = vmatpush1.msra.mxu0 %v374
      %2295 = vmatprep.subr.mxu0 %v429
      %2296 = vmatpush1.msra.mxu0 %v428
      %2297 = vmatprep.subr.mxu0 0.0
      %2298 = vmatpush1.msra.mxu0 0.0
      %2299 = vmatprep.subr.mxu0 0.0
      %2300 = vmatpush1.msra.mxu0 0.0
      %2301 = vmatprep.subr.mxu0 0.0
      %2302 = vmatpush1.msra.mxu0 0.0
      %2303 = vmatprep.subr.mxu0 0.0
      %2304 = vmatpush1.msra.mxu0 0.0
      %2305 = vmatprep.subr.mxu0 0.0
      %2306 = vmatpush1.msra.mxu0 0.0
      %2307 = vmatprep.subr.mxu0 0.0
      %2308 = vmatpush1.msra.mxu0 0.0
      %2309 = vmatprep.subr.mxu0 0.0
      %2310 = vmatpush1.msra.mxu0 0.0
      %2311 = vmatprep.subr.mxu0 0.0
      %2312 = vmatpush1.msra.mxu0 0.0
      %2313 = vmatprep.subr.mxu0 0.0
      %2314 = vmatpush1.msra.mxu0 0.0
      %2315 = vmatprep.subr.mxu0 0.0
      %2316 = vmatpush1.msra.mxu0 0.0
      %2317 = vmatprep.subr.mxu0 0.0
      %2318 = vmatpush1.msra.mxu0 0.0
      %2319 = vmatprep.subr.mxu0 0.0
      %2320 = vmatpush1.msra.mxu0 0.0
      %2321 = vmatprep.subr.mxu0 0.0
      %2322 = vmatpush1.msra.mxu0 0.0
      %2323 = vmatprep.subr.mxu0 0.0
      %2324 = vmatpush1.msra.mxu0 0.0
      %2325 = vmatprep.subr.mxu0 0.0
      %2326 = vmatpush1.msra.mxu0 0.0
      %2327 = vmatprep.subr.mxu0 0.0
      %2328 = vmatpush1.msra.mxu0 0.0
      %2329 = vmatprep.subr.mxu0 0.0
      %2330 = vmatpush1.msra.mxu0 0.0
      %2331 = vmatprep.subr.mxu0 0.0
      %2332 = vmatpush1.msra.mxu0 0.0
      %2333 = vmatprep.subr.mxu0 0.0
      %2334 = vmatpush1.msra.mxu0 0.0
      %2335 = vmatprep.subr.mxu0 0.0
      %2336 = vmatpush1.msra.mxu0 0.0
      %2337 = vmatprep.subr.mxu0 0.0
      %2338 = vmatpush1.msra.mxu0 0.0
      %2339 = vmatprep.subr.mxu0 0.0
      %2340 = vmatpush1.msra.mxu0 0.0
      %2341 = vmatprep.subr.mxu0 0.0
      %2342 = vmatpush1.msra.mxu0 0.0
      %2343 = vmatprep.subr.mxu0 0.0
      %2344 = vmatpush1.msra.mxu0 0.0
      %2345 = vmatprep.subr.mxu0 0.0
      %2346 = vmatpush1.msra.mxu0 0.0
      %2347 = vmatprep.subr.mxu0 0.0
      %2348 = vmatpush1.msra.mxu0 0.0
      %2349 = vmatprep.subr.mxu0 0.0
      %2350 = vmatpush1.msra.mxu0 0.0
      %2351 = vmatprep.subr.mxu0 0.0
      %2352 = vmatpush1.msra.mxu0 0.0
      %2353 = vmatprep.subr.mxu0 0.0
      %2354 = vmatpush1.msra.mxu0 0.0
      %2355 = vmatprep.mubr.f32.mxu0 0.0
      %2356 = vmatmul.mubr.f32.gmra.mrb[0].mxu0 %v438
      %v2357 = vpop.f32.mrb[0].mxu0
      %v2358 = vadd.f32 0.0, %v2357
      %v2359 = vpop.f32.mrb[0].mxu0
      %v2360 = vadd.f32 0.0, %v2359
      %2361 = vmatprep.mubr.f32.mxu0 0.0
      %2362 = vmatmul.mubr.f32.gmra.mrb[0].mxu0 %v441
      %v2363 = vpop.f32.mrb[0].mxu0
      %v2364 = vadd.f32 0.0, %v2363
      %v2365 = vpop.f32.mrb[0].mxu0
      %v2366 = vadd.f32 0.0, %v2365
      %2367 = vdwg.mxu0
      %2368 = vmatprep.subr.mxu0 %v323
      %2369 = vmatpush1.msra.mxu0 %v322
      %2370 = vmatprep.subr.mxu0 %v377
      %2371 = vmatpush1.msra.mxu0 %v376
      %2372 = vmatprep.subr.mxu0 %v431
      %2373 = vmatpush1.msra.mxu0 %v430
      %2374 = vmatprep.subr.mxu0 0.0
      %2375 = vmatpush1.msra.mxu0 0.0
      %2376 = vmatprep.subr.mxu0 0.0
      %2377 = vmatpush1.msra.mxu0 0.0
      %2378 = vmatprep.subr.mxu0 0.0
      %2379 = vmatpush1.msra.mxu0 0.0
      %2380 = vmatprep.subr.mxu0 0.0
      %2381 = vmatpush1.msra.mxu0 0.0
      %2382 = vmatprep.subr.mxu0 0.0
      %2383 = vmatpush1.msra.mxu0 0.0
      %2384 = vmatprep.subr.mxu0 0.0
      %2385 = vmatpush1.msra.mxu0 0.0
      %2386 = vmatprep.subr.mxu0 0.0
      %2387 = vmatpush1.msra.mxu0 0.0
      %2388 = vmatprep.subr.mxu0 0.0
      %2389 = vmatpush1.msra.mxu0 0.0
      %2390 = vmatprep.subr.mxu0 0.0
      %2391 = vmatpush1.msra.mxu0 0.0
      %2392 = vmatprep.subr.mxu0 0.0
      %2393 = vmatpush1.msra.mxu0 0.0
      %2394 = vmatprep.subr.mxu0 0.0
      %2395 = vmatpush1.msra.mxu0 0.0
      %2396 = vmatprep.subr.mxu0 0.0
      %2397 = vmatpush1.msra.mxu0 0.0
      %2398 = vmatprep.subr.mxu0 0.0
      %2399 = vmatpush1.msra.mxu0 0.0
      %2400 = vmatprep.subr.mxu0 0.0
      %2401 = vmatpush1.msra.mxu0 0.0
      %2402 = vmatprep.subr.mxu0 0.0
      %2403 = vmatpush1.msra.mxu0 0.0
      %2404 = vmatprep.subr.mxu0 0.0
      %2405 = vmatpush1.msra.mxu0 0.0
      %2406 = vmatprep.subr.mxu0 0.0
      %2407 = vmatpush1.msra.mxu0 0.0
      %2408 = vmatprep.subr.mxu0 0.0
      %2409 = vmatpush1.msra.mxu0 0.0
      %2410 = vmatprep.subr.mxu0 0.0
      %2411 = vmatpush1.msra.mxu0 0.0
      %2412 = vmatprep.subr.mxu0 0.0
      %2413 = vmatpush1.msra.mxu0 0.0
      %2414 = vmatprep.subr.mxu0 0.0
      %2415 = vmatpush1.msra.mxu0 0.0
      %2416 = vmatprep.subr.mxu0 0.0
      %2417 = vmatpush1.msra.mxu0 0.0
      %2418 = vmatprep.subr.mxu0 0.0
      %2419 = vmatpush1.msra.mxu0 0.0
      %2420 = vmatprep.subr.mxu0 0.0
      %2421 = vmatpush1.msra.mxu0 0.0
      %2422 = vmatprep.subr.mxu0 0.0
      %2423 = vmatpush1.msra.mxu0 0.0
      %2424 = vmatprep.subr.mxu0 0.0
      %2425 = vmatpush1.msra.mxu0 0.0
      %2426 = vmatprep.subr.mxu0 0.0
      %2427 = vmatpush1.msra.mxu0 0.0
      %2428 = vmatprep.subr.mxu0 0.0
      %2429 = vmatpush1.msra.mxu0 0.0
      %2430 = vmatprep.subr.mxu0 0.0
      %2431 = vmatpush1.msra.mxu0 0.0
      %2432 = vmatprep.mubr.f32.mxu0 0.0
      %2433 = vmatmul.mubr.f32.gmra.mrb[0].mxu0 %v438
      %v2434 = vpop.f32.mrb[0].mxu0
      %v2435 = vadd.f32 0.0, %v2434
      %v2436 = vpop.f32.mrb[0].mxu0
      %v2437 = vadd.f32 0.0, %v2436
      %2438 = vmatprep.mubr.f32.mxu0 0.0
      %2439 = vmatmul.mubr.f32.gmra.mrb[0].mxu0 %v441
      %v2440 = vpop.f32.mrb[0].mxu0
      %v2441 = vadd.f32 0.0, %v2440
      %v2442 = vpop.f32.mrb[0].mxu0
      %v2443 = vadd.f32 0.0, %v2442
      %2444 = vdwg.mxu0
      %2445 = vmatprep.subr.mxu0 %v325
      %2446 = vmatpush1.msra.mxu0 %v324
      %2447 = vmatprep.subr.mxu0 %v379
      %2448 = vmatpush1.msra.mxu0 %v378
      %2449 = vmatprep.subr.mxu0 %v433
      %2450 = vmatpush1.msra.mxu0 %v432
      %2451 = vmatprep.subr.mxu0 0.0
      %2452 = vmatpush1.msra.mxu0 0.0
      %2453 = vmatprep.subr.mxu0 0.0
      %2454 = vmatpush1.msra.mxu0 0.0
      %2455 = vmatprep.subr.mxu0 0.0
      %2456 = vmatpush1.msra.mxu0 0.0
      %2457 = vmatprep.subr.mxu0 0.0
      %2458 = vmatpush1.msra.mxu0 0.0
      %2459 = vmatprep.subr.mxu0 0.0
      %2460 = vmatpush1.msra.mxu0 0.0
      %2461 = vmatprep.subr.mxu0 0.0
      %2462 = vmatpush1.msra.mxu0 0.0
      %2463 = vmatprep.subr.mxu0 0.0
      %2464 = vmatpush1.msra.mxu0 0.0
      %2465 = vmatprep.subr.mxu0 0.0
      %2466 = vmatpush1.msra.mxu0 0.0
      %2467 = vmatprep.subr.mxu0 0.0
      %2468 = vmatpush1.msra.mxu0 0.0
      %2469 = vmatprep.subr.mxu0 0.0
      %2470 = vmatpush1.msra.mxu0 0.0
      %2471 = vmatprep.subr.mxu0 0.0
      %2472 = vmatpush1.msra.mxu0 0.0
      %2473 = vmatprep.subr.mxu0 0.0
      %2474 = vmatpush1.msra.mxu0 0.0
      %2475 = vmatprep.subr.mxu0 0.0
      %2476 = vmatpush1.msra.mxu0 0.0
      %2477 = vmatprep.subr.mxu0 0.0
      %2478 = vmatpush1.msra.mxu0 0.0
      %2479 = vmatprep.subr.mxu0 0.0
      %2480 = vmatpush1.msra.mxu0 0.0
      %2481 = vmatprep.subr.mxu0 0.0
      %2482 = vmatpush1.msra.mxu0 0.0
      %2483 = vmatprep.subr.mxu0 0.0
      %2484 = vmatpush1.msra.mxu0 0.0
      %2485 = vmatprep.subr.mxu0 0.0
      %2486 = vmatpush1.msra.mxu0 0.0
      %2487 = vmatprep.subr.mxu0 0.0
      %2488 = vmatpush1.msra.mxu0 0.0
      %2489 = vmatprep.subr.mxu0 0.0
      %2490 = vmatpush1.msra.mxu0 0.0
      %2491 = vmatprep.subr.mxu0 0.0
      %2492 = vmatpush1.msra.mxu0 0.0
      %2493 = vmatprep.subr.mxu0 0.0
      %2494 = vmatpush1.msra.mxu0 0.0
      %2495 = vmatprep.subr.mxu0 0.0
      %2496 = vmatpush1.msra.mxu0 0.0
      %2497 = vmatprep.subr.mxu0 0.0
      %2498 = vmatpush1.msra.mxu0 0.0
      %2499 = vmatprep.subr.mxu0 0.0
      %2500 = vmatpush1.msra.mxu0 0.0
      %2501 = vmatprep.subr.mxu0 0.0
      %2502 = vmatpush1.msra.mxu0 0.0
      %2503 = vmatprep.subr.mxu0 0.0
      %2504 = vmatpush1.msra.mxu0 0.0
      %2505 = vmatprep.subr.mxu0 0.0
      %2506 = vmatpush1.msra.mxu0 0.0
      %2507 = vmatprep.subr.mxu0 0.0
      %2508 = vmatpush1.msra.mxu0 0.0
      %2509 = vmatprep.mubr.f32.mxu0 0.0
      %2510 = vmatmul.mubr.f32.gmra.mrb[0].mxu0 %v438
      %v2511 = vpop.f32.mrb[0].mxu0
      %v2512 = vadd.f32 0.0, %v2511
      %v2513 = vpop.f32.mrb[0].mxu0
      %v2514 = vadd.f32 0.0, %v2513
      %2515 = vmatprep.mubr.f32.mxu0 0.0
      %2516 = vmatmul.mubr.f32.gmra.mrb[0].mxu0 %v441
      %v2517 = vpop.f32.mrb[0].mxu0
      %v2518 = vadd.f32 0.0, %v2517
      %v2519 = vpop.f32.mrb[0].mxu0
      %v2520 = vadd.f32 0.0, %v2519
      %2521 = vdwg.mxu0
      %v2522 = vld [vmem:[%s180] sm:$0x77]
      %v2523 = vld [vmem:[%s180 + $0x8] sm:$0x77]
      %v2524 = vld [vmem:[%s180 + $0x10] sm:$0x77]
      %v2525 = vld [vmem:[%s180 + $0x18] sm:$0x77]
      %v2526 = vld [vmem:[%s180 + $0x20] sm:$0x77]
      %v2527 = vld [vmem:[%s180 + $0x28] sm:$0x77]
      %v2528 = vld [vmem:[%s180 + $0x30] sm:$0x77]
      %v2529 = vld [vmem:[%s180 + $0x38] sm:$0x77]
      %v2530 = vld [vmem:[%s180 + $0x40] sm:$0x77]
      %v2531 = vld [vmem:[%s180 + $0x48] sm:$0x77]
      %v2532 = vld [vmem:[%s180 + $0x50] sm:$0x77]
      %v2533 = vld [vmem:[%s180 + $0x58] sm:$0x77]
      %v2534 = vld [vmem:[%s180 + $0x60] sm:$0x77]
      %v2535 = vld [vmem:[%s180 + $0x68] sm:$0x77]
      %v2536 = vld [vmem:[%s180 + $0x70] sm:$0x77]
      %v2537 = vld [vmem:[%s180 + $0x78] sm:$0x77]
      %v2538 = vld [vmem:[%s180 + $0x80] sm:$0x77]
      %v2539 = vld [vmem:[%s180 + $0x88] sm:$0x77]
      %v2540 = vld [vmem:[%s180 + $0x90] sm:$0x77]
      %v2541 = vld [vmem:[%s180 + $0x98] sm:$0x77]
      %v2542 = vld [vmem:[%s180 + $0xa0] sm:$0x77]
      %v2543 = vld [vmem:[%s180 + $0xa8] sm:$0x77]
      %v2544 = vld [vmem:[%s180 + $0xb0] sm:$0x77]
      %v2545 = vld [vmem:[%s180 + $0xb8] sm:$0x77]
      %v2546 = vld [vmem:[%s180 + $0xc0] sm:$0x77]
      %v2547 = vld [vmem:[%s180 + $0xc8] sm:$0x77]
      %v2548 = vld [vmem:[%s180 + $0xd0] sm:$0x77]
      %v2576 = vlaneseq
      %v2577 = vshrl.u32 %v2576, 7
      %v2578 = vsub.s32 0, %v2577
      %v2579 = vrot.slane %v2522, %v2578
      %v2580 = vlaneseq
      %v2581 = vshrl.u32 %v2580, 7
      %v2582 = vsub.s32 4, %v2581
      %v2583 = vrot.slane %v2522, %v2582
      %v2584 = vlaneseq
      %v2585 = vshrl.u32 %v2584, 7
      %v2586 = vsub.s32 0, %v2585
      %v2587 = vrot.slane %v2523, %v2586
      %v2588 = vlaneseq
      %v2589 = vshrl.u32 %v2588, 7
      %v2590 = vsub.s32 4, %v2589
      %v2591 = vrot.slane %v2523, %v2590
      %v2592 = vlaneseq
      %v2593 = vshrl.u32 %v2592, 7
      %v2594 = vsub.s32 0, %v2593
      %v2595 = vrot.slane %v2524, %v2594
      %v2596 = vlaneseq
      %v2597 = vshrl.u32 %v2596, 7
      %v2598 = vsub.s32 4, %v2597
      %v2599 = vrot.slane %v2524, %v2598
      %v2600 = vlaneseq
      %v2601 = vshrl.u32 %v2600, 7
      %v2602 = vsub.s32 0, %v2601
      %v2603 = vrot.slane %v2525, %v2602
      %v2604 = vlaneseq
      %v2605 = vshrl.u32 %v2604, 7
      %v2606 = vsub.s32 4, %v2605
      %v2607 = vrot.slane %v2525, %v2606
      %v2608 = vlaneseq
      %v2609 = vshrl.u32 %v2608, 7
      %v2610 = vsub.s32 0, %v2609
      %v2611 = vrot.slane %v2526, %v2610
      %v2612 = vlaneseq
      %v2613 = vshrl.u32 %v2612, 7
      %v2614 = vsub.s32 4, %v2613
      %v2615 = vrot.slane %v2526, %v2614
      %v2616 = vlaneseq
      %v2617 = vshrl.u32 %v2616, 7
      %v2618 = vsub.s32 0, %v2617
      %v2619 = vrot.slane %v2527, %v2618
      %v2620 = vlaneseq
      %v2621 = vshrl.u32 %v2620, 7
      %v2622 = vsub.s32 4, %v2621
      %v2623 = vrot.slane %v2527, %v2622
      %v2624 = vlaneseq
      %v2625 = vshrl.u32 %v2624, 7
      %v2626 = vsub.s32 0, %v2625
      %v2627 = vrot.slane %v2528, %v2626
      %v2628 = vlaneseq
      %v2629 = vshrl.u32 %v2628, 7
      %v2630 = vsub.s32 4, %v2629
      %v2631 = vrot.slane %v2528, %v2630
      %v2632 = vlaneseq
      %v2633 = vshrl.u32 %v2632, 7
      %v2634 = vsub.s32 0, %v2633
      %v2635 = vrot.slane %v2529, %v2634
      %v2636 = vlaneseq
      %v2637 = vshrl.u32 %v2636, 7
      %v2638 = vsub.s32 4, %v2637
      %v2639 = vrot.slane %v2529, %v2638
      %v2640 = vlaneseq
      %v2641 = vshrl.u32 %v2640, 7
      %v2642 = vsub.s32 0, %v2641
      %v2643 = vrot.slane %v2530, %v2642
      %v2644 = vlaneseq
      %v2645 = vshrl.u32 %v2644, 7
      %v2646 = vsub.s32 4, %v2645
      %v2647 = vrot.slane %v2530, %v2646
      %v2648 = vlaneseq
      %v2649 = vshrl.u32 %v2648, 7
      %v2650 = vsub.s32 0, %v2649
      %v2651 = vrot.slane %v2531, %v2650
      %v2652 = vlaneseq
      %v2653 = vshrl.u32 %v2652, 7
      %v2654 = vsub.s32 4, %v2653
      %v2655 = vrot.slane %v2531, %v2654
      %v2656 = vlaneseq
      %v2657 = vshrl.u32 %v2656, 7
      %v2658 = vsub.s32 0, %v2657
      %v2659 = vrot.slane %v2532, %v2658
      %v2660 = vlaneseq
      %v2661 = vshrl.u32 %v2660, 7
      %v2662 = vsub.s32 4, %v2661
      %v2663 = vrot.slane %v2532, %v2662
      %v2664 = vlaneseq
      %v2665 = vshrl.u32 %v2664, 7
      %v2666 = vsub.s32 0, %v2665
      %v2667 = vrot.slane %v2533, %v2666
      %v2668 = vlaneseq
      %v2669 = vshrl.u32 %v2668, 7
      %v2670 = vsub.s32 4, %v2669
      %v2671 = vrot.slane %v2533, %v2670
      %v2672 = vlaneseq
      %v2673 = vshrl.u32 %v2672, 7
      %v2674 = vsub.s32 0, %v2673
      %v2675 = vrot.slane %v2534, %v2674
      %v2676 = vlaneseq
      %v2677 = vshrl.u32 %v2676, 7
      %v2678 = vsub.s32 4, %v2677
      %v2679 = vrot.slane %v2534, %v2678
      %v2680 = vlaneseq
      %v2681 = vshrl.u32 %v2680, 7
      %v2682 = vsub.s32 0, %v2681
      %v2683 = vrot.slane %v2535, %v2682
      %v2684 = vlaneseq
      %v2685 = vshrl.u32 %v2684, 7
      %v2686 = vsub.s32 4, %v2685
      %v2687 = vrot.slane %v2535, %v2686
      %v2688 = vlaneseq
      %v2689 = vshrl.u32 %v2688, 7
      %v2690 = vsub.s32 0, %v2689
      %v2691 = vrot.slane %v2536, %v2690
      %v2692 = vlaneseq
      %v2693 = vshrl.u32 %v2692, 7
      %v2694 = vsub.s32 4, %v2693
      %v2695 = vrot.slane %v2536, %v2694
      %v2696 = vlaneseq
      %v2697 = vshrl.u32 %v2696, 7
      %v2698 = vsub.s32 0, %v2697
      %v2699 = vrot.slane %v2537, %v2698
      %v2700 = vlaneseq
      %v2701 = vshrl.u32 %v2700, 7
      %v2702 = vsub.s32 4, %v2701
      %v2703 = vrot.slane %v2537, %v2702
      %v2704 = vlaneseq
      %v2705 = vshrl.u32 %v2704, 7
      %v2706 = vsub.s32 0, %v2705
      %v2707 = vrot.slane %v2538, %v2706
      %v2708 = vlaneseq
      %v2709 = vshrl.u32 %v2708, 7
      %v2710 = vsub.s32 4, %v2709
      %v2711 = vrot.slane %v2538, %v2710
      %v2712 = vlaneseq
      %v2713 = vshrl.u32 %v2712, 7
      %v2714 = vsub.s32 0, %v2713
      %v2715 = vrot.slane %v2539, %v2714
      %v2716 = vlaneseq
      %v2717 = vshrl.u32 %v2716, 7
      %v2718 = vsub.s32 4, %v2717
      %v2719 = vrot.slane %v2539, %v2718
      %v2720 = vlaneseq
      %v2721 = vshrl.u32 %v2720, 7
      %v2722 = vsub.s32 0, %v2721
      %v2723 = vrot.slane %v2540, %v2722
      %v2724 = vlaneseq
      %v2725 = vshrl.u32 %v2724, 7
      %v2726 = vsub.s32 4, %v2725
      %v2727 = vrot.slane %v2540, %v2726
      %v2728 = vlaneseq
      %v2729 = vshrl.u32 %v2728, 7
      %v2730 = vsub.s32 0, %v2729
      %v2731 = vrot.slane %v2541, %v2730
      %v2732 = vlaneseq
      %v2733 = vshrl.u32 %v2732, 7
      %v2734 = vsub.s32 4, %v2733
      %v2735 = vrot.slane %v2541, %v2734
      %v2736 = vlaneseq
      %v2737 = vshrl.u32 %v2736, 7
      %v2738 = vsub.s32 0, %v2737
      %v2739 = vrot.slane %v2542, %v2738
      %v2740 = vlaneseq
      %v2741 = vshrl.u32 %v2740, 7
      %v2742 = vsub.s32 4, %v2741
      %v2743 = vrot.slane %v2542, %v2742
      %v2744 = vlaneseq
      %v2745 = vshrl.u32 %v2744, 7
      %v2746 = vsub.s32 0, %v2745
      %v2747 = vrot.slane %v2543, %v2746
      %v2748 = vlaneseq
      %v2749 = vshrl.u32 %v2748, 7
      %v2750 = vsub.s32 4, %v2749
      %v2751 = vrot.slane %v2543, %v2750
      %v2752 = vlaneseq
      %v2753 = vshrl.u32 %v2752, 7
      %v2754 = vsub.s32 0, %v2753
      %v2755 = vrot.slane %v2544, %v2754
      %v2756 = vlaneseq
      %v2757 = vshrl.u32 %v2756, 7
      %v2758 = vsub.s32 4, %v2757
      %v2759 = vrot.slane %v2544, %v2758
      %v2760 = vlaneseq
      %v2761 = vshrl.u32 %v2760, 7
      %v2762 = vsub.s32 0, %v2761
      %v2763 = vrot.slane %v2545, %v2762
      %v2764 = vlaneseq
      %v2765 = vshrl.u32 %v2764, 7
      %v2766 = vsub.s32 4, %v2765
      %v2767 = vrot.slane %v2545, %v2766
      %v2768 = vlaneseq
      %v2769 = vshrl.u32 %v2768, 7
      %v2770 = vsub.s32 0, %v2769
      %v2771 = vrot.slane %v2546, %v2770
      %v2772 = vlaneseq
      %v2773 = vshrl.u32 %v2772, 7
      %v2774 = vsub.s32 4, %v2773
      %v2775 = vrot.slane %v2546, %v2774
      %v2776 = vlaneseq
      %v2777 = vshrl.u32 %v2776, 7
      %v2778 = vsub.s32 0, %v2777
      %v2779 = vrot.slane %v2547, %v2778
      %v2780 = vlaneseq
      %v2781 = vshrl.u32 %v2780, 7
      %v2782 = vsub.s32 4, %v2781
      %v2783 = vrot.slane %v2547, %v2782
      %v2784 = vlaneseq
      %v2785 = vshrl.u32 %v2784, 7
      %v2786 = vsub.s32 0, %v2785
      %v2787 = vrot.slane %v2548, %v2786
      %v2788 = vlaneseq
      %v2789 = vshrl.u32 %v2788, 7
      %v2790 = vsub.s32 4, %v2789
      %v2791 = vrot.slane %v2548, %v2790
      %v2846 = vmul.f32 %v510, %v2579
      %v2847 = vmul.f32 %v512, %v2583
      %v2848 = vmul.f32 %v587, %v2587
      %v2849 = vmul.f32 %v589, %v2591
      %v2850 = vmul.f32 %v664, %v2595
      %v2851 = vmul.f32 %v666, %v2599
      %v2852 = vmul.f32 %v741, %v2603
      %v2853 = vmul.f32 %v743, %v2607
      %v2854 = vmul.f32 %v818, %v2611
      %v2855 = vmul.f32 %v820, %v2615
      %v2856 = vmul.f32 %v895, %v2619
      %v2857 = vmul.f32 %v897, %v2623
      %v2858 = vmul.f32 %v972, %v2627
      %v2859 = vmul.f32 %v974, %v2631
      %v2860 = vmul.f32 %v1049, %v2635
      %v2861 = vmul.f32 %v1051, %v2639
      %v2862 = vmul.f32 %v1126, %v2643
      %v2863 = vmul.f32 %v1128, %v2647
      %v2864 = vmul.f32 %v1203, %v2651
      %v2865 = vmul.f32 %v1205, %v2655
      %v2866 = vmul.f32 %v1280, %v2659
      %v2867 = vmul.f32 %v1282, %v2663
      %v2868 = vmul.f32 %v1357, %v2667
      %v2869 = vmul.f32 %v1359, %v2671
      %v2870 = vmul.f32 %v1434, %v2675
      %v2871 = vmul.f32 %v1436, %v2679
      %v2872 = vmul.f32 %v1511, %v2683
      %v2873 = vmul.f32 %v1513, %v2687
      %v2874 = vmul.f32 %v1588, %v2691
      %v2875 = vmul.f32 %v1590, %v2695
      %v2876 = vmul.f32 %v1665, %v2699
      %v2877 = vmul.f32 %v1667, %v2703
      %v2878 = vmul.f32 %v1742, %v2707
      %v2879 = vmul.f32 %v1744, %v2711
      %v2880 = vmul.f32 %v1819, %v2715
      %v2881 = vmul.f32 %v1821, %v2719
      %v2882 = vmul.f32 %v1896, %v2723
      %v2883 = vmul.f32 %v1898, %v2727
      %v2884 = vmul.f32 %v1973, %v2731
      %v2885 = vmul.f32 %v1975, %v2735
      %v2886 = vmul.f32 %v2050, %v2739
      %v2887 = vmul.f32 %v2052, %v2743
      %v2888 = vmul.f32 %v2127, %v2747
      %v2889 = vmul.f32 %v2129, %v2751
      %v2890 = vmul.f32 %v2204, %v2755
      %v2891 = vmul.f32 %v2206, %v2759
      %v2892 = vmul.f32 %v2281, %v2763
      %v2893 = vmul.f32 %v2283, %v2767
      %v2894 = vmul.f32 %v2358, %v2771
      %v2895 = vmul.f32 %v2360, %v2775
      %v2896 = vmul.f32 %v2435, %v2779
      %v2897 = vmul.f32 %v2437, %v2783
      %v2898 = vmul.f32 %v2512, %v2787
      %v2899 = vmul.f32 %v2514, %v2791
      %v2900 = vlaneseq
      %v2901 = vshrl.u32 %v2900, 7
      %v2902 = vsub.s32 1, %v2901
      %v2903 = vrot.slane %v2522, %v2902
      %v2904 = vlaneseq
      %v2905 = vshrl.u32 %v2904, 7
      %v2906 = vsub.s32 5, %v2905
      %v2907 = vrot.slane %v2522, %v2906
      %v2908 = vlaneseq
      %v2909 = vshrl.u32 %v2908, 7
      %v2910 = vsub.s32 1, %v2909
      %v2911 = vrot.slane %v2523, %v2910
      %v2912 = vlaneseq
      %v2913 = vshrl.u32 %v2912, 7
      %v2914 = vsub.s32 5, %v2913
      %v2915 = vrot.slane %v2523, %v2914
      %v2916 = vlaneseq
      %v2917 = vshrl.u32 %v2916, 7
      %v2918 = vsub.s32 1, %v2917
      %v2919 = vrot.slane %v2524, %v2918
      %v2920 = vlaneseq
      %v2921 = vshrl.u32 %v2920, 7
      %v2922 = vsub.s32 5, %v2921
      %v2923 = vrot.slane %v2524, %v2922
      %v2924 = vlaneseq
      %v2925 = vshrl.u32 %v2924, 7
      %v2926 = vsub.s32 1, %v2925
      %v2927 = vrot.slane %v2525, %v2926
      %v2928 = vlaneseq
      %v2929 = vshrl.u32 %v2928, 7
      %v2930 = vsub.s32 5, %v2929
      %v2931 = vrot.slane %v2525, %v2930
      %v2932 = vlaneseq
      %v2933 = vshrl.u32 %v2932, 7
      %v2934 = vsub.s32 1, %v2933
      %v2935 = vrot.slane %v2526, %v2934
      %v2936 = vlaneseq
      %v2937 = vshrl.u32 %v2936, 7
      %v2938 = vsub.s32 5, %v2937
      %v2939 = vrot.slane %v2526, %v2938
      %v2940 = vlaneseq
      %v2941 = vshrl.u32 %v2940, 7
      %v2942 = vsub.s32 1, %v2941
      %v2943 = vrot.slane %v2527, %v2942
      %v2944 = vlaneseq
      %v2945 = vshrl.u32 %v2944, 7
      %v2946 = vsub.s32 5, %v2945
      %v2947 = vrot.slane %v2527, %v2946
      %v2948 = vlaneseq
      %v2949 = vshrl.u32 %v2948, 7
      %v2950 = vsub.s32 1, %v2949
      %v2951 = vrot.slane %v2528, %v2950
      %v2952 = vlaneseq
      %v2953 = vshrl.u32 %v2952, 7
      %v2954 = vsub.s32 5, %v2953
      %v2955 = vrot.slane %v2528, %v2954
      %v2956 = vlaneseq
      %v2957 = vshrl.u32 %v2956, 7
      %v2958 = vsub.s32 1, %v2957
      %v2959 = vrot.slane %v2529, %v2958
      %v2960 = vlaneseq
      %v2961 = vshrl.u32 %v2960, 7
      %v2962 = vsub.s32 5, %v2961
      %v2963 = vrot.slane %v2529, %v2962
      %v2964 = vlaneseq
      %v2965 = vshrl.u32 %v2964, 7
      %v2966 = vsub.s32 1, %v2965
      %v2967 = vrot.slane %v2530, %v2966
      %v2968 = vlaneseq
      %v2969 = vshrl.u32 %v2968, 7
      %v2970 = vsub.s32 5, %v2969
      %v2971 = vrot.slane %v2530, %v2970
      %v2972 = vlaneseq
      %v2973 = vshrl.u32 %v2972, 7
      %v2974 = vsub.s32 1, %v2973
      %v2975 = vrot.slane %v2531, %v2974
      %v2976 = vlaneseq
      %v2977 = vshrl.u32 %v2976, 7
      %v2978 = vsub.s32 5, %v2977
      %v2979 = vrot.slane %v2531, %v2978
      %v2980 = vlaneseq
      %v2981 = vshrl.u32 %v2980, 7
      %v2982 = vsub.s32 1, %v2981
      %v2983 = vrot.slane %v2532, %v2982
      %v2984 = vlaneseq
      %v2985 = vshrl.u32 %v2984, 7
      %v2986 = vsub.s32 5, %v2985
      %v2987 = vrot.slane %v2532, %v2986
      %v2988 = vlaneseq
      %v2989 = vshrl.u32 %v2988, 7
      %v2990 = vsub.s32 1, %v2989
      %v2991 = vrot.slane %v2533, %v2990
      %v2992 = vlaneseq
      %v2993 = vshrl.u32 %v2992, 7
      %v2994 = vsub.s32 5, %v2993
      %v2995 = vrot.slane %v2533, %v2994
      %v2996 = vlaneseq
      %v2997 = vshrl.u32 %v2996, 7
      %v2998 = vsub.s32 1, %v2997
      %v2999 = vrot.slane %v2534, %v2998
      %v3000 = vlaneseq
      %v3001 = vshrl.u32 %v3000, 7
      %v3002 = vsub.s32 5, %v3001
      %v3003 = vrot.slane %v2534, %v3002
      %v3004 = vlaneseq
      %v3005 = vshrl.u32 %v3004, 7
      %v3006 = vsub.s32 1, %v3005
      %v3007 = vrot.slane %v2535, %v3006
      %v3008 = vlaneseq
      %v3009 = vshrl.u32 %v3008, 7
      %v3010 = vsub.s32 5, %v3009
      %v3011 = vrot.slane %v2535, %v3010
      %v3012 = vlaneseq
      %v3013 = vshrl.u32 %v3012, 7
      %v3014 = vsub.s32 1, %v3013
      %v3015 = vrot.slane %v2536, %v3014
      %v3016 = vlaneseq
      %v3017 = vshrl.u32 %v3016, 7
      %v3018 = vsub.s32 5, %v3017
      %v3019 = vrot.slane %v2536, %v3018
      %v3020 = vlaneseq
      %v3021 = vshrl.u32 %v3020, 7
      %v3022 = vsub.s32 1, %v3021
      %v3023 = vrot.slane %v2537, %v3022
      %v3024 = vlaneseq
      %v3025 = vshrl.u32 %v3024, 7
      %v3026 = vsub.s32 5, %v3025
      %v3027 = vrot.slane %v2537, %v3026
      %v3028 = vlaneseq
      %v3029 = vshrl.u32 %v3028, 7
      %v3030 = vsub.s32 1, %v3029
      %v3031 = vrot.slane %v2538, %v3030
      %v3032 = vlaneseq
      %v3033 = vshrl.u32 %v3032, 7
      %v3034 = vsub.s32 5, %v3033
      %v3035 = vrot.slane %v2538, %v3034
      %v3036 = vlaneseq
      %v3037 = vshrl.u32 %v3036, 7
      %v3038 = vsub.s32 1, %v3037
      %v3039 = vrot.slane %v2539, %v3038
      %v3040 = vlaneseq
      %v3041 = vshrl.u32 %v3040, 7
      %v3042 = vsub.s32 5, %v3041
      %v3043 = vrot.slane %v2539, %v3042
      %v3044 = vlaneseq
      %v3045 = vshrl.u32 %v3044, 7
      %v3046 = vsub.s32 1, %v3045
      %v3047 = vrot.slane %v2540, %v3046
      %v3048 = vlaneseq
      %v3049 = vshrl.u32 %v3048, 7
      %v3050 = vsub.s32 5, %v3049
      %v3051 = vrot.slane %v2540, %v3050
      %v3052 = vlaneseq
      %v3053 = vshrl.u32 %v3052, 7
      %v3054 = vsub.s32 1, %v3053
      %v3055 = vrot.slane %v2541, %v3054
      %v3056 = vlaneseq
      %v3057 = vshrl.u32 %v3056, 7
      %v3058 = vsub.s32 5, %v3057
      %v3059 = vrot.slane %v2541, %v3058
      %v3060 = vlaneseq
      %v3061 = vshrl.u32 %v3060, 7
      %v3062 = vsub.s32 1, %v3061
      %v3063 = vrot.slane %v2542, %v3062
      %v3064 = vlaneseq
      %v3065 = vshrl.u32 %v3064, 7
      %v3066 = vsub.s32 5, %v3065
      %v3067 = vrot.slane %v2542, %v3066
      %v3068 = vlaneseq
      %v3069 = vshrl.u32 %v3068, 7
      %v3070 = vsub.s32 1, %v3069
      %v3071 = vrot.slane %v2543, %v3070
      %v3072 = vlaneseq
      %v3073 = vshrl.u32 %v3072, 7
      %v3074 = vsub.s32 5, %v3073
      %v3075 = vrot.slane %v2543, %v3074
      %v3076 = vlaneseq
      %v3077 = vshrl.u32 %v3076, 7
      %v3078 = vsub.s32 1, %v3077
      %v3079 = vrot.slane %v2544, %v3078
      %v3080 = vlaneseq
      %v3081 = vshrl.u32 %v3080, 7
      %v3082 = vsub.s32 5, %v3081
      %v3083 = vrot.slane %v2544, %v3082
      %v3084 = vlaneseq
      %v3085 = vshrl.u32 %v3084, 7
      %v3086 = vsub.s32 1, %v3085
      %v3087 = vrot.slane %v2545, %v3086
      %v3088 = vlaneseq
      %v3089 = vshrl.u32 %v3088, 7
      %v3090 = vsub.s32 5, %v3089
      %v3091 = vrot.slane %v2545, %v3090
      %v3092 = vlaneseq
      %v3093 = vshrl.u32 %v3092, 7
      %v3094 = vsub.s32 1, %v3093
      %v3095 = vrot.slane %v2546, %v3094
      %v3096 = vlaneseq
      %v3097 = vshrl.u32 %v3096, 7
      %v3098 = vsub.s32 5, %v3097
      %v3099 = vrot.slane %v2546, %v3098
      %v3100 = vlaneseq
      %v3101 = vshrl.u32 %v3100, 7
      %v3102 = vsub.s32 1, %v3101
      %v3103 = vrot.slane %v2547, %v3102
      %v3104 = vlaneseq
      %v3105 = vshrl.u32 %v3104, 7
      %v3106 = vsub.s32 5, %v3105
      %v3107 = vrot.slane %v2547, %v3106
      %v3108 = vlaneseq
      %v3109 = vshrl.u32 %v3108, 7
      %v3110 = vsub.s32 1, %v3109
      %v3111 = vrot.slane %v2548, %v3110
      %v3112 = vlaneseq
      %v3113 = vshrl.u32 %v3112, 7
      %v3114 = vsub.s32 5, %v3113
      %v3115 = vrot.slane %v2548, %v3114
      %v3170 = vmul.f32 %v510, %v2903
      %v3171 = vmul.f32 %v512, %v2907
      %v3172 = vmul.f32 %v587, %v2911
      %v3173 = vmul.f32 %v589, %v2915
      %v3174 = vmul.f32 %v664, %v2919
      %v3175 = vmul.f32 %v666, %v2923
      %v3176 = vmul.f32 %v741, %v2927
      %v3177 = vmul.f32 %v743, %v2931
      %v3178 = vmul.f32 %v818, %v2935
      %v3179 = vmul.f32 %v820, %v2939
      %v3180 = vmul.f32 %v895, %v2943
      %v3181 = vmul.f32 %v897, %v2947
      %v3182 = vmul.f32 %v972, %v2951
      %v3183 = vmul.f32 %v974, %v2955
      %v3184 = vmul.f32 %v1049, %v2959
      %v3185 = vmul.f32 %v1051, %v2963
      %v3186 = vmul.f32 %v1126, %v2967
      %v3187 = vmul.f32 %v1128, %v2971
      %v3188 = vmul.f32 %v1203, %v2975
      %v3189 = vmul.f32 %v1205, %v2979
      %v3190 = vmul.f32 %v1280, %v2983
      %v3191 = vmul.f32 %v1282, %v2987
      %v3192 = vmul.f32 %v1357, %v2991
      %v3193 = vmul.f32 %v1359, %v2995
      %v3194 = vmul.f32 %v1434, %v2999
      %v3195 = vmul.f32 %v1436, %v3003
      %v3196 = vmul.f32 %v1511, %v3007
      %v3197 = vmul.f32 %v1513, %v3011
      %v3198 = vmul.f32 %v1588, %v3015
      %v3199 = vmul.f32 %v1590, %v3019
      %v3200 = vmul.f32 %v1665, %v3023
      %v3201 = vmul.f32 %v1667, %v3027
      %v3202 = vmul.f32 %v1742, %v3031
      %v3203 = vmul.f32 %v1744, %v3035
      %v3204 = vmul.f32 %v1819, %v3039
      %v3205 = vmul.f32 %v1821, %v3043
      %v3206 = vmul.f32 %v1896, %v3047
      %v3207 = vmul.f32 %v1898, %v3051
      %v3208 = vmul.f32 %v1973, %v3055
      %v3209 = vmul.f32 %v1975, %v3059
      %v3210 = vmul.f32 %v2050, %v3063
      %v3211 = vmul.f32 %v2052, %v3067
      %v3212 = vmul.f32 %v2127, %v3071
      %v3213 = vmul.f32 %v2129, %v3075
      %v3214 = vmul.f32 %v2204, %v3079
      %v3215 = vmul.f32 %v2206, %v3083
      %v3216 = vmul.f32 %v2281, %v3087
      %v3217 = vmul.f32 %v2283, %v3091
      %v3218 = vmul.f32 %v2358, %v3095
      %v3219 = vmul.f32 %v2360, %v3099
      %v3220 = vmul.f32 %v2435, %v3103
      %v3221 = vmul.f32 %v2437, %v3107
      %v3222 = vmul.f32 %v2512, %v3111
      %v3223 = vmul.f32 %v2514, %v3115
      %v3278 = vrot.slane %v3170, 1
      %v3279 = vrot.slane %v3171, 1
      %v3280 = vrot.slane %v3172, 1
      %v3281 = vrot.slane %v3173, 1
      %v3282 = vrot.slane %v3174, 1
      %v3283 = vrot.slane %v3175, 1
      %v3284 = vrot.slane %v3176, 1
      %v3285 = vrot.slane %v3177, 1
      %v3286 = vrot.slane %v3178, 1
      %v3287 = vrot.slane %v3179, 1
      %v3288 = vrot.slane %v3180, 1
      %v3289 = vrot.slane %v3181, 1
      %v3290 = vrot.slane %v3182, 1
      %v3291 = vrot.slane %v3183, 1
      %v3292 = vrot.slane %v3184, 1
      %v3293 = vrot.slane %v3185, 1
      %v3294 = vrot.slane %v3186, 1
      %v3295 = vrot.slane %v3187, 1
      %v3296 = vrot.slane %v3188, 1
      %v3297 = vrot.slane %v3189, 1
      %v3298 = vrot.slane %v3190, 1
      %v3299 = vrot.slane %v3191, 1
      %v3300 = vrot.slane %v3192, 1
      %v3301 = vrot.slane %v3193, 1
      %v3302 = vrot.slane %v3194, 1
      %v3303 = vrot.slane %v3195, 1
      %v3304 = vrot.slane %v3196, 1
      %v3305 = vrot.slane %v3197, 1
      %v3306 = vrot.slane %v3198, 1
      %v3307 = vrot.slane %v3199, 1
      %v3308 = vrot.slane %v3200, 1
      %v3309 = vrot.slane %v3201, 1
      %v3310 = vrot.slane %v3202, 1
      %v3311 = vrot.slane %v3203, 1
      %v3312 = vrot.slane %v3204, 1
      %v3313 = vrot.slane %v3205, 1
      %v3314 = vrot.slane %v3206, 1
      %v3315 = vrot.slane %v3207, 1
      %v3316 = vrot.slane %v3208, 1
      %v3317 = vrot.slane %v3209, 1
      %v3318 = vrot.slane %v3210, 1
      %v3319 = vrot.slane %v3211, 1
      %v3320 = vrot.slane %v3212, 1
      %v3321 = vrot.slane %v3213, 1
      %v3322 = vrot.slane %v3214, 1
      %v3323 = vrot.slane %v3215, 1
      %v3324 = vrot.slane %v3216, 1
      %v3325 = vrot.slane %v3217, 1
      %v3326 = vrot.slane %v3218, 1
      %v3327 = vrot.slane %v3219, 1
      %v3328 = vrot.slane %v3220, 1
      %v3329 = vrot.slane %v3221, 1
      %v3330 = vrot.slane %v3222, 1
      %v3331 = vrot.slane %v3223, 1
      %v3386 = vadd.f32 %v2846, %v3278
      %v3387 = vadd.f32 %v2847, %v3279
      %v3388 = vadd.f32 %v2848, %v3280
      %v3389 = vadd.f32 %v2849, %v3281
      %v3390 = vadd.f32 %v2850, %v3282
      %v3391 = vadd.f32 %v2851, %v3283
      %v3392 = vadd.f32 %v2852, %v3284
      %v3393 = vadd.f32 %v2853, %v3285
      %v3394 = vadd.f32 %v2854, %v3286
      %v3395 = vadd.f32 %v2855, %v3287
      %v3396 = vadd.f32 %v2856, %v3288
      %v3397 = vadd.f32 %v2857, %v3289
      %v3398 = vadd.f32 %v2858, %v3290
      %v3399 = vadd.f32 %v2859, %v3291
      %v3400 = vadd.f32 %v2860, %v3292
      %v3401 = vadd.f32 %v2861, %v3293
      %v3402 = vadd.f32 %v2862, %v3294
      %v3403 = vadd.f32 %v2863, %v3295
      %v3404 = vadd.f32 %v2864, %v3296
      %v3405 = vadd.f32 %v2865, %v3297
      %v3406 = vadd.f32 %v2866, %v3298
      %v3407 = vadd.f32 %v2867, %v3299
      %v3408 = vadd.f32 %v2868, %v3300
      %v3409 = vadd.f32 %v2869, %v3301
      %v3410 = vadd.f32 %v2870, %v3302
      %v3411 = vadd.f32 %v2871, %v3303
      %v3412 = vadd.f32 %v2872, %v3304
      %v3413 = vadd.f32 %v2873, %v3305
      %v3414 = vadd.f32 %v2874, %v3306
      %v3415 = vadd.f32 %v2875, %v3307
      %v3416 = vadd.f32 %v2876, %v3308
      %v3417 = vadd.f32 %v2877, %v3309
      %v3418 = vadd.f32 %v2878, %v3310
      %v3419 = vadd.f32 %v2879, %v3311
      %v3420 = vadd.f32 %v2880, %v3312
      %v3421 = vadd.f32 %v2881, %v3313
      %v3422 = vadd.f32 %v2882, %v3314
      %v3423 = vadd.f32 %v2883, %v3315
      %v3424 = vadd.f32 %v2884, %v3316
      %v3425 = vadd.f32 %v2885, %v3317
      %v3426 = vadd.f32 %v2886, %v3318
      %v3427 = vadd.f32 %v2887, %v3319
      %v3428 = vadd.f32 %v2888, %v3320
      %v3429 = vadd.f32 %v2889, %v3321
      %v3430 = vadd.f32 %v2890, %v3322
      %v3431 = vadd.f32 %v2891, %v3323
      %v3432 = vadd.f32 %v2892, %v3324
      %v3433 = vadd.f32 %v2893, %v3325
      %v3434 = vadd.f32 %v2894, %v3326
      %v3435 = vadd.f32 %v2895, %v3327
      %v3436 = vadd.f32 %v2896, %v3328
      %v3437 = vadd.f32 %v2897, %v3329
      %v3438 = vadd.f32 %v2898, %v3330
      %v3439 = vadd.f32 %v2899, %v3331
      %v3440 = vlaneseq
      %v3441 = vshrl.u32 %v3440, 7
      %v3442 = vsub.s32 2, %v3441
      %v3443 = vrot.slane %v2522, %v3442
      %v3444 = vlaneseq
      %v3445 = vshrl.u32 %v3444, 7
      %v3446 = vsub.s32 6, %v3445
      %v3447 = vrot.slane %v2522, %v3446
      %v3448 = vlaneseq
      %v3449 = vshrl.u32 %v3448, 7
      %v3450 = vsub.s32 2, %v3449
      %v3451 = vrot.slane %v2523, %v3450
      %v3452 = vlaneseq
      %v3453 = vshrl.u32 %v3452, 7
      %v3454 = vsub.s32 6, %v3453
      %v3455 = vrot.slane %v2523, %v3454
      %v3456 = vlaneseq
      %v3457 = vshrl.u32 %v3456, 7
      %v3458 = vsub.s32 2, %v3457
      %v3459 = vrot.slane %v2524, %v3458
      %v3460 = vlaneseq
      %v3461 = vshrl.u32 %v3460, 7
      %v3462 = vsub.s32 6, %v3461
      %v3463 = vrot.slane %v2524, %v3462
      %v3464 = vlaneseq
      %v3465 = vshrl.u32 %v3464, 7
      %v3466 = vsub.s32 2, %v3465
      %v3467 = vrot.slane %v2525, %v3466
      %v3468 = vlaneseq
      %v3469 = vshrl.u32 %v3468, 7
      %v3470 = vsub.s32 6, %v3469
      %v3471 = vrot.slane %v2525, %v3470
      %v3472 = vlaneseq
      %v3473 = vshrl.u32 %v3472, 7
      %v3474 = vsub.s32 2, %v3473
      %v3475 = vrot.slane %v2526, %v3474
      %v3476 = vlaneseq
      %v3477 = vshrl.u32 %v3476, 7
      %v3478 = vsub.s32 6, %v3477
      %v3479 = vrot.slane %v2526, %v3478
      %v3480 = vlaneseq
      %v3481 = vshrl.u32 %v3480, 7
      %v3482 = vsub.s32 2, %v3481
      %v3483 = vrot.slane %v2527, %v3482
      %v3484 = vlaneseq
      %v3485 = vshrl.u32 %v3484, 7
      %v3486 = vsub.s32 6, %v3485
      %v3487 = vrot.slane %v2527, %v3486
      %v3488 = vlaneseq
      %v3489 = vshrl.u32 %v3488, 7
      %v3490 = vsub.s32 2, %v3489
      %v3491 = vrot.slane %v2528, %v3490
      %v3492 = vlaneseq
      %v3493 = vshrl.u32 %v3492, 7
      %v3494 = vsub.s32 6, %v3493
      %v3495 = vrot.slane %v2528, %v3494
      %v3496 = vlaneseq
      %v3497 = vshrl.u32 %v3496, 7
      %v3498 = vsub.s32 2, %v3497
      %v3499 = vrot.slane %v2529, %v3498
      %v3500 = vlaneseq
      %v3501 = vshrl.u32 %v3500, 7
      %v3502 = vsub.s32 6, %v3501
      %v3503 = vrot.slane %v2529, %v3502
      %v3504 = vlaneseq
      %v3505 = vshrl.u32 %v3504, 7
      %v3506 = vsub.s32 2, %v3505
      %v3507 = vrot.slane %v2530, %v3506
      %v3508 = vlaneseq
      %v3509 = vshrl.u32 %v3508, 7
      %v3510 = vsub.s32 6, %v3509
      %v3511 = vrot.slane %v2530, %v3510
      %v3512 = vlaneseq
      %v3513 = vshrl.u32 %v3512, 7
      %v3514 = vsub.s32 2, %v3513
      %v3515 = vrot.slane %v2531, %v3514
      %v3516 = vlaneseq
      %v3517 = vshrl.u32 %v3516, 7
      %v3518 = vsub.s32 6, %v3517
      %v3519 = vrot.slane %v2531, %v3518
      %v3520 = vlaneseq
      %v3521 = vshrl.u32 %v3520, 7
      %v3522 = vsub.s32 2, %v3521
      %v3523 = vrot.slane %v2532, %v3522
      %v3524 = vlaneseq
      %v3525 = vshrl.u32 %v3524, 7
      %v3526 = vsub.s32 6, %v3525
      %v3527 = vrot.slane %v2532, %v3526
      %v3528 = vlaneseq
      %v3529 = vshrl.u32 %v3528, 7
      %v3530 = vsub.s32 2, %v3529
      %v3531 = vrot.slane %v2533, %v3530
      %v3532 = vlaneseq
      %v3533 = vshrl.u32 %v3532, 7
      %v3534 = vsub.s32 6, %v3533
      %v3535 = vrot.slane %v2533, %v3534
      %v3536 = vlaneseq
      %v3537 = vshrl.u32 %v3536, 7
      %v3538 = vsub.s32 2, %v3537
      %v3539 = vrot.slane %v2534, %v3538
      %v3540 = vlaneseq
      %v3541 = vshrl.u32 %v3540, 7
      %v3542 = vsub.s32 6, %v3541
      %v3543 = vrot.slane %v2534, %v3542
      %v3544 = vlaneseq
      %v3545 = vshrl.u32 %v3544, 7
      %v3546 = vsub.s32 2, %v3545
      %v3547 = vrot.slane %v2535, %v3546
      %v3548 = vlaneseq
      %v3549 = vshrl.u32 %v3548, 7
      %v3550 = vsub.s32 6, %v3549
      %v3551 = vrot.slane %v2535, %v3550
      %v3552 = vlaneseq
      %v3553 = vshrl.u32 %v3552, 7
      %v3554 = vsub.s32 2, %v3553
      %v3555 = vrot.slane %v2536, %v3554
      %v3556 = vlaneseq
      %v3557 = vshrl.u32 %v3556, 7
      %v3558 = vsub.s32 6, %v3557
      %v3559 = vrot.slane %v2536, %v3558
      %v3560 = vlaneseq
      %v3561 = vshrl.u32 %v3560, 7
      %v3562 = vsub.s32 2, %v3561
      %v3563 = vrot.slane %v2537, %v3562
      %v3564 = vlaneseq
      %v3565 = vshrl.u32 %v3564, 7
      %v3566 = vsub.s32 6, %v3565
      %v3567 = vrot.slane %v2537, %v3566
      %v3568 = vlaneseq
      %v3569 = vshrl.u32 %v3568, 7
      %v3570 = vsub.s32 2, %v3569
      %v3571 = vrot.slane %v2538, %v3570
      %v3572 = vlaneseq
      %v3573 = vshrl.u32 %v3572, 7
      %v3574 = vsub.s32 6, %v3573
      %v3575 = vrot.slane %v2538, %v3574
      %v3576 = vlaneseq
      %v3577 = vshrl.u32 %v3576, 7
      %v3578 = vsub.s32 2, %v3577
      %v3579 = vrot.slane %v2539, %v3578
      %v3580 = vlaneseq
      %v3581 = vshrl.u32 %v3580, 7
      %v3582 = vsub.s32 6, %v3581
      %v3583 = vrot.slane %v2539, %v3582
      %v3584 = vlaneseq
      %v3585 = vshrl.u32 %v3584, 7
      %v3586 = vsub.s32 2, %v3585
      %v3587 = vrot.slane %v2540, %v3586
      %v3588 = vlaneseq
      %v3589 = vshrl.u32 %v3588, 7
      %v3590 = vsub.s32 6, %v3589
      %v3591 = vrot.slane %v2540, %v3590
      %v3592 = vlaneseq
      %v3593 = vshrl.u32 %v3592, 7
      %v3594 = vsub.s32 2, %v3593
      %v3595 = vrot.slane %v2541, %v3594
      %v3596 = vlaneseq
      %v3597 = vshrl.u32 %v3596, 7
      %v3598 = vsub.s32 6, %v3597
      %v3599 = vrot.slane %v2541, %v3598
      %v3600 = vlaneseq
      %v3601 = vshrl.u32 %v3600, 7
      %v3602 = vsub.s32 2, %v3601
      %v3603 = vrot.slane %v2542, %v3602
      %v3604 = vlaneseq
      %v3605 = vshrl.u32 %v3604, 7
      %v3606 = vsub.s32 6, %v3605
      %v3607 = vrot.slane %v2542, %v3606
      %v3608 = vlaneseq
      %v3609 = vshrl.u32 %v3608, 7
      %v3610 = vsub.s32 2, %v3609
      %v3611 = vrot.slane %v2543, %v3610
      %v3612 = vlaneseq
      %v3613 = vshrl.u32 %v3612, 7
      %v3614 = vsub.s32 6, %v3613
      %v3615 = vrot.slane %v2543, %v3614
      %v3616 = vlaneseq
      %v3617 = vshrl.u32 %v3616, 7
      %v3618 = vsub.s32 2, %v3617
      %v3619 = vrot.slane %v2544, %v3618
      %v3620 = vlaneseq
      %v3621 = vshrl.u32 %v3620, 7
      %v3622 = vsub.s32 6, %v3621
      %v3623 = vrot.slane %v2544, %v3622
      %v3624 = vlaneseq
      %v3625 = vshrl.u32 %v3624, 7
      %v3626 = vsub.s32 2, %v3625
      %v3627 = vrot.slane %v2545, %v3626
      %v3628 = vlaneseq
      %v3629 = vshrl.u32 %v3628, 7
      %v3630 = vsub.s32 6, %v3629
      %v3631 = vrot.slane %v2545, %v3630
      %v3632 = vlaneseq
      %v3633 = vshrl.u32 %v3632, 7
      %v3634 = vsub.s32 2, %v3633
      %v3635 = vrot.slane %v2546, %v3634
      %v3636 = vlaneseq
      %v3637 = vshrl.u32 %v3636, 7
      %v3638 = vsub.s32 6, %v3637
      %v3639 = vrot.slane %v2546, %v3638
      %v3640 = vlaneseq
      %v3641 = vshrl.u32 %v3640, 7
      %v3642 = vsub.s32 2, %v3641
      %v3643 = vrot.slane %v2547, %v3642
      %v3644 = vlaneseq
      %v3645 = vshrl.u32 %v3644, 7
      %v3646 = vsub.s32 6, %v3645
      %v3647 = vrot.slane %v2547, %v3646
      %v3648 = vlaneseq
      %v3649 = vshrl.u32 %v3648, 7
      %v3650 = vsub.s32 2, %v3649
      %v3651 = vrot.slane %v2548, %v3650
      %v3652 = vlaneseq
      %v3653 = vshrl.u32 %v3652, 7
      %v3654 = vsub.s32 6, %v3653
      %v3655 = vrot.slane %v2548, %v3654
      %v3710 = vmul.f32 %v510, %v3443
      %v3711 = vmul.f32 %v512, %v3447
      %v3712 = vmul.f32 %v587, %v3451
      %v3713 = vmul.f32 %v589, %v3455
      %v3714 = vmul.f32 %v664, %v3459
      %v3715 = vmul.f32 %v666, %v3463
      %v3716 = vmul.f32 %v741, %v3467
      %v3717 = vmul.f32 %v743, %v3471
      %v3718 = vmul.f32 %v818, %v3475
      %v3719 = vmul.f32 %v820, %v3479
      %v3720 = vmul.f32 %v895, %v3483
      %v3721 = vmul.f32 %v897, %v3487
      %v3722 = vmul.f32 %v972, %v3491
      %v3723 = vmul.f32 %v974, %v3495
      %v3724 = vmul.f32 %v1049, %v3499
      %v3725 = vmul.f32 %v1051, %v3503
      %v3726 = vmul.f32 %v1126, %v3507
      %v3727 = vmul.f32 %v1128, %v3511
      %v3728 = vmul.f32 %v1203, %v3515
      %v3729 = vmul.f32 %v1205, %v3519
      %v3730 = vmul.f32 %v1280, %v3523
      %v3731 = vmul.f32 %v1282, %v3527
      %v3732 = vmul.f32 %v1357, %v3531
      %v3733 = vmul.f32 %v1359, %v3535
      %v3734 = vmul.f32 %v1434, %v3539
      %v3735 = vmul.f32 %v1436, %v3543
      %v3736 = vmul.f32 %v1511, %v3547
      %v3737 = vmul.f32 %v1513, %v3551
      %v3738 = vmul.f32 %v1588, %v3555
      %v3739 = vmul.f32 %v1590, %v3559
      %v3740 = vmul.f32 %v1665, %v3563
      %v3741 = vmul.f32 %v1667, %v3567
      %v3742 = vmul.f32 %v1742, %v3571
      %v3743 = vmul.f32 %v1744, %v3575
      %v3744 = vmul.f32 %v1819, %v3579
      %v3745 = vmul.f32 %v1821, %v3583
      %v3746 = vmul.f32 %v1896, %v3587
      %v3747 = vmul.f32 %v1898, %v3591
      %v3748 = vmul.f32 %v1973, %v3595
      %v3749 = vmul.f32 %v1975, %v3599
      %v3750 = vmul.f32 %v2050, %v3603
      %v3751 = vmul.f32 %v2052, %v3607
      %v3752 = vmul.f32 %v2127, %v3611
      %v3753 = vmul.f32 %v2129, %v3615
      %v3754 = vmul.f32 %v2204, %v3619
      %v3755 = vmul.f32 %v2206, %v3623
      %v3756 = vmul.f32 %v2281, %v3627
      %v3757 = vmul.f32 %v2283, %v3631
      %v3758 = vmul.f32 %v2358, %v3635
      %v3759 = vmul.f32 %v2360, %v3639
      %v3760 = vmul.f32 %v2435, %v3643
      %v3761 = vmul.f32 %v2437, %v3647
      %v3762 = vmul.f32 %v2512, %v3651
      %v3763 = vmul.f32 %v2514, %v3655
      %v3818 = vrot.slane %v3710, 2
      %v3819 = vrot.slane %v3711, 2
      %v3820 = vrot.slane %v3712, 2
      %v3821 = vrot.slane %v3713, 2
      %v3822 = vrot.slane %v3714, 2
      %v3823 = vrot.slane %v3715, 2
      %v3824 = vrot.slane %v3716, 2
      %v3825 = vrot.slane %v3717, 2
      %v3826 = vrot.slane %v3718, 2
      %v3827 = vrot.slane %v3719, 2
      %v3828 = vrot.slane %v3720, 2
      %v3829 = vrot.slane %v3721, 2
      %v3830 = vrot.slane %v3722, 2
      %v3831 = vrot.slane %v3723, 2
      %v3832 = vrot.slane %v3724, 2
      %v3833 = vrot.slane %v3725, 2
      %v3834 = vrot.slane %v3726, 2
      %v3835 = vrot.slane %v3727, 2
      %v3836 = vrot.slane %v3728, 2
      %v3837 = vrot.slane %v3729, 2
      %v3838 = vrot.slane %v3730, 2
      %v3839 = vrot.slane %v3731, 2
      %v3840 = vrot.slane %v3732, 2
      %v3841 = vrot.slane %v3733, 2
      %v3842 = vrot.slane %v3734, 2
      %v3843 = vrot.slane %v3735, 2
      %v3844 = vrot.slane %v3736, 2
      %v3845 = vrot.slane %v3737, 2
      %v3846 = vrot.slane %v3738, 2
      %v3847 = vrot.slane %v3739, 2
      %v3848 = vrot.slane %v3740, 2
      %v3849 = vrot.slane %v3741, 2
      %v3850 = vrot.slane %v3742, 2
      %v3851 = vrot.slane %v3743, 2
      %v3852 = vrot.slane %v3744, 2
      %v3853 = vrot.slane %v3745, 2
      %v3854 = vrot.slane %v3746, 2
      %v3855 = vrot.slane %v3747, 2
      %v3856 = vrot.slane %v3748, 2
      %v3857 = vrot.slane %v3749, 2
      %v3858 = vrot.slane %v3750, 2
      %v3859 = vrot.slane %v3751, 2
      %v3860 = vrot.slane %v3752, 2
      %v3861 = vrot.slane %v3753, 2
      %v3862 = vrot.slane %v3754, 2
      %v3863 = vrot.slane %v3755, 2
      %v3864 = vrot.slane %v3756, 2
      %v3865 = vrot.slane %v3757, 2
      %v3866 = vrot.slane %v3758, 2
      %v3867 = vrot.slane %v3759, 2
      %v3868 = vrot.slane %v3760, 2
      %v3869 = vrot.slane %v3761, 2
      %v3870 = vrot.slane %v3762, 2
      %v3871 = vrot.slane %v3763, 2
      %v3926 = vadd.f32 %v3386, %v3818
      %v3927 = vadd.f32 %v3387, %v3819
      %v3928 = vadd.f32 %v3388, %v3820
      %v3929 = vadd.f32 %v3389, %v3821
      %v3930 = vadd.f32 %v3390, %v3822
      %v3931 = vadd.f32 %v3391, %v3823
      %v3932 = vadd.f32 %v3392, %v3824
      %v3933 = vadd.f32 %v3393, %v3825
      %v3934 = vadd.f32 %v3394, %v3826
      %v3935 = vadd.f32 %v3395, %v3827
      %v3936 = vadd.f32 %v3396, %v3828
      %v3937 = vadd.f32 %v3397, %v3829
      %v3938 = vadd.f32 %v3398, %v3830
      %v3939 = vadd.f32 %v3399, %v3831
      %v3940 = vadd.f32 %v3400, %v3832
      %v3941 = vadd.f32 %v3401, %v3833
      %v3942 = vadd.f32 %v3402, %v3834
      %v3943 = vadd.f32 %v3403, %v3835
      %v3944 = vadd.f32 %v3404, %v3836
      %v3945 = vadd.f32 %v3405, %v3837
      %v3946 = vadd.f32 %v3406, %v3838
      %v3947 = vadd.f32 %v3407, %v3839
      %v3948 = vadd.f32 %v3408, %v3840
      %v3949 = vadd.f32 %v3409, %v3841
      %v3950 = vadd.f32 %v3410, %v3842
      %v3951 = vadd.f32 %v3411, %v3843
      %v3952 = vadd.f32 %v3412, %v3844
      %v3953 = vadd.f32 %v3413, %v3845
      %v3954 = vadd.f32 %v3414, %v3846
      %v3955 = vadd.f32 %v3415, %v3847
      %v3956 = vadd.f32 %v3416, %v3848
      %v3957 = vadd.f32 %v3417, %v3849
      %v3958 = vadd.f32 %v3418, %v3850
      %v3959 = vadd.f32 %v3419, %v3851
      %v3960 = vadd.f32 %v3420, %v3852
      %v3961 = vadd.f32 %v3421, %v3853
      %v3962 = vadd.f32 %v3422, %v3854
      %v3963 = vadd.f32 %v3423, %v3855
      %v3964 = vadd.f32 %v3424, %v3856
      %v3965 = vadd.f32 %v3425, %v3857
      %v3966 = vadd.f32 %v3426, %v3858
      %v3967 = vadd.f32 %v3427, %v3859
      %v3968 = vadd.f32 %v3428, %v3860
      %v3969 = vadd.f32 %v3429, %v3861
      %v3970 = vadd.f32 %v3430, %v3862
      %v3971 = vadd.f32 %v3431, %v3863
      %v3972 = vadd.f32 %v3432, %v3864
      %v3973 = vadd.f32 %v3433, %v3865
      %v3974 = vadd.f32 %v3434, %v3866
      %v3975 = vadd.f32 %v3435, %v3867
      %v3976 = vadd.f32 %v3436, %v3868
      %v3977 = vadd.f32 %v3437, %v3869
      %v3978 = vadd.f32 %v3438, %v3870
      %v3979 = vadd.f32 %v3439, %v3871
      %v4034 = vrot.slane %v510, 3
      %v4035 = vrot.slane %v512, 3
      %v4036 = vrot.slane %v587, 3
      %v4037 = vrot.slane %v589, 3
      %v4038 = vrot.slane %v664, 3
      %v4039 = vrot.slane %v666, 3
      %v4040 = vrot.slane %v741, 3
      %v4041 = vrot.slane %v743, 3
      %v4042 = vrot.slane %v818, 3
      %v4043 = vrot.slane %v820, 3
      %v4044 = vrot.slane %v895, 3
      %v4045 = vrot.slane %v897, 3
      %v4046 = vrot.slane %v972, 3
      %v4047 = vrot.slane %v974, 3
      %v4048 = vrot.slane %v1049, 3
      %v4049 = vrot.slane %v1051, 3
      %v4050 = vrot.slane %v1126, 3
      %v4051 = vrot.slane %v1128, 3
      %v4052 = vrot.slane %v1203, 3
      %v4053 = vrot.slane %v1205, 3
      %v4054 = vrot.slane %v1280, 3
      %v4055 = vrot.slane %v1282, 3
      %v4056 = vrot.slane %v1357, 3
      %v4057 = vrot.slane %v1359, 3
      %v4058 = vrot.slane %v1434, 3
      %v4059 = vrot.slane %v1436, 3
      %v4060 = vrot.slane %v1511, 3
      %v4061 = vrot.slane %v1513, 3
      %v4062 = vrot.slane %v1588, 3
      %v4063 = vrot.slane %v1590, 3
      %v4064 = vrot.slane %v1665, 3
      %v4065 = vrot.slane %v1667, 3
      %v4066 = vrot.slane %v1742, 3
      %v4067 = vrot.slane %v1744, 3
      %v4068 = vrot.slane %v1819, 3
      %v4069 = vrot.slane %v1821, 3
      %v4070 = vrot.slane %v1896, 3
      %v4071 = vrot.slane %v1898, 3
      %v4072 = vrot.slane %v1973, 3
      %v4073 = vrot.slane %v1975, 3
      %v4074 = vrot.slane %v2050, 3
      %v4075 = vrot.slane %v2052, 3
      %v4076 = vrot.slane %v2127, 3
      %v4077 = vrot.slane %v2129, 3
      %v4078 = vrot.slane %v2204, 3
      %v4079 = vrot.slane %v2206, 3
      %v4080 = vrot.slane %v2281, 3
      %v4081 = vrot.slane %v2283, 3
      %v4082 = vrot.slane %v2358, 3
      %v4083 = vrot.slane %v2360, 3
      %v4084 = vrot.slane %v2435, 3
      %v4085 = vrot.slane %v2437, 3
      %v4086 = vrot.slane %v2512, 3
      %v4087 = vrot.slane %v2514, 3
      %v4142 = vadd.f32 %v3926, %v4034
      %v4143 = vadd.f32 %v3927, %v4035
      %v4144 = vadd.f32 %v3928, %v4036
      %v4145 = vadd.f32 %v3929, %v4037
      %v4146 = vadd.f32 %v3930, %v4038
      %v4147 = vadd.f32 %v3931, %v4039
      %v4148 = vadd.f32 %v3932, %v4040
      %v4149 = vadd.f32 %v3933, %v4041
      %v4150 = vadd.f32 %v3934, %v4042
      %v4151 = vadd.f32 %v3935, %v4043
      %v4152 = vadd.f32 %v3936, %v4044
      %v4153 = vadd.f32 %v3937, %v4045
      %v4154 = vadd.f32 %v3938, %v4046
      %v4155 = vadd.f32 %v3939, %v4047
      %v4156 = vadd.f32 %v3940, %v4048
      %v4157 = vadd.f32 %v3941, %v4049
      %v4158 = vadd.f32 %v3942, %v4050
      %v4159 = vadd.f32 %v3943, %v4051
      %v4160 = vadd.f32 %v3944, %v4052
      %v4161 = vadd.f32 %v3945, %v4053
      %v4162 = vadd.f32 %v3946, %v4054
      %v4163 = vadd.f32 %v3947, %v4055
      %v4164 = vadd.f32 %v3948, %v4056
      %v4165 = vadd.f32 %v3949, %v4057
      %v4166 = vadd.f32 %v3950, %v4058
      %v4167 = vadd.f32 %v3951, %v4059
      %v4168 = vadd.f32 %v3952, %v4060
      %v4169 = vadd.f32 %v3953, %v4061
      %v4170 = vadd.f32 %v3954, %v4062
      %v4171 = vadd.f32 %v3955, %v4063
      %v4172 = vadd.f32 %v3956, %v4064
      %v4173 = vadd.f32 %v3957, %v4065
      %v4174 = vadd.f32 %v3958, %v4066
      %v4175 = vadd.f32 %v3959, %v4067
      %v4176 = vadd.f32 %v3960, %v4068
      %v4177 = vadd.f32 %v3961, %v4069
      %v4178 = vadd.f32 %v3962, %v4070
      %v4179 = vadd.f32 %v3963, %v4071
      %v4180 = vadd.f32 %v3964, %v4072
      %v4181 = vadd.f32 %v3965, %v4073
      %v4182 = vadd.f32 %v3966, %v4074
      %v4183 = vadd.f32 %v3967, %v4075
      %v4184 = vadd.f32 %v3968, %v4076
      %v4185 = vadd.f32 %v3969, %v4077
      %v4186 = vadd.f32 %v3970, %v4078
      %v4187 = vadd.f32 %v3971, %v4079
      %v4188 = vadd.f32 %v3972, %v4080
      %v4189 = vadd.f32 %v3973, %v4081
      %v4190 = vadd.f32 %v3974, %v4082
      %v4191 = vadd.f32 %v3975, %v4083
      %v4192 = vadd.f32 %v3976, %v4084
      %v4193 = vadd.f32 %v3977, %v4085
      %v4194 = vadd.f32 %v3978, %v4086
      %v4195 = vadd.f32 %v3979, %v4087
      %v4196 = vmul.f32 %v516, %v2579
      %v4197 = vmul.f32 %v518, %v2583
      %v4198 = vmul.f32 %v593, %v2587
      %v4199 = vmul.f32 %v595, %v2591
      %v4200 = vmul.f32 %v670, %v2595
      %v4201 = vmul.f32 %v672, %v2599
      %v4202 = vmul.f32 %v747, %v2603
      %v4203 = vmul.f32 %v749, %v2607
      %v4204 = vmul.f32 %v824, %v2611
      %v4205 = vmul.f32 %v826, %v2615
      %v4206 = vmul.f32 %v901, %v2619
      %v4207 = vmul.f32 %v903, %v2623
      %v4208 = vmul.f32 %v978, %v2627
      %v4209 = vmul.f32 %v980, %v2631
      %v4210 = vmul.f32 %v1055, %v2635
      %v4211 = vmul.f32 %v1057, %v2639
      %v4212 = vmul.f32 %v1132, %v2643
      %v4213 = vmul.f32 %v1134, %v2647
      %v4214 = vmul.f32 %v1209, %v2651
      %v4215 = vmul.f32 %v1211, %v2655
      %v4216 = vmul.f32 %v1286, %v2659
      %v4217 = vmul.f32 %v1288, %v2663
      %v4218 = vmul.f32 %v1363, %v2667
      %v4219 = vmul.f32 %v1365, %v2671
      %v4220 = vmul.f32 %v1440, %v2675
      %v4221 = vmul.f32 %v1442, %v2679
      %v4222 = vmul.f32 %v1517, %v2683
      %v4223 = vmul.f32 %v1519, %v2687
      %v4224 = vmul.f32 %v1594, %v2691
      %v4225 = vmul.f32 %v1596, %v2695
      %v4226 = vmul.f32 %v1671, %v2699
      %v4227 = vmul.f32 %v1673, %v2703
      %v4228 = vmul.f32 %v1748, %v2707
      %v4229 = vmul.f32 %v1750, %v2711
      %v4230 = vmul.f32 %v1825, %v2715
      %v4231 = vmul.f32 %v1827, %v2719
      %v4232 = vmul.f32 %v1902, %v2723
      %v4233 = vmul.f32 %v1904, %v2727
      %v4234 = vmul.f32 %v1979, %v2731
      %v4235 = vmul.f32 %v1981, %v2735
      %v4236 = vmul.f32 %v2056, %v2739
      %v4237 = vmul.f32 %v2058, %v2743
      %v4238 = vmul.f32 %v2133, %v2747
      %v4239 = vmul.f32 %v2135, %v2751
      %v4240 = vmul.f32 %v2210, %v2755
      %v4241 = vmul.f32 %v2212, %v2759
      %v4242 = vmul.f32 %v2287, %v2763
      %v4243 = vmul.f32 %v2289, %v2767
      %v4244 = vmul.f32 %v2364, %v2771
      %v4245 = vmul.f32 %v2366, %v2775
      %v4246 = vmul.f32 %v2441, %v2779
      %v4247 = vmul.f32 %v2443, %v2783
      %v4248 = vmul.f32 %v2518, %v2787
      %v4249 = vmul.f32 %v2520, %v2791
      %v4250 = vmul.f32 %v516, %v2903
      %v4251 = vmul.f32 %v518, %v2907
      %v4252 = vmul.f32 %v593, %v2911
      %v4253 = vmul.f32 %v595, %v2915
      %v4254 = vmul.f32 %v670, %v2919
      %v4255 = vmul.f32 %v672, %v2923
      %v4256 = vmul.f32 %v747, %v2927
      %v4257 = vmul.f32 %v749, %v2931
      %v4258 = vmul.f32 %v824, %v2935
      %v4259 = vmul.f32 %v826, %v2939
      %v4260 = vmul.f32 %v901, %v2943
      %v4261 = vmul.f32 %v903, %v2947
      %v4262 = vmul.f32 %v978, %v2951
      %v4263 = vmul.f32 %v980, %v2955
      %v4264 = vmul.f32 %v1055, %v2959
      %v4265 = vmul.f32 %v1057, %v2963
      %v4266 = vmul.f32 %v1132, %v2967
      %v4267 = vmul.f32 %v1134, %v2971
      %v4268 = vmul.f32 %v1209, %v2975
      %v4269 = vmul.f32 %v1211, %v2979
      %v4270 = vmul.f32 %v1286, %v2983
      %v4271 = vmul.f32 %v1288, %v2987
      %v4272 = vmul.f32 %v1363, %v2991
      %v4273 = vmul.f32 %v1365, %v2995
      %v4274 = vmul.f32 %v1440, %v2999
      %v4275 = vmul.f32 %v1442, %v3003
      %v4276 = vmul.f32 %v1517, %v3007
      %v4277 = vmul.f32 %v1519, %v3011
      %v4278 = vmul.f32 %v1594, %v3015
      %v4279 = vmul.f32 %v1596, %v3019
      %v4280 = vmul.f32 %v1671, %v3023
      %v4281 = vmul.f32 %v1673, %v3027
      %v4282 = vmul.f32 %v1748, %v3031
      %v4283 = vmul.f32 %v1750, %v3035
      %v4284 = vmul.f32 %v1825, %v3039
      %v4285 = vmul.f32 %v1827, %v3043
      %v4286 = vmul.f32 %v1902, %v3047
      %v4287 = vmul.f32 %v1904, %v3051
      %v4288 = vmul.f32 %v1979, %v3055
      %v4289 = vmul.f32 %v1981, %v3059
      %v4290 = vmul.f32 %v2056, %v3063
      %v4291 = vmul.f32 %v2058, %v3067
      %v4292 = vmul.f32 %v2133, %v3071
      %v4293 = vmul.f32 %v2135, %v3075
      %v4294 = vmul.f32 %v2210, %v3079
      %v4295 = vmul.f32 %v2212, %v3083
      %v4296 = vmul.f32 %v2287, %v3087
      %v4297 = vmul.f32 %v2289, %v3091
      %v4298 = vmul.f32 %v2364, %v3095
      %v4299 = vmul.f32 %v2366, %v3099
      %v4300 = vmul.f32 %v2441, %v3103
      %v4301 = vmul.f32 %v2443, %v3107
      %v4302 = vmul.f32 %v2518, %v3111
      %v4303 = vmul.f32 %v2520, %v3115
      %v4358 = vrot.slane %v4250, 1
      %v4359 = vrot.slane %v4251, 1
      %v4360 = vrot.slane %v4252, 1
      %v4361 = vrot.slane %v4253, 1
      %v4362 = vrot.slane %v4254, 1
      %v4363 = vrot.slane %v4255, 1
      %v4364 = vrot.slane %v4256, 1
      %v4365 = vrot.slane %v4257, 1
      %v4366 = vrot.slane %v4258, 1
      %v4367 = vrot.slane %v4259, 1
      %v4368 = vrot.slane %v4260, 1
      %v4369 = vrot.slane %v4261, 1
      %v4370 = vrot.slane %v4262, 1
      %v4371 = vrot.slane %v4263, 1
      %v4372 = vrot.slane %v4264, 1
      %v4373 = vrot.slane %v4265, 1
      %v4374 = vrot.slane %v4266, 1
      %v4375 = vrot.slane %v4267, 1
      %v4376 = vrot.slane %v4268, 1
      %v4377 = vrot.slane %v4269, 1
      %v4378 = vrot.slane %v4270, 1
      %v4379 = vrot.slane %v4271, 1
      %v4380 = vrot.slane %v4272, 1
      %v4381 = vrot.slane %v4273, 1
      %v4382 = vrot.slane %v4274, 1
      %v4383 = vrot.slane %v4275, 1
      %v4384 = vrot.slane %v4276, 1
      %v4385 = vrot.slane %v4277, 1
      %v4386 = vrot.slane %v4278, 1
      %v4387 = vrot.slane %v4279, 1
      %v4388 = vrot.slane %v4280, 1
      %v4389 = vrot.slane %v4281, 1
      %v4390 = vrot.slane %v4282, 1
      %v4391 = vrot.slane %v4283, 1
      %v4392 = vrot.slane %v4284, 1
      %v4393 = vrot.slane %v4285, 1
      %v4394 = vrot.slane %v4286, 1
      %v4395 = vrot.slane %v4287, 1
      %v4396 = vrot.slane %v4288, 1
      %v4397 = vrot.slane %v4289, 1
      %v4398 = vrot.slane %v4290, 1
      %v4399 = vrot.slane %v4291, 1
      %v4400 = vrot.slane %v4292, 1
      %v4401 = vrot.slane %v4293, 1
      %v4402 = vrot.slane %v4294, 1
      %v4403 = vrot.slane %v4295, 1
      %v4404 = vrot.slane %v4296, 1
      %v4405 = vrot.slane %v4297, 1
      %v4406 = vrot.slane %v4298, 1
      %v4407 = vrot.slane %v4299, 1
      %v4408 = vrot.slane %v4300, 1
      %v4409 = vrot.slane %v4301, 1
      %v4410 = vrot.slane %v4302, 1
      %v4411 = vrot.slane %v4303, 1
      %v4466 = vadd.f32 %v4196, %v4358
      %v4467 = vadd.f32 %v4197, %v4359
      %v4468 = vadd.f32 %v4198, %v4360
      %v4469 = vadd.f32 %v4199, %v4361
      %v4470 = vadd.f32 %v4200, %v4362
      %v4471 = vadd.f32 %v4201, %v4363
      %v4472 = vadd.f32 %v4202, %v4364
      %v4473 = vadd.f32 %v4203, %v4365
      %v4474 = vadd.f32 %v4204, %v4366
      %v4475 = vadd.f32 %v4205, %v4367
      %v4476 = vadd.f32 %v4206, %v4368
      %v4477 = vadd.f32 %v4207, %v4369
      %v4478 = vadd.f32 %v4208, %v4370
      %v4479 = vadd.f32 %v4209, %v4371
      %v4480 = vadd.f32 %v4210, %v4372
      %v4481 = vadd.f32 %v4211, %v4373
      %v4482 = vadd.f32 %v4212, %v4374
      %v4483 = vadd.f32 %v4213, %v4375
      %v4484 = vadd.f32 %v4214, %v4376
      %v4485 = vadd.f32 %v4215, %v4377
      %v4486 = vadd.f32 %v4216, %v4378
      %v4487 = vadd.f32 %v4217, %v4379
      %v4488 = vadd.f32 %v4218, %v4380
      %v4489 = vadd.f32 %v4219, %v4381
      %v4490 = vadd.f32 %v4220, %v4382
      %v4491 = vadd.f32 %v4221, %v4383
      %v4492 = vadd.f32 %v4222, %v4384
      %v4493 = vadd.f32 %v4223, %v4385
      %v4494 = vadd.f32 %v4224, %v4386
      %v4495 = vadd.f32 %v4225, %v4387
      %v4496 = vadd.f32 %v4226, %v4388
      %v4497 = vadd.f32 %v4227, %v4389
      %v4498 = vadd.f32 %v4228, %v4390
      %v4499 = vadd.f32 %v4229, %v4391
      %v4500 = vadd.f32 %v4230, %v4392
      %v4501 = vadd.f32 %v4231, %v4393
      %v4502 = vadd.f32 %v4232, %v4394
      %v4503 = vadd.f32 %v4233, %v4395
      %v4504 = vadd.f32 %v4234, %v4396
      %v4505 = vadd.f32 %v4235, %v4397
      %v4506 = vadd.f32 %v4236, %v4398
      %v4507 = vadd.f32 %v4237, %v4399
      %v4508 = vadd.f32 %v4238, %v4400
      %v4509 = vadd.f32 %v4239, %v4401
      %v4510 = vadd.f32 %v4240, %v4402
      %v4511 = vadd.f32 %v4241, %v4403
      %v4512 = vadd.f32 %v4242, %v4404
      %v4513 = vadd.f32 %v4243, %v4405
      %v4514 = vadd.f32 %v4244, %v4406
      %v4515 = vadd.f32 %v4245, %v4407
      %v4516 = vadd.f32 %v4246, %v4408
      %v4517 = vadd.f32 %v4247, %v4409
      %v4518 = vadd.f32 %v4248, %v4410
      %v4519 = vadd.f32 %v4249, %v4411
      %v4520 = vmul.f32 %v516, %v3443
      %v4521 = vmul.f32 %v518, %v3447
      %v4522 = vmul.f32 %v593, %v3451
      %v4523 = vmul.f32 %v595, %v3455
      %v4524 = vmul.f32 %v670, %v3459
      %v4525 = vmul.f32 %v672, %v3463
      %v4526 = vmul.f32 %v747, %v3467
      %v4527 = vmul.f32 %v749, %v3471
      %v4528 = vmul.f32 %v824, %v3475
      %v4529 = vmul.f32 %v826, %v3479
      %v4530 = vmul.f32 %v901, %v3483
      %v4531 = vmul.f32 %v903, %v3487
      %v4532 = vmul.f32 %v978, %v3491
      %v4533 = vmul.f32 %v980, %v3495
      %v4534 = vmul.f32 %v1055, %v3499
      %v4535 = vmul.f32 %v1057, %v3503
      %v4536 = vmul.f32 %v1132, %v3507
      %v4537 = vmul.f32 %v1134, %v3511
      %v4538 = vmul.f32 %v1209, %v3515
      %v4539 = vmul.f32 %v1211, %v3519
      %v4540 = vmul.f32 %v1286, %v3523
      %v4541 = vmul.f32 %v1288, %v3527
      %v4542 = vmul.f32 %v1363, %v3531
      %v4543 = vmul.f32 %v1365, %v3535
      %v4544 = vmul.f32 %v1440, %v3539
      %v4545 = vmul.f32 %v1442, %v3543
      %v4546 = vmul.f32 %v1517, %v3547
      %v4547 = vmul.f32 %v1519, %v3551
      %v4548 = vmul.f32 %v1594, %v3555
      %v4549 = vmul.f32 %v1596, %v3559
      %v4550 = vmul.f32 %v1671, %v3563
      %v4551 = vmul.f32 %v1673, %v3567
      %v4552 = vmul.f32 %v1748, %v3571
      %v4553 = vmul.f32 %v1750, %v3575
      %v4554 = vmul.f32 %v1825, %v3579
      %v4555 = vmul.f32 %v1827, %v3583
      %v4556 = vmul.f32 %v1902, %v3587
      %v4557 = vmul.f32 %v1904, %v3591
      %v4558 = vmul.f32 %v1979, %v3595
      %v4559 = vmul.f32 %v1981, %v3599
      %v4560 = vmul.f32 %v2056, %v3603
      %v4561 = vmul.f32 %v2058, %v3607
      %v4562 = vmul.f32 %v2133, %v3611
      %v4563 = vmul.f32 %v2135, %v3615
      %v4564 = vmul.f32 %v2210, %v3619
      %v4565 = vmul.f32 %v2212, %v3623
      %v4566 = vmul.f32 %v2287, %v3627
      %v4567 = vmul.f32 %v2289, %v3631
      %v4568 = vmul.f32 %v2364, %v3635
      %v4569 = vmul.f32 %v2366, %v3639
      %v4570 = vmul.f32 %v2441, %v3643
      %v4571 = vmul.f32 %v2443, %v3647
      %v4572 = vmul.f32 %v2518, %v3651
      %v4573 = vmul.f32 %v2520, %v3655
      %v4628 = vrot.slane %v4520, 2
      %v4629 = vrot.slane %v4521, 2
      %v4630 = vrot.slane %v4522, 2
      %v4631 = vrot.slane %v4523, 2
      %v4632 = vrot.slane %v4524, 2
      %v4633 = vrot.slane %v4525, 2
      %v4634 = vrot.slane %v4526, 2
      %v4635 = vrot.slane %v4527, 2
      %v4636 = vrot.slane %v4528, 2
      %v4637 = vrot.slane %v4529, 2
      %v4638 = vrot.slane %v4530, 2
      %v4639 = vrot.slane %v4531, 2
      %v4640 = vrot.slane %v4532, 2
      %v4641 = vrot.slane %v4533, 2
      %v4642 = vrot.slane %v4534, 2
      %v4643 = vrot.slane %v4535, 2
      %v4644 = vrot.slane %v4536, 2
      %v4645 = vrot.slane %v4537, 2
      %v4646 = vrot.slane %v4538, 2
      %v4647 = vrot.slane %v4539, 2
      %v4648 = vrot.slane %v4540, 2
      %v4649 = vrot.slane %v4541, 2
      %v4650 = vrot.slane %v4542, 2
      %v4651 = vrot.slane %v4543, 2
      %v4652 = vrot.slane %v4544, 2
      %v4653 = vrot.slane %v4545, 2
      %v4654 = vrot.slane %v4546, 2
      %v4655 = vrot.slane %v4547, 2
      %v4656 = vrot.slane %v4548, 2
      %v4657 = vrot.slane %v4549, 2
      %v4658 = vrot.slane %v4550, 2
      %v4659 = vrot.slane %v4551, 2
      %v4660 = vrot.slane %v4552, 2
      %v4661 = vrot.slane %v4553, 2
      %v4662 = vrot.slane %v4554, 2
      %v4663 = vrot.slane %v4555, 2
      %v4664 = vrot.slane %v4556, 2
      %v4665 = vrot.slane %v4557, 2
      %v4666 = vrot.slane %v4558, 2
      %v4667 = vrot.slane %v4559, 2
      %v4668 = vrot.slane %v4560, 2
      %v4669 = vrot.slane %v4561, 2
      %v4670 = vrot.slane %v4562, 2
      %v4671 = vrot.slane %v4563, 2
      %v4672 = vrot.slane %v4564, 2
      %v4673 = vrot.slane %v4565, 2
      %v4674 = vrot.slane %v4566, 2
      %v4675 = vrot.slane %v4567, 2
      %v4676 = vrot.slane %v4568, 2
      %v4677 = vrot.slane %v4569, 2
      %v4678 = vrot.slane %v4570, 2
      %v4679 = vrot.slane %v4571, 2
      %v4680 = vrot.slane %v4572, 2
      %v4681 = vrot.slane %v4573, 2
      %v4736 = vadd.f32 %v4466, %v4628
      %v4737 = vadd.f32 %v4467, %v4629
      %v4738 = vadd.f32 %v4468, %v4630
      %v4739 = vadd.f32 %v4469, %v4631
      %v4740 = vadd.f32 %v4470, %v4632
      %v4741 = vadd.f32 %v4471, %v4633
      %v4742 = vadd.f32 %v4472, %v4634
      %v4743 = vadd.f32 %v4473, %v4635
      %v4744 = vadd.f32 %v4474, %v4636
      %v4745 = vadd.f32 %v4475, %v4637
      %v4746 = vadd.f32 %v4476, %v4638
      %v4747 = vadd.f32 %v4477, %v4639
      %v4748 = vadd.f32 %v4478, %v4640
      %v4749 = vadd.f32 %v4479, %v4641
      %v4750 = vadd.f32 %v4480, %v4642
      %v4751 = vadd.f32 %v4481, %v4643
      %v4752 = vadd.f32 %v4482, %v4644
      %v4753 = vadd.f32 %v4483, %v4645
      %v4754 = vadd.f32 %v4484, %v4646
      %v4755 = vadd.f32 %v4485, %v4647
      %v4756 = vadd.f32 %v4486, %v4648
      %v4757 = vadd.f32 %v4487, %v4649
      %v4758 = vadd.f32 %v4488, %v4650
      %v4759 = vadd.f32 %v4489, %v4651
      %v4760 = vadd.f32 %v4490, %v4652
      %v4761 = vadd.f32 %v4491, %v4653
      %v4762 = vadd.f32 %v4492, %v4654
      %v4763 = vadd.f32 %v4493, %v4655
      %v4764 = vadd.f32 %v4494, %v4656
      %v4765 = vadd.f32 %v4495, %v4657
      %v4766 = vadd.f32 %v4496, %v4658
      %v4767 = vadd.f32 %v4497, %v4659
      %v4768 = vadd.f32 %v4498, %v4660
      %v4769 = vadd.f32 %v4499, %v4661
      %v4770 = vadd.f32 %v4500, %v4662
      %v4771 = vadd.f32 %v4501, %v4663
      %v4772 = vadd.f32 %v4502, %v4664
      %v4773 = vadd.f32 %v4503, %v4665
      %v4774 = vadd.f32 %v4504, %v4666
      %v4775 = vadd.f32 %v4505, %v4667
      %v4776 = vadd.f32 %v4506, %v4668
      %v4777 = vadd.f32 %v4507, %v4669
      %v4778 = vadd.f32 %v4508, %v4670
      %v4779 = vadd.f32 %v4509, %v4671
      %v4780 = vadd.f32 %v4510, %v4672
      %v4781 = vadd.f32 %v4511, %v4673
      %v4782 = vadd.f32 %v4512, %v4674
      %v4783 = vadd.f32 %v4513, %v4675
      %v4784 = vadd.f32 %v4514, %v4676
      %v4785 = vadd.f32 %v4515, %v4677
      %v4786 = vadd.f32 %v4516, %v4678
      %v4787 = vadd.f32 %v4517, %v4679
      %v4788 = vadd.f32 %v4518, %v4680
      %v4789 = vadd.f32 %v4519, %v4681
      %v4844 = vrot.slane %v516, 3
      %v4845 = vrot.slane %v518, 3
      %v4846 = vrot.slane %v593, 3
      %v4847 = vrot.slane %v595, 3
      %v4848 = vrot.slane %v670, 3
      %v4849 = vrot.slane %v672, 3
      %v4850 = vrot.slane %v747, 3
      %v4851 = vrot.slane %v749, 3
      %v4852 = vrot.slane %v824, 3
      %v4853 = vrot.slane %v826, 3
      %v4854 = vrot.slane %v901, 3
      %v4855 = vrot.slane %v903, 3
      %v4856 = vrot.slane %v978, 3
      %v4857 = vrot.slane %v980, 3
      %v4858 = vrot.slane %v1055, 3
      %v4859 = vrot.slane %v1057, 3
      %v4860 = vrot.slane %v1132, 3
      %v4861 = vrot.slane %v1134, 3
      %v4862 = vrot.slane %v1209, 3
      %v4863 = vrot.slane %v1211, 3
      %v4864 = vrot.slane %v1286, 3
      %v4865 = vrot.slane %v1288, 3
      %v4866 = vrot.slane %v1363, 3
      %v4867 = vrot.slane %v1365, 3
      %v4868 = vrot.slane %v1440, 3
      %v4869 = vrot.slane %v1442, 3
      %v4870 = vrot.slane %v1517, 3
      %v4871 = vrot.slane %v1519, 3
      %v4872 = vrot.slane %v1594, 3
      %v4873 = vrot.slane %v1596, 3
      %v4874 = vrot.slane %v1671, 3
      %v4875 = vrot.slane %v1673, 3
      %v4876 = vrot.slane %v1748, 3
      %v4877 = vrot.slane %v1750, 3
      %v4878 = vrot.slane %v1825, 3
      %v4879 = vrot.slane %v1827, 3
      %v4880 = vrot.slane %v1902, 3
      %v4881 = vrot.slane %v1904, 3
      %v4882 = vrot.slane %v1979, 3
      %v4883 = vrot.slane %v1981, 3
      %v4884 = vrot.slane %v2056, 3
      %v4885 = vrot.slane %v2058, 3
      %v4886 = vrot.slane %v2133, 3
      %v4887 = vrot.slane %v2135, 3
      %v4888 = vrot.slane %v2210, 3
      %v4889 = vrot.slane %v2212, 3
      %v4890 = vrot.slane %v2287, 3
      %v4891 = vrot.slane %v2289, 3
      %v4892 = vrot.slane %v2364, 3
      %v4893 = vrot.slane %v2366, 3
      %v4894 = vrot.slane %v2441, 3
      %v4895 = vrot.slane %v2443, 3
      %v4896 = vrot.slane %v2518, 3
      %v4897 = vrot.slane %v2520, 3
      %v4952 = vadd.f32 %v4736, %v4844
      %v4953 = vadd.f32 %v4737, %v4845
      %v4954 = vadd.f32 %v4738, %v4846
      %v4955 = vadd.f32 %v4739, %v4847
      %v4956 = vadd.f32 %v4740, %v4848
      %v4957 = vadd.f32 %v4741, %v4849
      %v4958 = vadd.f32 %v4742, %v4850
      %v4959 = vadd.f32 %v4743, %v4851
      %v4960 = vadd.f32 %v4744, %v4852
      %v4961 = vadd.f32 %v4745, %v4853
      %v4962 = vadd.f32 %v4746, %v4854
      %v4963 = vadd.f32 %v4747, %v4855
      %v4964 = vadd.f32 %v4748, %v4856
      %v4965 = vadd.f32 %v4749, %v4857
      %v4966 = vadd.f32 %v4750, %v4858
      %v4967 = vadd.f32 %v4751, %v4859
      %v4968 = vadd.f32 %v4752, %v4860
      %v4969 = vadd.f32 %v4753, %v4861
      %v4970 = vadd.f32 %v4754, %v4862
      %v4971 = vadd.f32 %v4755, %v4863
      %v4972 = vadd.f32 %v4756, %v4864
      %v4973 = vadd.f32 %v4757, %v4865
      %v4974 = vadd.f32 %v4758, %v4866
      %v4975 = vadd.f32 %v4759, %v4867
      %v4976 = vadd.f32 %v4760, %v4868
      %v4977 = vadd.f32 %v4761, %v4869
      %v4978 = vadd.f32 %v4762, %v4870
      %v4979 = vadd.f32 %v4763, %v4871
      %v4980 = vadd.f32 %v4764, %v4872
      %v4981 = vadd.f32 %v4765, %v4873
      %v4982 = vadd.f32 %v4766, %v4874
      %v4983 = vadd.f32 %v4767, %v4875
      %v4984 = vadd.f32 %v4768, %v4876
      %v4985 = vadd.f32 %v4769, %v4877
      %v4986 = vadd.f32 %v4770, %v4878
      %v4987 = vadd.f32 %v4771, %v4879
      %v4988 = vadd.f32 %v4772, %v4880
      %v4989 = vadd.f32 %v4773, %v4881
      %v4990 = vadd.f32 %v4774, %v4882
      %v4991 = vadd.f32 %v4775, %v4883
      %v4992 = vadd.f32 %v4776, %v4884
      %v4993 = vadd.f32 %v4777, %v4885
      %v4994 = vadd.f32 %v4778, %v4886
      %v4995 = vadd.f32 %v4779, %v4887
      %v4996 = vadd.f32 %v4780, %v4888
      %v4997 = vadd.f32 %v4781, %v4889
      %v4998 = vadd.f32 %v4782, %v4890
      %v4999 = vadd.f32 %v4783, %v4891
      %v5000 = vadd.f32 %v4784, %v4892
      %v5001 = vadd.f32 %v4785, %v4893
      %v5002 = vadd.f32 %v4786, %v4894
      %v5003 = vadd.f32 %v4787, %v4895
      %v5004 = vadd.f32 %v4788, %v4896
      %v5005 = vadd.f32 %v4789, %v4897
      %v5060 = vrot.slane %v4142, 3
      %v5061 = vrot.slane %v4143, 3
      %v5062 = vrot.slane %v4144, 3
      %v5063 = vrot.slane %v4145, 3
      %v5064 = vrot.slane %v4146, 3
      %v5065 = vrot.slane %v4147, 3
      %v5066 = vrot.slane %v4148, 3
      %v5067 = vrot.slane %v4149, 3
      %v5068 = vrot.slane %v4150, 3
      %v5069 = vrot.slane %v4151, 3
      %v5070 = vrot.slane %v4152, 3
      %v5071 = vrot.slane %v4153, 3
      %v5072 = vrot.slane %v4154, 3
      %v5073 = vrot.slane %v4155, 3
      %v5074 = vrot.slane %v4156, 3
      %v5075 = vrot.slane %v4157, 3
      %v5076 = vrot.slane %v4158, 3
      %v5077 = vrot.slane %v4159, 3
      %v5078 = vrot.slane %v4160, 3
      %v5079 = vrot.slane %v4161, 3
      %v5080 = vrot.slane %v4162, 3
      %v5081 = vrot.slane %v4163, 3
      %v5082 = vrot.slane %v4164, 3
      %v5083 = vrot.slane %v4165, 3
      %v5084 = vrot.slane %v4166, 3
      %v5085 = vrot.slane %v4167, 3
      %v5086 = vrot.slane %v4168, 3
      %v5087 = vrot.slane %v4169, 3
      %v5088 = vrot.slane %v4170, 3
      %v5089 = vrot.slane %v4171, 3
      %v5090 = vrot.slane %v4172, 3
      %v5091 = vrot.slane %v4173, 3
      %v5092 = vrot.slane %v4174, 3
      %v5093 = vrot.slane %v4175, 3
      %v5094 = vrot.slane %v4176, 3
      %v5095 = vrot.slane %v4177, 3
      %v5096 = vrot.slane %v4178, 3
      %v5097 = vrot.slane %v4179, 3
      %v5098 = vrot.slane %v4180, 3
      %v5099 = vrot.slane %v4181, 3
      %v5100 = vrot.slane %v4182, 3
      %v5101 = vrot.slane %v4183, 3
      %v5102 = vrot.slane %v4184, 3
      %v5103 = vrot.slane %v4185, 3
      %v5104 = vrot.slane %v4186, 3
      %v5105 = vrot.slane %v4187, 3
      %v5106 = vrot.slane %v4188, 3
      %v5107 = vrot.slane %v4189, 3
      %v5108 = vrot.slane %v4190, 3
      %v5109 = vrot.slane %v4191, 3
      %v5110 = vrot.slane %v4192, 3
      %v5111 = vrot.slane %v4193, 3
      %v5112 = vrot.slane %v4194, 3
      %v5113 = vrot.slane %v4195, 3
      %v5222 = vrot.slane %v4952, 6
      %v5223 = vrot.slane %v4953, 6
      %v5224 = vrot.slane %v4954, 6
      %v5225 = vrot.slane %v4955, 6
      %v5226 = vrot.slane %v4956, 6
      %v5227 = vrot.slane %v4957, 6
      %v5228 = vrot.slane %v4958, 6
      %v5229 = vrot.slane %v4959, 6
      %v5230 = vrot.slane %v4960, 6
      %v5231 = vrot.slane %v4961, 6
      %v5232 = vrot.slane %v4962, 6
      %v5233 = vrot.slane %v4963, 6
      %v5234 = vrot.slane %v4964, 6
      %v5235 = vrot.slane %v4965, 6
      %v5236 = vrot.slane %v4966, 6
      %v5237 = vrot.slane %v4967, 6
      %v5238 = vrot.slane %v4968, 6
      %v5239 = vrot.slane %v4969, 6
      %v5240 = vrot.slane %v4970, 6
      %v5241 = vrot.slane %v4971, 6
      %v5242 = vrot.slane %v4972, 6
      %v5243 = vrot.slane %v4973, 6
      %v5244 = vrot.slane %v4974, 6
      %v5245 = vrot.slane %v4975, 6
      %v5246 = vrot.slane %v4976, 6
      %v5247 = vrot.slane %v4977, 6
      %v5248 = vrot.slane %v4978, 6
      %v5249 = vrot.slane %v4979, 6
      %v5250 = vrot.slane %v4980, 6
      %v5251 = vrot.slane %v4981, 6
      %v5252 = vrot.slane %v4982, 6
      %v5253 = vrot.slane %v4983, 6
      %v5254 = vrot.slane %v4984, 6
      %v5255 = vrot.slane %v4985, 6
      %v5256 = vrot.slane %v4986, 6
      %v5257 = vrot.slane %v4987, 6
      %v5258 = vrot.slane %v4988, 6
      %v5259 = vrot.slane %v4989, 6
      %v5260 = vrot.slane %v4990, 6
      %v5261 = vrot.slane %v4991, 6
      %v5262 = vrot.slane %v4992, 6
      %v5263 = vrot.slane %v4993, 6
      %v5264 = vrot.slane %v4994, 6
      %v5265 = vrot.slane %v4995, 6
      %v5266 = vrot.slane %v4996, 6
      %v5267 = vrot.slane %v4997, 6
      %v5268 = vrot.slane %v4998, 6
      %v5269 = vrot.slane %v4999, 6
      %v5270 = vrot.slane %v5000, 6
      %v5271 = vrot.slane %v5001, 6
      %v5272 = vrot.slane %v5002, 6
      %v5273 = vrot.slane %v5003, 6
      %v5274 = vrot.slane %v5004, 6
      %v5275 = vrot.slane %v5005, 6
      %vm5330 = vcmask 1040384
      %v5331 = vsel %vm5330, %v4142, %v5060
      %v5332 = vsel %vm5330, %v4143, %v5061
      %v5333 = vsel %vm5330, %v4144, %v5062
      %v5334 = vsel %vm5330, %v4145, %v5063
      %v5335 = vsel %vm5330, %v4146, %v5064
      %v5336 = vsel %vm5330, %v4147, %v5065
      %v5337 = vsel %vm5330, %v4148, %v5066
      %v5338 = vsel %vm5330, %v4149, %v5067
      %v5339 = vsel %vm5330, %v4150, %v5068
      %v5340 = vsel %vm5330, %v4151, %v5069
      %v5341 = vsel %vm5330, %v4152, %v5070
      %v5342 = vsel %vm5330, %v4153, %v5071
      %v5343 = vsel %vm5330, %v4154, %v5072
      %v5344 = vsel %vm5330, %v4155, %v5073
      %v5345 = vsel %vm5330, %v4156, %v5074
      %v5346 = vsel %vm5330, %v4157, %v5075
      %v5347 = vsel %vm5330, %v4158, %v5076
      %v5348 = vsel %vm5330, %v4159, %v5077
      %v5349 = vsel %vm5330, %v4160, %v5078
      %v5350 = vsel %vm5330, %v4161, %v5079
      %v5351 = vsel %vm5330, %v4162, %v5080
      %v5352 = vsel %vm5330, %v4163, %v5081
      %v5353 = vsel %vm5330, %v4164, %v5082
      %v5354 = vsel %vm5330, %v4165, %v5083
      %v5355 = vsel %vm5330, %v4166, %v5084
      %v5356 = vsel %vm5330, %v4167, %v5085
      %v5357 = vsel %vm5330, %v4168, %v5086
      %v5358 = vsel %vm5330, %v4169, %v5087
      %v5359 = vsel %vm5330, %v4170, %v5088
      %v5360 = vsel %vm5330, %v4171, %v5089
      %v5361 = vsel %vm5330, %v4172, %v5090
      %v5362 = vsel %vm5330, %v4173, %v5091
      %v5363 = vsel %vm5330, %v4174, %v5092
      %v5364 = vsel %vm5330, %v4175, %v5093
      %v5365 = vsel %vm5330, %v4176, %v5094
      %v5366 = vsel %vm5330, %v4177, %v5095
      %v5367 = vsel %vm5330, %v4178, %v5096
      %v5368 = vsel %vm5330, %v4179, %v5097
      %v5369 = vsel %vm5330, %v4180, %v5098
      %v5370 = vsel %vm5330, %v4181, %v5099
      %v5371 = vsel %vm5330, %v4182, %v5100
      %v5372 = vsel %vm5330, %v4183, %v5101
      %v5373 = vsel %vm5330, %v4184, %v5102
      %v5374 = vsel %vm5330, %v4185, %v5103
      %v5375 = vsel %vm5330, %v4186, %v5104
      %v5376 = vsel %vm5330, %v4187, %v5105
      %v5377 = vsel %vm5330, %v4188, %v5106
      %v5378 = vsel %vm5330, %v4189, %v5107
      %v5379 = vsel %vm5330, %v4190, %v5108
      %v5380 = vsel %vm5330, %v4191, %v5109
      %v5381 = vsel %vm5330, %v4192, %v5110
      %v5382 = vsel %vm5330, %v4193, %v5111
      %v5383 = vsel %vm5330, %v4194, %v5112
      %v5384 = vsel %vm5330, %v4195, %v5113
      %vm5385 = vcmask 1041408
      %v5386 = vsel %vm5385, %v5331, %v5222
      %v5387 = vsel %vm5385, %v5332, %v5223
      %v5388 = vsel %vm5385, %v5333, %v5224
      %v5389 = vsel %vm5385, %v5334, %v5225
      %v5390 = vsel %vm5385, %v5335, %v5226
      %v5391 = vsel %vm5385, %v5336, %v5227
      %v5392 = vsel %vm5385, %v5337, %v5228
      %v5393 = vsel %vm5385, %v5338, %v5229
      %v5394 = vsel %vm5385, %v5339, %v5230
      %v5395 = vsel %vm5385, %v5340, %v5231
      %v5396 = vsel %vm5385, %v5341, %v5232
      %v5397 = vsel %vm5385, %v5342, %v5233
      %v5398 = vsel %vm5385, %v5343, %v5234
      %v5399 = vsel %vm5385, %v5344, %v5235
      %v5400 = vsel %vm5385, %v5345, %v5236
      %v5401 = vsel %vm5385, %v5346, %v5237
      %v5402 = vsel %vm5385, %v5347, %v5238
      %v5403 = vsel %vm5385, %v5348, %v5239
      %v5404 = vsel %vm5385, %v5349, %v5240
      %v5405 = vsel %vm5385, %v5350, %v5241
      %v5406 = vsel %vm5385, %v5351, %v5242
      %v5407 = vsel %vm5385, %v5352, %v5243
      %v5408 = vsel %vm5385, %v5353, %v5244
      %v5409 = vsel %vm5385, %v5354, %v5245
      %v5410 = vsel %vm5385, %v5355, %v5246
      %v5411 = vsel %vm5385, %v5356, %v5247
      %v5412 = vsel %vm5385, %v5357, %v5248
      %v5413 = vsel %vm5385, %v5358, %v5249
      %v5414 = vsel %vm5385, %v5359, %v5250
      %v5415 = vsel %vm5385, %v5360, %v5251
      %v5416 = vsel %vm5385, %v5361, %v5252
      %v5417 = vsel %vm5385, %v5362, %v5253
      %v5418 = vsel %vm5385, %v5363, %v5254
      %v5419 = vsel %vm5385, %v5364, %v5255
      %v5420 = vsel %vm5385, %v5365, %v5256
      %v5421 = vsel %vm5385, %v5366, %v5257
      %v5422 = vsel %vm5385, %v5367, %v5258
      %v5423 = vsel %vm5385, %v5368, %v5259
      %v5424 = vsel %vm5385, %v5369, %v5260
      %v5425 = vsel %vm5385, %v5370, %v5261
      %v5426 = vsel %vm5385, %v5371, %v5262
      %v5427 = vsel %vm5385, %v5372, %v5263
      %v5428 = vsel %vm5385, %v5373, %v5264
      %v5429 = vsel %vm5385, %v5374, %v5265
      %v5430 = vsel %vm5385, %v5375, %v5266
      %v5431 = vsel %vm5385, %v5376, %v5267
      %v5432 = vsel %vm5385, %v5377, %v5268
      %v5433 = vsel %vm5385, %v5378, %v5269
      %v5434 = vsel %vm5385, %v5379, %v5270
      %v5435 = vsel %vm5385, %v5380, %v5271
      %v5436 = vsel %vm5385, %v5381, %v5272
      %v5437 = vsel %vm5385, %v5382, %v5273
      %v5438 = vsel %vm5385, %v5383, %v5274
      %v5439 = vsel %vm5385, %v5384, %v5275
      %v5494 = vcombine.low %v5386, %v5387
      %v5495 = vcombine.low %v5388, %v5389
      %v5496 = vcombine.low %v5390, %v5391
      %v5497 = vcombine.low %v5392, %v5393
      %v5498 = vcombine.low %v5394, %v5395
      %v5499 = vcombine.low %v5396, %v5397
      %v5500 = vcombine.low %v5398, %v5399
      %v5501 = vcombine.low %v5400, %v5401
      %v5502 = vcombine.low %v5402, %v5403
      %v5503 = vcombine.low %v5404, %v5405
      %v5504 = vcombine.low %v5406, %v5407
      %v5505 = vcombine.low %v5408, %v5409
      %v5506 = vcombine.low %v5410, %v5411
      %v5507 = vcombine.low %v5412, %v5413
      %v5508 = vcombine.low %v5414, %v5415
      %v5509 = vcombine.low %v5416, %v5417
      %v5510 = vcombine.low %v5418, %v5419
      %v5511 = vcombine.low %v5420, %v5421
      %v5512 = vcombine.low %v5422, %v5423
      %v5513 = vcombine.low %v5424, %v5425
      %v5514 = vcombine.low %v5426, %v5427
      %v5515 = vcombine.low %v5428, %v5429
      %v5516 = vcombine.low %v5430, %v5431
      %v5517 = vcombine.low %v5432, %v5433
      %v5518 = vcombine.low %v5434, %v5435
      %v5519 = vcombine.low %v5436, %v5437
      %v5520 = vcombine.low %v5438, %v5439
      %5548 = vst [vmem:[%s190] sm:$0x77] %v5494
      %5549 = vst [vmem:[%s190 + $0x8] sm:$0x77] %v5495
      %5550 = vst [vmem:[%s190 + $0x10] sm:$0x77] %v5496
      %5551 = vst [vmem:[%s190 + $0x18] sm:$0x77] %v5497
      %5552 = vst [vmem:[%s190 + $0x20] sm:$0x77] %v5498
      %5553 = vst [vmem:[%s190 + $0x28] sm:$0x77] %v5499
      %5554 = vst [vmem:[%s190 + $0x30] sm:$0x77] %v5500
      %5555 = vst [vmem:[%s190 + $0x38] sm:$0x77] %v5501
      %5556 = vst [vmem:[%s190 + $0x40] sm:$0x77] %v5502
      %5557 = vst [vmem:[%s190 + $0x48] sm:$0x77] %v5503
      %5558 = vst [vmem:[%s190 + $0x50] sm:$0x77] %v5504
      %5559 = vst [vmem:[%s190 + $0x58] sm:$0x77] %v5505
      %5560 = vst [vmem:[%s190 + $0x60] sm:$0x77] %v5506
      %5561 = vst [vmem:[%s190 + $0x68] sm:$0x77] %v5507
      %5562 = vst [vmem:[%s190 + $0x70] sm:$0x77] %v5508
      %5563 = vst [vmem:[%s190 + $0x78] sm:$0x77] %v5509
      %5564 = vst [vmem:[%s190 + $0x80] sm:$0x77] %v5510
      %5565 = vst [vmem:[%s190 + $0x88] sm:$0x77] %v5511
      %5566 = vst [vmem:[%s190 + $0x90] sm:$0x77] %v5512
      %5567 = vst [vmem:[%s190 + $0x98] sm:$0x77] %v5513
      %5568 = vst [vmem:[%s190 + $0xa0] sm:$0x77] %v5514
      %5569 = vst [vmem:[%s190 + $0xa8] sm:$0x77] %v5515
      %5570 = vst [vmem:[%s190 + $0xb0] sm:$0x77] %v5516
      %5571 = vst [vmem:[%s190 + $0xb8] sm:$0x77] %v5517
      %5572 = vst [vmem:[%s190 + $0xc0] sm:$0x77] %v5518
      %5573 = vst [vmem:[%s190 + $0xc8] sm:$0x77] %v5519
      %5574 = vst [vmem:[%s190 + $0xd0] sm:$0x77] %v5520
      %p5575 = scmp.lt.s32.totalorder %s14, 1
      %s5576 = scalar_select %p5575, %s14, 1
      %s5577 = smul.addr %s5576, 54
      %s5578 = smul.addr %s5577, 4
      %s5579 = scalar_lea.vmem %s3, %s5578
      // Predicated region
      $region33: #{smpl_forward.3} parent=31 // pred_check
        %p5580 = pneg %p105
      $region34: #{smpl_forward.3} parent=31 // pred_check_branch
        %5582 = sbr.rel (%p5580) target = $region36
      $region35: #{smpl_forward.3} parent=31 // pred_region
        _
      $region36: #{smpl_forward.3} parent=31 // pred_fallthru
        _
    $region32: #{smpl_forward.3} parent=5 // pred_fallthru
      _
    %p5583 = scmp.le.s32.totalorder 2, %s9
    // Predicated region
    $region37: #{smpl_forward.3} parent=5 // pred_check
      %p5584 = pneg %p5583
    $region38: #{smpl_forward.3} parent=5 // pred_check_branch
      %5586 = sbr.rel (%p5584) target = $region40
    $region39: #{smpl_forward.3} parent=5 // pred_region
      %s5587 = ssub.s32 %s9, 2
      // Predicated region
      $region41: #{smpl_forward.3} parent=39 // pred_check
        %p5588 = pneg %p111
      $region42: #{smpl_forward.3} parent=39 // pred_check_branch
        %5590 = sbr.rel (%p5588) target = $region44
      $region43: #{smpl_forward.3} parent=39 // pred_region
        %p5591 = scmp.lt.s32.totalorder %s15, 1
        %s5592 = scalar_select %p5591, %s15, 1
        %s5593 = smul.addr %s5592, 54
        %s5594 = smul.addr %s5593, 4
        %s5595 = scalar_lea.vmem %s3, %s5594
      $region44: #{smpl_forward.3} parent=39 // pred_fallthru
        _
    $region40: #{smpl_forward.3} parent=5 // pred_fallthru
      _
  $region6: #{smpl_forward.3} parent=0 // loop_footer
    %s13 = sadd.s32 1, %s9
  $region7: #{smpl_forward.3} parent=0 // loop_footer_branch
    %8 = sbr.rel target = $region3
  $region8: #{smpl_forward.3} parent=0 // loop_exit
    _

// kernel: smpl_forward.2
$region0: #{smpl_forward.2}
  #allocation0 [shape = 'u32[]', space=smem, size = 0x4, offset = 0x4, fixed_abs, tag = 'smem constant byte address 0x4 - core index']
  #allocation1 [shape = 'u32[144,128]{1,0:T(1,128)}', space=vmem, size = 0x12000, scoped, tag = 'internal scratch']
  %s0 = inlined_call_operand.vmem [shape: bf16[2,224], index: 0, kind: input, shape index: {}]
  %s1 = inlined_call_operand.hbm [shape: bf16[224,20736], index: 1, kind: input, shape index: {}]
  %s2 = inlined_call_operand.vmem [shape: f32[2,20736], index: 2, kind: output, shape index: {}]
  %s3 = sld [smem:[#allocation0]]
  $region45: #{smpl_forward.2} parent=0
    _
  %s5 = ssub.s32 1, %s3
  %s6 = scalar_select 0, %s5, %s3
  $region1: #{smpl_forward.2} parent=0
    #allocation2 [shape = 'u8[9289728]{0}', space=vmem, size = 0x8dc000, scoped, tag = 'input window, operand 1']
    #allocation3 [shape = 's32[2]{0}', space=sflag, size = 0x8, scoped, tag = 'scoped memory for smpl_forward.2']
    %7 = vsyncpa [#allocation3], 0
    %s8 = scalar_lea.sflag [#allocation3], 1
    %9 = vsyncpa %s8, 0
    loop: start=0, step=1, limit=4
    $region2: #{smpl_forward.2} parent=1 // loop_pre_header
      _
    $region3: #{smpl_forward.2} parent=1 // loop_header
      %s11 = sphi 0, %s15
      %p12 = scmp.ge.s32.totalorder %s11, 4
      %s19 = sphi 0, %s19
      %s21 = sphi 0, %s19
      %s22 = sphi 0, %s21
      %s36 = sphi 0, %s22
      %s42 = sphi 0, %s44
      %s45 = sphi 0, %s42
      %s46 = sphi 0, %s45
      %s62 = sphi 0, %s46
      %s68 = sphi 0, %s70
      %s71 = sphi 0, %s68
      %s72 = sphi 0, %s71
      %s88 = sphi 0, %s72
    $region4: #{smpl_forward.2} parent=1 // loop_header_branch
      %14 = sbr.rel (%p12) target = $region8
    $region5: #{smpl_forward.2} parent=1 // loop_body
      %s16 = ssub.s32 %s11, 1
      %s17 = ssub.s32 %s11, 2
      %s18 = sadd.s32 %s11, 1
      %s20 = sadd.s32 %s19, 1
      %p23 = scmp.eq.s32.totalorder %s11, 1
      %p24 = scmp.ne.s32.totalorder %s19, %s21
      %p25 = scmp.eq.s32.totalorder %s11, 0
      %p26 = por %p24, %p25
      %p27 = scmp.ne.s32.totalorder %s19, %s21
      %p28 = scmp.eq.s32.totalorder %s16, 1
      %p29 = por %p27, %p28
      %p30 = scmp.ne.s32.totalorder %s21, %s22
      %p31 = scmp.eq.s32.totalorder %s16, 0
      %p32 = por %p30, %p31
      %p33 = scmp.ne.s32.totalorder %s21, %s22
      %p34 = scmp.eq.s32.totalorder %s17, 1
      %p35 = por %p33, %p34
      %p37 = scmp.ne.s32.totalorder %s22, %s36
      %p38 = scmp.eq.s32.totalorder %s17, 0
      %p39 = por %p37, %p38
      %s40 = ssub.s32 %s11, %s18
      %p41 = scmp.eq.s32.totalorder %s40, 0
      %s43 = sadd.s32 %s42, 1
      %s44 = scalar_select %p41, %s42, %s43
      %p47 = pneg %p41
      %p48 = scmp.eq.s32.totalorder %s11, 1
      %p49 = por %p47, %p48
      %p50 = scmp.ne.s32.totalorder %s42, %s45
      %p51 = scmp.eq.s32.totalorder %s11, 0
      %p52 = por %p50, %p51
      %p53 = scmp.ne.s32.totalorder %s42, %s45
      %p54 = scmp.eq.s32.totalorder %s16, 1
      %p55 = por %p53, %p54
      %p56 = scmp.ne.s32.totalorder %s45, %s46
      %p57 = scmp.eq.s32.totalorder %s16, 0
      %p58 = por %p56, %p57
      %p59 = scmp.ne.s32.totalorder %s45, %s46
      %p60 = scmp.eq.s32.totalorder %s17, 1
      %p61 = por %p59, %p60
      %p63 = scmp.ne.s32.totalorder %s46, %s62
      %p64 = scmp.eq.s32.totalorder %s17, 0
      %p65 = por %p63, %p64
      %s66 = ssub.s32 %s11, %s18
      %p67 = scmp.eq.s32.totalorder %s66, 0
      %s69 = sadd.s32 %s68, 1
      %s70 = scalar_select %p67, %s68, %s69
      %p73 = pneg %p67
      %p74 = scmp.eq.s32.totalorder %s11, 1
      %p75 = por %p73, %p74
      %p76 = scmp.ne.s32.totalorder %s68, %s71
      %p77 = scmp.eq.s32.totalorder %s11, 0
      %p78 = por %p76, %p77
      %p79 = scmp.ne.s32.totalorder %s68, %s71
      %p80 = scmp.eq.s32.totalorder %s16, 1
      %p81 = por %p79, %p80
      %p82 = scmp.ne.s32.totalorder %s71, %s72
      %p83 = scmp.eq.s32.totalorder %s16, 0
      %p84 = por %p82, %p83
      %p85 = scmp.ne.s32.totalorder %s71, %s72
      %p86 = scmp.eq.s32.totalorder %s17, 1
      %p87 = por %p85, %p86
      %p89 = scmp.ne.s32.totalorder %s72, %s88
      %p90 = scmp.eq.s32.totalorder %s17, 0
      %p91 = por %p89, %p90
      %p92 = scmp.le.s32.totalorder 1, %s11
      %p93 = scmp.lt.s32.totalorder %s11, 3
      %p94 = pnand %p92, %p93
      %p95 = pneg %p94
      // Predicated region
      $region9: #{smpl_forward.2} parent=5 // pred_check
        _
      $region10: #{smpl_forward.2} parent=5 // pred_check_branch
        %97 = sbr.rel (%p94) target = $region12
      $region11: #{smpl_forward.2} parent=5 // pred_region
        %s98 = ssub.s32 %s11, 1
        // Predicated region
        $region13: #{smpl_forward.2} parent=11 // pred_check
          %p99 = pneg %p32
        $region14: #{smpl_forward.2} parent=11 // pred_check_branch
          %101 = sbr.rel (%p99) target = $region16
        $region15: #{smpl_forward.2} parent=11 // pred_region
          _
        $region16: #{smpl_forward.2} parent=11 // pred_fallthru
          _
      $region12: #{smpl_forward.2} parent=5 // pred_fallthru
        _
      %p102 = scmp.lt.s32.totalorder %s11, 2
      // Predicated region
      $region17: #{smpl_forward.2} parent=5 // pred_check
        %p103 = pneg %p102
      $region18: #{smpl_forward.2} parent=5 // pred_check_branch
        %105 = sbr.rel (%p103) target = $region20
      $region19: #{smpl_forward.2} parent=5 // pred_region
        // Predicated region
        $region21: #{smpl_forward.2} parent=19 // pred_check
          %p106 = pneg %p52
        $region22: #{smpl_forward.2} parent=19 // pred_check_branch
          %108 = sbr.rel (%p106) target = $region24
        $region23: #{smpl_forward.2} parent=19 // pred_region
          %s109 = sand.u32 %s42, 1
          %s110 = scalar_lea.sflag [#allocation3], %s109
          %s111 = sand.u32 %s42, 1
          %s112 = smul.addr %s111, 9072
          %s113 = scalar_lea.vmem [#allocation2], %s112
          %s114 = smul.u32 81, %s11
          %s116 = ssub.s32 145152, 145152
          %117 = vsyncadd %s110, %s116
          %s118 = smul.addr %s114, 64
          %s119 = scalar_lea.hbm %s1, %s118
          %s120 = sshll.u32 %s113, 4
          %s121 = int_to_ptr.vmem [resolvable:$true] %s120
          %126 = dma.hbm_to_vmem [thread:$0]  %s119, 145152, %s121, %s110, 10368, 5184, 324
        $region24: #{smpl_forward.2} parent=19 // pred_fallthru
          _
      $region20: #{smpl_forward.2} parent=5 // pred_fallthru
        _
      %p127 = scmp.le.s32.totalorder 1, %s11
      %p128 = scmp.lt.s32.totalorder %s11, 3
      %p129 = pnand %p127, %p128
      %p130 = pneg %p129
      // Predicated region
      $region25: #{smpl_forward.2} parent=5 // pred_check
        _
      $region26: #{smpl_forward.2} parent=5 // pred_check_branch
        %132 = sbr.rel (%p129) target = $region28
      $region27: #{smpl_forward.2} parent=5 // pred_region
        %s133 = ssub.s32 %s11, 1
        %s134 = sand.u32 %s45, 1
        %s135 = scalar_lea.sflag [#allocation3], %s134
        %s136 = sand.u32 %s45, 1
        %s137 = smul.addr %s136, 9072
        %s138 = scalar_lea.vmem [#allocation2], %s137
        // Predicated region
        $region29: #{smpl_forward.2} parent=27 // pred_check
          %p139 = pneg %p58
        $region30: #{smpl_forward.2} parent=27 // pred_check_branch
          %141 = sbr.rel (%p139) target = $region32
        $region31: #{smpl_forward.2} parent=27 // pred_region
          %142 = dma.done %s135, 145152
        $region32: #{smpl_forward.2} parent=27 // pred_fallthru
          _
        %p143 = pneg %p32
        %p144 = pneg %p29
        %s145 = sand.u32 %s45, 1
        %s146 = scalar_lea.sflag [#allocation3], %s145
        %s147 = sand.u32 %s45, 1
        %s148 = smul.addr %s147, 9072
        %s149 = scalar_lea.vmem [#allocation2], %s148
        %p150 = pneg %p58
        %p151 = pneg %p55
        %p152 = pneg %p84
        %p153 = pneg %p81
        %s154 = smul.u32 81, %s16
        %p155 = scmp.lt.s32.totalorder %s154, 161
        %s156 = scalar_select %p155, %s154, 161
        %s157 = smul.addr %s156, 2
        %s158 = scalar_lea.vmem %s2, %s157
        %s159 = smul.u32 81, %s16
        %s160 = smul.u32 81, %s16
        %p161 = scmp.lt.s32.totalorder %s160, 161
        %s162 = scalar_select %p161, %s160, 161
        %s163 = smul.addr %s162, 2
        %s164 = scalar_lea.vmem %s2, %s163
        %s165 = smul.u32 81, %s16
        %v167 = vld [vmem:[%s0] sm:$0x3]
        %v168 = vld [vmem:[%s138] sm:$0xff]
        %v169 = vld [vmem:[%s138 + $0x8] sm:$0xff]
        %v170 = vld [vmem:[%s138 + $0x10] sm:$0xff]
        %v171 = vld [vmem:[%s138 + $0x18] sm:$0xff]
        %v172 = vld [vmem:[%s138 + $0x20] sm:$0xff]
        %v173 = vld [vmem:[%s138 + $0x28] sm:$0xff]
        %v174 = vld [vmem:[%s138 + $0x30] sm:$0xff]
        %v175 = vld [vmem:[%s138 + $0x38] sm:$0xff]
        %v176 = vld [vmem:[%s138 + $0x40] sm:$0xff]
        %v177 = vld [vmem:[%s138 + $0x48] sm:$0xff]
        %v178 = vld [vmem:[%s138 + $0x50] sm:$0xff]
        %v179 = vld [vmem:[%s138 + $0x58] sm:$0xff]
        %v180 = vld [vmem:[%s138 + $0x60] sm:$0xff]
        %v181 = vld [vmem:[%s138 + $0x68] sm:$0xff]
        %v182 = vld [vmem:[%s138 + $0x70] sm:$0xff]
        %v183 = vld [vmem:[%s138 + $0x78] sm:$0xff]
        %v184 = vld [vmem:[%s138 + $0x80] sm:$0xff]
        %v185 = vld [vmem:[%s138 + $0x88] sm:$0xff]
        %v186 = vld [vmem:[%s138 + $0x90] sm:$0xff]
        %v187 = vld [vmem:[%s138 + $0x98] sm:$0xff]
        %v188 = vld [vmem:[%s138 + $0xa0] sm:$0xff]
        %v189 = vld [vmem:[%s138 + $0xa8] sm:$0xff]
        %v190 = vld [vmem:[%s138 + $0xb0] sm:$0xff]
        %v191 = vld [vmem:[%s138 + $0xb8] sm:$0xff]
        %v192 = vld [vmem:[%s138 + $0xc0] sm:$0xff]
        %v193 = vld [vmem:[%s138 + $0xc8] sm:$0xff]
        %v194 = vld [vmem:[%s138 + $0xd0] sm:$0xff]
        %v195 = vld [vmem:[%s138 + $0xd8] sm:$0xff]
        %v196 = vld [vmem:[%s138 + $0xe0] sm:$0xff]
        %v197 = vld [vmem:[%s138 + $0xe8] sm:$0xff]
        %v198 = vld [vmem:[%s138 + $0xf0] sm:$0xff]
        %v199 = vld [vmem:[%s138 + $0xf8] sm:$0xff]
        %v200 = vld [vmem:[%s138 + $0x100] sm:$0xff]
        %v201 = vld [vmem:[%s138 + $0x108] sm:$0xff]
        %v202 = vld [vmem:[%s138 + $0x110] sm:$0xff]
        %v203 = vld [vmem:[%s138 + $0x118] sm:$0xff]
        %v204 = vld [vmem:[%s138 + $0x120] sm:$0xff]
        %v205 = vld [vmem:[%s138 + $0x128] sm:$0xff]
        %v206 = vld [vmem:[%s138 + $0x130] sm:$0xff]
        %v207 = vld [vmem:[%s138 + $0x138] sm:$0xff]
        %v208 = vld [vmem:[%s138 + $0x140] sm:$0xf]
        %v209 = vld [vmem:[%s138 + $0x144] sm:$0xff]
        %v210 = vld [vmem:[%s138 + $0x14c] sm:$0xff]
        %v211 = vld [vmem:[%s138 + $0x154] sm:$0xff]
        %v212 = vld [vmem:[%s138 + $0x15c] sm:$0xff]
        %v213 = vld [vmem:[%s138 + $0x164] sm:$0xff]
        %v214 = vld [vmem:[%s138 + $0x16c] sm:$0xff]
        %v215 = vld [vmem:[%s138 + $0x174] sm:$0xff]
        %v216 = vld [vmem:[%s138 + $0x17c] sm:$0xff]
        %v217 = vld [vmem:[%s138 + $0x184] sm:$0xff]
        %v218 = vld [vmem:[%s138 + $0x18c] sm:$0xff]
        %v219 = vld [vmem:[%s138 + $0x194] sm:$0xff]
        %v220 = vld [vmem:[%s138 + $0x19c] sm:$0xff]
        %v221 = vld [vmem:[%s138 + $0x1a4] sm:$0xff]
        %v222 = vld [vmem:[%s138 + $0x1ac] sm:$0xff]
        %v223 = vld [vmem:[%s138 + $0x1b4] sm:$0xff]
        %v224 = vld [vmem:[%s138 + $0x1bc] sm:$0xff]
        %v225 = vld [vmem:[%s138 + $0x1c4] sm:$0xff]
        %v226 = vld [vmem:[%s138 + $0x1cc] sm:$0xff]
        %v227 = vld [vmem:[%s138 + $0x1d4] sm:$0xff]
        %v228 = vld [vmem:[%s138 + $0x1dc] sm:$0xff]
        %v229 = vld [vmem:[%s138 + $0x1e4] sm:$0xff]
        %v230 = vld [vmem:[%s138 + $0x1ec] sm:$0xff]
        %v231 = vld [vmem:[%s138 + $0x1f4] sm:$0xff]
        %v232 = vld [vmem:[%s138 + $0x1fc] sm:$0xff]
        %v233 = vld [vmem:[%s138 + $0x204] sm:$0xff]
        %v234 = vld [vmem:[%s138 + $0x20c] sm:$0xff]
        %v235 = vld [vmem:[%s138 + $0x214] sm:$0xff]
        %v236 = vld [vmem:[%s138 + $0x21c] sm:$0xff]
        %v237 = vld [vmem:[%s138 + $0x224] sm:$0xff]
        %v238 = vld [vmem:[%s138 + $0x22c] sm:$0xff]
        %v239 = vld [vmem:[%s138 + $0x234] sm:$0xff]
        %v240 = vld [vmem:[%s138 + $0x23c] sm:$0xff]
        %v241 = vld [vmem:[%s138 + $0x244] sm:$0xff]
        %v242 = vld [vmem:[%s138 + $0x24c] sm:$0xff]
        %v243 = vld [vmem:[%s138 + $0x254] sm:$0xff]
        %v244 = vld [vmem:[%s138 + $0x25c] sm:$0xff]
        %v245 = vld [vmem:[%s138 + $0x264] sm:$0xff]
        %v246 = vld [vmem:[%s138 + $0x26c] sm:$0xff]
        %v247 = vld [vmem:[%s138 + $0x274] sm:$0xff]
        %v248 = vld [vmem:[%s138 + $0x27c] sm:$0xff]
        %v249 = vld [vmem:[%s138 + $0x284] sm:$0xf]
        %v250 = vld [vmem:[%s138 + $0x288] sm:$0xff]
        %v251 = vld [vmem:[%s138 + $0x290] sm:$0xff]
        %v252 = vld [vmem:[%s138 + $0x298] sm:$0xff]
        %v253 = vld [vmem:[%s138 + $0x2a0] sm:$0xff]
        %v254 = vld [vmem:[%s138 + $0x2a8] sm:$0xff]
        %v255 = vld [vmem:[%s138 + $0x2b0] sm:$0xff]
        %v256 = vld [vmem:[%s138 + $0x2b8] sm:$0xff]
        %v257 = vld [vmem:[%s138 + $0x2c0] sm:$0xff]
        %v258 = vld [vmem:[%s138 + $0x2c8] sm:$0xff]
        %v259 = vld [vmem:[%s138 + $0x2d0] sm:$0xff]
        %v260 = vld [vmem:[%s138 + $0x2d8] sm:$0xff]
        %v261 = vld [vmem:[%s138 + $0x2e0] sm:$0xff]
        %v262 = vld [vmem:[%s138 + $0x2e8] sm:$0xff]
        %v263 = vld [vmem:[%s138 + $0x2f0] sm:$0xff]
        %v264 = vld [vmem:[%s138 + $0x2f8] sm:$0xff]
        %v265 = vld [vmem:[%s138 + $0x300] sm:$0xff]
        %v266 = vld [vmem:[%s138 + $0x308] sm:$0xff]
        %v267 = vld [vmem:[%s138 + $0x310] sm:$0xff]
        %v268 = vld [vmem:[%s138 + $0x318] sm:$0xff]
        %v269 = vld [vmem:[%s138 + $0x320] sm:$0xff]
        %v270 = vld [vmem:[%s138 + $0x328] sm:$0xff]
        %v271 = vld [vmem:[%s138 + $0x330] sm:$0xff]
        %v272 = vld [vmem:[%s138 + $0x338] sm:$0xff]
        %v273 = vld [vmem:[%s138 + $0x340] sm:$0xff]
        %v274 = vld [vmem:[%s138 + $0x348] sm:$0xff]
        %v275 = vld [vmem:[%s138 + $0x350] sm:$0xff]
        %v276 = vld [vmem:[%s138 + $0x358] sm:$0xff]
        %v277 = vld [vmem:[%s138 + $0x360] sm:$0xff]
        %v278 = vld [vmem:[%s138 + $0x368] sm:$0xff]
        %v279 = vld [vmem:[%s138 + $0x370] sm:$0xff]
        %v280 = vld [vmem:[%s138 + $0x378] sm:$0xff]
        %v281 = vld [vmem:[%s138 + $0x380] sm:$0xff]
        %v282 = vld [vmem:[%s138 + $0x388] sm:$0xff]
        %v283 = vld [vmem:[%s138 + $0x390] sm:$0xff]
        %v284 = vld [vmem:[%s138 + $0x398] sm:$0xff]
        %v285 = vld [vmem:[%s138 + $0x3a0] sm:$0xff]
        %v286 = vld [vmem:[%s138 + $0x3a8] sm:$0xff]
        %v287 = vld [vmem:[%s138 + $0x3b0] sm:$0xff]
        %v288 = vld [vmem:[%s138 + $0x3b8] sm:$0xff]
        %v289 = vld [vmem:[%s138 + $0x3c0] sm:$0xff]
        %v290 = vld [vmem:[%s138 + $0x3c8] sm:$0xf]
        %v291 = vld [vmem:[%s138 + $0x3cc] sm:$0xff]
        %v292 = vld [vmem:[%s138 + $0x3d4] sm:$0xff]
        %v293 = vld [vmem:[%s138 + $0x3dc] sm:$0xff]
        %v294 = vld [vmem:[%s138 + $0x3e4] sm:$0xff]
        %v295 = vld [vmem:[%s138 + $0x3ec] sm:$0xff]
        %v296 = vld [vmem:[%s138 + $0x3f4] sm:$0xff]
        %v297 = vld [vmem:[%s138 + $0x3fc] sm:$0xff]
        %v298 = vld [vmem:[%s138 + $0x404] sm:$0xff]
        %v299 = vld [vmem:[%s138 + $0x40c] sm:$0xff]
        %v300 = vld [vmem:[%s138 + $0x414] sm:$0xff]
        %v301 = vld [vmem:[%s138 + $0x41c] sm:$0xff]
        %v302 = vld [vmem:[%s138 + $0x424] sm:$0xff]
        %v303 = vld [vmem:[%s138 + $0x42c] sm:$0xff]
        %v304 = vld [vmem:[%s138 + $0x434] sm:$0xff]
        %v305 = vld [vmem:[%s138 + $0x43c] sm:$0xff]
        %v306 = vld [vmem:[%s138 + $0x444] sm:$0xff]
        %v307 = vld [vmem:[%s138 + $0x44c] sm:$0xff]
        %v308 = vld [vmem:[%s138 + $0x454] sm:$0xff]
        %v309 = vld [vmem:[%s138 + $0x45c] sm:$0xff]
        %v310 = vld [vmem:[%s138 + $0x464] sm:$0xff]
        %v311 = vld [vmem:[%s138 + $0x46c] sm:$0xff]
        %v312 = vld [vmem:[%s138 + $0x474] sm:$0xff]
        %v313 = vld [vmem:[%s138 + $0x47c] sm:$0xff]
        %v314 = vld [vmem:[%s138 + $0x484] sm:$0xff]
        %v315 = vld [vmem:[%s138 + $0x48c] sm:$0xff]
        %v316 = vld [vmem:[%s138 + $0x494] sm:$0xff]
        %v317 = vld [vmem:[%s138 + $0x49c] sm:$0xff]
        %v318 = vld [vmem:[%s138 + $0x4a4] sm:$0xff]
        %v319 = vld [vmem:[%s138 + $0x4ac] sm:$0xff]
        %v320 = vld [vmem:[%s138 + $0x4b4] sm:$0xff]
        %v321 = vld [vmem:[%s138 + $0x4bc] sm:$0xff]
        %v322 = vld [vmem:[%s138 + $0x4c4] sm:$0xff]
        %v323 = vld [vmem:[%s138 + $0x4cc] sm:$0xff]
        %v324 = vld [vmem:[%s138 + $0x4d4] sm:$0xff]
        %v325 = vld [vmem:[%s138 + $0x4dc] sm:$0xff]
        %v326 = vld [vmem:[%s138 + $0x4e4] sm:$0xff]
        %v327 = vld [vmem:[%s138 + $0x4ec] sm:$0xff]
        %v328 = vld [vmem:[%s138 + $0x4f4] sm:$0xff]
        %v329 = vld [vmem:[%s138 + $0x4fc] sm:$0xff]
        %v330 = vld [vmem:[%s138 + $0x504] sm:$0xff]
        %v331 = vld [vmem:[%s138 + $0x50c] sm:$0xf]
        %v332 = vld [vmem:[%s138 + $0x510] sm:$0xff]
        %v333 = vld [vmem:[%s138 + $0x518] sm:$0xff]
        %v334 = vld [vmem:[%s138 + $0x520] sm:$0xff]
        %v335 = vld [vmem:[%s138 + $0x528] sm:$0xff]
        %v336 = vld [vmem:[%s138 + $0x530] sm:$0xff]
        %v337 = vld [vmem:[%s138 + $0x538] sm:$0xff]
        %v338 = vld [vmem:[%s138 + $0x540] sm:$0xff]
        %v339 = vld [vmem:[%s138 + $0x548] sm:$0xff]
        %v340 = vld [vmem:[%s138 + $0x550] sm:$0xff]
        %v341 = vld [vmem:[%s138 + $0x558] sm:$0xff]
        %v342 = vld [vmem:[%s138 + $0x560] sm:$0xff]
        %v343 = vld [vmem:[%s138 + $0x568] sm:$0xff]
        %v344 = vld [vmem:[%s138 + $0x570] sm:$0xff]
        %v345 = vld [vmem:[%s138 + $0x578] sm:$0xff]
        %v346 = vld [vmem:[%s138 + $0x580] sm:$0xff]
        %v347 = vld [vmem:[%s138 + $0x588] sm:$0xff]
        %v348 = vld [vmem:[%s138 + $0x590] sm:$0xff]
        %v349 = vld [vmem:[%s138 + $0x598] sm:$0xff]
        %v350 = vld [vmem:[%s138 + $0x5a0] sm:$0xff]
        %v351 = vld [vmem:[%s138 + $0x5a8] sm:$0xff]
        %v352 = vld [vmem:[%s138 + $0x5b0] sm:$0xff]
        %v353 = vld [vmem:[%s138 + $0x5b8] sm:$0xff]
        %v354 = vld [vmem:[%s138 + $0x5c0] sm:$0xff]
        %v355 = vld [vmem:[%s138 + $0x5c8] sm:$0xff]
        %v356 = vld [vmem:[%s138 + $0x5d0] sm:$0xff]
        %v357 = vld [vmem:[%s138 + $0x5d8] sm:$0xff]
        %v358 = vld [vmem:[%s138 + $0x5e0] sm:$0xff]
        %v359 = vld [vmem:[%s138 + $0x5e8] sm:$0xff]
        %v360 = vld [vmem:[%s138 + $0x5f0] sm:$0xff]
        %v361 = vld [vmem:[%s138 + $0x5f8] sm:$0xff]
        %v362 = vld [vmem:[%s138 + $0x600] sm:$0xff]
        %v363 = vld [vmem:[%s138 + $0x608] sm:$0xff]
        %v364 = vld [vmem:[%s138 + $0x610] sm:$0xff]
        %v365 = vld [vmem:[%s138 + $0x618] sm:$0xff]
        %v366 = vld [vmem:[%s138 + $0x620] sm:$0xff]
        %v367 = vld [vmem:[%s138 + $0x628] sm:$0xff]
        %v368 = vld [vmem:[%s138 + $0x630] sm:$0xff]
        %v369 = vld [vmem:[%s138 + $0x638] sm:$0xff]
        %v370 = vld [vmem:[%s138 + $0x640] sm:$0xff]
        %v371 = vld [vmem:[%s138 + $0x648] sm:$0xff]
        %v372 = vld [vmem:[%s138 + $0x650] sm:$0xf]
        %v373 = vld [vmem:[%s138 + $0x654] sm:$0xff]
        %v374 = vld [vmem:[%s138 + $0x65c] sm:$0xff]
        %v375 = vld [vmem:[%s138 + $0x664] sm:$0xff]
        %v376 = vld [vmem:[%s138 + $0x66c] sm:$0xff]
        %v377 = vld [vmem:[%s138 + $0x674] sm:$0xff]
        %v378 = vld [vmem:[%s138 + $0x67c] sm:$0xff]
        %v379 = vld [vmem:[%s138 + $0x684] sm:$0xff]
        %v380 = vld [vmem:[%s138 + $0x68c] sm:$0xff]
        %v381 = vld [vmem:[%s138 + $0x694] sm:$0xff]
        %v382 = vld [vmem:[%s138 + $0x69c] sm:$0xff]
        %v383 = vld [vmem:[%s138 + $0x6a4] sm:$0xff]
        %v384 = vld [vmem:[%s138 + $0x6ac] sm:$0xff]
        %v385 = vld [vmem:[%s138 + $0x6b4] sm:$0xff]
        %v386 = vld [vmem:[%s138 + $0x6bc] sm:$0xff]
        %v387 = vld [vmem:[%s138 + $0x6c4] sm:$0xff]
        %v388 = vld [vmem:[%s138 + $0x6cc] sm:$0xff]
        %v389 = vld [vmem:[%s138 + $0x6d4] sm:$0xff]
        %v390 = vld [vmem:[%s138 + $0x6dc] sm:$0xff]
        %v391 = vld [vmem:[%s138 + $0x6e4] sm:$0xff]
        %v392 = vld [vmem:[%s138 + $0x6ec] sm:$0xff]
        %v393 = vld [vmem:[%s138 + $0x6f4] sm:$0xff]
        %v394 = vld [vmem:[%s138 + $0x6fc] sm:$0xff]
        %v395 = vld [vmem:[%s138 + $0x704] sm:$0xff]
        %v396 = vld [vmem:[%s138 + $0x70c] sm:$0xff]
        %v397 = vld [vmem:[%s138 + $0x714] sm:$0xff]
        %v398 = vld [vmem:[%s138 + $0x71c] sm:$0xff]
        %v399 = vld [vmem:[%s138 + $0x724] sm:$0xff]
        %v400 = vld [vmem:[%s138 + $0x72c] sm:$0xff]
        %v401 = vld [vmem:[%s138 + $0x734] sm:$0xff]
        %v402 = vld [vmem:[%s138 + $0x73c] sm:$0xff]
        %v403 = vld [vmem:[%s138 + $0x744] sm:$0xff]
        %v404 = vld [vmem:[%s138 + $0x74c] sm:$0xff]
        %v405 = vld [vmem:[%s138 + $0x754] sm:$0xff]
        %v406 = vld [vmem:[%s138 + $0x75c] sm:$0xff]
        %v407 = vld [vmem:[%s138 + $0x764] sm:$0xff]
        %v408 = vld [vmem:[%s138 + $0x76c] sm:$0xff]
        %v409 = vld [vmem:[%s138 + $0x774] sm:$0xff]
        %v410 = vld [vmem:[%s138 + $0x77c] sm:$0xff]
        %v411 = vld [vmem:[%s138 + $0x784] sm:$0xff]
        %v412 = vld [vmem:[%s138 + $0x78c] sm:$0xff]
        %v413 = vld [vmem:[%s138 + $0x794] sm:$0xf]
        %v414 = vld [vmem:[%s138 + $0x798] sm:$0xff]
        %v415 = vld [vmem:[%s138 + $0x7a0] sm:$0xff]
        %v416 = vld [vmem:[%s138 + $0x7a8] sm:$0xff]
        %v417 = vld [vmem:[%s138 + $0x7b0] sm:$0xff]
        %v418 = vld [vmem:[%s138 + $0x7b8] sm:$0xff]
        %v419 = vld [vmem:[%s138 + $0x7c0] sm:$0xff]
        %v420 = vld [vmem:[%s138 + $0x7c8] sm:$0xff]
        %v421 = vld [vmem:[%s138 + $0x7d0] sm:$0xff]
        %v422 = vld [vmem:[%s138 + $0x7d8] sm:$0xff]
        %v423 = vld [vmem:[%s138 + $0x7e0] sm:$0xff]
        %v424 = vld [vmem:[%s138 + $0x7e8] sm:$0xff]
        %v425 = vld [vmem:[%s138 + $0x7f0] sm:$0xff]
        %v426 = vld [vmem:[%s138 + $0x7f8] sm:$0xff]
        %v427 = vld [vmem:[%s138 + $0x800] sm:$0xff]
        %v428 = vld [vmem:[%s138 + $0x808] sm:$0xff]
        %v429 = vld [vmem:[%s138 + $0x810] sm:$0xff]
        %v430 = vld [vmem:[%s138 + $0x818] sm:$0xff]
        %v431 = vld [vmem:[%s138 + $0x820] sm:$0xff]
        %v432 = vld [vmem:[%s138 + $0x828] sm:$0xff]
        %v433 = vld [vmem:[%s138 + $0x830] sm:$0xff]
        %v434 = vld [vmem:[%s138 + $0x838] sm:$0xff]
        %v435 = vld [vmem:[%s138 + $0x840] sm:$0xff]
        %v436 = vld [vmem:[%s138 + $0x848] sm:$0xff]
        %v437 = vld [vmem:[%s138 + $0x850] sm:$0xff]
        %v438 = vld [vmem:[%s138 + $0x858] sm:$0xff]
        %v439 = vld [vmem:[%s138 + $0x860] sm:$0xff]
        %v440 = vld [vmem:[%s138 + $0x868] sm:$0xff]
        %v441 = vld [vmem:[%s138 + $0x870] sm:$0xff]
        %v442 = vld [vmem:[%s138 + $0x878] sm:$0xff]
        %v443 = vld [vmem:[%s138 + $0x880] sm:$0xff]
        %v444 = vld [vmem:[%s138 + $0x888] sm:$0xff]
        %v445 = vld [vmem:[%s138 + $0x890] sm:$0xff]
        %v446 = vld [vmem:[%s138 + $0x898] sm:$0xff]
        %v447 = vld [vmem:[%s138 + $0x8a0] sm:$0xff]
        %v448 = vld [vmem:[%s138 + $0x8a8] sm:$0xff]
        %v449 = vld [vmem:[%s138 + $0x8b0] sm:$0xff]
        %v450 = vld [vmem:[%s138 + $0x8b8] sm:$0xff]
        %v451 = vld [vmem:[%s138 + $0x8c0] sm:$0xff]
        %v452 = vld [vmem:[%s138 + $0x8c8] sm:$0xff]
        %v453 = vld [vmem:[%s138 + $0x8d0] sm:$0xff]
        %v454 = vld [vmem:[%s138 + $0x8d8] sm:$0xf]
        %v455 = vld [vmem:[%s138 + $0x8dc] sm:$0xff]
        %v456 = vld [vmem:[%s138 + $0x8e4] sm:$0xff]
        %v457 = vld [vmem:[%s138 + $0x8ec] sm:$0xff]
        %v458 = vld [vmem:[%s138 + $0x8f4] sm:$0xff]
        %v459 = vld [vmem:[%s138 + $0x8fc] sm:$0xff]
        %v460 = vld [vmem:[%s138 + $0x904] sm:$0xff]
        %v461 = vld [vmem:[%s138 + $0x90c] sm:$0xff]
        %v462 = vld [vmem:[%s138 + $0x914] sm:$0xff]
        %v463 = vld [vmem:[%s138 + $0x91c] sm:$0xff]
        %v464 = vld [vmem:[%s138 + $0x924] sm:$0xff]
        %v465 = vld [vmem:[%s138 + $0x92c] sm:$0xff]
        %v466 = vld [vmem:[%s138 + $0x934] sm:$0xff]
        %v467 = vld [vmem:[%s138 + $0x93c] sm:$0xff]
        %v468 = vld [vmem:[%s138 + $0x944] sm:$0xff]
        %v469 = vld [vmem:[%s138 + $0x94c] sm:$0xff]
        %v470 = vld [vmem:[%s138 + $0x954] sm:$0xff]
        %v471 = vld [vmem:[%s138 + $0x95c] sm:$0xff]
        %v472 = vld [vmem:[%s138 + $0x964] sm:$0xff]
        %v473 = vld [vmem:[%s138 + $0x96c] sm:$0xff]
        %v474 = vld [vmem:[%s138 + $0x974] sm:$0xff]
        %v475 = vld [vmem:[%s138 + $0x97c] sm:$0xff]
        %v476 = vld [vmem:[%s138 + $0x984] sm:$0xff]
        %v477 = vld [vmem:[%s138 + $0x98c] sm:$0xff]
        %v478 = vld [vmem:[%s138 + $0x994] sm:$0xff]
        %v479 = vld [vmem:[%s138 + $0x99c] sm:$0xff]
        %v480 = vld [vmem:[%s138 + $0x9a4] sm:$0xff]
        %v481 = vld [vmem:[%s138 + $0x9ac] sm:$0xff]
        %v482 = vld [vmem:[%s138 + $0x9b4] sm:$0xff]
        %v483 = vld [vmem:[%s138 + $0x9bc] sm:$0xff]
        %v484 = vld [vmem:[%s138 + $0x9c4] sm:$0xff]
        %v485 = vld [vmem:[%s138 + $0x9cc] sm:$0xff]
        %v486 = vld [vmem:[%s138 + $0x9d4] sm:$0xff]
        %v487 = vld [vmem:[%s138 + $0x9dc] sm:$0xff]
        %v488 = vld [vmem:[%s138 + $0x9e4] sm:$0xff]
        %v489 = vld [vmem:[%s138 + $0x9ec] sm:$0xff]
        %v490 = vld [vmem:[%s138 + $0x9f4] sm:$0xff]
        %v491 = vld [vmem:[%s138 + $0x9fc] sm:$0xff]
        %v492 = vld [vmem:[%s138 + $0xa04] sm:$0xff]
        %v493 = vld [vmem:[%s138 + $0xa0c] sm:$0xff]
        %v494 = vld [vmem:[%s138 + $0xa14] sm:$0xff]
        %v495 = vld [vmem:[%s138 + $0xa1c] sm:$0xf]
        %v496 = vld [vmem:[%s138 + $0xa20] sm:$0xff]
        %v497 = vld [vmem:[%s138 + $0xa28] sm:$0xff]
        %v498 = vld [vmem:[%s138 + $0xa30] sm:$0xff]
        %v499 = vld [vmem:[%s138 + $0xa38] sm:$0xff]
        %v500 = vld [vmem:[%s138 + $0xa40] sm:$0xff]
        %v501 = vld [vmem:[%s138 + $0xa48] sm:$0xff]
        %v502 = vld [vmem:[%s138 + $0xa50] sm:$0xff]
        %v503 = vld [vmem:[%s138 + $0xa58] sm:$0xff]
        %v504 = vld [vmem:[%s138 + $0xa60] sm:$0xff]
        %v505 = vld [vmem:[%s138 + $0xa68] sm:$0xff]
        %v506 = vld [vmem:[%s138 + $0xa70] sm:$0xff]
        %v507 = vld [vmem:[%s138 + $0xa78] sm:$0xff]
        %v508 = vld [vmem:[%s138 + $0xa80] sm:$0xff]
        %v509 = vld [vmem:[%s138 + $0xa88] sm:$0xff]
        %v510 = vld [vmem:[%s138 + $0xa90] sm:$0xff]
        %v511 = vld [vmem:[%s138 + $0xa98] sm:$0xff]
        %v512 = vld [vmem:[%s138 + $0xaa0] sm:$0xff]
        %v513 = vld [vmem:[%s138 + $0xaa8] sm:$0xff]
        %v514 = vld [vmem:[%s138 + $0xab0] sm:$0xff]
        %v515 = vld [vmem:[%s138 + $0xab8] sm:$0xff]
        %v516 = vld [vmem:[%s138 + $0xac0] sm:$0xff]
        %v517 = vld [vmem:[%s138 + $0xac8] sm:$0xff]
        %v518 = vld [vmem:[%s138 + $0xad0] sm:$0xff]
        %v519 = vld [vmem:[%s138 + $0xad8] sm:$0xff]
        %v520 = vld [vmem:[%s138 + $0xae0] sm:$0xff]
        %v521 = vld [vmem:[%s138 + $0xae8] sm:$0xff]
        %v522 = vld [vmem:[%s138 + $0xaf0] sm:$0xff]
        %v523 = vld [vmem:[%s138 + $0xaf8] sm:$0xff]
        %v524 = vld [vmem:[%s138 + $0xb00] sm:$0xff]
        %v525 = vld [vmem:[%s138 + $0xb08] sm:$0xff]
        %v526 = vld [vmem:[%s138 + $0xb10] sm:$0xff]
        %v527 = vld [vmem:[%s138 + $0xb18] sm:$0xff]
        %v528 = vld [vmem:[%s138 + $0xb20] sm:$0xff]
        %v529 = vld [vmem:[%s138 + $0xb28] sm:$0xff]
        %v530 = vld [vmem:[%s138 + $0xb30] sm:$0xff]
        %v531 = vld [vmem:[%s138 + $0xb38] sm:$0xff]
        %v532 = vld [vmem:[%s138 + $0xb40] sm:$0xff]
        %v533 = vld [vmem:[%s138 + $0xb48] sm:$0xff]
        %v534 = vld [vmem:[%s138 + $0xb50] sm:$0xff]
        %v535 = vld [vmem:[%s138 + $0xb58] sm:$0xff]
        %v536 = vld [vmem:[%s138 + $0xb60] sm:$0xf]
        %v537 = vld [vmem:[%s138 + $0xb64] sm:$0xff]
        %v538 = vld [vmem:[%s138 + $0xb6c] sm:$0xff]
        %v539 = vld [vmem:[%s138 + $0xb74] sm:$0xff]
        %v540 = vld [vmem:[%s138 + $0xb7c] sm:$0xff]
        %v541 = vld [vmem:[%s138 + $0xb84] sm:$0xff]
        %v542 = vld [vmem:[%s138 + $0xb8c] sm:$0xff]
        %v543 = vld [vmem:[%s138 + $0xb94] sm:$0xff]
        %v544 = vld [vmem:[%s138 + $0xb9c] sm:$0xff]
        %v545 = vld [vmem:[%s138 + $0xba4] sm:$0xff]
        %v546 = vld [vmem:[%s138 + $0xbac] sm:$0xff]
        %v547 = vld [vmem:[%s138 + $0xbb4] sm:$0xff]
        %v548 = vld [vmem:[%s138 + $0xbbc] sm:$0xff]
        %v549 = vld [vmem:[%s138 + $0xbc4] sm:$0xff]
        %v550 = vld [vmem:[%s138 + $0xbcc] sm:$0xff]
        %v551 = vld [vmem:[%s138 + $0xbd4] sm:$0xff]
        %v552 = vld [vmem:[%s138 + $0xbdc] sm:$0xff]
        %v553 = vld [vmem:[%s138 + $0xbe4] sm:$0xff]
        %v554 = vld [vmem:[%s138 + $0xbec] sm:$0xff]
        %v555 = vld [vmem:[%s138 + $0xbf4] sm:$0xff]
        %v556 = vld [vmem:[%s138 + $0xbfc] sm:$0xff]
        %v557 = vld [vmem:[%s138 + $0xc04] sm:$0xff]
        %v558 = vld [vmem:[%s138 + $0xc0c] sm:$0xff]
        %v559 = vld [vmem:[%s138 + $0xc14] sm:$0xff]
        %v560 = vld [vmem:[%s138 + $0xc1c] sm:$0xff]
        %v561 = vld [vmem:[%s138 + $0xc24] sm:$0xff]
        %v562 = vld [vmem:[%s138 + $0xc2c] sm:$0xff]
        %v563 = vld [vmem:[%s138 + $0xc34] sm:$0xff]
        %v564 = vld [vmem:[%s138 + $0xc3c] sm:$0xff]
        %v565 = vld [vmem:[%s138 + $0xc44] sm:$0xff]
        %v566 = vld [vmem:[%s138 + $0xc4c] sm:$0xff]
        %v567 = vld [vmem:[%s138 + $0xc54] sm:$0xff]
        %v568 = vld [vmem:[%s138 + $0xc5c] sm:$0xff]
        %v569 = vld [vmem:[%s138 + $0xc64] sm:$0xff]
        %v570 = vld [vmem:[%s138 + $0xc6c] sm:$0xff]
        %v571 = vld [vmem:[%s138 + $0xc74] sm:$0xff]
        %v572 = vld [vmem:[%s138 + $0xc7c] sm:$0xff]
        %v573 = vld [vmem:[%s138 + $0xc84] sm:$0xff]
        %v574 = vld [vmem:[%s138 + $0xc8c] sm:$0xff]
        %v575 = vld [vmem:[%s138 + $0xc94] sm:$0xff]
        %v576 = vld [vmem:[%s138 + $0xc9c] sm:$0xff]
        %v577 = vld [vmem:[%s138 + $0xca4] sm:$0xf]
        %v578 = vld [vmem:[%s138 + $0xca8] sm:$0xff]
        %v579 = vld [vmem:[%s138 + $0xcb0] sm:$0xff]
        %v580 = vld [vmem:[%s138 + $0xcb8] sm:$0xff]
        %v581 = vld [vmem:[%s138 + $0xcc0] sm:$0xff]
        %v582 = vld [vmem:[%s138 + $0xcc8] sm:$0xff]
        %v583 = vld [vmem:[%s138 + $0xcd0] sm:$0xff]
        %v584 = vld [vmem:[%s138 + $0xcd8] sm:$0xff]
        %v585 = vld [vmem:[%s138 + $0xce0] sm:$0xff]
        %v586 = vld [vmem:[%s138 + $0xce8] sm:$0xff]
        %v587 = vld [vmem:[%s138 + $0xcf0] sm:$0xff]
        %v588 = vld [vmem:[%s138 + $0xcf8] sm:$0xff]
        %v589 = vld [vmem:[%s138 + $0xd00] sm:$0xff]
        %v590 = vld [vmem:[%s138 + $0xd08] sm:$0xff]
        %v591 = vld [vmem:[%s138 + $0xd10] sm:$0xff]
        %v592 = vld [vmem:[%s138 + $0xd18] sm:$0xff]
        %v593 = vld [vmem:[%s138 + $0xd20] sm:$0xff]
        %v594 = vld [vmem:[%s138 + $0xd28] sm:$0xff]
        %v595 = vld [vmem:[%s138 + $0xd30] sm:$0xff]
        %v596 = vld [vmem:[%s138 + $0xd38] sm:$0xff]
        %v597 = vld [vmem:[%s138 + $0xd40] sm:$0xff]
        %v598 = vld [vmem:[%s138 + $0xd48] sm:$0xff]
        %v599 = vld [vmem:[%s138 + $0xd50] sm:$0xff]
        %v600 = vld [vmem:[%s138 + $0xd58] sm:$0xff]
        %v601 = vld [vmem:[%s138 + $0xd60] sm:$0xff]
        %v602 = vld [vmem:[%s138 + $0xd68] sm:$0xff]
        %v603 = vld [vmem:[%s138 + $0xd70] sm:$0xff]
        %v604 = vld [vmem:[%s138 + $0xd78] sm:$0xff]
        %v605 = vld [vmem:[%s138 + $0xd80] sm:$0xff]
        %v606 = vld [vmem:[%s138 + $0xd88] sm:$0xff]
        %v607 = vld [vmem:[%s138 + $0xd90] sm:$0xff]
        %v608 = vld [vmem:[%s138 + $0xd98] sm:$0xff]
        %v609 = vld [vmem:[%s138 + $0xda0] sm:$0xff]
        %v610 = vld [vmem:[%s138 + $0xda8] sm:$0xff]
        %v611 = vld [vmem:[%s138 + $0xdb0] sm:$0xff]
        %v612 = vld [vmem:[%s138 + $0xdb8] sm:$0xff]
        %v613 = vld [vmem:[%s138 + $0xdc0] sm:$0xff]
        %v614 = vld [vmem:[%s138 + $0xdc8] sm:$0xff]
        %v615 = vld [vmem:[%s138 + $0xdd0] sm:$0xff]
        %v616 = vld [vmem:[%s138 + $0xdd8] sm:$0xff]
        %v617 = vld [vmem:[%s138 + $0xde0] sm:$0xff]
        %v618 = vld [vmem:[%s138 + $0xde8] sm:$0xf]
        %v619 = vld [vmem:[%s138 + $0xdec] sm:$0xff]
        %v620 = vld [vmem:[%s138 + $0xdf4] sm:$0xff]
        %v621 = vld [vmem:[%s138 + $0xdfc] sm:$0xff]
        %v622 = vld [vmem:[%s138 + $0xe04] sm:$0xff]
        %v623 = vld [vmem:[%s138 + $0xe0c] sm:$0xff]
        %v624 = vld [vmem:[%s138 + $0xe14] sm:$0xff]
        %v625 = vld [vmem:[%s138 + $0xe1c] sm:$0xff]
        %v626 = vld [vmem:[%s138 + $0xe24] sm:$0xff]
        %v627 = vld [vmem:[%s138 + $0xe2c] sm:$0xff]
        %v628 = vld [vmem:[%s138 + $0xe34] sm:$0xff]
        %v629 = vld [vmem:[%s138 + $0xe3c] sm:$0xff]
        %v630 = vld [vmem:[%s138 + $0xe44] sm:$0xff]
        %v631 = vld [vmem:[%s138 + $0xe4c] sm:$0xff]
        %v632 = vld [vmem:[%s138 + $0xe54] sm:$0xff]
        %v633 = vld [vmem:[%s138 + $0xe5c] sm:$0xff]
        %v634 = vld [vmem:[%s138 + $0xe64] sm:$0xff]
        %v635 = vld [vmem:[%s138 + $0xe6c] sm:$0xff]
        %v636 = vld [vmem:[%s138 + $0xe74] sm:$0xff]
        %v637 = vld [vmem:[%s138 + $0xe7c] sm:$0xff]
        %v638 = vld [vmem:[%s138 + $0xe84] sm:$0xff]
        %v639 = vld [vmem:[%s138 + $0xe8c] sm:$0xff]
        %v640 = vld [vmem:[%s138 + $0xe94] sm:$0xff]
        %v641 = vld [vmem:[%s138 + $0xe9c] sm:$0xff]
        %v642 = vld [vmem:[%s138 + $0xea4] sm:$0xff]
        %v643 = vld [vmem:[%s138 + $0xeac] sm:$0xff]
        %v644 = vld [vmem:[%s138 + $0xeb4] sm:$0xff]
        %v645 = vld [vmem:[%s138 + $0xebc] sm:$0xff]
        %v646 = vld [vmem:[%s138 + $0xec4] sm:$0xff]
        %v647 = vld [vmem:[%s138 + $0xecc] sm:$0xff]
        %v648 = vld [vmem:[%s138 + $0xed4] sm:$0xff]
        %v649 = vld [vmem:[%s138 + $0xedc] sm:$0xff]
        %v650 = vld [vmem:[%s138 + $0xee4] sm:$0xff]
        %v651 = vld [vmem:[%s138 + $0xeec] sm:$0xff]
        %v652 = vld [vmem:[%s138 + $0xef4] sm:$0xff]
        %v653 = vld [vmem:[%s138 + $0xefc] sm:$0xff]
        %v654 = vld [vmem:[%s138 + $0xf04] sm:$0xff]
        %v655 = vld [vmem:[%s138 + $0xf0c] sm:$0xff]
        %v656 = vld [vmem:[%s138 + $0xf14] sm:$0xff]
        %v657 = vld [vmem:[%s138 + $0xf1c] sm:$0xff]
        %v658 = vld [vmem:[%s138 + $0xf24] sm:$0xff]
        %v659 = vld [vmem:[%s138 + $0xf2c] sm:$0xf]
        %v660 = vld [vmem:[%s138 + $0xf30] sm:$0xff]
        %v661 = vld [vmem:[%s138 + $0xf38] sm:$0xff]
        %v662 = vld [vmem:[%s138 + $0xf40] sm:$0xff]
        %v663 = vld [vmem:[%s138 + $0xf48] sm:$0xff]
        %v664 = vld [vmem:[%s138 + $0xf50] sm:$0xff]
        %v665 = vld [vmem:[%s138 + $0xf58] sm:$0xff]
        %v666 = vld [vmem:[%s138 + $0xf60] sm:$0xff]
        %v667 = vld [vmem:[%s138 + $0xf68] sm:$0xff]
        %v668 = vld [vmem:[%s138 + $0xf70] sm:$0xff]
        %v669 = vld [vmem:[%s138 + $0xf78] sm:$0xff]
        %v670 = vld [vmem:[%s138 + $0xf80] sm:$0xff]
        %v671 = vld [vmem:[%s138 + $0xf88] sm:$0xff]
        %v672 = vld [vmem:[%s138 + $0xf90] sm:$0xff]
        %v673 = vld [vmem:[%s138 + $0xf98] sm:$0xff]
        %v674 = vld [vmem:[%s138 + $0xfa0] sm:$0xff]
        %v675 = vld [vmem:[%s138 + $0xfa8] sm:$0xff]
        %v676 = vld [vmem:[%s138 + $0xfb0] sm:$0xff]
        %v677 = vld [vmem:[%s138 + $0xfb8] sm:$0xff]
        %v678 = vld [vmem:[%s138 + $0xfc0] sm:$0xff]
        %v679 = vld [vmem:[%s138 + $0xfc8] sm:$0xff]
        %v680 = vld [vmem:[%s138 + $0xfd0] sm:$0xff]
        %v681 = vld [vmem:[%s138 + $0xfd8] sm:$0xff]
        %v682 = vld [vmem:[%s138 + $0xfe0] sm:$0xff]
        %v683 = vld [vmem:[%s138 + $0xfe8] sm:$0xff]
        %v684 = vld [vmem:[%s138 + $0xff0] sm:$0xff]
        %v685 = vld [vmem:[%s138 + $0xff8] sm:$0xff]
        %v686 = vld [vmem:[%s138 + $0x1000] sm:$0xff]
        %v687 = vld [vmem:[%s138 + $0x1008] sm:$0xff]
        %v688 = vld [vmem:[%s138 + $0x1010] sm:$0xff]
        %v689 = vld [vmem:[%s138 + $0x1018] sm:$0xff]
        %v690 = vld [vmem:[%s138 + $0x1020] sm:$0xff]
        %v691 = vld [vmem:[%s138 + $0x1028] sm:$0xff]
        %v692 = vld [vmem:[%s138 + $0x1030] sm:$0xff]
        %v693 = vld [vmem:[%s138 + $0x1038] sm:$0xff]
        %v694 = vld [vmem:[%s138 + $0x1040] sm:$0xff]
        %v695 = vld [vmem:[%s138 + $0x1048] sm:$0xff]
        %v696 = vld [vmem:[%s138 + $0x1050] sm:$0xff]
        %v697 = vld [vmem:[%s138 + $0x1058] sm:$0xff]
        %v698 = vld [vmem:[%s138 + $0x1060] sm:$0xff]
        %v699 = vld [vmem:[%s138 + $0x1068] sm:$0xff]
        %v700 = vld [vmem:[%s138 + $0x1070] sm:$0xf]
        %v701 = vld [vmem:[%s138 + $0x1074] sm:$0xff]
        %v702 = vld [vmem:[%s138 + $0x107c] sm:$0xff]
        %v703 = vld [vmem:[%s138 + $0x1084] sm:$0xff]
        %v704 = vld [vmem:[%s138 + $0x108c] sm:$0xff]
        %v705 = vld [vmem:[%s138 + $0x1094] sm:$0xff]
        %v706 = vld [vmem:[%s138 + $0x109c] sm:$0xff]
        %v707 = vld [vmem:[%s138 + $0x10a4] sm:$0xff]
        %v708 = vld [vmem:[%s138 + $0x10ac] sm:$0xff]
        %v709 = vld [vmem:[%s138 + $0x10b4] sm:$0xff]
        %v710 = vld [vmem:[%s138 + $0x10bc] sm:$0xff]
        %v711 = vld [vmem:[%s138 + $0x10c4] sm:$0xff]
        %v712 = vld [vmem:[%s138 + $0x10cc] sm:$0xff]
        %v713 = vld [vmem:[%s138 + $0x10d4] sm:$0xff]
        %v714 = vld [vmem:[%s138 + $0x10dc] sm:$0xff]
        %v715 = vld [vmem:[%s138 + $0x10e4] sm:$0xff]
        %v716 = vld [vmem:[%s138 + $0x10ec] sm:$0xff]
        %v717 = vld [vmem:[%s138 + $0x10f4] sm:$0xff]
        %v718 = vld [vmem:[%s138 + $0x10fc] sm:$0xff]
        %v719 = vld [vmem:[%s138 + $0x1104] sm:$0xff]
        %v720 = vld [vmem:[%s138 + $0x110c] sm:$0xff]
        %v721 = vld [vmem:[%s138 + $0x1114] sm:$0xff]
        %v722 = vld [vmem:[%s138 + $0x111c] sm:$0xff]
        %v723 = vld [vmem:[%s138 + $0x1124] sm:$0xff]
        %v724 = vld [vmem:[%s138 + $0x112c] sm:$0xff]
        %v725 = vld [vmem:[%s138 + $0x1134] sm:$0xff]
        %v726 = vld [vmem:[%s138 + $0x113c] sm:$0xff]
        %v727 = vld [vmem:[%s138 + $0x1144] sm:$0xff]
        %v728 = vld [vmem:[%s138 + $0x114c] sm:$0xff]
        %v729 = vld [vmem:[%s138 + $0x1154] sm:$0xff]
        %v730 = vld [vmem:[%s138 + $0x115c] sm:$0xff]
        %v731 = vld [vmem:[%s138 + $0x1164] sm:$0xff]
        %v732 = vld [vmem:[%s138 + $0x116c] sm:$0xff]
        %v733 = vld [vmem:[%s138 + $0x1174] sm:$0xff]
        %v734 = vld [vmem:[%s138 + $0x117c] sm:$0xff]
        %v735 = vld [vmem:[%s138 + $0x1184] sm:$0xff]
        %v736 = vld [vmem:[%s138 + $0x118c] sm:$0xff]
        %v737 = vld [vmem:[%s138 + $0x1194] sm:$0xff]
        %v738 = vld [vmem:[%s138 + $0x119c] sm:$0xff]
        %v739 = vld [vmem:[%s138 + $0x11a4] sm:$0xff]
        %v740 = vld [vmem:[%s138 + $0x11ac] sm:$0xff]
        %v741 = vld [vmem:[%s138 + $0x11b4] sm:$0xf]
        %v742 = vld [vmem:[%s138 + $0x11b8] sm:$0xff]
        %v743 = vld [vmem:[%s138 + $0x11c0] sm:$0xff]
        %v744 = vld [vmem:[%s138 + $0x11c8] sm:$0xff]
        %v745 = vld [vmem:[%s138 + $0x11d0] sm:$0xff]
        %v746 = vld [vmem:[%s138 + $0x11d8] sm:$0xff]
        %v747 = vld [vmem:[%s138 + $0x11e0] sm:$0xff]
        %v748 = vld [vmem:[%s138 + $0x11e8] sm:$0xff]
        %v749 = vld [vmem:[%s138 + $0x11f0] sm:$0xff]
        %v750 = vld [vmem:[%s138 + $0x11f8] sm:$0xff]
        %v751 = vld [vmem:[%s138 + $0x1200] sm:$0xff]
        %v752 = vld [vmem:[%s138 + $0x1208] sm:$0xff]
        %v753 = vld [vmem:[%s138 + $0x1210] sm:$0xff]
        %v754 = vld [vmem:[%s138 + $0x1218] sm:$0xff]
        %v755 = vld [vmem:[%s138 + $0x1220] sm:$0xff]
        %v756 = vld [vmem:[%s138 + $0x1228] sm:$0xff]
        %v757 = vld [vmem:[%s138 + $0x1230] sm:$0xff]
        %v758 = vld [vmem:[%s138 + $0x1238] sm:$0xff]
        %v759 = vld [vmem:[%s138 + $0x1240] sm:$0xff]
        %v760 = vld [vmem:[%s138 + $0x1248] sm:$0xff]
        %v761 = vld [vmem:[%s138 + $0x1250] sm:$0xff]
        %v762 = vld [vmem:[%s138 + $0x1258] sm:$0xff]
        %v763 = vld [vmem:[%s138 + $0x1260] sm:$0xff]
        %v764 = vld [vmem:[%s138 + $0x1268] sm:$0xff]
        %v765 = vld [vmem:[%s138 + $0x1270] sm:$0xff]
        %v766 = vld [vmem:[%s138 + $0x1278] sm:$0xff]
        %v767 = vld [vmem:[%s138 + $0x1280] sm:$0xff]
        %v768 = vld [vmem:[%s138 + $0x1288] sm:$0xff]
        %v769 = vld [vmem:[%s138 + $0x1290] sm:$0xff]
        %v770 = vld [vmem:[%s138 + $0x1298] sm:$0xff]
        %v771 = vld [vmem:[%s138 + $0x12a0] sm:$0xff]
        %v772 = vld [vmem:[%s138 + $0x12a8] sm:$0xff]
        %v773 = vld [vmem:[%s138 + $0x12b0] sm:$0xff]
        %v774 = vld [vmem:[%s138 + $0x12b8] sm:$0xff]
        %v775 = vld [vmem:[%s138 + $0x12c0] sm:$0xff]
        %v776 = vld [vmem:[%s138 + $0x12c8] sm:$0xff]
        %v777 = vld [vmem:[%s138 + $0x12d0] sm:$0xff]
        %v778 = vld [vmem:[%s138 + $0x12d8] sm:$0xff]
        %v779 = vld [vmem:[%s138 + $0x12e0] sm:$0xff]
        %v780 = vld [vmem:[%s138 + $0x12e8] sm:$0xff]
        %v781 = vld [vmem:[%s138 + $0x12f0] sm:$0xff]
        %v782 = vld [vmem:[%s138 + $0x12f8] sm:$0xf]
        %v783 = vld [vmem:[%s138 + $0x12fc] sm:$0xff]
        %v784 = vld [vmem:[%s138 + $0x1304] sm:$0xff]
        %v785 = vld [vmem:[%s138 + $0x130c] sm:$0xff]
        %v786 = vld [vmem:[%s138 + $0x1314] sm:$0xff]
        %v787 = vld [vmem:[%s138 + $0x131c] sm:$0xff]
        %v788 = vld [vmem:[%s138 + $0x1324] sm:$0xff]
        %v789 = vld [vmem:[%s138 + $0x132c] sm:$0xff]
        %v790 = vld [vmem:[%s138 + $0x1334] sm:$0xff]
        %v791 = vld [vmem:[%s138 + $0x133c] sm:$0xff]
        %v792 = vld [vmem:[%s138 + $0x1344] sm:$0xff]
        %v793 = vld [vmem:[%s138 + $0x134c] sm:$0xff]
        %v794 = vld [vmem:[%s138 + $0x1354] sm:$0xff]
        %v795 = vld [vmem:[%s138 + $0x135c] sm:$0xff]
        %v796 = vld [vmem:[%s138 + $0x1364] sm:$0xff]
        %v797 = vld [vmem:[%s138 + $0x136c] sm:$0xff]
        %v798 = vld [vmem:[%s138 + $0x1374] sm:$0xff]
        %v799 = vld [vmem:[%s138 + $0x137c] sm:$0xff]
        %v800 = vld [vmem:[%s138 + $0x1384] sm:$0xff]
        %v801 = vld [vmem:[%s138 + $0x138c] sm:$0xff]
        %v802 = vld [vmem:[%s138 + $0x1394] sm:$0xff]
        %v803 = vld [vmem:[%s138 + $0x139c] sm:$0xff]
        %v804 = vld [vmem:[%s138 + $0x13a4] sm:$0xff]
        %v805 = vld [vmem:[%s138 + $0x13ac] sm:$0xff]
        %v806 = vld [vmem:[%s138 + $0x13b4] sm:$0xff]
        %v807 = vld [vmem:[%s138 + $0x13bc] sm:$0xff]
        %v808 = vld [vmem:[%s138 + $0x13c4] sm:$0xff]
        %v809 = vld [vmem:[%s138 + $0x13cc] sm:$0xff]
        %v810 = vld [vmem:[%s138 + $0x13d4] sm:$0xff]
        %v811 = vld [vmem:[%s138 + $0x13dc] sm:$0xff]
        %v812 = vld [vmem:[%s138 + $0x13e4] sm:$0xff]
        %v813 = vld [vmem:[%s138 + $0x13ec] sm:$0xff]
        %v814 = vld [vmem:[%s138 + $0x13f4] sm:$0xff]
        %v815 = vld [vmem:[%s138 + $0x13fc] sm:$0xff]
        %v816 = vld [vmem:[%s138 + $0x1404] sm:$0xff]
        %v817 = vld [vmem:[%s138 + $0x140c] sm:$0xff]
        %v818 = vld [vmem:[%s138 + $0x1414] sm:$0xff]
        %v819 = vld [vmem:[%s138 + $0x141c] sm:$0xff]
        %v820 = vld [vmem:[%s138 + $0x1424] sm:$0xff]
        %v821 = vld [vmem:[%s138 + $0x142c] sm:$0xff]
        %v822 = vld [vmem:[%s138 + $0x1434] sm:$0xff]
        %v823 = vld [vmem:[%s138 + $0x143c] sm:$0xf]
        %v824 = vld [vmem:[%s138 + $0x1440] sm:$0xff]
        %v825 = vld [vmem:[%s138 + $0x1448] sm:$0xff]
        %v826 = vld [vmem:[%s138 + $0x1450] sm:$0xff]
        %v827 = vld [vmem:[%s138 + $0x1458] sm:$0xff]
        %v828 = vld [vmem:[%s138 + $0x1460] sm:$0xff]
        %v829 = vld [vmem:[%s138 + $0x1468] sm:$0xff]
        %v830 = vld [vmem:[%s138 + $0x1470] sm:$0xff]
        %v831 = vld [vmem:[%s138 + $0x1478] sm:$0xff]
        %v832 = vld [vmem:[%s138 + $0x1480] sm:$0xff]
        %v833 = vld [vmem:[%s138 + $0x1488] sm:$0xff]
        %v834 = vld [vmem:[%s138 + $0x1490] sm:$0xff]
        %v835 = vld [vmem:[%s138 + $0x1498] sm:$0xff]
        %v836 = vld [vmem:[%s138 + $0x14a0] sm:$0xff]
        %v837 = vld [vmem:[%s138 + $0x14a8] sm:$0xff]
        %v838 = vld [vmem:[%s138 + $0x14b0] sm:$0xff]
        %v839 = vld [vmem:[%s138 + $0x14b8] sm:$0xff]
        %v840 = vld [vmem:[%s138 + $0x14c0] sm:$0xff]
        %v841 = vld [vmem:[%s138 + $0x14c8] sm:$0xff]
        %v842 = vld [vmem:[%s138 + $0x14d0] sm:$0xff]
        %v843 = vld [vmem:[%s138 + $0x14d8] sm:$0xff]
        %v844 = vld [vmem:[%s138 + $0x14e0] sm:$0xff]
        %v845 = vld [vmem:[%s138 + $0x14e8] sm:$0xff]
        %v846 = vld [vmem:[%s138 + $0x14f0] sm:$0xff]
        %v847 = vld [vmem:[%s138 + $0x14f8] sm:$0xff]
        %v848 = vld [vmem:[%s138 + $0x1500] sm:$0xff]
        %v849 = vld [vmem:[%s138 + $0x1508] sm:$0xff]
        %v850 = vld [vmem:[%s138 + $0x1510] sm:$0xff]
        %v851 = vld [vmem:[%s138 + $0x1518] sm:$0xff]
        %v852 = vld [vmem:[%s138 + $0x1520] sm:$0xff]
        %v853 = vld [vmem:[%s138 + $0x1528] sm:$0xff]
        %v854 = vld [vmem:[%s138 + $0x1530] sm:$0xff]
        %v855 = vld [vmem:[%s138 + $0x1538] sm:$0xff]
        %v856 = vld [vmem:[%s138 + $0x1540] sm:$0xff]
        %v857 = vld [vmem:[%s138 + $0x1548] sm:$0xff]
        %v858 = vld [vmem:[%s138 + $0x1550] sm:$0xff]
        %v859 = vld [vmem:[%s138 + $0x1558] sm:$0xff]
        %v860 = vld [vmem:[%s138 + $0x1560] sm:$0xff]
        %v861 = vld [vmem:[%s138 + $0x1568] sm:$0xff]
        %v862 = vld [vmem:[%s138 + $0x1570] sm:$0xff]
        %v863 = vld [vmem:[%s138 + $0x1578] sm:$0xff]
        %v864 = vld [vmem:[%s138 + $0x1580] sm:$0xf]
        %v865 = vld [vmem:[%s138 + $0x1584] sm:$0xff]
        %v866 = vld [vmem:[%s138 + $0x158c] sm:$0xff]
        %v867 = vld [vmem:[%s138 + $0x1594] sm:$0xff]
        %v868 = vld [vmem:[%s138 + $0x159c] sm:$0xff]
        %v869 = vld [vmem:[%s138 + $0x15a4] sm:$0xff]
        %v870 = vld [vmem:[%s138 + $0x15ac] sm:$0xff]
        %v871 = vld [vmem:[%s138 + $0x15b4] sm:$0xff]
        %v872 = vld [vmem:[%s138 + $0x15bc] sm:$0xff]
        %v873 = vld [vmem:[%s138 + $0x15c4] sm:$0xff]
        %v874 = vld [vmem:[%s138 + $0x15cc] sm:$0xff]
        %v875 = vld [vmem:[%s138 + $0x15d4] sm:$0xff]
        %v876 = vld [vmem:[%s138 + $0x15dc] sm:$0xff]
        %v877 = vld [vmem:[%s138 + $0x15e4] sm:$0xff]
        %v878 = vld [vmem:[%s138 + $0x15ec] sm:$0xff]
        %v879 = vld [vmem:[%s138 + $0x15f4] sm:$0xff]
        %v880 = vld [vmem:[%s138 + $0x15fc] sm:$0xff]
        %v881 = vld [vmem:[%s138 + $0x1604] sm:$0xff]
        %v882 = vld [vmem:[%s138 + $0x160c] sm:$0xff]
        %v883 = vld [vmem:[%s138 + $0x1614] sm:$0xff]
        %v884 = vld [vmem:[%s138 + $0x161c] sm:$0xff]
        %v885 = vld [vmem:[%s138 + $0x1624] sm:$0xff]
        %v886 = vld [vmem:[%s138 + $0x162c] sm:$0xff]
        %v887 = vld [vmem:[%s138 + $0x1634] sm:$0xff]
        %v888 = vld [vmem:[%s138 + $0x163c] sm:$0xff]
        %v889 = vld [vmem:[%s138 + $0x1644] sm:$0xff]
        %v890 = vld [vmem:[%s138 + $0x164c] sm:$0xff]
        %v891 = vld [vmem:[%s138 + $0x1654] sm:$0xff]
        %v892 = vld [vmem:[%s138 + $0x165c] sm:$0xff]
        %v893 = vld [vmem:[%s138 + $0x1664] sm:$0xff]
        %v894 = vld [vmem:[%s138 + $0x166c] sm:$0xff]
        %v895 = vld [vmem:[%s138 + $0x1674] sm:$0xff]
        %v896 = vld [vmem:[%s138 + $0x167c] sm:$0xff]
        %v897 = vld [vmem:[%s138 + $0x1684] sm:$0xff]
        %v898 = vld [vmem:[%s138 + $0x168c] sm:$0xff]
        %v899 = vld [vmem:[%s138 + $0x1694] sm:$0xff]
        %v900 = vld [vmem:[%s138 + $0x169c] sm:$0xff]
        %v901 = vld [vmem:[%s138 + $0x16a4] sm:$0xff]
        %v902 = vld [vmem:[%s138 + $0x16ac] sm:$0xff]
        %v903 = vld [vmem:[%s138 + $0x16b4] sm:$0xff]
        %v904 = vld [vmem:[%s138 + $0x16bc] sm:$0xff]
        %v905 = vld [vmem:[%s138 + $0x16c4] sm:$0xf]
        %v906 = vld [vmem:[%s138 + $0x16c8] sm:$0xff]
        %v907 = vld [vmem:[%s138 + $0x16d0] sm:$0xff]
        %v908 = vld [vmem:[%s138 + $0x16d8] sm:$0xff]
        %v909 = vld [vmem:[%s138 + $0x16e0] sm:$0xff]
        %v910 = vld [vmem:[%s138 + $0x16e8] sm:$0xff]
        %v911 = vld [vmem:[%s138 + $0x16f0] sm:$0xff]
        %v912 = vld [vmem:[%s138 + $0x16f8] sm:$0xff]
        %v913 = vld [vmem:[%s138 + $0x1700] sm:$0xff]
        %v914 = vld [vmem:[%s138 + $0x1708] sm:$0xff]
        %v915 = vld [vmem:[%s138 + $0x1710] sm:$0xff]
        %v916 = vld [vmem:[%s138 + $0x1718] sm:$0xff]
        %v917 = vld [vmem:[%s138 + $0x1720] sm:$0xff]
        %v918 = vld [vmem:[%s138 + $0x1728] sm:$0xff]
        %v919 = vld [vmem:[%s138 + $0x1730] sm:$0xff]
        %v920 = vld [vmem:[%s138 + $0x1738] sm:$0xff]
        %v921 = vld [vmem:[%s138 + $0x1740] sm:$0xff]
        %v922 = vld [vmem:[%s138 + $0x1748] sm:$0xff]
        %v923 = vld [vmem:[%s138 + $0x1750] sm:$0xff]
        %v924 = vld [vmem:[%s138 + $0x1758] sm:$0xff]
        %v925 = vld [vmem:[%s138 + $0x1760] sm:$0xff]
        %v926 = vld [vmem:[%s138 + $0x1768] sm:$0xff]
        %v927 = vld [vmem:[%s138 + $0x1770] sm:$0xff]
        %v928 = vld [vmem:[%s138 + $0x1778] sm:$0xff]
        %v929 = vld [vmem:[%s138 + $0x1780] sm:$0xff]
        %v930 = vld [vmem:[%s138 + $0x1788] sm:$0xff]
        %v931 = vld [vmem:[%s138 + $0x1790] sm:$0xff]
        %v932 = vld [vmem:[%s138 + $0x1798] sm:$0xff]
        %v933 = vld [vmem:[%s138 + $0x17a0] sm:$0xff]
        %v934 = vld [vmem:[%s138 + $0x17a8] sm:$0xff]
        %v935 = vld [vmem:[%s138 + $0x17b0] sm:$0xff]
        %v936 = vld [vmem:[%s138 + $0x17b8] sm:$0xff]
        %v937 = vld [vmem:[%s138 + $0x17c0] sm:$0xff]
        %v938 = vld [vmem:[%s138 + $0x17c8] sm:$0xff]
        %v939 = vld [vmem:[%s138 + $0x17d0] sm:$0xff]
        %v940 = vld [vmem:[%s138 + $0x17d8] sm:$0xff]
        %v941 = vld [vmem:[%s138 + $0x17e0] sm:$0xff]
        %v942 = vld [vmem:[%s138 + $0x17e8] sm:$0xff]
        %v943 = vld [vmem:[%s138 + $0x17f0] sm:$0xff]
        %v944 = vld [vmem:[%s138 + $0x17f8] sm:$0xff]
        %v945 = vld [vmem:[%s138 + $0x1800] sm:$0xff]
        %v946 = vld [vmem:[%s138 + $0x1808] sm:$0xf]
        %v947 = vld [vmem:[%s138 + $0x180c] sm:$0xff]
        %v948 = vld [vmem:[%s138 + $0x1814] sm:$0xff]
        %v949 = vld [vmem:[%s138 + $0x181c] sm:$0xff]
        %v950 = vld [vmem:[%s138 + $0x1824] sm:$0xff]
        %v951 = vld [vmem:[%s138 + $0x182c] sm:$0xff]
        %v952 = vld [vmem:[%s138 + $0x1834] sm:$0xff]
        %v953 = vld [vmem:[%s138 + $0x183c] sm:$0xff]
        %v954 = vld [vmem:[%s138 + $0x1844] sm:$0xff]
        %v955 = vld [vmem:[%s138 + $0x184c] sm:$0xff]
        %v956 = vld [vmem:[%s138 + $0x1854] sm:$0xff]
        %v957 = vld [vmem:[%s138 + $0x185c] sm:$0xff]
        %v958 = vld [vmem:[%s138 + $0x1864] sm:$0xff]
        %v959 = vld [vmem:[%s138 + $0x186c] sm:$0xff]
        %v960 = vld [vmem:[%s138 + $0x1874] sm:$0xff]
        %v961 = vld [vmem:[%s138 + $0x187c] sm:$0xff]
        %v962 = vld [vmem:[%s138 + $0x1884] sm:$0xff]
        %v963 = vld [vmem:[%s138 + $0x188c] sm:$0xff]
        %v964 = vld [vmem:[%s138 + $0x1894] sm:$0xff]
        %v965 = vld [vmem:[%s138 + $0x189c] sm:$0xff]
        %v966 = vld [vmem:[%s138 + $0x18a4] sm:$0xff]
        %v967 = vld [vmem:[%s138 + $0x18ac] sm:$0xff]
        %v968 = vld [vmem:[%s138 + $0x18b4] sm:$0xff]
        %v969 = vld [vmem:[%s138 + $0x18bc] sm:$0xff]
        %v970 = vld [vmem:[%s138 + $0x18c4] sm:$0xff]
        %v971 = vld [vmem:[%s138 + $0x18cc] sm:$0xff]
        %v972 = vld [vmem:[%s138 + $0x18d4] sm:$0xff]
        %v973 = vld [vmem:[%s138 + $0x18dc] sm:$0xff]
        %v974 = vld [vmem:[%s138 + $0x18e4] sm:$0xff]
        %v975 = vld [vmem:[%s138 + $0x18ec] sm:$0xff]
        %v976 = vld [vmem:[%s138 + $0x18f4] sm:$0xff]
        %v977 = vld [vmem:[%s138 + $0x18fc] sm:$0xff]
        %v978 = vld [vmem:[%s138 + $0x1904] sm:$0xff]
        %v979 = vld [vmem:[%s138 + $0x190c] sm:$0xff]
        %v980 = vld [vmem:[%s138 + $0x1914] sm:$0xff]
        %v981 = vld [vmem:[%s138 + $0x191c] sm:$0xff]
        %v982 = vld [vmem:[%s138 + $0x1924] sm:$0xff]
        %v983 = vld [vmem:[%s138 + $0x192c] sm:$0xff]
        %v984 = vld [vmem:[%s138 + $0x1934] sm:$0xff]
        %v985 = vld [vmem:[%s138 + $0x193c] sm:$0xff]
        %v986 = vld [vmem:[%s138 + $0x1944] sm:$0xff]
        %v987 = vld [vmem:[%s138 + $0x194c] sm:$0xf]
        %v988 = vld [vmem:[%s138 + $0x1950] sm:$0xff]
        %v989 = vld [vmem:[%s138 + $0x1958] sm:$0xff]
        %v990 = vld [vmem:[%s138 + $0x1960] sm:$0xff]
        %v991 = vld [vmem:[%s138 + $0x1968] sm:$0xff]
        %v992 = vld [vmem:[%s138 + $0x1970] sm:$0xff]
        %v993 = vld [vmem:[%s138 + $0x1978] sm:$0xff]
        %v994 = vld [vmem:[%s138 + $0x1980] sm:$0xff]
        %v995 = vld [vmem:[%s138 + $0x1988] sm:$0xff]
        %v996 = vld [vmem:[%s138 + $0x1990] sm:$0xff]
        %v997 = vld [vmem:[%s138 + $0x1998] sm:$0xff]
        %v998 = vld [vmem:[%s138 + $0x19a0] sm:$0xff]
        %v999 = vld [vmem:[%s138 + $0x19a8] sm:$0xff]
        %v1000 = vld [vmem:[%s138 + $0x19b0] sm:$0xff]
        %v1001 = vld [vmem:[%s138 + $0x19b8] sm:$0xff]
        %v1002 = vld [vmem:[%s138 + $0x19c0] sm:$0xff]
        %v1003 = vld [vmem:[%s138 + $0x19c8] sm:$0xff]
        %v1004 = vld [vmem:[%s138 + $0x19d0] sm:$0xff]
        %v1005 = vld [vmem:[%s138 + $0x19d8] sm:$0xff]
        %v1006 = vld [vmem:[%s138 + $0x19e0] sm:$0xff]
        %v1007 = vld [vmem:[%s138 + $0x19e8] sm:$0xff]
        %v1008 = vld [vmem:[%s138 + $0x19f0] sm:$0xff]
        %v1009 = vld [vmem:[%s138 + $0x19f8] sm:$0xff]
        %v1010 = vld [vmem:[%s138 + $0x1a00] sm:$0xff]
        %v1011 = vld [vmem:[%s138 + $0x1a08] sm:$0xff]
        %v1012 = vld [vmem:[%s138 + $0x1a10] sm:$0xff]
        %v1013 = vld [vmem:[%s138 + $0x1a18] sm:$0xff]
        %v1014 = vld [vmem:[%s138 + $0x1a20] sm:$0xff]
        %v1015 = vld [vmem:[%s138 + $0x1a28] sm:$0xff]
        %v1016 = vld [vmem:[%s138 + $0x1a30] sm:$0xff]
        %v1017 = vld [vmem:[%s138 + $0x1a38] sm:$0xff]
        %v1018 = vld [vmem:[%s138 + $0x1a40] sm:$0xff]
        %v1019 = vld [vmem:[%s138 + $0x1a48] sm:$0xff]
        %v1020 = vld [vmem:[%s138 + $0x1a50] sm:$0xff]
        %v1021 = vld [vmem:[%s138 + $0x1a58] sm:$0xff]
        %v1022 = vld [vmem:[%s138 + $0x1a60] sm:$0xff]
        %v1023 = vld [vmem:[%s138 + $0x1a68] sm:$0xff]
        %v1024 = vld [vmem:[%s138 + $0x1a70] sm:$0xff]
        %v1025 = vld [vmem:[%s138 + $0x1a78] sm:$0xff]
        %v1026 = vld [vmem:[%s138 + $0x1a80] sm:$0xff]
        %v1027 = vld [vmem:[%s138 + $0x1a88] sm:$0xff]
        %v1028 = vld [vmem:[%s138 + $0x1a90] sm:$0xf]
        %v1029 = vld [vmem:[%s138 + $0x1a94] sm:$0xff]
        %v1030 = vld [vmem:[%s138 + $0x1a9c] sm:$0xff]
        %v1031 = vld [vmem:[%s138 + $0x1aa4] sm:$0xff]
        %v1032 = vld [vmem:[%s138 + $0x1aac] sm:$0xff]
        %v1033 = vld [vmem:[%s138 + $0x1ab4] sm:$0xff]
        %v1034 = vld [vmem:[%s138 + $0x1abc] sm:$0xff]
        %v1035 = vld [vmem:[%s138 + $0x1ac4] sm:$0xff]
        %v1036 = vld [vmem:[%s138 + $0x1acc] sm:$0xff]
        %v1037 = vld [vmem:[%s138 + $0x1ad4] sm:$0xff]
        %v1038 = vld [vmem:[%s138 + $0x1adc] sm:$0xff]
        %v1039 = vld [vmem:[%s138 + $0x1ae4] sm:$0xff]
        %v1040 = vld [vmem:[%s138 + $0x1aec] sm:$0xff]
        %v1041 = vld [vmem:[%s138 + $0x1af4] sm:$0xff]
        %v1042 = vld [vmem:[%s138 + $0x1afc] sm:$0xff]
        %v1043 = vld [vmem:[%s138 + $0x1b04] sm:$0xff]
        %v1044 = vld [vmem:[%s138 + $0x1b0c] sm:$0xff]
        %v1045 = vld [vmem:[%s138 + $0x1b14] sm:$0xff]
        %v1046 = vld [vmem:[%s138 + $0x1b1c] sm:$0xff]
        %v1047 = vld [vmem:[%s138 + $0x1b24] sm:$0xff]
        %v1048 = vld [vmem:[%s138 + $0x1b2c] sm:$0xff]
        %v1049 = vld [vmem:[%s138 + $0x1b34] sm:$0xff]
        %v1050 = vld [vmem:[%s138 + $0x1b3c] sm:$0xff]
        %v1051 = vld [vmem:[%s138 + $0x1b44] sm:$0xff]
        %v1052 = vld [vmem:[%s138 + $0x1b4c] sm:$0xff]
        %v1053 = vld [vmem:[%s138 + $0x1b54] sm:$0xff]
        %v1054 = vld [vmem:[%s138 + $0x1b5c] sm:$0xff]
        %v1055 = vld [vmem:[%s138 + $0x1b64] sm:$0xff]
        %v1056 = vld [vmem:[%s138 + $0x1b6c] sm:$0xff]
        %v1057 = vld [vmem:[%s138 + $0x1b74] sm:$0xff]
        %v1058 = vld [vmem:[%s138 + $0x1b7c] sm:$0xff]
        %v1059 = vld [vmem:[%s138 + $0x1b84] sm:$0xff]
        %v1060 = vld [vmem:[%s138 + $0x1b8c] sm:$0xff]
        %v1061 = vld [vmem:[%s138 + $0x1b94] sm:$0xff]
        %v1062 = vld [vmem:[%s138 + $0x1b9c] sm:$0xff]
        %v1063 = vld [vmem:[%s138 + $0x1ba4] sm:$0xff]
        %v1064 = vld [vmem:[%s138 + $0x1bac] sm:$0xff]
        %v1065 = vld [vmem:[%s138 + $0x1bb4] sm:$0xff]
        %v1066 = vld [vmem:[%s138 + $0x1bbc] sm:$0xff]
        %v1067 = vld [vmem:[%s138 + $0x1bc4] sm:$0xff]
        %v1068 = vld [vmem:[%s138 + $0x1bcc] sm:$0xff]
        %v1069 = vld [vmem:[%s138 + $0x1bd4] sm:$0xf]
        %v1070 = vld [vmem:[%s138 + $0x1bd8] sm:$0xff]
        %v1071 = vld [vmem:[%s138 + $0x1be0] sm:$0xff]
        %v1072 = vld [vmem:[%s138 + $0x1be8] sm:$0xff]
        %v1073 = vld [vmem:[%s138 + $0x1bf0] sm:$0xff]
        %v1074 = vld [vmem:[%s138 + $0x1bf8] sm:$0xff]
        %v1075 = vld [vmem:[%s138 + $0x1c00] sm:$0xff]
        %v1076 = vld [vmem:[%s138 + $0x1c08] sm:$0xff]
        %v1077 = vld [vmem:[%s138 + $0x1c10] sm:$0xff]
        %v1078 = vld [vmem:[%s138 + $0x1c18] sm:$0xff]
        %v1079 = vld [vmem:[%s138 + $0x1c20] sm:$0xff]
        %v1080 = vld [vmem:[%s138 + $0x1c28] sm:$0xff]
        %v1081 = vld [vmem:[%s138 + $0x1c30] sm:$0xff]
        %v1082 = vld [vmem:[%s138 + $0x1c38] sm:$0xff]
        %v1083 = vld [vmem:[%s138 + $0x1c40] sm:$0xff]
        %v1084 = vld [vmem:[%s138 + $0x1c48] sm:$0xff]
        %v1085 = vld [vmem:[%s138 + $0x1c50] sm:$0xff]
        %v1086 = vld [vmem:[%s138 + $0x1c58] sm:$0xff]
        %v1087 = vld [vmem:[%s138 + $0x1c60] sm:$0xff]
        %v1088 = vld [vmem:[%s138 + $0x1c68] sm:$0xff]
        %v1089 = vld [vmem:[%s138 + $0x1c70] sm:$0xff]
        %v1090 = vld [vmem:[%s138 + $0x1c78] sm:$0xff]
        %v1091 = vld [vmem:[%s138 + $0x1c80] sm:$0xff]
        %v1092 = vld [vmem:[%s138 + $0x1c88] sm:$0xff]
        %v1093 = vld [vmem:[%s138 + $0x1c90] sm:$0xff]
        %v1094 = vld [vmem:[%s138 + $0x1c98] sm:$0xff]
        %v1095 = vld [vmem:[%s138 + $0x1ca0] sm:$0xff]
        %v1096 = vld [vmem:[%s138 + $0x1ca8] sm:$0xff]
        %v1097 = vld [vmem:[%s138 + $0x1cb0] sm:$0xff]
        %v1098 = vld [vmem:[%s138 + $0x1cb8] sm:$0xff]
        %v1099 = vld [vmem:[%s138 + $0x1cc0] sm:$0xff]
        %v1100 = vld [vmem:[%s138 + $0x1cc8] sm:$0xff]
        %v1101 = vld [vmem:[%s138 + $0x1cd0] sm:$0xff]
        %v1102 = vld [vmem:[%s138 + $0x1cd8] sm:$0xff]
        %v1103 = vld [vmem:[%s138 + $0x1ce0] sm:$0xff]
        %v1104 = vld [vmem:[%s138 + $0x1ce8] sm:$0xff]
        %v1105 = vld [vmem:[%s138 + $0x1cf0] sm:$0xff]
        %v1106 = vld [vmem:[%s138 + $0x1cf8] sm:$0xff]
        %v1107 = vld [vmem:[%s138 + $0x1d00] sm:$0xff]
        %v1108 = vld [vmem:[%s138 + $0x1d08] sm:$0xff]
        %v1109 = vld [vmem:[%s138 + $0x1d10] sm:$0xff]
        %v1110 = vld [vmem:[%s138 + $0x1d18] sm:$0xf]
        %v1111 = vld [vmem:[%s138 + $0x1d1c] sm:$0xff]
        %v1112 = vld [vmem:[%s138 + $0x1d24] sm:$0xff]
        %v1113 = vld [vmem:[%s138 + $0x1d2c] sm:$0xff]
        %v1114 = vld [vmem:[%s138 + $0x1d34] sm:$0xff]
        %v1115 = vld [vmem:[%s138 + $0x1d3c] sm:$0xff]
        %v1116 = vld [vmem:[%s138 + $0x1d44] sm:$0xff]
        %v1117 = vld [vmem:[%s138 + $0x1d4c] sm:$0xff]
        %v1118 = vld [vmem:[%s138 + $0x1d54] sm:$0xff]
        %v1119 = vld [vmem:[%s138 + $0x1d5c] sm:$0xff]
        %v1120 = vld [vmem:[%s138 + $0x1d64] sm:$0xff]
        %v1121 = vld [vmem:[%s138 + $0x1d6c] sm:$0xff]
        %v1122 = vld [vmem:[%s138 + $0x1d74] sm:$0xff]
        %v1123 = vld [vmem:[%s138 + $0x1d7c] sm:$0xff]
        %v1124 = vld [vmem:[%s138 + $0x1d84] sm:$0xff]
        %v1125 = vld [vmem:[%s138 + $0x1d8c] sm:$0xff]
        %v1126 = vld [vmem:[%s138 + $0x1d94] sm:$0xff]
        %v1127 = vld [vmem:[%s138 + $0x1d9c] sm:$0xff]
        %v1128 = vld [vmem:[%s138 + $0x1da4] sm:$0xff]
        %v1129 = vld [vmem:[%s138 + $0x1dac] sm:$0xff]
        %v1130 = vld [vmem:[%s138 + $0x1db4] sm:$0xff]
        %v1131 = vld [vmem:[%s138 + $0x1dbc] sm:$0xff]
        %v1132 = vld [vmem:[%s138 + $0x1dc4] sm:$0xff]
        %v1133 = vld [vmem:[%s138 + $0x1dcc] sm:$0xff]
        %v1134 = vld [vmem:[%s138 + $0x1dd4] sm:$0xff]
        %v1135 = vld [vmem:[%s138 + $0x1ddc] sm:$0xff]
        %v1136 = vld [vmem:[%s138 + $0x1de4] sm:$0xff]
        %v1137 = vld [vmem:[%s138 + $0x1dec] sm:$0xff]
        %v1138 = vld [vmem:[%s138 + $0x1df4] sm:$0xff]
        %v1139 = vld [vmem:[%s138 + $0x1dfc] sm:$0xff]
        %v1140 = vld [vmem:[%s138 + $0x1e04] sm:$0xff]
        %v1141 = vld [vmem:[%s138 + $0x1e0c] sm:$0xff]
        %v1142 = vld [vmem:[%s138 + $0x1e14] sm:$0xff]
        %v1143 = vld [vmem:[%s138 + $0x1e1c] sm:$0xff]
        %v1144 = vld [vmem:[%s138 + $0x1e24] sm:$0xff]
        %v1145 = vld [vmem:[%s138 + $0x1e2c] sm:$0xff]
        %v1146 = vld [vmem:[%s138 + $0x1e34] sm:$0xff]
        %v1147 = vld [vmem:[%s138 + $0x1e3c] sm:$0xff]
        %v1148 = vld [vmem:[%s138 + $0x1e44] sm:$0xff]
        %v1149 = vld [vmem:[%s138 + $0x1e4c] sm:$0xff]
        %v1150 = vld [vmem:[%s138 + $0x1e54] sm:$0xff]
        %v1151 = vld [vmem:[%s138 + $0x1e5c] sm:$0xf]
        %v1152 = vld [vmem:[%s138 + $0x1e60] sm:$0xff]
        %v1153 = vld [vmem:[%s138 + $0x1e68] sm:$0xff]
        %v1154 = vld [vmem:[%s138 + $0x1e70] sm:$0xff]
        %v1155 = vld [vmem:[%s138 + $0x1e78] sm:$0xff]
        %v1156 = vld [vmem:[%s138 + $0x1e80] sm:$0xff]
        %v1157 = vld [vmem:[%s138 + $0x1e88] sm:$0xff]
        %v1158 = vld [vmem:[%s138 + $0x1e90] sm:$0xff]
        %v1159 = vld [vmem:[%s138 + $0x1e98] sm:$0xff]
        %v1160 = vld [vmem:[%s138 + $0x1ea0] sm:$0xff]
        %v1161 = vld [vmem:[%s138 + $0x1ea8] sm:$0xff]
        %v1162 = vld [vmem:[%s138 + $0x1eb0] sm:$0xff]
        %v1163 = vld [vmem:[%s138 + $0x1eb8] sm:$0xff]
        %v1164 = vld [vmem:[%s138 + $0x1ec0] sm:$0xff]
        %v1165 = vld [vmem:[%s138 + $0x1ec8] sm:$0xff]
        %v1166 = vld [vmem:[%s138 + $0x1ed0] sm:$0xff]
        %v1167 = vld [vmem:[%s138 + $0x1ed8] sm:$0xff]
        %v1168 = vld [vmem:[%s138 + $0x1ee0] sm:$0xff]
        %v1169 = vld [vmem:[%s138 + $0x1ee8] sm:$0xff]
        %v1170 = vld [vmem:[%s138 + $0x1ef0] sm:$0xff]
        %v1171 = vld [vmem:[%s138 + $0x1ef8] sm:$0xff]
        %v1172 = vld [vmem:[%s138 + $0x1f00] sm:$0xff]
        %v1173 = vld [vmem:[%s138 + $0x1f08] sm:$0xff]
        %v1174 = vld [vmem:[%s138 + $0x1f10] sm:$0xff]
        %v1175 = vld [vmem:[%s138 + $0x1f18] sm:$0xff]
        %v1176 = vld [vmem:[%s138 + $0x1f20] sm:$0xff]
        %v1177 = vld [vmem:[%s138 + $0x1f28] sm:$0xff]
        %v1178 = vld [vmem:[%s138 + $0x1f30] sm:$0xff]
        %v1179 = vld [vmem:[%s138 + $0x1f38] sm:$0xff]
        %v1180 = vld [vmem:[%s138 + $0x1f40] sm:$0xff]
        %v1181 = vld [vmem:[%s138 + $0x1f48] sm:$0xff]
        %v1182 = vld [vmem:[%s138 + $0x1f50] sm:$0xff]
        %v1183 = vld [vmem:[%s138 + $0x1f58] sm:$0xff]
        %v1184 = vld [vmem:[%s138 + $0x1f60] sm:$0xff]
        %v1185 = vld [vmem:[%s138 + $0x1f68] sm:$0xff]
        %v1186 = vld [vmem:[%s138 + $0x1f70] sm:$0xff]
        %v1187 = vld [vmem:[%s138 + $0x1f78] sm:$0xff]
        %v1188 = vld [vmem:[%s138 + $0x1f80] sm:$0xff]
        %v1189 = vld [vmem:[%s138 + $0x1f88] sm:$0xff]
        %v1190 = vld [vmem:[%s138 + $0x1f90] sm:$0xff]
        %v1191 = vld [vmem:[%s138 + $0x1f98] sm:$0xff]
        %v1192 = vld [vmem:[%s138 + $0x1fa0] sm:$0xf]
        %v1193 = vld [vmem:[%s138 + $0x1fa4] sm:$0xff]
        %v1194 = vld [vmem:[%s138 + $0x1fac] sm:$0xff]
        %v1195 = vld [vmem:[%s138 + $0x1fb4] sm:$0xff]
        %v1196 = vld [vmem:[%s138 + $0x1fbc] sm:$0xff]
        %v1197 = vld [vmem:[%s138 + $0x1fc4] sm:$0xff]
        %v1198 = vld [vmem:[%s138 + $0x1fcc] sm:$0xff]
        %v1199 = vld [vmem:[%s138 + $0x1fd4] sm:$0xff]
        %v1200 = vld [vmem:[%s138 + $0x1fdc] sm:$0xff]
        %v1201 = vld [vmem:[%s138 + $0x1fe4] sm:$0xff]
        %v1202 = vld [vmem:[%s138 + $0x1fec] sm:$0xff]
        %v1203 = vld [vmem:[%s138 + $0x1ff4] sm:$0xff]
        %v1204 = vld [vmem:[%s138 + $0x1ffc] sm:$0xff]
        %v1205 = vld [vmem:[%s138 + $0x2004] sm:$0xff]
        %v1206 = vld [vmem:[%s138 + $0x200c] sm:$0xff]
        %v1207 = vld [vmem:[%s138 + $0x2014] sm:$0xff]
        %v1208 = vld [vmem:[%s138 + $0x201c] sm:$0xff]
        %v1209 = vld [vmem:[%s138 + $0x2024] sm:$0xff]
        %v1210 = vld [vmem:[%s138 + $0x202c] sm:$0xff]
        %v1211 = vld [vmem:[%s138 + $0x2034] sm:$0xff]
        %v1212 = vld [vmem:[%s138 + $0x203c] sm:$0xff]
        %v1213 = vld [vmem:[%s138 + $0x2044] sm:$0xff]
        %v1214 = vld [vmem:[%s138 + $0x204c] sm:$0xff]
        %v1215 = vld [vmem:[%s138 + $0x2054] sm:$0xff]
        %v1216 = vld [vmem:[%s138 + $0x205c] sm:$0xff]
        %v1217 = vld [vmem:[%s138 + $0x2064] sm:$0xff]
        %v1218 = vld [vmem:[%s138 + $0x206c] sm:$0xff]
        %v1219 = vld [vmem:[%s138 + $0x2074] sm:$0xff]
        %v1220 = vld [vmem:[%s138 + $0x207c] sm:$0xff]
        %v1221 = vld [vmem:[%s138 + $0x2084] sm:$0xff]
        %v1222 = vld [vmem:[%s138 + $0x208c] sm:$0xff]
        %v1223 = vld [vmem:[%s138 + $0x2094] sm:$0xff]
        %v1224 = vld [vmem:[%s138 + $0x209c] sm:$0xff]
        %v1225 = vld [vmem:[%s138 + $0x20a4] sm:$0xff]
        %v1226 = vld [vmem:[%s138 + $0x20ac] sm:$0xff]
        %v1227 = vld [vmem:[%s138 + $0x20b4] sm:$0xff]
        %v1228 = vld [vmem:[%s138 + $0x20bc] sm:$0xff]
        %v1229 = vld [vmem:[%s138 + $0x20c4] sm:$0xff]
        %v1230 = vld [vmem:[%s138 + $0x20cc] sm:$0xff]
        %v1231 = vld [vmem:[%s138 + $0x20d4] sm:$0xff]
        %v1232 = vld [vmem:[%s138 + $0x20dc] sm:$0xff]
        %v1233 = vld [vmem:[%s138 + $0x20e4] sm:$0xf]
        %v1234 = vld [vmem:[%s138 + $0x20e8] sm:$0xff]
        %v1235 = vld [vmem:[%s138 + $0x20f0] sm:$0xff]
        %v1236 = vld [vmem:[%s138 + $0x20f8] sm:$0xff]
        %v1237 = vld [vmem:[%s138 + $0x2100] sm:$0xff]
        %v1238 = vld [vmem:[%s138 + $0x2108] sm:$0xff]
        %v1239 = vld [vmem:[%s138 + $0x2110] sm:$0xff]
        %v1240 = vld [vmem:[%s138 + $0x2118] sm:$0xff]
        %v1241 = vld [vmem:[%s138 + $0x2120] sm:$0xff]
        %v1242 = vld [vmem:[%s138 + $0x2128] sm:$0xff]
        %v1243 = vld [vmem:[%s138 + $0x2130] sm:$0xff]
        %v1244 = vld [vmem:[%s138 + $0x2138] sm:$0xff]
        %v1245 = vld [vmem:[%s138 + $0x2140] sm:$0xff]
        %v1246 = vld [vmem:[%s138 + $0x2148] sm:$0xff]
        %v1247 = vld [vmem:[%s138 + $0x2150] sm:$0xff]
        %v1248 = vld [vmem:[%s138 + $0x2158] sm:$0xff]
        %v1249 = vld [vmem:[%s138 + $0x2160] sm:$0xff]
        %v1250 = vld [vmem:[%s138 + $0x2168] sm:$0xff]
        %v1251 = vld [vmem:[%s138 + $0x2170] sm:$0xff]
        %v1252 = vld [vmem:[%s138 + $0x2178] sm:$0xff]
        %v1253 = vld [vmem:[%s138 + $0x2180] sm:$0xff]
        %v1254 = vld [vmem:[%s138 + $0x2188] sm:$0xff]
        %v1255 = vld [vmem:[%s138 + $0x2190] sm:$0xff]
        %v1256 = vld [vmem:[%s138 + $0x2198] sm:$0xff]
        %v1257 = vld [vmem:[%s138 + $0x21a0] sm:$0xff]
        %v1258 = vld [vmem:[%s138 + $0x21a8] sm:$0xff]
        %v1259 = vld [vmem:[%s138 + $0x21b0] sm:$0xff]
        %v1260 = vld [vmem:[%s138 + $0x21b8] sm:$0xff]
        %v1261 = vld [vmem:[%s138 + $0x21c0] sm:$0xff]
        %v1262 = vld [vmem:[%s138 + $0x21c8] sm:$0xff]
        %v1263 = vld [vmem:[%s138 + $0x21d0] sm:$0xff]
        %v1264 = vld [vmem:[%s138 + $0x21d8] sm:$0xff]
        %v1265 = vld [vmem:[%s138 + $0x21e0] sm:$0xff]
        %v1266 = vld [vmem:[%s138 + $0x21e8] sm:$0xff]
        %v1267 = vld [vmem:[%s138 + $0x21f0] sm:$0xff]
        %v1268 = vld [vmem:[%s138 + $0x21f8] sm:$0xff]
        %v1269 = vld [vmem:[%s138 + $0x2200] sm:$0xff]
        %v1270 = vld [vmem:[%s138 + $0x2208] sm:$0xff]
        %v1271 = vld [vmem:[%s138 + $0x2210] sm:$0xff]
        %v1272 = vld [vmem:[%s138 + $0x2218] sm:$0xff]
        %v1273 = vld [vmem:[%s138 + $0x2220] sm:$0xff]
        %v1274 = vld [vmem:[%s138 + $0x2228] sm:$0xf]
        %v1275 = vld [vmem:[%s138 + $0x222c] sm:$0xff]
        %v1276 = vld [vmem:[%s138 + $0x2234] sm:$0xff]
        %v1277 = vld [vmem:[%s138 + $0x223c] sm:$0xff]
        %v1278 = vld [vmem:[%s138 + $0x2244] sm:$0xff]
        %v1279 = vld [vmem:[%s138 + $0x224c] sm:$0xff]
        %v1280 = vld [vmem:[%s138 + $0x2254] sm:$0xff]
        %v1281 = vld [vmem:[%s138 + $0x225c] sm:$0xff]
        %v1282 = vld [vmem:[%s138 + $0x2264] sm:$0xff]
        %v1283 = vld [vmem:[%s138 + $0x226c] sm:$0xff]
        %v1284 = vld [vmem:[%s138 + $0x2274] sm:$0xff]
        %v1285 = vld [vmem:[%s138 + $0x227c] sm:$0xff]
        %v1286 = vld [vmem:[%s138 + $0x2284] sm:$0xff]
        %v1287 = vld [vmem:[%s138 + $0x228c] sm:$0xff]
        %v1288 = vld [vmem:[%s138 + $0x2294] sm:$0xff]
        %v1289 = vld [vmem:[%s138 + $0x229c] sm:$0xff]
        %v1290 = vld [vmem:[%s138 + $0x22a4] sm:$0xff]
        %v1291 = vld [vmem:[%s138 + $0x22ac] sm:$0xff]
        %v1292 = vld [vmem:[%s138 + $0x22b4] sm:$0xff]
        %v1293 = vld [vmem:[%s138 + $0x22bc] sm:$0xff]
        %v1294 = vld [vmem:[%s138 + $0x22c4] sm:$0xff]
        %v1295 = vld [vmem:[%s138 + $0x22cc] sm:$0xff]
        %v1296 = vld [vmem:[%s138 + $0x22d4] sm:$0xff]
        %v1297 = vld [vmem:[%s138 + $0x22dc] sm:$0xff]
        %v1298 = vld [vmem:[%s138 + $0x22e4] sm:$0xff]
        %v1299 = vld [vmem:[%s138 + $0x22ec] sm:$0xff]
        %v1300 = vld [vmem:[%s138 + $0x22f4] sm:$0xff]
        %v1301 = vld [vmem:[%s138 + $0x22fc] sm:$0xff]
        %v1302 = vld [vmem:[%s138 + $0x2304] sm:$0xff]
        %v1303 = vld [vmem:[%s138 + $0x230c] sm:$0xff]
        %v1304 = vld [vmem:[%s138 + $0x2314] sm:$0xff]
        %v1305 = vld [vmem:[%s138 + $0x231c] sm:$0xff]
        %v1306 = vld [vmem:[%s138 + $0x2324] sm:$0xff]
        %v1307 = vld [vmem:[%s138 + $0x232c] sm:$0xff]
        %v1308 = vld [vmem:[%s138 + $0x2334] sm:$0xff]
        %v1309 = vld [vmem:[%s138 + $0x233c] sm:$0xff]
        %v1310 = vld [vmem:[%s138 + $0x2344] sm:$0xff]
        %v1311 = vld [vmem:[%s138 + $0x234c] sm:$0xff]
        %v1312 = vld [vmem:[%s138 + $0x2354] sm:$0xff]
        %v1313 = vld [vmem:[%s138 + $0x235c] sm:$0xff]
        %v1314 = vld [vmem:[%s138 + $0x2364] sm:$0xff]
        %v1315 = vld [vmem:[%s138 + $0x236c] sm:$0xf]
        %v1318 = vunpack.c.l.s4 1966171168
        %v1319 = vunpack.c.0.s8 %v1318
        %v1320 = vlaneseq
        %v1321 = vshrl.u32 %v1320, 7
        %v1322 = vsub.s32 %v1319, %v1321
        %v1323 = vrot.slane %v167, %v1322
        %v1324 = vcombine.high %v1323, %v1323
        %v1326 = vunpack.c.l.s4 1966171168
        %v1327 = vunpack.c.0.s8 %v1326
        %v1328 = vlaneseq
        %v1329 = vshrl.u32 %v1328, 7
        %v1330 = vsub.s32 %v1327, %v1329
        %v1331 = vrot.slane %v1323, %v1330
        %v1333 = vunpack.c.l.s4 1966171168
        %v1334 = vunpack.c.0.s8 %v1333
        %v1335 = vlaneseq
        %v1336 = vshrl.u32 %v1335, 7
        %v1337 = vsub.s32 %v1334, %v1336
        %v1338 = vrot.slane %v1324, %v1337
        %v2488 = vunpack.c.l.b16 %v168
        %v2489 = vunpack.c.h.b16 %v168
        %v2490 = vunpack.c.l.b16 %v169
        %v2491 = vunpack.c.h.b16 %v169
        %v2492 = vunpack.c.l.b16 %v170
        %v2493 = vunpack.c.h.b16 %v170
        %v2494 = vunpack.c.l.b16 %v171
        %v2495 = vunpack.c.h.b16 %v171
        %v2496 = vunpack.c.l.b16 %v172
        %v2497 = vunpack.c.h.b16 %v172
        %v2498 = vunpack.c.l.b16 %v173
        %v2499 = vunpack.c.h.b16 %v173
        %v2500 = vunpack.c.l.b16 %v174
        %v2501 = vunpack.c.h.b16 %v174
        %v2502 = vunpack.c.l.b16 %v175
        %v2503 = vunpack.c.h.b16 %v175
        %v2504 = vunpack.c.l.b16 %v176
        %v2505 = vunpack.c.h.b16 %v176
        %v2506 = vunpack.c.l.b16 %v177
        %v2507 = vunpack.c.h.b16 %v177
        %v2508 = vunpack.c.l.b16 %v178
        %v2509 = vunpack.c.h.b16 %v178
        %v2510 = vunpack.c.l.b16 %v179
        %v2511 = vunpack.c.h.b16 %v179
        %v2512 = vunpack.c.l.b16 %v180
        %v2513 = vunpack.c.h.b16 %v180
        %v2514 = vunpack.c.l.b16 %v181
        %v2515 = vunpack.c.h.b16 %v181
        %v2516 = vunpack.c.l.b16 %v182
        %v2517 = vunpack.c.h.b16 %v182
        %v2518 = vunpack.c.l.b16 %v183
        %v2519 = vunpack.c.h.b16 %v183
        %v2520 = vunpack.c.l.b16 %v184
        %v2521 = vunpack.c.h.b16 %v184
        %v2522 = vunpack.c.l.b16 %v185
        %v2523 = vunpack.c.h.b16 %v185
        %v2524 = vunpack.c.l.b16 %v186
        %v2525 = vunpack.c.h.b16 %v186
        %v2526 = vunpack.c.l.b16 %v187
        %v2527 = vunpack.c.h.b16 %v187
        %v2528 = vunpack.c.l.b16 %v188
        %v2529 = vunpack.c.h.b16 %v188
        %v2530 = vunpack.c.l.b16 %v189
        %v2531 = vunpack.c.h.b16 %v189
        %v2532 = vunpack.c.l.b16 %v190
        %v2533 = vunpack.c.h.b16 %v190
        %v2534 = vunpack.c.l.b16 %v191
        %v2535 = vunpack.c.h.b16 %v191
        %v2536 = vunpack.c.l.b16 %v192
        %v2537 = vunpack.c.h.b16 %v192
        %v2538 = vunpack.c.l.b16 %v193
        %v2539 = vunpack.c.h.b16 %v193
        %v2540 = vunpack.c.l.b16 %v194
        %v2541 = vunpack.c.h.b16 %v194
        %v2542 = vunpack.c.l.b16 %v195
        %v2543 = vunpack.c.h.b16 %v195
        %v2544 = vunpack.c.l.b16 %v196
        %v2545 = vunpack.c.h.b16 %v196
        %v2546 = vunpack.c.l.b16 %v197
        %v2547 = vunpack.c.h.b16 %v197
        %v2548 = vunpack.c.l.b16 %v198
        %v2549 = vunpack.c.h.b16 %v198
        %v2550 = vunpack.c.l.b16 %v199
        %v2551 = vunpack.c.h.b16 %v199
        %v2552 = vunpack.c.l.b16 %v200
        %v2553 = vunpack.c.h.b16 %v200
        %v2554 = vunpack.c.l.b16 %v201
        %v2555 = vunpack.c.h.b16 %v201
        %v2556 = vunpack.c.l.b16 %v202
        %v2557 = vunpack.c.h.b16 %v202
        %v2558 = vunpack.c.l.b16 %v203
        %v2559 = vunpack.c.h.b16 %v203
        %v2560 = vunpack.c.l.b16 %v204
        %v2561 = vunpack.c.h.b16 %v204
        %v2562 = vunpack.c.l.b16 %v205
        %v2563 = vunpack.c.h.b16 %v205
        %v2564 = vunpack.c.l.b16 %v206
        %v2565 = vunpack.c.h.b16 %v206
        %v2566 = vunpack.c.l.b16 %v207
        %v2567 = vunpack.c.h.b16 %v207
        %v2568 = vunpack.c.l.b16 %v208
        %v2569 = vunpack.c.l.b16 %v209
        %v2570 = vunpack.c.h.b16 %v209
        %v2571 = vunpack.c.l.b16 %v210
        %v2572 = vunpack.c.h.b16 %v210
        %v2573 = vunpack.c.l.b16 %v211
        %v2574 = vunpack.c.h.b16 %v211
        %v2575 = vunpack.c.l.b16 %v212
        %v2576 = vunpack.c.h.b16 %v212
        %v2577 = vunpack.c.l.b16 %v213
        %v2578 = vunpack.c.h.b16 %v213
        %v2579 = vunpack.c.l.b16 %v214
        %v2580 = vunpack.c.h.b16 %v214
        %v2581 = vunpack.c.l.b16 %v215
        %v2582 = vunpack.c.h.b16 %v215
        %v2583 = vunpack.c.l.b16 %v216
        %v2584 = vunpack.c.h.b16 %v216
        %v2585 = vunpack.c.l.b16 %v217
        %v2586 = vunpack.c.h.b16 %v217
        %v2587 = vunpack.c.l.b16 %v218
        %v2588 = vunpack.c.h.b16 %v218
        %v2589 = vunpack.c.l.b16 %v219
        %v2590 = vunpack.c.h.b16 %v219
        %v2591 = vunpack.c.l.b16 %v220
        %v2592 = vunpack.c.h.b16 %v220
        %v2593 = vunpack.c.l.b16 %v221
        %v2594 = vunpack.c.h.b16 %v221
        %v2595 = vunpack.c.l.b16 %v222
        %v2596 = vunpack.c.h.b16 %v222
        %v2597 = vunpack.c.l.b16 %v223
        %v2598 = vunpack.c.h.b16 %v223
        %v2599 = vunpack.c.l.b16 %v224
        %v2600 = vunpack.c.h.b16 %v224
        %v2601 = vunpack.c.l.b16 %v225
        %v2602 = vunpack.c.h.b16 %v225
        %v2603 = vunpack.c.l.b16 %v226
        %v2604 = vunpack.c.h.b16 %v226
        %v2605 = vunpack.c.l.b16 %v227
        %v2606 = vunpack.c.h.b16 %v227
        %v2607 = vunpack.c.l.b16 %v228
        %v2608 = vunpack.c.h.b16 %v228
        %v2609 = vunpack.c.l.b16 %v229
        %v2610 = vunpack.c.h.b16 %v229
        %v2611 = vunpack.c.l.b16 %v230
        %v2612 = vunpack.c.h.b16 %v230
        %v2613 = vunpack.c.l.b16 %v231
        %v2614 = vunpack.c.h.b16 %v231
        %v2615 = vunpack.c.l.b16 %v232
        %v2616 = vunpack.c.h.b16 %v232
        %v2617 = vunpack.c.l.b16 %v233
        %v2618 = vunpack.c.h.b16 %v233
        %v2619 = vunpack.c.l.b16 %v234
        %v2620 = vunpack.c.h.b16 %v234
        %v2621 = vunpack.c.l.b16 %v235
        %v2622 = vunpack.c.h.b16 %v235
        %v2623 = vunpack.c.l.b16 %v236
        %v2624 = vunpack.c.h.b16 %v236
        %v2625 = vunpack.c.l.b16 %v237
        %v2626 = vunpack.c.h.b16 %v237
        %v2627 = vunpack.c.l.b16 %v238
        %v2628 = vunpack.c.h.b16 %v238
        %v2629 = vunpack.c.l.b16 %v239
        %v2630 = vunpack.c.h.b16 %v239
        %v2631 = vunpack.c.l.b16 %v240
        %v2632 = vunpack.c.h.b16 %v240
        %v2633 = vunpack.c.l.b16 %v241
        %v2634 = vunpack.c.h.b16 %v241
        %v2635 = vunpack.c.l.b16 %v242
        %v2636 = vunpack.c.h.b16 %v242
        %v2637 = vunpack.c.l.b16 %v243
        %v2638 = vunpack.c.h.b16 %v243
        %v2639 = vunpack.c.l.b16 %v244
        %v2640 = vunpack.c.h.b16 %v244
        %v2641 = vunpack.c.l.b16 %v245
        %v2642 = vunpack.c.h.b16 %v245
        %v2643 = vunpack.c.l.b16 %v246
        %v2644 = vunpack.c.h.b16 %v246
        %v2645 = vunpack.c.l.b16 %v247
        %v2646 = vunpack.c.h.b16 %v247
        %v2647 = vunpack.c.l.b16 %v248
        %v2648 = vunpack.c.h.b16 %v248
        %v2649 = vunpack.c.l.b16 %v249
        %v2650 = vunpack.c.l.b16 %v250
        %v2651 = vunpack.c.h.b16 %v250
        %v2652 = vunpack.c.l.b16 %v251
        %v2653 = vunpack.c.h.b16 %v251
        %v2654 = vunpack.c.l.b16 %v252
        %v2655 = vunpack.c.h.b16 %v252
        %v2656 = vunpack.c.l.b16 %v253
        %v2657 = vunpack.c.h.b16 %v253
        %v2658 = vunpack.c.l.b16 %v254
        %v2659 = vunpack.c.h.b16 %v254
        %v2660 = vunpack.c.l.b16 %v255
        %v2661 = vunpack.c.h.b16 %v255
        %v2662 = vunpack.c.l.b16 %v256
        %v2663 = vunpack.c.h.b16 %v256
        %v2664 = vunpack.c.l.b16 %v257
        %v2665 = vunpack.c.h.b16 %v257
        %v2666 = vunpack.c.l.b16 %v258
        %v2667 = vunpack.c.h.b16 %v258
        %v2668 = vunpack.c.l.b16 %v259
        %v2669 = vunpack.c.h.b16 %v259
        %v2670 = vunpack.c.l.b16 %v260
        %v2671 = vunpack.c.h.b16 %v260
        %v2672 = vunpack.c.l.b16 %v261
        %v2673 = vunpack.c.h.b16 %v261
        %v2674 = vunpack.c.l.b16 %v262
        %v2675 = vunpack.c.h.b16 %v262
        %v2676 = vunpack.c.l.b16 %v263
        %v2677 = vunpack.c.h.b16 %v263
        %v2678 = vunpack.c.l.b16 %v264
        %v2679 = vunpack.c.h.b16 %v264
        %v2680 = vunpack.c.l.b16 %v265
        %v2681 = vunpack.c.h.b16 %v265
        %v2682 = vunpack.c.l.b16 %v266
        %v2683 = vunpack.c.h.b16 %v266
        %v2684 = vunpack.c.l.b16 %v267
        %v2685 = vunpack.c.h.b16 %v267
        %v2686 = vunpack.c.l.b16 %v268
        %v2687 = vunpack.c.h.b16 %v268
        %v2688 = vunpack.c.l.b16 %v269
        %v2689 = vunpack.c.h.b16 %v269
        %v2690 = vunpack.c.l.b16 %v270
        %v2691 = vunpack.c.h.b16 %v270
        %v2692 = vunpack.c.l.b16 %v271
        %v2693 = vunpack.c.h.b16 %v271
        %v2694 = vunpack.c.l.b16 %v272
        %v2695 = vunpack.c.h.b16 %v272
        %v2696 = vunpack.c.l.b16 %v273
        %v2697 = vunpack.c.h.b16 %v273
        %v2698 = vunpack.c.l.b16 %v274
        %v2699 = vunpack.c.h.b16 %v274
        %v2700 = vunpack.c.l.b16 %v275
        %v2701 = vunpack.c.h.b16 %v275
        %v2702 = vunpack.c.l.b16 %v276
        %v2703 = vunpack.c.h.b16 %v276
        %v2704 = vunpack.c.l.b16 %v277
        %v2705 = vunpack.c.h.b16 %v277
        %v2706 = vunpack.c.l.b16 %v278
        %v2707 = vunpack.c.h.b16 %v278
        %v2708 = vunpack.c.l.b16 %v279
        %v2709 = vunpack.c.h.b16 %v279
        %v2710 = vunpack.c.l.b16 %v280
        %v2711 = vunpack.c.h.b16 %v280
        %v2712 = vunpack.c.l.b16 %v281
        %v2713 = vunpack.c.h.b16 %v281
        %v2714 = vunpack.c.l.b16 %v282
        %v2715 = vunpack.c.h.b16 %v282
        %v2716 = vunpack.c.l.b16 %v283
        %v2717 = vunpack.c.h.b16 %v283
        %v2718 = vunpack.c.l.b16 %v284
        %v2719 = vunpack.c.h.b16 %v284
        %v2720 = vunpack.c.l.b16 %v285
        %v2721 = vunpack.c.h.b16 %v285
        %v2722 = vunpack.c.l.b16 %v286
        %v2723 = vunpack.c.h.b16 %v286
        %v2724 = vunpack.c.l.b16 %v287
        %v2725 = vunpack.c.h.b16 %v287
        %v2726 = vunpack.c.l.b16 %v288
        %v2727 = vunpack.c.h.b16 %v288
        %v2728 = vunpack.c.l.b16 %v289
        %v2729 = vunpack.c.h.b16 %v289
        %v2730 = vunpack.c.l.b16 %v290
        %v2731 = vunpack.c.l.b16 %v291
        %v2732 = vunpack.c.h.b16 %v291
        %v2733 = vunpack.c.l.b16 %v292
        %v2734 = vunpack.c.h.b16 %v292
        %v2735 = vunpack.c.l.b16 %v293
        %v2736 = vunpack.c.h.b16 %v293
        %v2737 = vunpack.c.l.b16 %v294
        %v2738 = vunpack.c.h.b16 %v294
        %v2739 = vunpack.c.l.b16 %v295
        %v2740 = vunpack.c.h.b16 %v295
        %v2741 = vunpack.c.l.b16 %v296
        %v2742 = vunpack.c.h.b16 %v296
        %v2743 = vunpack.c.l.b16 %v297
        %v2744 = vunpack.c.h.b16 %v297
        %v2745 = vunpack.c.l.b16 %v298
        %v2746 = vunpack.c.h.b16 %v298
        %v2747 = vunpack.c.l.b16 %v299
        %v2748 = vunpack.c.h.b16 %v299
        %v2749 = vunpack.c.l.b16 %v300
        %v2750 = vunpack.c.h.b16 %v300
        %v2751 = vunpack.c.l.b16 %v301
        %v2752 = vunpack.c.h.b16 %v301
        %v2753 = vunpack.c.l.b16 %v302
        %v2754 = vunpack.c.h.b16 %v302
        %v2755 = vunpack.c.l.b16 %v303
        %v2756 = vunpack.c.h.b16 %v303
        %v2757 = vunpack.c.l.b16 %v304
        %v2758 = vunpack.c.h.b16 %v304
        %v2759 = vunpack.c.l.b16 %v305
        %v2760 = vunpack.c.h.b16 %v305
        %v2761 = vunpack.c.l.b16 %v306
        %v2762 = vunpack.c.h.b16 %v306
        %v2763 = vunpack.c.l.b16 %v307
        %v2764 = vunpack.c.h.b16 %v307
        %v2765 = vunpack.c.l.b16 %v308
        %v2766 = vunpack.c.h.b16 %v308
        %v2767 = vunpack.c.l.b16 %v309
        %v2768 = vunpack.c.h.b16 %v309
        %v2769 = vunpack.c.l.b16 %v310
        %v2770 = vunpack.c.h.b16 %v310
        %v2771 = vunpack.c.l.b16 %v311
        %v2772 = vunpack.c.h.b16 %v311
        %v2773 = vunpack.c.l.b16 %v312
        %v2774 = vunpack.c.h.b16 %v312
        %v2775 = vunpack.c.l.b16 %v313
        %v2776 = vunpack.c.h.b16 %v313
        %v2777 = vunpack.c.l.b16 %v314
        %v2778 = vunpack.c.h.b16 %v314
        %v2779 = vunpack.c.l.b16 %v315
        %v2780 = vunpack.c.h.b16 %v315
        %v2781 = vunpack.c.l.b16 %v316
        %v2782 = vunpack.c.h.b16 %v316
        %v2783 = vunpack.c.l.b16 %v317
        %v2784 = vunpack.c.h.b16 %v317
        %v2785 = vunpack.c.l.b16 %v318
        %v2786 = vunpack.c.h.b16 %v318
        %v2787 = vunpack.c.l.b16 %v319
        %v2788 = vunpack.c.h.b16 %v319
        %v2789 = vunpack.c.l.b16 %v320
        %v2790 = vunpack.c.h.b16 %v320
        %v2791 = vunpack.c.l.b16 %v321
        %v2792 = vunpack.c.h.b16 %v321
        %v2793 = vunpack.c.l.b16 %v322
        %v2794 = vunpack.c.h.b16 %v322
        %v2795 = vunpack.c.l.b16 %v323
        %v2796 = vunpack.c.h.b16 %v323
        %v2797 = vunpack.c.l.b16 %v324
        %v2798 = vunpack.c.h.b16 %v324
        %v2799 = vunpack.c.l.b16 %v325
        %v2800 = vunpack.c.h.b16 %v325
        %v2801 = vunpack.c.l.b16 %v326
        %v2802 = vunpack.c.h.b16 %v326
        %v2803 = vunpack.c.l.b16 %v327
        %v2804 = vunpack.c.h.b16 %v327
        %v2805 = vunpack.c.l.b16 %v328
        %v2806 = vunpack.c.h.b16 %v328
        %v2807 = vunpack.c.l.b16 %v329
        %v2808 = vunpack.c.h.b16 %v329
        %v2809 = vunpack.c.l.b16 %v330
        %v2810 = vunpack.c.h.b16 %v330
        %v2811 = vunpack.c.l.b16 %v331
        %v2812 = vunpack.c.l.b16 %v332
        %v2813 = vunpack.c.h.b16 %v332
        %v2814 = vunpack.c.l.b16 %v333
        %v2815 = vunpack.c.h.b16 %v333
        %v2816 = vunpack.c.l.b16 %v334
        %v2817 = vunpack.c.h.b16 %v334
        %v2818 = vunpack.c.l.b16 %v335
        %v2819 = vunpack.c.h.b16 %v335
        %v2820 = vunpack.c.l.b16 %v336
        %v2821 = vunpack.c.h.b16 %v336
        %v2822 = vunpack.c.l.b16 %v337
        %v2823 = vunpack.c.h.b16 %v337
        %v2824 = vunpack.c.l.b16 %v338
        %v2825 = vunpack.c.h.b16 %v338
        %v2826 = vunpack.c.l.b16 %v339
        %v2827 = vunpack.c.h.b16 %v339
        %v2828 = vunpack.c.l.b16 %v340
        %v2829 = vunpack.c.h.b16 %v340
        %v2830 = vunpack.c.l.b16 %v341
        %v2831 = vunpack.c.h.b16 %v341
        %v2832 = vunpack.c.l.b16 %v342
        %v2833 = vunpack.c.h.b16 %v342
        %v2834 = vunpack.c.l.b16 %v343
        %v2835 = vunpack.c.h.b16 %v343
        %v2836 = vunpack.c.l.b16 %v344
        %v2837 = vunpack.c.h.b16 %v344
        %v2838 = vunpack.c.l.b16 %v345
        %v2839 = vunpack.c.h.b16 %v345
        %v2840 = vunpack.c.l.b16 %v346
        %v2841 = vunpack.c.h.b16 %v346
        %v2842 = vunpack.c.l.b16 %v347
        %v2843 = vunpack.c.h.b16 %v347
        %v2844 = vunpack.c.l.b16 %v348
        %v2845 = vunpack.c.h.b16 %v348
        %v2846 = vunpack.c.l.b16 %v349
        %v2847 = vunpack.c.h.b16 %v349
        %v2848 = vunpack.c.l.b16 %v350
        %v2849 = vunpack.c.h.b16 %v350
        %v2850 = vunpack.c.l.b16 %v351
        %v2851 = vunpack.c.h.b16 %v351
        %v2852 = vunpack.c.l.b16 %v352
        %v2853 = vunpack.c.h.b16 %v352
        %v2854 = vunpack.c.l.b16 %v353
        %v2855 = vunpack.c.h.b16 %v353
        %v2856 = vunpack.c.l.b16 %v354
        %v2857 = vunpack.c.h.b16 %v354
        %v2858 = vunpack.c.l.b16 %v355
        %v2859 = vunpack.c.h.b16 %v355
        %v2860 = vunpack.c.l.b16 %v356
        %v2861 = vunpack.c.h.b16 %v356
        %v2862 = vunpack.c.l.b16 %v357
        %v2863 = vunpack.c.h.b16 %v357
        %v2864 = vunpack.c.l.b16 %v358
        %v2865 = vunpack.c.h.b16 %v358
        %v2866 = vunpack.c.l.b16 %v359
        %v2867 = vunpack.c.h.b16 %v359
        %v2868 = vunpack.c.l.b16 %v360
        %v2869 = vunpack.c.h.b16 %v360
        %v2870 = vunpack.c.l.b16 %v361
        %v2871 = vunpack.c.h.b16 %v361
        %v2872 = vunpack.c.l.b16 %v362
        %v2873 = vunpack.c.h.b16 %v362
        %v2874 = vunpack.c.l.b16 %v363
        %v2875 = vunpack.c.h.b16 %v363
        %v2876 = vunpack.c.l.b16 %v364
        %v2877 = vunpack.c.h.b16 %v364
        %v2878 = vunpack.c.l.b16 %v365
        %v2879 = vunpack.c.h.b16 %v365
        %v2880 = vunpack.c.l.b16 %v366
        %v2881 = vunpack.c.h.b16 %v366
        %v2882 = vunpack.c.l.b16 %v367
        %v2883 = vunpack.c.h.b16 %v367
        %v2884 = vunpack.c.l.b16 %v368
        %v2885 = vunpack.c.h.b16 %v368
        %v2886 = vunpack.c.l.b16 %v369
        %v2887 = vunpack.c.h.b16 %v369
        %v2888 = vunpack.c.l.b16 %v370
        %v2889 = vunpack.c.h.b16 %v370
        %v2890 = vunpack.c.l.b16 %v371
        %v2891 = vunpack.c.h.b16 %v371
        %v2892 = vunpack.c.l.b16 %v372
        %v2893 = vunpack.c.l.b16 %v373
        %v2894 = vunpack.c.h.b16 %v373
        %v2895 = vunpack.c.l.b16 %v374
        %v2896 = vunpack.c.h.b16 %v374
        %v2897 = vunpack.c.l.b16 %v375
        %v2898 = vunpack.c.h.b16 %v375
        %v2899 = vunpack.c.l.b16 %v376
        %v2900 = vunpack.c.h.b16 %v376
        %v2901 = vunpack.c.l.b16 %v377
        %v2902 = vunpack.c.h.b16 %v377
        %v2903 = vunpack.c.l.b16 %v378
        %v2904 = vunpack.c.h.b16 %v378
        %v2905 = vunpack.c.l.b16 %v379
        %v2906 = vunpack.c.h.b16 %v379
        %v2907 = vunpack.c.l.b16 %v380
        %v2908 = vunpack.c.h.b16 %v380
        %v2909 = vunpack.c.l.b16 %v381
        %v2910 = vunpack.c.h.b16 %v381
        %v2911 = vunpack.c.l.b16 %v382
        %v2912 = vunpack.c.h.b16 %v382
        %v2913 = vunpack.c.l.b16 %v383
        %v2914 = vunpack.c.h.b16 %v383
        %v2915 = vunpack.c.l.b16 %v384
        %v2916 = vunpack.c.h.b16 %v384
        %v2917 = vunpack.c.l.b16 %v385
        %v2918 = vunpack.c.h.b16 %v385
        %v2919 = vunpack.c.l.b16 %v386
        %v2920 = vunpack.c.h.b16 %v386
        %v2921 = vunpack.c.l.b16 %v387
        %v2922 = vunpack.c.h.b16 %v387
        %v2923 = vunpack.c.l.b16 %v388
        %v2924 = vunpack.c.h.b16 %v388
        %v2925 = vunpack.c.l.b16 %v389
        %v2926 = vunpack.c.h.b16 %v389
        %v2927 = vunpack.c.l.b16 %v390
        %v2928 = vunpack.c.h.b16 %v390
        %v2929 = vunpack.c.l.b16 %v391
        %v2930 = vunpack.c.h.b16 %v391
        %v2931 = vunpack.c.l.b16 %v392
        %v2932 = vunpack.c.h.b16 %v392
        %v2933 = vunpack.c.l.b16 %v393
        %v2934 = vunpack.c.h.b16 %v393
        %v2935 = vunpack.c.l.b16 %v394
        %v2936 = vunpack.c.h.b16 %v394
        %v2937 = vunpack.c.l.b16 %v395
        %v2938 = vunpack.c.h.b16 %v395
        %v2939 = vunpack.c.l.b16 %v396
        %v2940 = vunpack.c.h.b16 %v396
        %v2941 = vunpack.c.l.b16 %v397
        %v2942 = vunpack.c.h.b16 %v397
        %v2943 = vunpack.c.l.b16 %v398
        %v2944 = vunpack.c.h.b16 %v398
        %v2945 = vunpack.c.l.b16 %v399
        %v2946 = vunpack.c.h.b16 %v399
        %v2947 = vunpack.c.l.b16 %v400
        %v2948 = vunpack.c.h.b16 %v400
        %v2949 = vunpack.c.l.b16 %v401
        %v2950 = vunpack.c.h.b16 %v401
        %v2951 = vunpack.c.l.b16 %v402
        %v2952 = vunpack.c.h.b16 %v402
        %v2953 = vunpack.c.l.b16 %v403
        %v2954 = vunpack.c.h.b16 %v403
        %v2955 = vunpack.c.l.b16 %v404
        %v2956 = vunpack.c.h.b16 %v404
        %v2957 = vunpack.c.l.b16 %v405
        %v2958 = vunpack.c.h.b16 %v405
        %v2959 = vunpack.c.l.b16 %v406
        %v2960 = vunpack.c.h.b16 %v406
        %v2961 = vunpack.c.l.b16 %v407
        %v2962 = vunpack.c.h.b16 %v407
        %v2963 = vunpack.c.l.b16 %v408
        %v2964 = vunpack.c.h.b16 %v408
        %v2965 = vunpack.c.l.b16 %v409
        %v2966 = vunpack.c.h.b16 %v409
        %v2967 = vunpack.c.l.b16 %v410
        %v2968 = vunpack.c.h.b16 %v410
        %v2969 = vunpack.c.l.b16 %v411
        %v2970 = vunpack.c.h.b16 %v411
        %v2971 = vunpack.c.l.b16 %v412
        %v2972 = vunpack.c.h.b16 %v412
        %v2973 = vunpack.c.l.b16 %v413
        %v2974 = vunpack.c.l.b16 %v414
        %v2975 = vunpack.c.h.b16 %v414
        %v2976 = vunpack.c.l.b16 %v415
        %v2977 = vunpack.c.h.b16 %v415
        %v2978 = vunpack.c.l.b16 %v416
        %v2979 = vunpack.c.h.b16 %v416
        %v2980 = vunpack.c.l.b16 %v417
        %v2981 = vunpack.c.h.b16 %v417
        %v2982 = vunpack.c.l.b16 %v418
        %v2983 = vunpack.c.h.b16 %v418
        %v2984 = vunpack.c.l.b16 %v419
        %v2985 = vunpack.c.h.b16 %v419
        %v2986 = vunpack.c.l.b16 %v420
        %v2987 = vunpack.c.h.b16 %v420
        %v2988 = vunpack.c.l.b16 %v421
        %v2989 = vunpack.c.h.b16 %v421
        %v2990 = vunpack.c.l.b16 %v422
        %v2991 = vunpack.c.h.b16 %v422
        %v2992 = vunpack.c.l.b16 %v423
        %v2993 = vunpack.c.h.b16 %v423
        %v2994 = vunpack.c.l.b16 %v424
        %v2995 = vunpack.c.h.b16 %v424
        %v2996 = vunpack.c.l.b16 %v425
        %v2997 = vunpack.c.h.b16 %v425
        %v2998 = vunpack.c.l.b16 %v426
        %v2999 = vunpack.c.h.b16 %v426
        %v3000 = vunpack.c.l.b16 %v427
        %v3001 = vunpack.c.h.b16 %v427
        %v3002 = vunpack.c.l.b16 %v428
        %v3003 = vunpack.c.h.b16 %v428
        %v3004 = vunpack.c.l.b16 %v429
        %v3005 = vunpack.c.h.b16 %v429
        %v3006 = vunpack.c.l.b16 %v430
        %v3007 = vunpack.c.h.b16 %v430
        %v3008 = vunpack.c.l.b16 %v431
        %v3009 = vunpack.c.h.b16 %v431
        %v3010 = vunpack.c.l.b16 %v432
        %v3011 = vunpack.c.h.b16 %v432
        %v3012 = vunpack.c.l.b16 %v433
        %v3013 = vunpack.c.h.b16 %v433
        %v3014 = vunpack.c.l.b16 %v434
        %v3015 = vunpack.c.h.b16 %v434
        %v3016 = vunpack.c.l.b16 %v435
        %v3017 = vunpack.c.h.b16 %v435
        %v3018 = vunpack.c.l.b16 %v436
        %v3019 = vunpack.c.h.b16 %v436
        %v3020 = vunpack.c.l.b16 %v437
        %v3021 = vunpack.c.h.b16 %v437
        %v3022 = vunpack.c.l.b16 %v438
        %v3023 = vunpack.c.h.b16 %v438
        %v3024 = vunpack.c.l.b16 %v439
        %v3025 = vunpack.c.h.b16 %v439
        %v3026 = vunpack.c.l.b16 %v440
        %v3027 = vunpack.c.h.b16 %v440
        %v3028 = vunpack.c.l.b16 %v441
        %v3029 = vunpack.c.h.b16 %v441
        %v3030 = vunpack.c.l.b16 %v442
        %v3031 = vunpack.c.h.b16 %v442
        %v3032 = vunpack.c.l.b16 %v443
        %v3033 = vunpack.c.h.b16 %v443
        %v3034 = vunpack.c.l.b16 %v444
        %v3035 = vunpack.c.h.b16 %v444
        %v3036 = vunpack.c.l.b16 %v445
        %v3037 = vunpack.c.h.b16 %v445
        %v3038 = vunpack.c.l.b16 %v446
        %v3039 = vunpack.c.h.b16 %v446
        %v3040 = vunpack.c.l.b16 %v447
        %v3041 = vunpack.c.h.b16 %v447
        %v3042 = vunpack.c.l.b16 %v448
        %v3043 = vunpack.c.h.b16 %v448
        %v3044 = vunpack.c.l.b16 %v449
        %v3045 = vunpack.c.h.b16 %v449
        %v3046 = vunpack.c.l.b16 %v450
        %v3047 = vunpack.c.h.b16 %v450
        %v3048 = vunpack.c.l.b16 %v451
        %v3049 = vunpack.c.h.b16 %v451
        %v3050 = vunpack.c.l.b16 %v452
        %v3051 = vunpack.c.h.b16 %v452
        %v3052 = vunpack.c.l.b16 %v453
        %v3053 = vunpack.c.h.b16 %v453
        %v3054 = vunpack.c.l.b16 %v454
        %v3055 = vunpack.c.l.b16 %v455
        %v3056 = vunpack.c.h.b16 %v455
        %v3057 = vunpack.c.l.b16 %v456
        %v3058 = vunpack.c.h.b16 %v456
        %v3059 = vunpack.c.l.b16 %v457
        %v3060 = vunpack.c.h.b16 %v457
        %v3061 = vunpack.c.l.b16 %v458
        %v3062 = vunpack.c.h.b16 %v458
        %v3063 = vunpack.c.l.b16 %v459
        %v3064 = vunpack.c.h.b16 %v459
        %v3065 = vunpack.c.l.b16 %v460
        %v3066 = vunpack.c.h.b16 %v460
        %v3067 = vunpack.c.l.b16 %v461
        %v3068 = vunpack.c.h.b16 %v461
        %v3069 = vunpack.c.l.b16 %v462
        %v3070 = vunpack.c.h.b16 %v462
        %v3071 = vunpack.c.l.b16 %v463
        %v3072 = vunpack.c.h.b16 %v463
        %v3073 = vunpack.c.l.b16 %v464
        %v3074 = vunpack.c.h.b16 %v464
        %v3075 = vunpack.c.l.b16 %v465
        %v3076 = vunpack.c.h.b16 %v465
        %v3077 = vunpack.c.l.b16 %v466
        %v3078 = vunpack.c.h.b16 %v466
        %v3079 = vunpack.c.l.b16 %v467
        %v3080 = vunpack.c.h.b16 %v467
        %v3081 = vunpack.c.l.b16 %v468
        %v3082 = vunpack.c.h.b16 %v468
        %v3083 = vunpack.c.l.b16 %v469
        %v3084 = vunpack.c.h.b16 %v469
        %v3085 = vunpack.c.l.b16 %v470
        %v3086 = vunpack.c.h.b16 %v470
        %v3087 = vunpack.c.l.b16 %v471
        %v3088 = vunpack.c.h.b16 %v471
        %v3089 = vunpack.c.l.b16 %v472
        %v3090 = vunpack.c.h.b16 %v472
        %v3091 = vunpack.c.l.b16 %v473
        %v3092 = vunpack.c.h.b16 %v473
        %v3093 = vunpack.c.l.b16 %v474
        %v3094 = vunpack.c.h.b16 %v474
        %v3095 = vunpack.c.l.b16 %v475
        %v3096 = vunpack.c.h.b16 %v475
        %v3097 = vunpack.c.l.b16 %v476
        %v3098 = vunpack.c.h.b16 %v476
        %v3099 = vunpack.c.l.b16 %v477
        %v3100 = vunpack.c.h.b16 %v477
        %v3101 = vunpack.c.l.b16 %v478
        %v3102 = vunpack.c.h.b16 %v478
        %v3103 = vunpack.c.l.b16 %v479
        %v3104 = vunpack.c.h.b16 %v479
        %v3105 = vunpack.c.l.b16 %v480
        %v3106 = vunpack.c.h.b16 %v480
        %v3107 = vunpack.c.l.b16 %v481
        %v3108 = vunpack.c.h.b16 %v481
        %v3109 = vunpack.c.l.b16 %v482
        %v3110 = vunpack.c.h.b16 %v482
        %v3111 = vunpack.c.l.b16 %v483
        %v3112 = vunpack.c.h.b16 %v483
        %v3113 = vunpack.c.l.b16 %v484
        %v3114 = vunpack.c.h.b16 %v484
        %v3115 = vunpack.c.l.b16 %v485
        %v3116 = vunpack.c.h.b16 %v485
        %v3117 = vunpack.c.l.b16 %v486
        %v3118 = vunpack.c.h.b16 %v486
        %v3119 = vunpack.c.l.b16 %v487
        %v3120 = vunpack.c.h.b16 %v487
        %v3121 = vunpack.c.l.b16 %v488
        %v3122 = vunpack.c.h.b16 %v488
        %v3123 = vunpack.c.l.b16 %v489
        %v3124 = vunpack.c.h.b16 %v489
        %v3125 = vunpack.c.l.b16 %v490
        %v3126 = vunpack.c.h.b16 %v490
        %v3127 = vunpack.c.l.b16 %v491
        %v3128 = vunpack.c.h.b16 %v491
        %v3129 = vunpack.c.l.b16 %v492
        %v3130 = vunpack.c.h.b16 %v492
        %v3131 = vunpack.c.l.b16 %v493
        %v3132 = vunpack.c.h.b16 %v493
        %v3133 = vunpack.c.l.b16 %v494
        %v3134 = vunpack.c.h.b16 %v494
        %v3135 = vunpack.c.l.b16 %v495
        %v3136 = vunpack.c.l.b16 %v496
        %v3137 = vunpack.c.h.b16 %v496
        %v3138 = vunpack.c.l.b16 %v497
        %v3139 = vunpack.c.h.b16 %v497
        %v3140 = vunpack.c.l.b16 %v498
        %v3141 = vunpack.c.h.b16 %v498
        %v3142 = vunpack.c.l.b16 %v499
        %v3143 = vunpack.c.h.b16 %v499
        %v3144 = vunpack.c.l.b16 %v500
        %v3145 = vunpack.c.h.b16 %v500
        %v3146 = vunpack.c.l.b16 %v501
        %v3147 = vunpack.c.h.b16 %v501
        %v3148 = vunpack.c.l.b16 %v502
        %v3149 = vunpack.c.h.b16 %v502
        %v3150 = vunpack.c.l.b16 %v503
        %v3151 = vunpack.c.h.b16 %v503
        %v3152 = vunpack.c.l.b16 %v504
        %v3153 = vunpack.c.h.b16 %v504
        %v3154 = vunpack.c.l.b16 %v505
        %v3155 = vunpack.c.h.b16 %v505
        %v3156 = vunpack.c.l.b16 %v506
        %v3157 = vunpack.c.h.b16 %v506
        %v3158 = vunpack.c.l.b16 %v507
        %v3159 = vunpack.c.h.b16 %v507
        %v3160 = vunpack.c.l.b16 %v508
        %v3161 = vunpack.c.h.b16 %v508
        %v3162 = vunpack.c.l.b16 %v509
        %v3163 = vunpack.c.h.b16 %v509
        %v3164 = vunpack.c.l.b16 %v510
        %v3165 = vunpack.c.h.b16 %v510
        %v3166 = vunpack.c.l.b16 %v511
        %v3167 = vunpack.c.h.b16 %v511
        %v3168 = vunpack.c.l.b16 %v512
        %v3169 = vunpack.c.h.b16 %v512
        %v3170 = vunpack.c.l.b16 %v513
        %v3171 = vunpack.c.h.b16 %v513
        %v3172 = vunpack.c.l.b16 %v514
        %v3173 = vunpack.c.h.b16 %v514
        %v3174 = vunpack.c.l.b16 %v515
        %v3175 = vunpack.c.h.b16 %v515
        %v3176 = vunpack.c.l.b16 %v516
        %v3177 = vunpack.c.h.b16 %v516
        %v3178 = vunpack.c.l.b16 %v517
        %v3179 = vunpack.c.h.b16 %v517
        %v3180 = vunpack.c.l.b16 %v518
        %v3181 = vunpack.c.h.b16 %v518
        %v3182 = vunpack.c.l.b16 %v519
        %v3183 = vunpack.c.h.b16 %v519
        %v3184 = vunpack.c.l.b16 %v520
        %v3185 = vunpack.c.h.b16 %v520
        %v3186 = vunpack.c.l.b16 %v521
        %v3187 = vunpack.c.h.b16 %v521
        %v3188 = vunpack.c.l.b16 %v522
        %v3189 = vunpack.c.h.b16 %v522
        %v3190 = vunpack.c.l.b16 %v523
        %v3191 = vunpack.c.h.b16 %v523
        %v3192 = vunpack.c.l.b16 %v524
        %v3193 = vunpack.c.h.b16 %v524
        %v3194 = vunpack.c.l.b16 %v525
        %v3195 = vunpack.c.h.b16 %v525
        %v3196 = vunpack.c.l.b16 %v526
        %v3197 = vunpack.c.h.b16 %v526
        %v3198 = vunpack.c.l.b16 %v527
        %v3199 = vunpack.c.h.b16 %v527
        %v3200 = vunpack.c.l.b16 %v528
        %v3201 = vunpack.c.h.b16 %v528
        %v3202 = vunpack.c.l.b16 %v529
        %v3203 = vunpack.c.h.b16 %v529
        %v3204 = vunpack.c.l.b16 %v530
        %v3205 = vunpack.c.h.b16 %v530
        %v3206 = vunpack.c.l.b16 %v531
        %v3207 = vunpack.c.h.b16 %v531
        %v3208 = vunpack.c.l.b16 %v532
        %v3209 = vunpack.c.h.b16 %v532
        %v3210 = vunpack.c.l.b16 %v533
        %v3211 = vunpack.c.h.b16 %v533
        %v3212 = vunpack.c.l.b16 %v534
        %v3213 = vunpack.c.h.b16 %v534
        %v3214 = vunpack.c.l.b16 %v535
        %v3215 = vunpack.c.h.b16 %v535
        %v3216 = vunpack.c.l.b16 %v536
        %v3217 = vunpack.c.l.b16 %v537
        %v3218 = vunpack.c.h.b16 %v537
        %v3219 = vunpack.c.l.b16 %v538
        %v3220 = vunpack.c.h.b16 %v538
        %v3221 = vunpack.c.l.b16 %v539
        %v3222 = vunpack.c.h.b16 %v539
        %v3223 = vunpack.c.l.b16 %v540
        %v3224 = vunpack.c.h.b16 %v540
        %v3225 = vunpack.c.l.b16 %v541
        %v3226 = vunpack.c.h.b16 %v541
        %v3227 = vunpack.c.l.b16 %v542
        %v3228 = vunpack.c.h.b16 %v542
        %v3229 = vunpack.c.l.b16 %v543
        %v3230 = vunpack.c.h.b16 %v543
        %v3231 = vunpack.c.l.b16 %v544
        %v3232 = vunpack.c.h.b16 %v544
        %v3233 = vunpack.c.l.b16 %v545
        %v3234 = vunpack.c.h.b16 %v545
        %v3235 = vunpack.c.l.b16 %v546
        %v3236 = vunpack.c.h.b16 %v546
        %v3237 = vunpack.c.l.b16 %v547
        %v3238 = vunpack.c.h.b16 %v547
        %v3239 = vunpack.c.l.b16 %v548
        %v3240 = vunpack.c.h.b16 %v548
        %v3241 = vunpack.c.l.b16 %v549
        %v3242 = vunpack.c.h.b16 %v549
        %v3243 = vunpack.c.l.b16 %v550
        %v3244 = vunpack.c.h.b16 %v550
        %v3245 = vunpack.c.l.b16 %v551
        %v3246 = vunpack.c.h.b16 %v551
        %v3247 = vunpack.c.l.b16 %v552
        %v3248 = vunpack.c.h.b16 %v552
        %v3249 = vunpack.c.l.b16 %v553
        %v3250 = vunpack.c.h.b16 %v553
        %v3251 = vunpack.c.l.b16 %v554
        %v3252 = vunpack.c.h.b16 %v554
        %v3253 = vunpack.c.l.b16 %v555
        %v3254 = vunpack.c.h.b16 %v555
        %v3255 = vunpack.c.l.b16 %v556
        %v3256 = vunpack.c.h.b16 %v556
        %v3257 = vunpack.c.l.b16 %v557
        %v3258 = vunpack.c.h.b16 %v557
        %v3259 = vunpack.c.l.b16 %v558
        %v3260 = vunpack.c.h.b16 %v558
        %v3261 = vunpack.c.l.b16 %v559
        %v3262 = vunpack.c.h.b16 %v559
        %v3263 = vunpack.c.l.b16 %v560
        %v3264 = vunpack.c.h.b16 %v560
        %v3265 = vunpack.c.l.b16 %v561
        %v3266 = vunpack.c.h.b16 %v561
        %v3267 = vunpack.c.l.b16 %v562
        %v3268 = vunpack.c.h.b16 %v562
        %v3269 = vunpack.c.l.b16 %v563
        %v3270 = vunpack.c.h.b16 %v563
        %v3271 = vunpack.c.l.b16 %v564
        %v3272 = vunpack.c.h.b16 %v564
        %v3273 = vunpack.c.l.b16 %v565
        %v3274 = vunpack.c.h.b16 %v565
        %v3275 = vunpack.c.l.b16 %v566
        %v3276 = vunpack.c.h.b16 %v566
        %v3277 = vunpack.c.l.b16 %v567
        %v3278 = vunpack.c.h.b16 %v567
        %v3279 = vunpack.c.l.b16 %v568
        %v3280 = vunpack.c.h.b16 %v568
        %v3281 = vunpack.c.l.b16 %v569
        %v3282 = vunpack.c.h.b16 %v569
        %v3283 = vunpack.c.l.b16 %v570
        %v3284 = vunpack.c.h.b16 %v570
        %v3285 = vunpack.c.l.b16 %v571
        %v3286 = vunpack.c.h.b16 %v571
        %v3287 = vunpack.c.l.b16 %v572
        %v3288 = vunpack.c.h.b16 %v572
        %v3289 = vunpack.c.l.b16 %v573
        %v3290 = vunpack.c.h.b16 %v573
        %v3291 = vunpack.c.l.b16 %v574
        %v3292 = vunpack.c.h.b16 %v574
        %v3293 = vunpack.c.l.b16 %v575
        %v3294 = vunpack.c.h.b16 %v575
        %v3295 = vunpack.c.l.b16 %v576
        %v3296 = vunpack.c.h.b16 %v576
        %v3297 = vunpack.c.l.b16 %v577
        %v3298 = vunpack.c.l.b16 %v578
        %v3299 = vunpack.c.h.b16 %v578
        %v3300 = vunpack.c.l.b16 %v579
        %v3301 = vunpack.c.h.b16 %v579
        %v3302 = vunpack.c.l.b16 %v580
        %v3303 = vunpack.c.h.b16 %v580
        %v3304 = vunpack.c.l.b16 %v581
        %v3305 = vunpack.c.h.b16 %v581
        %v3306 = vunpack.c.l.b16 %v582
        %v3307 = vunpack.c.h.b16 %v582
        %v3308 = vunpack.c.l.b16 %v583
        %v3309 = vunpack.c.h.b16 %v583
        %v3310 = vunpack.c.l.b16 %v584
        %v3311 = vunpack.c.h.b16 %v584
        %v3312 = vunpack.c.l.b16 %v585
        %v3313 = vunpack.c.h.b16 %v585
        %v3314 = vunpack.c.l.b16 %v586
        %v3315 = vunpack.c.h.b16 %v586
        %v3316 = vunpack.c.l.b16 %v587
        %v3317 = vunpack.c.h.b16 %v587
        %v3318 = vunpack.c.l.b16 %v588
        %v3319 = vunpack.c.h.b16 %v588
        %v3320 = vunpack.c.l.b16 %v589
        %v3321 = vunpack.c.h.b16 %v589
        %v3322 = vunpack.c.l.b16 %v590
        %v3323 = vunpack.c.h.b16 %v590
        %v3324 = vunpack.c.l.b16 %v591
        %v3325 = vunpack.c.h.b16 %v591
        %v3326 = vunpack.c.l.b16 %v592
        %v3327 = vunpack.c.h.b16 %v592
        %v3328 = vunpack.c.l.b16 %v593
        %v3329 = vunpack.c.h.b16 %v593
        %v3330 = vunpack.c.l.b16 %v594
        %v3331 = vunpack.c.h.b16 %v594
        %v3332 = vunpack.c.l.b16 %v595
        %v3333 = vunpack.c.h.b16 %v595
        %v3334 = vunpack.c.l.b16 %v596
        %v3335 = vunpack.c.h.b16 %v596
        %v3336 = vunpack.c.l.b16 %v597
        %v3337 = vunpack.c.h.b16 %v597
        %v3338 = vunpack.c.l.b16 %v598
        %v3339 = vunpack.c.h.b16 %v598
        %v3340 = vunpack.c.l.b16 %v599
        %v3341 = vunpack.c.h.b16 %v599
        %v3342 = vunpack.c.l.b16 %v600
        %v3343 = vunpack.c.h.b16 %v600
        %v3344 = vunpack.c.l.b16 %v601
        %v3345 = vunpack.c.h.b16 %v601
        %v3346 = vunpack.c.l.b16 %v602
        %v3347 = vunpack.c.h.b16 %v602
        %v3348 = vunpack.c.l.b16 %v603
        %v3349 = vunpack.c.h.b16 %v603
        %v3350 = vunpack.c.l.b16 %v604
        %v3351 = vunpack.c.h.b16 %v604
        %v3352 = vunpack.c.l.b16 %v605
        %v3353 = vunpack.c.h.b16 %v605
        %v3354 = vunpack.c.l.b16 %v606
        %v3355 = vunpack.c.h.b16 %v606
        %v3356 = vunpack.c.l.b16 %v607
        %v3357 = vunpack.c.h.b16 %v607
        %v3358 = vunpack.c.l.b16 %v608
        %v3359 = vunpack.c.h.b16 %v608
        %v3360 = vunpack.c.l.b16 %v609
        %v3361 = vunpack.c.h.b16 %v609
        %v3362 = vunpack.c.l.b16 %v610
        %v3363 = vunpack.c.h.b16 %v610
        %v3364 = vunpack.c.l.b16 %v611
        %v3365 = vunpack.c.h.b16 %v611
        %v3366 = vunpack.c.l.b16 %v612
        %v3367 = vunpack.c.h.b16 %v612
        %v3368 = vunpack.c.l.b16 %v613
        %v3369 = vunpack.c.h.b16 %v613
        %v3370 = vunpack.c.l.b16 %v614
        %v3371 = vunpack.c.h.b16 %v614
        %v3372 = vunpack.c.l.b16 %v615
        %v3373 = vunpack.c.h.b16 %v615
        %v3374 = vunpack.c.l.b16 %v616
        %v3375 = vunpack.c.h.b16 %v616
        %v3376 = vunpack.c.l.b16 %v617
        %v3377 = vunpack.c.h.b16 %v617
        %v3378 = vunpack.c.l.b16 %v618
        %v3379 = vunpack.c.l.b16 %v619
        %v3380 = vunpack.c.h.b16 %v619
        %v3381 = vunpack.c.l.b16 %v620
        %v3382 = vunpack.c.h.b16 %v620
        %v3383 = vunpack.c.l.b16 %v621
        %v3384 = vunpack.c.h.b16 %v621
        %v3385 = vunpack.c.l.b16 %v622
        %v3386 = vunpack.c.h.b16 %v622
        %v3387 = vunpack.c.l.b16 %v623
        %v3388 = vunpack.c.h.b16 %v623
        %v3389 = vunpack.c.l.b16 %v624
        %v3390 = vunpack.c.h.b16 %v624
        %v3391 = vunpack.c.l.b16 %v625
        %v3392 = vunpack.c.h.b16 %v625
        %v3393 = vunpack.c.l.b16 %v626
        %v3394 = vunpack.c.h.b16 %v626
        %v3395 = vunpack.c.l.b16 %v627
        %v3396 = vunpack.c.h.b16 %v627
        %v3397 = vunpack.c.l.b16 %v628
        %v3398 = vunpack.c.h.b16 %v628
        %v3399 = vunpack.c.l.b16 %v629
        %v3400 = vunpack.c.h.b16 %v629
        %v3401 = vunpack.c.l.b16 %v630
        %v3402 = vunpack.c.h.b16 %v630
        %v3403 = vunpack.c.l.b16 %v631
        %v3404 = vunpack.c.h.b16 %v631
        %v3405 = vunpack.c.l.b16 %v632
        %v3406 = vunpack.c.h.b16 %v632
        %v3407 = vunpack.c.l.b16 %v633
        %v3408 = vunpack.c.h.b16 %v633
        %v3409 = vunpack.c.l.b16 %v634
        %v3410 = vunpack.c.h.b16 %v634
        %v3411 = vunpack.c.l.b16 %v635
        %v3412 = vunpack.c.h.b16 %v635
        %v3413 = vunpack.c.l.b16 %v636
        %v3414 = vunpack.c.h.b16 %v636
        %v3415 = vunpack.c.l.b16 %v637
        %v3416 = vunpack.c.h.b16 %v637
        %v3417 = vunpack.c.l.b16 %v638
        %v3418 = vunpack.c.h.b16 %v638
        %v3419 = vunpack.c.l.b16 %v639
        %v3420 = vunpack.c.h.b16 %v639
        %v3421 = vunpack.c.l.b16 %v640
        %v3422 = vunpack.c.h.b16 %v640
        %v3423 = vunpack.c.l.b16 %v641
        %v3424 = vunpack.c.h.b16 %v641
        %v3425 = vunpack.c.l.b16 %v642
        %v3426 = vunpack.c.h.b16 %v642
        %v3427 = vunpack.c.l.b16 %v643
        %v3428 = vunpack.c.h.b16 %v643
        %v3429 = vunpack.c.l.b16 %v644
        %v3430 = vunpack.c.h.b16 %v644
        %v3431 = vunpack.c.l.b16 %v645
        %v3432 = vunpack.c.h.b16 %v645
        %v3433 = vunpack.c.l.b16 %v646
        %v3434 = vunpack.c.h.b16 %v646
        %v3435 = vunpack.c.l.b16 %v647
        %v3436 = vunpack.c.h.b16 %v647
        %v3437 = vunpack.c.l.b16 %v648
        %v3438 = vunpack.c.h.b16 %v648
        %v3439 = vunpack.c.l.b16 %v649
        %v3440 = vunpack.c.h.b16 %v649
        %v3441 = vunpack.c.l.b16 %v650
        %v3442 = vunpack.c.h.b16 %v650
        %v3443 = vunpack.c.l.b16 %v651
        %v3444 = vunpack.c.h.b16 %v651
        %v3445 = vunpack.c.l.b16 %v652
        %v3446 = vunpack.c.h.b16 %v652
        %v3447 = vunpack.c.l.b16 %v653
        %v3448 = vunpack.c.h.b16 %v653
        %v3449 = vunpack.c.l.b16 %v654
        %v3450 = vunpack.c.h.b16 %v654
        %v3451 = vunpack.c.l.b16 %v655
        %v3452 = vunpack.c.h.b16 %v655
        %v3453 = vunpack.c.l.b16 %v656
        %v3454 = vunpack.c.h.b16 %v656
        %v3455 = vunpack.c.l.b16 %v657
        %v3456 = vunpack.c.h.b16 %v657
        %v3457 = vunpack.c.l.b16 %v658
        %v3458 = vunpack.c.h.b16 %v658
        %v3459 = vunpack.c.l.b16 %v659
        %v3460 = vunpack.c.l.b16 %v660
        %v3461 = vunpack.c.h.b16 %v660
        %v3462 = vunpack.c.l.b16 %v661
        %v3463 = vunpack.c.h.b16 %v661
        %v3464 = vunpack.c.l.b16 %v662
        %v3465 = vunpack.c.h.b16 %v662
        %v3466 = vunpack.c.l.b16 %v663
        %v3467 = vunpack.c.h.b16 %v663
        %v3468 = vunpack.c.l.b16 %v664
        %v3469 = vunpack.c.h.b16 %v664
        %v3470 = vunpack.c.l.b16 %v665
        %v3471 = vunpack.c.h.b16 %v665
        %v3472 = vunpack.c.l.b16 %v666
        %v3473 = vunpack.c.h.b16 %v666
        %v3474 = vunpack.c.l.b16 %v667
        %v3475 = vunpack.c.h.b16 %v667
        %v3476 = vunpack.c.l.b16 %v668
        %v3477 = vunpack.c.h.b16 %v668
        %v3478 = vunpack.c.l.b16 %v669
        %v3479 = vunpack.c.h.b16 %v669
        %v3480 = vunpack.c.l.b16 %v670
        %v3481 = vunpack.c.h.b16 %v670
        %v3482 = vunpack.c.l.b16 %v671
        %v3483 = vunpack.c.h.b16 %v671
        %v3484 = vunpack.c.l.b16 %v672
        %v3485 = vunpack.c.h.b16 %v672
        %v3486 = vunpack.c.l.b16 %v673
        %v3487 = vunpack.c.h.b16 %v673
        %v3488 = vunpack.c.l.b16 %v674
        %v3489 = vunpack.c.h.b16 %v674
        %v3490 = vunpack.c.l.b16 %v675
        %v3491 = vunpack.c.h.b16 %v675
        %v3492 = vunpack.c.l.b16 %v676
        %v3493 = vunpack.c.h.b16 %v676
        %v3494 = vunpack.c.l.b16 %v677
        %v3495 = vunpack.c.h.b16 %v677
        %v3496 = vunpack.c.l.b16 %v678
        %v3497 = vunpack.c.h.b16 %v678
        %v3498 = vunpack.c.l.b16 %v679
        %v3499 = vunpack.c.h.b16 %v679
        %v3500 = vunpack.c.l.b16 %v680
        %v3501 = vunpack.c.h.b16 %v680
        %v3502 = vunpack.c.l.b16 %v681
        %v3503 = vunpack.c.h.b16 %v681
        %v3504 = vunpack.c.l.b16 %v682
        %v3505 = vunpack.c.h.b16 %v682
        %v3506 = vunpack.c.l.b16 %v683
        %v3507 = vunpack.c.h.b16 %v683
        %v3508 = vunpack.c.l.b16 %v684
        %v3509 = vunpack.c.h.b16 %v684
        %v3510 = vunpack.c.l.b16 %v685
        %v3511 = vunpack.c.h.b16 %v685
        %v3512 = vunpack.c.l.b16 %v686
        %v3513 = vunpack.c.h.b16 %v686
        %v3514 = vunpack.c.l.b16 %v687
        %v3515 = vunpack.c.h.b16 %v687
        %v3516 = vunpack.c.l.b16 %v688
        %v3517 = vunpack.c.h.b16 %v688
        %v3518 = vunpack.c.l.b16 %v689
        %v3519 = vunpack.c.h.b16 %v689
        %v3520 = vunpack.c.l.b16 %v690
        %v3521 = vunpack.c.h.b16 %v690
        %v3522 = vunpack.c.l.b16 %v691
        %v3523 = vunpack.c.h.b16 %v691
        %v3524 = vunpack.c.l.b16 %v692
        %v3525 = vunpack.c.h.b16 %v692
        %v3526 = vunpack.c.l.b16 %v693
        %v3527 = vunpack.c.h.b16 %v693
        %v3528 = vunpack.c.l.b16 %v694
        %v3529 = vunpack.c.h.b16 %v694
        %v3530 = vunpack.c.l.b16 %v695
        %v3531 = vunpack.c.h.b16 %v695
        %v3532 = vunpack.c.l.b16 %v696
        %v3533 = vunpack.c.h.b16 %v696
        %v3534 = vunpack.c.l.b16 %v697
        %v3535 = vunpack.c.h.b16 %v697
        %v3536 = vunpack.c.l.b16 %v698
        %v3537 = vunpack.c.h.b16 %v698
        %v3538 = vunpack.c.l.b16 %v699
        %v3539 = vunpack.c.h.b16 %v699
        %v3540 = vunpack.c.l.b16 %v700
        %v3541 = vunpack.c.l.b16 %v701
        %v3542 = vunpack.c.h.b16 %v701
        %v3543 = vunpack.c.l.b16 %v702
        %v3544 = vunpack.c.h.b16 %v702
        %v3545 = vunpack.c.l.b16 %v703
        %v3546 = vunpack.c.h.b16 %v703
        %v3547 = vunpack.c.l.b16 %v704
        %v3548 = vunpack.c.h.b16 %v704
        %v3549 = vunpack.c.l.b16 %v705
        %v3550 = vunpack.c.h.b16 %v705
        %v3551 = vunpack.c.l.b16 %v706
        %v3552 = vunpack.c.h.b16 %v706
        %v3553 = vunpack.c.l.b16 %v707
        %v3554 = vunpack.c.h.b16 %v707
        %v3555 = vunpack.c.l.b16 %v708
        %v3556 = vunpack.c.h.b16 %v708
        %v3557 = vunpack.c.l.b16 %v709
        %v3558 = vunpack.c.h.b16 %v709
        %v3559 = vunpack.c.l.b16 %v710
        %v3560 = vunpack.c.h.b16 %v710
        %v3561 = vunpack.c.l.b16 %v711
        %v3562 = vunpack.c.h.b16 %v711
        %v3563 = vunpack.c.l.b16 %v712
        %v3564 = vunpack.c.h.b16 %v712
        %v3565 = vunpack.c.l.b16 %v713
        %v3566 = vunpack.c.h.b16 %v713
        %v3567 = vunpack.c.l.b16 %v714
        %v3568 = vunpack.c.h.b16 %v714
        %v3569 = vunpack.c.l.b16 %v715
        %v3570 = vunpack.c.h.b16 %v715
        %v3571 = vunpack.c.l.b16 %v716
        %v3572 = vunpack.c.h.b16 %v716
        %v3573 = vunpack.c.l.b16 %v717
        %v3574 = vunpack.c.h.b16 %v717
        %v3575 = vunpack.c.l.b16 %v718
        %v3576 = vunpack.c.h.b16 %v718
        %v3577 = vunpack.c.l.b16 %v719
        %v3578 = vunpack.c.h.b16 %v719
        %v3579 = vunpack.c.l.b16 %v720
        %v3580 = vunpack.c.h.b16 %v720
        %v3581 = vunpack.c.l.b16 %v721
        %v3582 = vunpack.c.h.b16 %v721
        %v3583 = vunpack.c.l.b16 %v722
        %v3584 = vunpack.c.h.b16 %v722
        %v3585 = vunpack.c.l.b16 %v723
        %v3586 = vunpack.c.h.b16 %v723
        %v3587 = vunpack.c.l.b16 %v724
        %v3588 = vunpack.c.h.b16 %v724
        %v3589 = vunpack.c.l.b16 %v725
        %v3590 = vunpack.c.h.b16 %v725
        %v3591 = vunpack.c.l.b16 %v726
        %v3592 = vunpack.c.h.b16 %v726
        %v3593 = vunpack.c.l.b16 %v727
        %v3594 = vunpack.c.h.b16 %v727
        %v3595 = vunpack.c.l.b16 %v728
        %v3596 = vunpack.c.h.b16 %v728
        %v3597 = vunpack.c.l.b16 %v729
        %v3598 = vunpack.c.h.b16 %v729
        %v3599 = vunpack.c.l.b16 %v730
        %v3600 = vunpack.c.h.b16 %v730
        %v3601 = vunpack.c.l.b16 %v731
        %v3602 = vunpack.c.h.b16 %v731
        %v3603 = vunpack.c.l.b16 %v732
        %v3604 = vunpack.c.h.b16 %v732
        %v3605 = vunpack.c.l.b16 %v733
        %v3606 = vunpack.c.h.b16 %v733
        %v3607 = vunpack.c.l.b16 %v734
        %v3608 = vunpack.c.h.b16 %v734
        %v3609 = vunpack.c.l.b16 %v735
        %v3610 = vunpack.c.h.b16 %v735
        %v3611 = vunpack.c.l.b16 %v736
        %v3612 = vunpack.c.h.b16 %v736
        %v3613 = vunpack.c.l.b16 %v737
        %v3614 = vunpack.c.h.b16 %v737
        %v3615 = vunpack.c.l.b16 %v738
        %v3616 = vunpack.c.h.b16 %v738
        %v3617 = vunpack.c.l.b16 %v739
        %v3618 = vunpack.c.h.b16 %v739
        %v3619 = vunpack.c.l.b16 %v740
        %v3620 = vunpack.c.h.b16 %v740
        %v3621 = vunpack.c.l.b16 %v741
        %v3622 = vunpack.c.l.b16 %v742
        %v3623 = vunpack.c.h.b16 %v742
        %v3624 = vunpack.c.l.b16 %v743
        %v3625 = vunpack.c.h.b16 %v743
        %v3626 = vunpack.c.l.b16 %v744
        %v3627 = vunpack.c.h.b16 %v744
        %v3628 = vunpack.c.l.b16 %v745
        %v3629 = vunpack.c.h.b16 %v745
        %v3630 = vunpack.c.l.b16 %v746
        %v3631 = vunpack.c.h.b16 %v746
        %v3632 = vunpack.c.l.b16 %v747
        %v3633 = vunpack.c.h.b16 %v747
        %v3634 = vunpack.c.l.b16 %v748
        %v3635 = vunpack.c.h.b16 %v748
        %v3636 = vunpack.c.l.b16 %v749
        %v3637 = vunpack.c.h.b16 %v749
        %v3638 = vunpack.c.l.b16 %v750
        %v3639 = vunpack.c.h.b16 %v750
        %v3640 = vunpack.c.l.b16 %v751
        %v3641 = vunpack.c.h.b16 %v751
        %v3642 = vunpack.c.l.b16 %v752
        %v3643 = vunpack.c.h.b16 %v752
        %v3644 = vunpack.c.l.b16 %v753
        %v3645 = vunpack.c.h.b16 %v753
        %v3646 = vunpack.c.l.b16 %v754
        %v3647 = vunpack.c.h.b16 %v754
        %v3648 = vunpack.c.l.b16 %v755
        %v3649 = vunpack.c.h.b16 %v755
        %v3650 = vunpack.c.l.b16 %v756
        %v3651 = vunpack.c.h.b16 %v756
        %v3652 = vunpack.c.l.b16 %v757
        %v3653 = vunpack.c.h.b16 %v757
        %v3654 = vunpack.c.l.b16 %v758
        %v3655 = vunpack.c.h.b16 %v758
        %v3656 = vunpack.c.l.b16 %v759
        %v3657 = vunpack.c.h.b16 %v759
        %v3658 = vunpack.c.l.b16 %v760
        %v3659 = vunpack.c.h.b16 %v760
        %v3660 = vunpack.c.l.b16 %v761
        %v3661 = vunpack.c.h.b16 %v761
        %v3662 = vunpack.c.l.b16 %v762
        %v3663 = vunpack.c.h.b16 %v762
        %v3664 = vunpack.c.l.b16 %v763
        %v3665 = vunpack.c.h.b16 %v763
        %v3666 = vunpack.c.l.b16 %v764
        %v3667 = vunpack.c.h.b16 %v764
        %v3668 = vunpack.c.l.b16 %v765
        %v3669 = vunpack.c.h.b16 %v765
        %v3670 = vunpack.c.l.b16 %v766
        %v3671 = vunpack.c.h.b16 %v766
        %v3672 = vunpack.c.l.b16 %v767
        %v3673 = vunpack.c.h.b16 %v767
        %v3674 = vunpack.c.l.b16 %v768
        %v3675 = vunpack.c.h.b16 %v768
        %v3676 = vunpack.c.l.b16 %v769
        %v3677 = vunpack.c.h.b16 %v769
        %v3678 = vunpack.c.l.b16 %v770
        %v3679 = vunpack.c.h.b16 %v770
        %v3680 = vunpack.c.l.b16 %v771
        %v3681 = vunpack.c.h.b16 %v771
        %v3682 = vunpack.c.l.b16 %v772
        %v3683 = vunpack.c.h.b16 %v772
        %v3684 = vunpack.c.l.b16 %v773
        %v3685 = vunpack.c.h.b16 %v773
        %v3686 = vunpack.c.l.b16 %v774
        %v3687 = vunpack.c.h.b16 %v774
        %v3688 = vunpack.c.l.b16 %v775
        %v3689 = vunpack.c.h.b16 %v775
        %v3690 = vunpack.c.l.b16 %v776
        %v3691 = vunpack.c.h.b16 %v776
        %v3692 = vunpack.c.l.b16 %v777
        %v3693 = vunpack.c.h.b16 %v777
        %v3694 = vunpack.c.l.b16 %v778
        %v3695 = vunpack.c.h.b16 %v778
        %v3696 = vunpack.c.l.b16 %v779
        %v3697 = vunpack.c.h.b16 %v779
        %v3698 = vunpack.c.l.b16 %v780
        %v3699 = vunpack.c.h.b16 %v780
        %v3700 = vunpack.c.l.b16 %v781
        %v3701 = vunpack.c.h.b16 %v781
        %v3702 = vunpack.c.l.b16 %v782
        %v3703 = vunpack.c.l.b16 %v783
        %v3704 = vunpack.c.h.b16 %v783
        %v3705 = vunpack.c.l.b16 %v784
        %v3706 = vunpack.c.h.b16 %v784
        %v3707 = vunpack.c.l.b16 %v785
        %v3708 = vunpack.c.h.b16 %v785
        %v3709 = vunpack.c.l.b16 %v786
        %v3710 = vunpack.c.h.b16 %v786
        %v3711 = vunpack.c.l.b16 %v787
        %v3712 = vunpack.c.h.b16 %v787
        %v3713 = vunpack.c.l.b16 %v788
        %v3714 = vunpack.c.h.b16 %v788
        %v3715 = vunpack.c.l.b16 %v789
        %v3716 = vunpack.c.h.b16 %v789
        %v3717 = vunpack.c.l.b16 %v790
        %v3718 = vunpack.c.h.b16 %v790
        %v3719 = vunpack.c.l.b16 %v791
        %v3720 = vunpack.c.h.b16 %v791
        %v3721 = vunpack.c.l.b16 %v792
        %v3722 = vunpack.c.h.b16 %v792
        %v3723 = vunpack.c.l.b16 %v793
        %v3724 = vunpack.c.h.b16 %v793
        %v3725 = vunpack.c.l.b16 %v794
        %v3726 = vunpack.c.h.b16 %v794
        %v3727 = vunpack.c.l.b16 %v795
        %v3728 = vunpack.c.h.b16 %v795
        %v3729 = vunpack.c.l.b16 %v796
        %v3730 = vunpack.c.h.b16 %v796
        %v3731 = vunpack.c.l.b16 %v797
        %v3732 = vunpack.c.h.b16 %v797
        %v3733 = vunpack.c.l.b16 %v798
        %v3734 = vunpack.c.h.b16 %v798
        %v3735 = vunpack.c.l.b16 %v799
        %v3736 = vunpack.c.h.b16 %v799
        %v3737 = vunpack.c.l.b16 %v800
        %v3738 = vunpack.c.h.b16 %v800
        %v3739 = vunpack.c.l.b16 %v801
        %v3740 = vunpack.c.h.b16 %v801
        %v3741 = vunpack.c.l.b16 %v802
        %v3742 = vunpack.c.h.b16 %v802
        %v3743 = vunpack.c.l.b16 %v803
        %v3744 = vunpack.c.h.b16 %v803
        %v3745 = vunpack.c.l.b16 %v804
        %v3746 = vunpack.c.h.b16 %v804
        %v3747 = vunpack.c.l.b16 %v805
        %v3748 = vunpack.c.h.b16 %v805
        %v3749 = vunpack.c.l.b16 %v806
        %v3750 = vunpack.c.h.b16 %v806
        %v3751 = vunpack.c.l.b16 %v807
        %v3752 = vunpack.c.h.b16 %v807
        %v3753 = vunpack.c.l.b16 %v808
        %v3754 = vunpack.c.h.b16 %v808
        %v3755 = vunpack.c.l.b16 %v809
        %v3756 = vunpack.c.h.b16 %v809
        %v3757 = vunpack.c.l.b16 %v810
        %v3758 = vunpack.c.h.b16 %v810
        %v3759 = vunpack.c.l.b16 %v811
        %v3760 = vunpack.c.h.b16 %v811
        %v3761 = vunpack.c.l.b16 %v812
        %v3762 = vunpack.c.h.b16 %v812
        %v3763 = vunpack.c.l.b16 %v813
        %v3764 = vunpack.c.h.b16 %v813
        %v3765 = vunpack.c.l.b16 %v814
        %v3766 = vunpack.c.h.b16 %v814
        %v3767 = vunpack.c.l.b16 %v815
        %v3768 = vunpack.c.h.b16 %v815
        %v3769 = vunpack.c.l.b16 %v816
        %v3770 = vunpack.c.h.b16 %v816
        %v3771 = vunpack.c.l.b16 %v817
        %v3772 = vunpack.c.h.b16 %v817
        %v3773 = vunpack.c.l.b16 %v818
        %v3774 = vunpack.c.h.b16 %v818
        %v3775 = vunpack.c.l.b16 %v819
        %v3776 = vunpack.c.h.b16 %v819
        %v3777 = vunpack.c.l.b16 %v820
        %v3778 = vunpack.c.h.b16 %v820
        %v3779 = vunpack.c.l.b16 %v821
        %v3780 = vunpack.c.h.b16 %v821
        %v3781 = vunpack.c.l.b16 %v822
        %v3782 = vunpack.c.h.b16 %v822
        %v3783 = vunpack.c.l.b16 %v823
        %v3784 = vunpack.c.l.b16 %v824
        %v3785 = vunpack.c.h.b16 %v824
        %v3786 = vunpack.c.l.b16 %v825
        %v3787 = vunpack.c.h.b16 %v825
        %v3788 = vunpack.c.l.b16 %v826
        %v3789 = vunpack.c.h.b16 %v826
        %v3790 = vunpack.c.l.b16 %v827
        %v3791 = vunpack.c.h.b16 %v827
        %v3792 = vunpack.c.l.b16 %v828
        %v3793 = vunpack.c.h.b16 %v828
        %v3794 = vunpack.c.l.b16 %v829
        %v3795 = vunpack.c.h.b16 %v829
        %v3796 = vunpack.c.l.b16 %v830
        %v3797 = vunpack.c.h.b16 %v830
        %v3798 = vunpack.c.l.b16 %v831
        %v3799 = vunpack.c.h.b16 %v831
        %v3800 = vunpack.c.l.b16 %v832
        %v3801 = vunpack.c.h.b16 %v832
        %v3802 = vunpack.c.l.b16 %v833
        %v3803 = vunpack.c.h.b16 %v833
        %v3804 = vunpack.c.l.b16 %v834
        %v3805 = vunpack.c.h.b16 %v834
        %v3806 = vunpack.c.l.b16 %v835
        %v3807 = vunpack.c.h.b16 %v835
        %v3808 = vunpack.c.l.b16 %v836
        %v3809 = vunpack.c.h.b16 %v836
        %v3810 = vunpack.c.l.b16 %v837
        %v3811 = vunpack.c.h.b16 %v837
        %v3812 = vunpack.c.l.b16 %v838
        %v3813 = vunpack.c.h.b16 %v838
        %v3814 = vunpack.c.l.b16 %v839
        %v3815 = vunpack.c.h.b16 %v839
        %v3816 = vunpack.c.l.b16 %v840
        %v3817 = vunpack.c.h.b16 %v840
        %v3818 = vunpack.c.l.b16 %v841
        %v3819 = vunpack.c.h.b16 %v841
        %v3820 = vunpack.c.l.b16 %v842
        %v3821 = vunpack.c.h.b16 %v842
        %v3822 = vunpack.c.l.b16 %v843
        %v3823 = vunpack.c.h.b16 %v843
        %v3824 = vunpack.c.l.b16 %v844
        %v3825 = vunpack.c.h.b16 %v844
        %v3826 = vunpack.c.l.b16 %v845
        %v3827 = vunpack.c.h.b16 %v845
        %v3828 = vunpack.c.l.b16 %v846
        %v3829 = vunpack.c.h.b16 %v846
        %v3830 = vunpack.c.l.b16 %v847
        %v3831 = vunpack.c.h.b16 %v847
        %v3832 = vunpack.c.l.b16 %v848
        %v3833 = vunpack.c.h.b16 %v848
        %v3834 = vunpack.c.l.b16 %v849
        %v3835 = vunpack.c.h.b16 %v849
        %v3836 = vunpack.c.l.b16 %v850
        %v3837 = vunpack.c.h.b16 %v850
        %v3838 = vunpack.c.l.b16 %v851
        %v3839 = vunpack.c.h.b16 %v851
        %v3840 = vunpack.c.l.b16 %v852
        %v3841 = vunpack.c.h.b16 %v852
        %v3842 = vunpack.c.l.b16 %v853
        %v3843 = vunpack.c.h.b16 %v853
        %v3844 = vunpack.c.l.b16 %v854
        %v3845 = vunpack.c.h.b16 %v854
        %v3846 = vunpack.c.l.b16 %v855
        %v3847 = vunpack.c.h.b16 %v855
        %v3848 = vunpack.c.l.b16 %v856
        %v3849 = vunpack.c.h.b16 %v856
        %v3850 = vunpack.c.l.b16 %v857
        %v3851 = vunpack.c.h.b16 %v857
        %v3852 = vunpack.c.l.b16 %v858
        %v3853 = vunpack.c.h.b16 %v858
        %v3854 = vunpack.c.l.b16 %v859
        %v3855 = vunpack.c.h.b16 %v859
        %v3856 = vunpack.c.l.b16 %v860
        %v3857 = vunpack.c.h.b16 %v860
        %v3858 = vunpack.c.l.b16 %v861
        %v3859 = vunpack.c.h.b16 %v861
        %v3860 = vunpack.c.l.b16 %v862
        %v3861 = vunpack.c.h.b16 %v862
        %v3862 = vunpack.c.l.b16 %v863
        %v3863 = vunpack.c.h.b16 %v863
        %v3864 = vunpack.c.l.b16 %v864
        %v3865 = vunpack.c.l.b16 %v865
        %v3866 = vunpack.c.h.b16 %v865
        %v3867 = vunpack.c.l.b16 %v866
        %v3868 = vunpack.c.h.b16 %v866
        %v3869 = vunpack.c.l.b16 %v867
        %v3870 = vunpack.c.h.b16 %v867
        %v3871 = vunpack.c.l.b16 %v868
        %v3872 = vunpack.c.h.b16 %v868
        %v3873 = vunpack.c.l.b16 %v869
        %v3874 = vunpack.c.h.b16 %v869
        %v3875 = vunpack.c.l.b16 %v870
        %v3876 = vunpack.c.h.b16 %v870
        %v3877 = vunpack.c.l.b16 %v871
        %v3878 = vunpack.c.h.b16 %v871
        %v3879 = vunpack.c.l.b16 %v872
        %v3880 = vunpack.c.h.b16 %v872
        %v3881 = vunpack.c.l.b16 %v873
        %v3882 = vunpack.c.h.b16 %v873
        %v3883 = vunpack.c.l.b16 %v874
        %v3884 = vunpack.c.h.b16 %v874
        %v3885 = vunpack.c.l.b16 %v875
        %v3886 = vunpack.c.h.b16 %v875
        %v3887 = vunpack.c.l.b16 %v876
        %v3888 = vunpack.c.h.b16 %v876
        %v3889 = vunpack.c.l.b16 %v877
        %v3890 = vunpack.c.h.b16 %v877
        %v3891 = vunpack.c.l.b16 %v878
        %v3892 = vunpack.c.h.b16 %v878
        %v3893 = vunpack.c.l.b16 %v879
        %v3894 = vunpack.c.h.b16 %v879
        %v3895 = vunpack.c.l.b16 %v880
        %v3896 = vunpack.c.h.b16 %v880
        %v3897 = vunpack.c.l.b16 %v881
        %v3898 = vunpack.c.h.b16 %v881
        %v3899 = vunpack.c.l.b16 %v882
        %v3900 = vunpack.c.h.b16 %v882
        %v3901 = vunpack.c.l.b16 %v883
        %v3902 = vunpack.c.h.b16 %v883
        %v3903 = vunpack.c.l.b16 %v884
        %v3904 = vunpack.c.h.b16 %v884
        %v3905 = vunpack.c.l.b16 %v885
        %v3906 = vunpack.c.h.b16 %v885
        %v3907 = vunpack.c.l.b16 %v886
        %v3908 = vunpack.c.h.b16 %v886
        %v3909 = vunpack.c.l.b16 %v887
        %v3910 = vunpack.c.h.b16 %v887
        %v3911 = vunpack.c.l.b16 %v888
        %v3912 = vunpack.c.h.b16 %v888
        %v3913 = vunpack.c.l.b16 %v889
        %v3914 = vunpack.c.h.b16 %v889
        %v3915 = vunpack.c.l.b16 %v890
        %v3916 = vunpack.c.h.b16 %v890
        %v3917 = vunpack.c.l.b16 %v891
        %v3918 = vunpack.c.h.b16 %v891
        %v3919 = vunpack.c.l.b16 %v892
        %v3920 = vunpack.c.h.b16 %v892
        %v3921 = vunpack.c.l.b16 %v893
        %v3922 = vunpack.c.h.b16 %v893
        %v3923 = vunpack.c.l.b16 %v894
        %v3924 = vunpack.c.h.b16 %v894
        %v3925 = vunpack.c.l.b16 %v895
        %v3926 = vunpack.c.h.b16 %v895
        %v3927 = vunpack.c.l.b16 %v896
        %v3928 = vunpack.c.h.b16 %v896
        %v3929 = vunpack.c.l.b16 %v897
        %v3930 = vunpack.c.h.b16 %v897
        %v3931 = vunpack.c.l.b16 %v898
        %v3932 = vunpack.c.h.b16 %v898
        %v3933 = vunpack.c.l.b16 %v899
        %v3934 = vunpack.c.h.b16 %v899
        %v3935 = vunpack.c.l.b16 %v900
        %v3936 = vunpack.c.h.b16 %v900
        %v3937 = vunpack.c.l.b16 %v901
        %v3938 = vunpack.c.h.b16 %v901
        %v3939 = vunpack.c.l.b16 %v902
        %v3940 = vunpack.c.h.b16 %v902
        %v3941 = vunpack.c.l.b16 %v903
        %v3942 = vunpack.c.h.b16 %v903
        %v3943 = vunpack.c.l.b16 %v904
        %v3944 = vunpack.c.h.b16 %v904
        %v3945 = vunpack.c.l.b16 %v905
        %v3946 = vunpack.c.l.b16 %v906
        %v3947 = vunpack.c.h.b16 %v906
        %v3948 = vunpack.c.l.b16 %v907
        %v3949 = vunpack.c.h.b16 %v907
        %v3950 = vunpack.c.l.b16 %v908
        %v3951 = vunpack.c.h.b16 %v908
        %v3952 = vunpack.c.l.b16 %v909
        %v3953 = vunpack.c.h.b16 %v909
        %v3954 = vunpack.c.l.b16 %v910
        %v3955 = vunpack.c.h.b16 %v910
        %v3956 = vunpack.c.l.b16 %v911
        %v3957 = vunpack.c.h.b16 %v911
        %v3958 = vunpack.c.l.b16 %v912
        %v3959 = vunpack.c.h.b16 %v912
        %v3960 = vunpack.c.l.b16 %v913
        %v3961 = vunpack.c.h.b16 %v913
        %v3962 = vunpack.c.l.b16 %v914
        %v3963 = vunpack.c.h.b16 %v914
        %v3964 = vunpack.c.l.b16 %v915
        %v3965 = vunpack.c.h.b16 %v915
        %v3966 = vunpack.c.l.b16 %v916
        %v3967 = vunpack.c.h.b16 %v916
        %v3968 = vunpack.c.l.b16 %v917
        %v3969 = vunpack.c.h.b16 %v917
        %v3970 = vunpack.c.l.b16 %v918
        %v3971 = vunpack.c.h.b16 %v918
        %v3972 = vunpack.c.l.b16 %v919
        %v3973 = vunpack.c.h.b16 %v919
        %v3974 = vunpack.c.l.b16 %v920
        %v3975 = vunpack.c.h.b16 %v920
        %v3976 = vunpack.c.l.b16 %v921
        %v3977 = vunpack.c.h.b16 %v921
        %v3978 = vunpack.c.l.b16 %v922
        %v3979 = vunpack.c.h.b16 %v922
        %v3980 = vunpack.c.l.b16 %v923
        %v3981 = vunpack.c.h.b16 %v923
        %v3982 = vunpack.c.l.b16 %v924
        %v3983 = vunpack.c.h.b16 %v924
        %v3984 = vunpack.c.l.b16 %v925
        %v3985 = vunpack.c.h.b16 %v925
        %v3986 = vunpack.c.l.b16 %v926
        %v3987 = vunpack.c.h.b16 %v926
        %v3988 = vunpack.c.l.b16 %v927
        %v3989 = vunpack.c.h.b16 %v927
        %v3990 = vunpack.c.l.b16 %v928
        %v3991 = vunpack.c.h.b16 %v928
        %v3992 = vunpack.c.l.b16 %v929
        %v3993 = vunpack.c.h.b16 %v929
        %v3994 = vunpack.c.l.b16 %v930
        %v3995 = vunpack.c.h.b16 %v930
        %v3996 = vunpack.c.l.b16 %v931
        %v3997 = vunpack.c.h.b16 %v931
        %v3998 = vunpack.c.l.b16 %v932
        %v3999 = vunpack.c.h.b16 %v932
        %v4000 = vunpack.c.l.b16 %v933
        %v4001 = vunpack.c.h.b16 %v933
        %v4002 = vunpack.c.l.b16 %v934
        %v4003 = vunpack.c.h.b16 %v934
        %v4004 = vunpack.c.l.b16 %v935
        %v4005 = vunpack.c.h.b16 %v935
        %v4006 = vunpack.c.l.b16 %v936
        %v4007 = vunpack.c.h.b16 %v936
        %v4008 = vunpack.c.l.b16 %v937
        %v4009 = vunpack.c.h.b16 %v937
        %v4010 = vunpack.c.l.b16 %v938
        %v4011 = vunpack.c.h.b16 %v938
        %v4012 = vunpack.c.l.b16 %v939
        %v4013 = vunpack.c.h.b16 %v939
        %v4014 = vunpack.c.l.b16 %v940
        %v4015 = vunpack.c.h.b16 %v940
        %v4016 = vunpack.c.l.b16 %v941
        %v4017 = vunpack.c.h.b16 %v941
        %v4018 = vunpack.c.l.b16 %v942
        %v4019 = vunpack.c.h.b16 %v942
        %v4020 = vunpack.c.l.b16 %v943
        %v4021 = vunpack.c.h.b16 %v943
        %v4022 = vunpack.c.l.b16 %v944
        %v4023 = vunpack.c.h.b16 %v944
        %v4024 = vunpack.c.l.b16 %v945
        %v4025 = vunpack.c.h.b16 %v945
        %v4026 = vunpack.c.l.b16 %v946
        %v4027 = vunpack.c.l.b16 %v947
        %v4028 = vunpack.c.h.b16 %v947
        %v4029 = vunpack.c.l.b16 %v948
        %v4030 = vunpack.c.h.b16 %v948
        %v4031 = vunpack.c.l.b16 %v949
        %v4032 = vunpack.c.h.b16 %v949
        %v4033 = vunpack.c.l.b16 %v950
        %v4034 = vunpack.c.h.b16 %v950
        %v4035 = vunpack.c.l.b16 %v951
        %v4036 = vunpack.c.h.b16 %v951
        %v4037 = vunpack.c.l.b16 %v952
        %v4038 = vunpack.c.h.b16 %v952
        %v4039 = vunpack.c.l.b16 %v953
        %v4040 = vunpack.c.h.b16 %v953
        %v4041 = vunpack.c.l.b16 %v954
        %v4042 = vunpack.c.h.b16 %v954
        %v4043 = vunpack.c.l.b16 %v955
        %v4044 = vunpack.c.h.b16 %v955
        %v4045 = vunpack.c.l.b16 %v956
        %v4046 = vunpack.c.h.b16 %v956
        %v4047 = vunpack.c.l.b16 %v957
        %v4048 = vunpack.c.h.b16 %v957
        %v4049 = vunpack.c.l.b16 %v958
        %v4050 = vunpack.c.h.b16 %v958
        %v4051 = vunpack.c.l.b16 %v959
        %v4052 = vunpack.c.h.b16 %v959
        %v4053 = vunpack.c.l.b16 %v960
        %v4054 = vunpack.c.h.b16 %v960
        %v4055 = vunpack.c.l.b16 %v961
        %v4056 = vunpack.c.h.b16 %v961
        %v4057 = vunpack.c.l.b16 %v962
        %v4058 = vunpack.c.h.b16 %v962
        %v4059 = vunpack.c.l.b16 %v963
        %v4060 = vunpack.c.h.b16 %v963
        %v4061 = vunpack.c.l.b16 %v964
        %v4062 = vunpack.c.h.b16 %v964
        %v4063 = vunpack.c.l.b16 %v965
        %v4064 = vunpack.c.h.b16 %v965
        %v4065 = vunpack.c.l.b16 %v966
        %v4066 = vunpack.c.h.b16 %v966
        %v4067 = vunpack.c.l.b16 %v967
        %v4068 = vunpack.c.h.b16 %v967
        %v4069 = vunpack.c.l.b16 %v968
        %v4070 = vunpack.c.h.b16 %v968
        %v4071 = vunpack.c.l.b16 %v969
        %v4072 = vunpack.c.h.b16 %v969
        %v4073 = vunpack.c.l.b16 %v970
        %v4074 = vunpack.c.h.b16 %v970
        %v4075 = vunpack.c.l.b16 %v971
        %v4076 = vunpack.c.h.b16 %v971
        %v4077 = vunpack.c.l.b16 %v972
        %v4078 = vunpack.c.h.b16 %v972
        %v4079 = vunpack.c.l.b16 %v973
        %v4080 = vunpack.c.h.b16 %v973
        %v4081 = vunpack.c.l.b16 %v974
        %v4082 = vunpack.c.h.b16 %v974
        %v4083 = vunpack.c.l.b16 %v975
        %v4084 = vunpack.c.h.b16 %v975
        %v4085 = vunpack.c.l.b16 %v976
        %v4086 = vunpack.c.h.b16 %v976
        %v4087 = vunpack.c.l.b16 %v977
        %v4088 = vunpack.c.h.b16 %v977
        %v4089 = vunpack.c.l.b16 %v978
        %v4090 = vunpack.c.h.b16 %v978
        %v4091 = vunpack.c.l.b16 %v979
        %v4092 = vunpack.c.h.b16 %v979
        %v4093 = vunpack.c.l.b16 %v980
        %v4094 = vunpack.c.h.b16 %v980
        %v4095 = vunpack.c.l.b16 %v981
        %v4096 = vunpack.c.h.b16 %v981
        %v4097 = vunpack.c.l.b16 %v982
        %v4098 = vunpack.c.h.b16 %v982
        %v4099 = vunpack.c.l.b16 %v983
        %v4100 = vunpack.c.h.b16 %v983
        %v4101 = vunpack.c.l.b16 %v984
        %v4102 = vunpack.c.h.b16 %v984
        %v4103 = vunpack.c.l.b16 %v985
        %v4104 = vunpack.c.h.b16 %v985
        %v4105 = vunpack.c.l.b16 %v986
        %v4106 = vunpack.c.h.b16 %v986
        %v4107 = vunpack.c.l.b16 %v987
        %v4108 = vunpack.c.l.b16 %v988
        %v4109 = vunpack.c.h.b16 %v988
        %v4110 = vunpack.c.l.b16 %v989
        %v4111 = vunpack.c.h.b16 %v989
        %v4112 = vunpack.c.l.b16 %v990
        %v4113 = vunpack.c.h.b16 %v990
        %v4114 = vunpack.c.l.b16 %v991
        %v4115 = vunpack.c.h.b16 %v991
        %v4116 = vunpack.c.l.b16 %v992
        %v4117 = vunpack.c.h.b16 %v992
        %v4118 = vunpack.c.l.b16 %v993
        %v4119 = vunpack.c.h.b16 %v993
        %v4120 = vunpack.c.l.b16 %v994
        %v4121 = vunpack.c.h.b16 %v994
        %v4122 = vunpack.c.l.b16 %v995
        %v4123 = vunpack.c.h.b16 %v995
        %v4124 = vunpack.c.l.b16 %v996
        %v4125 = vunpack.c.h.b16 %v996
        %v4126 = vunpack.c.l.b16 %v997
        %v4127 = vunpack.c.h.b16 %v997
        %v4128 = vunpack.c.l.b16 %v998
        %v4129 = vunpack.c.h.b16 %v998
        %v4130 = vunpack.c.l.b16 %v999
        %v4131 = vunpack.c.h.b16 %v999
        %v4132 = vunpack.c.l.b16 %v1000
        %v4133 = vunpack.c.h.b16 %v1000
        %v4134 = vunpack.c.l.b16 %v1001
        %v4135 = vunpack.c.h.b16 %v1001
        %v4136 = vunpack.c.l.b16 %v1002
        %v4137 = vunpack.c.h.b16 %v1002
        %v4138 = vunpack.c.l.b16 %v1003
        %v4139 = vunpack.c.h.b16 %v1003
        %v4140 = vunpack.c.l.b16 %v1004
        %v4141 = vunpack.c.h.b16 %v1004
        %v4142 = vunpack.c.l.b16 %v1005
        %v4143 = vunpack.c.h.b16 %v1005
        %v4144 = vunpack.c.l.b16 %v1006
        %v4145 = vunpack.c.h.b16 %v1006
        %v4146 = vunpack.c.l.b16 %v1007
        %v4147 = vunpack.c.h.b16 %v1007
        %v4148 = vunpack.c.l.b16 %v1008
        %v4149 = vunpack.c.h.b16 %v1008
        %v4150 = vunpack.c.l.b16 %v1009
        %v4151 = vunpack.c.h.b16 %v1009
        %v4152 = vunpack.c.l.b16 %v1010
        %v4153 = vunpack.c.h.b16 %v1010
        %v4154 = vunpack.c.l.b16 %v1011
        %v4155 = vunpack.c.h.b16 %v1011
        %v4156 = vunpack.c.l.b16 %v1012
        %v4157 = vunpack.c.h.b16 %v1012
        %v4158 = vunpack.c.l.b16 %v1013
        %v4159 = vunpack.c.h.b16 %v1013
        %v4160 = vunpack.c.l.b16 %v1014
        %v4161 = vunpack.c.h.b16 %v1014
        %v4162 = vunpack.c.l.b16 %v1015
        %v4163 = vunpack.c.h.b16 %v1015
        %v4164 = vunpack.c.l.b16 %v1016
        %v4165 = vunpack.c.h.b16 %v1016
        %v4166 = vunpack.c.l.b16 %v1017
        %v4167 = vunpack.c.h.b16 %v1017
        %v4168 = vunpack.c.l.b16 %v1018
        %v4169 = vunpack.c.h.b16 %v1018
        %v4170 = vunpack.c.l.b16 %v1019
        %v4171 = vunpack.c.h.b16 %v1019
        %v4172 = vunpack.c.l.b16 %v1020
        %v4173 = vunpack.c.h.b16 %v1020
        %v4174 = vunpack.c.l.b16 %v1021
        %v4175 = vunpack.c.h.b16 %v1021
        %v4176 = vunpack.c.l.b16 %v1022
        %v4177 = vunpack.c.h.b16 %v1022
        %v4178 = vunpack.c.l.b16 %v1023
        %v4179 = vunpack.c.h.b16 %v1023
        %v4180 = vunpack.c.l.b16 %v1024
        %v4181 = vunpack.c.h.b16 %v1024
        %v4182 = vunpack.c.l.b16 %v1025
        %v4183 = vunpack.c.h.b16 %v1025
        %v4184 = vunpack.c.l.b16 %v1026
        %v4185 = vunpack.c.h.b16 %v1026
        %v4186 = vunpack.c.l.b16 %v1027
        %v4187 = vunpack.c.h.b16 %v1027
        %v4188 = vunpack.c.l.b16 %v1028
        %v4189 = vunpack.c.l.b16 %v1029
        %v4190 = vunpack.c.h.b16 %v1029
        %v4191 = vunpack.c.l.b16 %v1030
        %v4192 = vunpack.c.h.b16 %v1030
        %v4193 = vunpack.c.l.b16 %v1031
        %v4194 = vunpack.c.h.b16 %v1031
        %v4195 = vunpack.c.l.b16 %v1032
        %v4196 = vunpack.c.h.b16 %v1032
        %v4197 = vunpack.c.l.b16 %v1033
        %v4198 = vunpack.c.h.b16 %v1033
        %v4199 = vunpack.c.l.b16 %v1034
        %v4200 = vunpack.c.h.b16 %v1034
        %v4201 = vunpack.c.l.b16 %v1035
        %v4202 = vunpack.c.h.b16 %v1035
        %v4203 = vunpack.c.l.b16 %v1036
        %v4204 = vunpack.c.h.b16 %v1036
        %v4205 = vunpack.c.l.b16 %v1037
        %v4206 = vunpack.c.h.b16 %v1037
        %v4207 = vunpack.c.l.b16 %v1038
        %v4208 = vunpack.c.h.b16 %v1038
        %v4209 = vunpack.c.l.b16 %v1039
        %v4210 = vunpack.c.h.b16 %v1039
        %v4211 = vunpack.c.l.b16 %v1040
        %v4212 = vunpack.c.h.b16 %v1040
        %v4213 = vunpack.c.l.b16 %v1041
        %v4214 = vunpack.c.h.b16 %v1041
        %v4215 = vunpack.c.l.b16 %v1042
        %v4216 = vunpack.c.h.b16 %v1042
        %v4217 = vunpack.c.l.b16 %v1043
        %v4218 = vunpack.c.h.b16 %v1043
        %v4219 = vunpack.c.l.b16 %v1044
        %v4220 = vunpack.c.h.b16 %v1044
        %v4221 = vunpack.c.l.b16 %v1045
        %v4222 = vunpack.c.h.b16 %v1045
        %v4223 = vunpack.c.l.b16 %v1046
        %v4224 = vunpack.c.h.b16 %v1046
        %v4225 = vunpack.c.l.b16 %v1047
        %v4226 = vunpack.c.h.b16 %v1047
        %v4227 = vunpack.c.l.b16 %v1048
        %v4228 = vunpack.c.h.b16 %v1048
        %v4229 = vunpack.c.l.b16 %v1049
        %v4230 = vunpack.c.h.b16 %v1049
        %v4231 = vunpack.c.l.b16 %v1050
        %v4232 = vunpack.c.h.b16 %v1050
        %v4233 = vunpack.c.l.b16 %v1051
        %v4234 = vunpack.c.h.b16 %v1051
        %v4235 = vunpack.c.l.b16 %v1052
        %v4236 = vunpack.c.h.b16 %v1052
        %v4237 = vunpack.c.l.b16 %v1053
        %v4238 = vunpack.c.h.b16 %v1053
        %v4239 = vunpack.c.l.b16 %v1054
        %v4240 = vunpack.c.h.b16 %v1054
        %v4241 = vunpack.c.l.b16 %v1055
        %v4242 = vunpack.c.h.b16 %v1055
        %v4243 = vunpack.c.l.b16 %v1056
        %v4244 = vunpack.c.h.b16 %v1056
        %v4245 = vunpack.c.l.b16 %v1057
        %v4246 = vunpack.c.h.b16 %v1057
        %v4247 = vunpack.c.l.b16 %v1058
        %v4248 = vunpack.c.h.b16 %v1058
        %v4249 = vunpack.c.l.b16 %v1059
        %v4250 = vunpack.c.h.b16 %v1059
        %v4251 = vunpack.c.l.b16 %v1060
        %v4252 = vunpack.c.h.b16 %v1060
        %v4253 = vunpack.c.l.b16 %v1061
        %v4254 = vunpack.c.h.b16 %v1061
        %v4255 = vunpack.c.l.b16 %v1062
        %v4256 = vunpack.c.h.b16 %v1062
        %v4257 = vunpack.c.l.b16 %v1063
        %v4258 = vunpack.c.h.b16 %v1063
        %v4259 = vunpack.c.l.b16 %v1064
        %v4260 = vunpack.c.h.b16 %v1064
        %v4261 = vunpack.c.l.b16 %v1065
        %v4262 = vunpack.c.h.b16 %v1065
        %v4263 = vunpack.c.l.b16 %v1066
        %v4264 = vunpack.c.h.b16 %v1066
        %v4265 = vunpack.c.l.b16 %v1067
        %v4266 = vunpack.c.h.b16 %v1067
        %v4267 = vunpack.c.l.b16 %v1068
        %v4268 = vunpack.c.h.b16 %v1068
        %v4269 = vunpack.c.l.b16 %v1069
        %v4270 = vunpack.c.l.b16 %v1070
        %v4271 = vunpack.c.h.b16 %v1070
        %v4272 = vunpack.c.l.b16 %v1071
        %v4273 = vunpack.c.h.b16 %v1071
        %v4274 = vunpack.c.l.b16 %v1072
        %v4275 = vunpack.c.h.b16 %v1072
        %v4276 = vunpack.c.l.b16 %v1073
        %v4277 = vunpack.c.h.b16 %v1073
        %v4278 = vunpack.c.l.b16 %v1074
        %v4279 = vunpack.c.h.b16 %v1074
        %v4280 = vunpack.c.l.b16 %v1075
        %v4281 = vunpack.c.h.b16 %v1075
        %v4282 = vunpack.c.l.b16 %v1076
        %v4283 = vunpack.c.h.b16 %v1076
        %v4284 = vunpack.c.l.b16 %v1077
        %v4285 = vunpack.c.h.b16 %v1077
        %v4286 = vunpack.c.l.b16 %v1078
        %v4287 = vunpack.c.h.b16 %v1078
        %v4288 = vunpack.c.l.b16 %v1079
        %v4289 = vunpack.c.h.b16 %v1079
        %v4290 = vunpack.c.l.b16 %v1080
        %v4291 = vunpack.c.h.b16 %v1080
        %v4292 = vunpack.c.l.b16 %v1081
        %v4293 = vunpack.c.h.b16 %v1081
        %v4294 = vunpack.c.l.b16 %v1082
        %v4295 = vunpack.c.h.b16 %v1082
        %v4296 = vunpack.c.l.b16 %v1083
        %v4297 = vunpack.c.h.b16 %v1083
        %v4298 = vunpack.c.l.b16 %v1084
        %v4299 = vunpack.c.h.b16 %v1084
        %v4300 = vunpack.c.l.b16 %v1085
        %v4301 = vunpack.c.h.b16 %v1085
        %v4302 = vunpack.c.l.b16 %v1086
        %v4303 = vunpack.c.h.b16 %v1086
        %v4304 = vunpack.c.l.b16 %v1087
        %v4305 = vunpack.c.h.b16 %v1087
        %v4306 = vunpack.c.l.b16 %v1088
        %v4307 = vunpack.c.h.b16 %v1088
        %v4308 = vunpack.c.l.b16 %v1089
        %v4309 = vunpack.c.h.b16 %v1089
        %v4310 = vunpack.c.l.b16 %v1090
        %v4311 = vunpack.c.h.b16 %v1090
        %v4312 = vunpack.c.l.b16 %v1091
        %v4313 = vunpack.c.h.b16 %v1091
        %v4314 = vunpack.c.l.b16 %v1092
        %v4315 = vunpack.c.h.b16 %v1092
        %v4316 = vunpack.c.l.b16 %v1093
        %v4317 = vunpack.c.h.b16 %v1093
        %v4318 = vunpack.c.l.b16 %v1094
        %v4319 = vunpack.c.h.b16 %v1094
        %v4320 = vunpack.c.l.b16 %v1095
        %v4321 = vunpack.c.h.b16 %v1095
        %v4322 = vunpack.c.l.b16 %v1096
        %v4323 = vunpack.c.h.b16 %v1096
        %v4324 = vunpack.c.l.b16 %v1097
        %v4325 = vunpack.c.h.b16 %v1097
        %v4326 = vunpack.c.l.b16 %v1098
        %v4327 = vunpack.c.h.b16 %v1098
        %v4328 = vunpack.c.l.b16 %v1099
        %v4329 = vunpack.c.h.b16 %v1099
        %v4330 = vunpack.c.l.b16 %v1100
        %v4331 = vunpack.c.h.b16 %v1100
        %v4332 = vunpack.c.l.b16 %v1101
        %v4333 = vunpack.c.h.b16 %v1101
        %v4334 = vunpack.c.l.b16 %v1102
        %v4335 = vunpack.c.h.b16 %v1102
        %v4336 = vunpack.c.l.b16 %v1103
        %v4337 = vunpack.c.h.b16 %v1103
        %v4338 = vunpack.c.l.b16 %v1104
        %v4339 = vunpack.c.h.b16 %v1104
        %v4340 = vunpack.c.l.b16 %v1105
        %v4341 = vunpack.c.h.b16 %v1105
        %v4342 = vunpack.c.l.b16 %v1106
        %v4343 = vunpack.c.h.b16 %v1106
        %v4344 = vunpack.c.l.b16 %v1107
        %v4345 = vunpack.c.h.b16 %v1107
        %v4346 = vunpack.c.l.b16 %v1108
        %v4347 = vunpack.c.h.b16 %v1108
        %v4348 = vunpack.c.l.b16 %v1109
        %v4349 = vunpack.c.h.b16 %v1109
        %v4350 = vunpack.c.l.b16 %v1110
        %v4351 = vunpack.c.l.b16 %v1111
        %v4352 = vunpack.c.h.b16 %v1111
        %v4353 = vunpack.c.l.b16 %v1112
        %v4354 = vunpack.c.h.b16 %v1112
        %v4355 = vunpack.c.l.b16 %v1113
        %v4356 = vunpack.c.h.b16 %v1113
        %v4357 = vunpack.c.l.b16 %v1114
        %v4358 = vunpack.c.h.b16 %v1114
        %v4359 = vunpack.c.l.b16 %v1115
        %v4360 = vunpack.c.h.b16 %v1115
        %v4361 = vunpack.c.l.b16 %v1116
        %v4362 = vunpack.c.h.b16 %v1116
        %v4363 = vunpack.c.l.b16 %v1117
        %v4364 = vunpack.c.h.b16 %v1117
        %v4365 = vunpack.c.l.b16 %v1118
        %v4366 = vunpack.c.h.b16 %v1118
        %v4367 = vunpack.c.l.b16 %v1119
        %v4368 = vunpack.c.h.b16 %v1119
        %v4369 = vunpack.c.l.b16 %v1120
        %v4370 = vunpack.c.h.b16 %v1120
        %v4371 = vunpack.c.l.b16 %v1121
        %v4372 = vunpack.c.h.b16 %v1121
        %v4373 = vunpack.c.l.b16 %v1122
        %v4374 = vunpack.c.h.b16 %v1122
        %v4375 = vunpack.c.l.b16 %v1123
        %v4376 = vunpack.c.h.b16 %v1123
        %v4377 = vunpack.c.l.b16 %v1124
        %v4378 = vunpack.c.h.b16 %v1124
        %v4379 = vunpack.c.l.b16 %v1125
        %v4380 = vunpack.c.h.b16 %v1125
        %v4381 = vunpack.c.l.b16 %v1126
        %v4382 = vunpack.c.h.b16 %v1126
        %v4383 = vunpack.c.l.b16 %v1127
        %v4384 = vunpack.c.h.b16 %v1127
        %v4385 = vunpack.c.l.b16 %v1128
        %v4386 = vunpack.c.h.b16 %v1128
        %v4387 = vunpack.c.l.b16 %v1129
        %v4388 = vunpack.c.h.b16 %v1129
        %v4389 = vunpack.c.l.b16 %v1130
        %v4390 = vunpack.c.h.b16 %v1130
        %v4391 = vunpack.c.l.b16 %v1131
        %v4392 = vunpack.c.h.b16 %v1131
        %v4393 = vunpack.c.l.b16 %v1132
        %v4394 = vunpack.c.h.b16 %v1132
        %v4395 = vunpack.c.l.b16 %v1133
        %v4396 = vunpack.c.h.b16 %v1133
        %v4397 = vunpack.c.l.b16 %v1134
        %v4398 = vunpack.c.h.b16 %v1134
        %v4399 = vunpack.c.l.b16 %v1135
        %v4400 = vunpack.c.h.b16 %v1135
        %v4401 = vunpack.c.l.b16 %v1136
        %v4402 = vunpack.c.h.b16 %v1136
        %v4403 = vunpack.c.l.b16 %v1137
        %v4404 = vunpack.c.h.b16 %v1137
        %v4405 = vunpack.c.l.b16 %v1138
        %v4406 = vunpack.c.h.b16 %v1138
        %v4407 = vunpack.c.l.b16 %v1139
        %v4408 = vunpack.c.h.b16 %v1139
        %v4409 = vunpack.c.l.b16 %v1140
        %v4410 = vunpack.c.h.b16 %v1140
        %v4411 = vunpack.c.l.b16 %v1141
        %v4412 = vunpack.c.h.b16 %v1141
        %v4413 = vunpack.c.l.b16 %v1142
        %v4414 = vunpack.c.h.b16 %v1142
        %v4415 = vunpack.c.l.b16 %v1143
        %v4416 = vunpack.c.h.b16 %v1143
        %v4417 = vunpack.c.l.b16 %v1144
        %v4418 = vunpack.c.h.b16 %v1144
        %v4419 = vunpack.c.l.b16 %v1145
        %v4420 = vunpack.c.h.b16 %v1145
        %v4421 = vunpack.c.l.b16 %v1146
        %v4422 = vunpack.c.h.b16 %v1146
        %v4423 = vunpack.c.l.b16 %v1147
        %v4424 = vunpack.c.h.b16 %v1147
        %v4425 = vunpack.c.l.b16 %v1148
        %v4426 = vunpack.c.h.b16 %v1148
        %v4427 = vunpack.c.l.b16 %v1149
        %v4428 = vunpack.c.h.b16 %v1149
        %v4429 = vunpack.c.l.b16 %v1150
        %v4430 = vunpack.c.h.b16 %v1150
        %v4431 = vunpack.c.l.b16 %v1151
        %v4432 = vunpack.c.l.b16 %v1152
        %v4433 = vunpack.c.h.b16 %v1152
        %v4434 = vunpack.c.l.b16 %v1153
        %v4435 = vunpack.c.h.b16 %v1153
        %v4436 = vunpack.c.l.b16 %v1154
        %v4437 = vunpack.c.h.b16 %v1154
        %v4438 = vunpack.c.l.b16 %v1155
        %v4439 = vunpack.c.h.b16 %v1155
        %v4440 = vunpack.c.l.b16 %v1156
        %v4441 = vunpack.c.h.b16 %v1156
        %v4442 = vunpack.c.l.b16 %v1157
        %v4443 = vunpack.c.h.b16 %v1157
        %v4444 = vunpack.c.l.b16 %v1158
        %v4445 = vunpack.c.h.b16 %v1158
        %v4446 = vunpack.c.l.b16 %v1159
        %v4447 = vunpack.c.h.b16 %v1159
        %v4448 = vunpack.c.l.b16 %v1160
        %v4449 = vunpack.c.h.b16 %v1160
        %v4450 = vunpack.c.l.b16 %v1161
        %v4451 = vunpack.c.h.b16 %v1161
        %v4452 = vunpack.c.l.b16 %v1162
        %v4453 = vunpack.c.h.b16 %v1162
        %v4454 = vunpack.c.l.b16 %v1163
        %v4455 = vunpack.c.h.b16 %v1163
        %v4456 = vunpack.c.l.b16 %v1164
        %v4457 = vunpack.c.h.b16 %v1164
        %v4458 = vunpack.c.l.b16 %v1165
        %v4459 = vunpack.c.h.b16 %v1165
        %v4460 = vunpack.c.l.b16 %v1166
        %v4461 = vunpack.c.h.b16 %v1166
        %v4462 = vunpack.c.l.b16 %v1167
        %v4463 = vunpack.c.h.b16 %v1167
        %v4464 = vunpack.c.l.b16 %v1168
        %v4465 = vunpack.c.h.b16 %v1168
        %v4466 = vunpack.c.l.b16 %v1169
        %v4467 = vunpack.c.h.b16 %v1169
        %v4468 = vunpack.c.l.b16 %v1170
        %v4469 = vunpack.c.h.b16 %v1170
        %v4470 = vunpack.c.l.b16 %v1171
        %v4471 = vunpack.c.h.b16 %v1171
        %v4472 = vunpack.c.l.b16 %v1172
        %v4473 = vunpack.c.h.b16 %v1172
        %v4474 = vunpack.c.l.b16 %v1173
        %v4475 = vunpack.c.h.b16 %v1173
        %v4476 = vunpack.c.l.b16 %v1174
        %v4477 = vunpack.c.h.b16 %v1174
        %v4478 = vunpack.c.l.b16 %v1175
        %v4479 = vunpack.c.h.b16 %v1175
        %v4480 = vunpack.c.l.b16 %v1176
        %v4481 = vunpack.c.h.b16 %v1176
        %v4482 = vunpack.c.l.b16 %v1177
        %v4483 = vunpack.c.h.b16 %v1177
        %v4484 = vunpack.c.l.b16 %v1178
        %v4485 = vunpack.c.h.b16 %v1178
        %v4486 = vunpack.c.l.b16 %v1179
        %v4487 = vunpack.c.h.b16 %v1179
        %v4488 = vunpack.c.l.b16 %v1180
        %v4489 = vunpack.c.h.b16 %v1180
        %v4490 = vunpack.c.l.b16 %v1181
        %v4491 = vunpack.c.h.b16 %v1181
        %v4492 = vunpack.c.l.b16 %v1182
        %v4493 = vunpack.c.h.b16 %v1182
        %v4494 = vunpack.c.l.b16 %v1183
        %v4495 = vunpack.c.h.b16 %v1183
        %v4496 = vunpack.c.l.b16 %v1184
        %v4497 = vunpack.c.h.b16 %v1184
        %v4498 = vunpack.c.l.b16 %v1185
        %v4499 = vunpack.c.h.b16 %v1185
        %v4500 = vunpack.c.l.b16 %v1186
        %v4501 = vunpack.c.h.b16 %v1186
        %v4502 = vunpack.c.l.b16 %v1187
        %v4503 = vunpack.c.h.b16 %v1187
        %v4504 = vunpack.c.l.b16 %v1188
        %v4505 = vunpack.c.h.b16 %v1188
        %v4506 = vunpack.c.l.b16 %v1189
        %v4507 = vunpack.c.h.b16 %v1189
        %v4508 = vunpack.c.l.b16 %v1190
        %v4509 = vunpack.c.h.b16 %v1190
        %v4510 = vunpack.c.l.b16 %v1191
        %v4511 = vunpack.c.h.b16 %v1191
        %v4512 = vunpack.c.l.b16 %v1192
        %v4513 = vunpack.c.l.b16 %v1193
        %v4514 = vunpack.c.h.b16 %v1193
        %v4515 = vunpack.c.l.b16 %v1194
        %v4516 = vunpack.c.h.b16 %v1194
        %v4517 = vunpack.c.l.b16 %v1195
        %v4518 = vunpack.c.h.b16 %v1195
        %v4519 = vunpack.c.l.b16 %v1196
        %v4520 = vunpack.c.h.b16 %v1196
        %v4521 = vunpack.c.l.b16 %v1197
        %v4522 = vunpack.c.h.b16 %v1197
        %v4523 = vunpack.c.l.b16 %v1198
        %v4524 = vunpack.c.h.b16 %v1198
        %v4525 = vunpack.c.l.b16 %v1199
        %v4526 = vunpack.c.h.b16 %v1199
        %v4527 = vunpack.c.l.b16 %v1200
        %v4528 = vunpack.c.h.b16 %v1200
        %v4529 = vunpack.c.l.b16 %v1201
        %v4530 = vunpack.c.h.b16 %v1201
        %v4531 = vunpack.c.l.b16 %v1202
        %v4532 = vunpack.c.h.b16 %v1202
        %v4533 = vunpack.c.l.b16 %v1203
        %v4534 = vunpack.c.h.b16 %v1203
        %v4535 = vunpack.c.l.b16 %v1204
        %v4536 = vunpack.c.h.b16 %v1204
        %v4537 = vunpack.c.l.b16 %v1205
        %v4538 = vunpack.c.h.b16 %v1205
        %v4539 = vunpack.c.l.b16 %v1206
        %v4540 = vunpack.c.h.b16 %v1206
        %v4541 = vunpack.c.l.b16 %v1207
        %v4542 = vunpack.c.h.b16 %v1207
        %v4543 = vunpack.c.l.b16 %v1208
        %v4544 = vunpack.c.h.b16 %v1208
        %v4545 = vunpack.c.l.b16 %v1209
        %v4546 = vunpack.c.h.b16 %v1209
        %v4547 = vunpack.c.l.b16 %v1210
        %v4548 = vunpack.c.h.b16 %v1210
        %v4549 = vunpack.c.l.b16 %v1211
        %v4550 = vunpack.c.h.b16 %v1211
        %v4551 = vunpack.c.l.b16 %v1212
        %v4552 = vunpack.c.h.b16 %v1212
        %v4553 = vunpack.c.l.b16 %v1213
        %v4554 = vunpack.c.h.b16 %v1213
        %v4555 = vunpack.c.l.b16 %v1214
        %v4556 = vunpack.c.h.b16 %v1214
        %v4557 = vunpack.c.l.b16 %v1215
        %v4558 = vunpack.c.h.b16 %v1215
        %v4559 = vunpack.c.l.b16 %v1216
        %v4560 = vunpack.c.h.b16 %v1216
        %v4561 = vunpack.c.l.b16 %v1217
        %v4562 = vunpack.c.h.b16 %v1217
        %v4563 = vunpack.c.l.b16 %v1218
        %v4564 = vunpack.c.h.b16 %v1218
        %v4565 = vunpack.c.l.b16 %v1219
        %v4566 = vunpack.c.h.b16 %v1219
        %v4567 = vunpack.c.l.b16 %v1220
        %v4568 = vunpack.c.h.b16 %v1220
        %v4569 = vunpack.c.l.b16 %v1221
        %v4570 = vunpack.c.h.b16 %v1221
        %v4571 = vunpack.c.l.b16 %v1222
        %v4572 = vunpack.c.h.b16 %v1222
        %v4573 = vunpack.c.l.b16 %v1223
        %v4574 = vunpack.c.h.b16 %v1223
        %v4575 = vunpack.c.l.b16 %v1224
        %v4576 = vunpack.c.h.b16 %v1224
        %v4577 = vunpack.c.l.b16 %v1225
        %v4578 = vunpack.c.h.b16 %v1225
        %v4579 = vunpack.c.l.b16 %v1226
        %v4580 = vunpack.c.h.b16 %v1226
        %v4581 = vunpack.c.l.b16 %v1227
        %v4582 = vunpack.c.h.b16 %v1227
        %v4583 = vunpack.c.l.b16 %v1228
        %v4584 = vunpack.c.h.b16 %v1228
        %v4585 = vunpack.c.l.b16 %v1229
        %v4586 = vunpack.c.h.b16 %v1229
        %v4587 = vunpack.c.l.b16 %v1230
        %v4588 = vunpack.c.h.b16 %v1230
        %v4589 = vunpack.c.l.b16 %v1231
        %v4590 = vunpack.c.h.b16 %v1231
        %v4591 = vunpack.c.l.b16 %v1232
        %v4592 = vunpack.c.h.b16 %v1232
        %v4593 = vunpack.c.l.b16 %v1233
        %v4594 = vunpack.c.l.b16 %v1234
        %v4595 = vunpack.c.h.b16 %v1234
        %v4596 = vunpack.c.l.b16 %v1235
        %v4597 = vunpack.c.h.b16 %v1235
        %v4598 = vunpack.c.l.b16 %v1236
        %v4599 = vunpack.c.h.b16 %v1236
        %v4600 = vunpack.c.l.b16 %v1237
        %v4601 = vunpack.c.h.b16 %v1237
        %v4602 = vunpack.c.l.b16 %v1238
        %v4603 = vunpack.c.h.b16 %v1238
        %v4604 = vunpack.c.l.b16 %v1239
        %v4605 = vunpack.c.h.b16 %v1239
        %v4606 = vunpack.c.l.b16 %v1240
        %v4607 = vunpack.c.h.b16 %v1240
        %v4608 = vunpack.c.l.b16 %v1241
        %v4609 = vunpack.c.h.b16 %v1241
        %v4610 = vunpack.c.l.b16 %v1242
        %v4611 = vunpack.c.h.b16 %v1242
        %v4612 = vunpack.c.l.b16 %v1243
        %v4613 = vunpack.c.h.b16 %v1243
        %v4614 = vunpack.c.l.b16 %v1244
        %v4615 = vunpack.c.h.b16 %v1244
        %v4616 = vunpack.c.l.b16 %v1245
        %v4617 = vunpack.c.h.b16 %v1245
        %v4618 = vunpack.c.l.b16 %v1246
        %v4619 = vunpack.c.h.b16 %v1246
        %v4620 = vunpack.c.l.b16 %v1247
        %v4621 = vunpack.c.h.b16 %v1247
        %v4622 = vunpack.c.l.b16 %v1248
        %v4623 = vunpack.c.h.b16 %v1248
        %v4624 = vunpack.c.l.b16 %v1249
        %v4625 = vunpack.c.h.b16 %v1249
        %v4626 = vunpack.c.l.b16 %v1250
        %v4627 = vunpack.c.h.b16 %v1250
        %v4628 = vunpack.c.l.b16 %v1251
        %v4629 = vunpack.c.h.b16 %v1251
        %v4630 = vunpack.c.l.b16 %v1252
        %v4631 = vunpack.c.h.b16 %v1252
        %v4632 = vunpack.c.l.b16 %v1253
        %v4633 = vunpack.c.h.b16 %v1253
        %v4634 = vunpack.c.l.b16 %v1254
        %v4635 = vunpack.c.h.b16 %v1254
        %v4636 = vunpack.c.l.b16 %v1255
        %v4637 = vunpack.c.h.b16 %v1255
        %v4638 = vunpack.c.l.b16 %v1256
        %v4639 = vunpack.c.h.b16 %v1256
        %v4640 = vunpack.c.l.b16 %v1257
        %v4641 = vunpack.c.h.b16 %v1257
        %v4642 = vunpack.c.l.b16 %v1258
        %v4643 = vunpack.c.h.b16 %v1258
        %v4644 = vunpack.c.l.b16 %v1259
        %v4645 = vunpack.c.h.b16 %v1259
        %v4646 = vunpack.c.l.b16 %v1260
        %v4647 = vunpack.c.h.b16 %v1260
        %v4648 = vunpack.c.l.b16 %v1261
        %v4649 = vunpack.c.h.b16 %v1261
        %v4650 = vunpack.c.l.b16 %v1262
        %v4651 = vunpack.c.h.b16 %v1262
        %v4652 = vunpack.c.l.b16 %v1263
        %v4653 = vunpack.c.h.b16 %v1263
        %v4654 = vunpack.c.l.b16 %v1264
        %v4655 = vunpack.c.h.b16 %v1264
        %v4656 = vunpack.c.l.b16 %v1265
        %v4657 = vunpack.c.h.b16 %v1265
        %v4658 = vunpack.c.l.b16 %v1266
        %v4659 = vunpack.c.h.b16 %v1266
        %v4660 = vunpack.c.l.b16 %v1267
        %v4661 = vunpack.c.h.b16 %v1267
        %v4662 = vunpack.c.l.b16 %v1268
        %v4663 = vunpack.c.h.b16 %v1268
        %v4664 = vunpack.c.l.b16 %v1269
        %v4665 = vunpack.c.h.b16 %v1269
        %v4666 = vunpack.c.l.b16 %v1270
        %v4667 = vunpack.c.h.b16 %v1270
        %v4668 = vunpack.c.l.b16 %v1271
        %v4669 = vunpack.c.h.b16 %v1271
        %v4670 = vunpack.c.l.b16 %v1272
        %v4671 = vunpack.c.h.b16 %v1272
        %v4672 = vunpack.c.l.b16 %v1273
        %v4673 = vunpack.c.h.b16 %v1273
        %v4674 = vunpack.c.l.b16 %v1274
        %v4675 = vunpack.c.l.b16 %v1275
        %v4676 = vunpack.c.h.b16 %v1275
        %v4677 = vunpack.c.l.b16 %v1276
        %v4678 = vunpack.c.h.b16 %v1276
        %v4679 = vunpack.c.l.b16 %v1277
        %v4680 = vunpack.c.h.b16 %v1277
        %v4681 = vunpack.c.l.b16 %v1278
        %v4682 = vunpack.c.h.b16 %v1278
        %v4683 = vunpack.c.l.b16 %v1279
        %v4684 = vunpack.c.h.b16 %v1279
        %v4685 = vunpack.c.l.b16 %v1280
        %v4686 = vunpack.c.h.b16 %v1280
        %v4687 = vunpack.c.l.b16 %v1281
        %v4688 = vunpack.c.h.b16 %v1281
        %v4689 = vunpack.c.l.b16 %v1282
        %v4690 = vunpack.c.h.b16 %v1282
        %v4691 = vunpack.c.l.b16 %v1283
        %v4692 = vunpack.c.h.b16 %v1283
        %v4693 = vunpack.c.l.b16 %v1284
        %v4694 = vunpack.c.h.b16 %v1284
        %v4695 = vunpack.c.l.b16 %v1285
        %v4696 = vunpack.c.h.b16 %v1285
        %v4697 = vunpack.c.l.b16 %v1286
        %v4698 = vunpack.c.h.b16 %v1286
        %v4699 = vunpack.c.l.b16 %v1287
        %v4700 = vunpack.c.h.b16 %v1287
        %v4701 = vunpack.c.l.b16 %v1288
        %v4702 = vunpack.c.h.b16 %v1288
        %v4703 = vunpack.c.l.b16 %v1289
        %v4704 = vunpack.c.h.b16 %v1289
        %v4705 = vunpack.c.l.b16 %v1290
        %v4706 = vunpack.c.h.b16 %v1290
        %v4707 = vunpack.c.l.b16 %v1291
        %v4708 = vunpack.c.h.b16 %v1291
        %v4709 = vunpack.c.l.b16 %v1292
        %v4710 = vunpack.c.h.b16 %v1292
        %v4711 = vunpack.c.l.b16 %v1293
        %v4712 = vunpack.c.h.b16 %v1293
        %v4713 = vunpack.c.l.b16 %v1294
        %v4714 = vunpack.c.h.b16 %v1294
        %v4715 = vunpack.c.l.b16 %v1295
        %v4716 = vunpack.c.h.b16 %v1295
        %v4717 = vunpack.c.l.b16 %v1296
        %v4718 = vunpack.c.h.b16 %v1296
        %v4719 = vunpack.c.l.b16 %v1297
        %v4720 = vunpack.c.h.b16 %v1297
        %v4721 = vunpack.c.l.b16 %v1298
        %v4722 = vunpack.c.h.b16 %v1298
        %v4723 = vunpack.c.l.b16 %v1299
        %v4724 = vunpack.c.h.b16 %v1299
        %v4725 = vunpack.c.l.b16 %v1300
        %v4726 = vunpack.c.h.b16 %v1300
        %v4727 = vunpack.c.l.b16 %v1301
        %v4728 = vunpack.c.h.b16 %v1301
        %v4729 = vunpack.c.l.b16 %v1302
        %v4730 = vunpack.c.h.b16 %v1302
        %v4731 = vunpack.c.l.b16 %v1303
        %v4732 = vunpack.c.h.b16 %v1303
        %v4733 = vunpack.c.l.b16 %v1304
        %v4734 = vunpack.c.h.b16 %v1304
        %v4735 = vunpack.c.l.b16 %v1305
        %v4736 = vunpack.c.h.b16 %v1305
        %v4737 = vunpack.c.l.b16 %v1306
        %v4738 = vunpack.c.h.b16 %v1306
        %v4739 = vunpack.c.l.b16 %v1307
        %v4740 = vunpack.c.h.b16 %v1307
        %v4741 = vunpack.c.l.b16 %v1308
        %v4742 = vunpack.c.h.b16 %v1308
        %v4743 = vunpack.c.l.b16 %v1309
        %v4744 = vunpack.c.h.b16 %v1309
        %v4745 = vunpack.c.l.b16 %v1310
        %v4746 = vunpack.c.h.b16 %v1310
        %v4747 = vunpack.c.l.b16 %v1311
        %v4748 = vunpack.c.h.b16 %v1311
        %v4749 = vunpack.c.l.b16 %v1312
        %v4750 = vunpack.c.h.b16 %v1312
        %v4751 = vunpack.c.l.b16 %v1313
        %v4752 = vunpack.c.h.b16 %v1313
        %v4753 = vunpack.c.l.b16 %v1314
        %v4754 = vunpack.c.h.b16 %v1314
        %v4755 = vunpack.c.l.b16 %v1315
        %v4756 = vpack.c.b16 %v2569, %v2488
        %v4757 = vpack.c.b16 %v2570, %v2489
        %v4758 = vpack.c.b16 %v2571, %v2490
        %v4759 = vpack.c.b16 %v2572, %v2491
        %v4760 = vpack.c.b16 %v2573, %v2492
        %v4761 = vpack.c.b16 %v2574, %v2493
        %v4762 = vpack.c.b16 %v2575, %v2494
        %v4763 = vpack.c.b16 %v2576, %v2495
        %v4764 = vpack.c.b16 %v2577, %v2496
        %v4765 = vpack.c.b16 %v2578, %v2497
        %v4766 = vpack.c.b16 %v2579, %v2498
        %v4767 = vpack.c.b16 %v2580, %v2499
        %v4768 = vpack.c.b16 %v2581, %v2500
        %v4769 = vpack.c.b16 %v2582, %v2501
        %v4770 = vpack.c.b16 %v2583, %v2502
        %v4771 = vpack.c.b16 %v2584, %v2503
        %v4772 = vpack.c.b16 %v2585, %v2504
        %v4773 = vpack.c.b16 %v2586, %v2505
        %v4774 = vpack.c.b16 %v2587, %v2506
        %v4775 = vpack.c.b16 %v2588, %v2507
        %v4776 = vpack.c.b16 %v2589, %v2508
        %v4777 = vpack.c.b16 %v2590, %v2509
        %v4778 = vpack.c.b16 %v2591, %v2510
        %v4779 = vpack.c.b16 %v2592, %v2511
        %v4780 = vpack.c.b16 %v2593, %v2512
        %v4781 = vpack.c.b16 %v2594, %v2513
        %v4782 = vpack.c.b16 %v2595, %v2514
        %v4783 = vpack.c.b16 %v2596, %v2515
        %v4784 = vpack.c.b16 %v2597, %v2516
        %v4785 = vpack.c.b16 %v2598, %v2517
        %v4786 = vpack.c.b16 %v2599, %v2518
        %v4787 = vpack.c.b16 %v2600, %v2519
        %v4788 = vpack.c.b16 %v2601, %v2520
        %v4789 = vpack.c.b16 %v2602, %v2521
        %v4790 = vpack.c.b16 %v2603, %v2522
        %v4791 = vpack.c.b16 %v2604, %v2523
        %v4792 = vpack.c.b16 %v2605, %v2524
        %v4793 = vpack.c.b16 %v2606, %v2525
        %v4794 = vpack.c.b16 %v2607, %v2526
        %v4795 = vpack.c.b16 %v2608, %v2527
        %v4796 = vpack.c.b16 %v2609, %v2528
        %v4797 = vpack.c.b16 %v2610, %v2529
        %v4798 = vpack.c.b16 %v2611, %v2530
        %v4799 = vpack.c.b16 %v2612, %v2531
        %v4800 = vpack.c.b16 %v2613, %v2532
        %v4801 = vpack.c.b16 %v2614, %v2533
        %v4802 = vpack.c.b16 %v2615, %v2534
        %v4803 = vpack.c.b16 %v2616, %v2535
        %v4804 = vpack.c.b16 %v2617, %v2536
        %v4805 = vpack.c.b16 %v2618, %v2537
        %v4806 = vpack.c.b16 %v2619, %v2538
        %v4807 = vpack.c.b16 %v2620, %v2539
        %v4808 = vpack.c.b16 %v2621, %v2540
        %v4809 = vpack.c.b16 %v2622, %v2541
        %v4810 = vpack.c.b16 %v2623, %v2542
        %v4811 = vpack.c.b16 %v2624, %v2543
        %v4812 = vpack.c.b16 %v2625, %v2544
        %v4813 = vpack.c.b16 %v2626, %v2545
        %v4814 = vpack.c.b16 %v2627, %v2546
        %v4815 = vpack.c.b16 %v2628, %v2547
        %v4816 = vpack.c.b16 %v2629, %v2548
        %v4817 = vpack.c.b16 %v2630, %v2549
        %v4818 = vpack.c.b16 %v2631, %v2550
        %v4819 = vpack.c.b16 %v2632, %v2551
        %v4820 = vpack.c.b16 %v2633, %v2552
        %v4821 = vpack.c.b16 %v2634, %v2553
        %v4822 = vpack.c.b16 %v2635, %v2554
        %v4823 = vpack.c.b16 %v2636, %v2555
        %v4824 = vpack.c.b16 %v2637, %v2556
        %v4825 = vpack.c.b16 %v2638, %v2557
        %v4826 = vpack.c.b16 %v2639, %v2558
        %v4827 = vpack.c.b16 %v2640, %v2559
        %v4828 = vpack.c.b16 %v2641, %v2560
        %v4829 = vpack.c.b16 %v2642, %v2561
        %v4830 = vpack.c.b16 %v2643, %v2562
        %v4831 = vpack.c.b16 %v2644, %v2563
        %v4832 = vpack.c.b16 %v2645, %v2564
        %v4833 = vpack.c.b16 %v2646, %v2565
        %v4834 = vpack.c.b16 %v2647, %v2566
        %v4835 = vpack.c.b16 %v2648, %v2567
        %v4836 = vpack.c.b16 %v2649, %v2568
        %v4837 = vpack.c.b16 %v2731, %v2650
        %v4838 = vpack.c.b16 %v2732, %v2651
        %v4839 = vpack.c.b16 %v2733, %v2652
        %v4840 = vpack.c.b16 %v2734, %v2653
        %v4841 = vpack.c.b16 %v2735, %v2654
        %v4842 = vpack.c.b16 %v2736, %v2655
        %v4843 = vpack.c.b16 %v2737, %v2656
        %v4844 = vpack.c.b16 %v2738, %v2657
        %v4845 = vpack.c.b16 %v2739, %v2658
        %v4846 = vpack.c.b16 %v2740, %v2659
        %v4847 = vpack.c.b16 %v2741, %v2660
        %v4848 = vpack.c.b16 %v2742, %v2661
        %v4849 = vpack.c.b16 %v2743, %v2662
        %v4850 = vpack.c.b16 %v2744, %v2663
        %v4851 = vpack.c.b16 %v2745, %v2664
        %v4852 = vpack.c.b16 %v2746, %v2665
        %v4853 = vpack.c.b16 %v2747, %v2666
        %v4854 = vpack.c.b16 %v2748, %v2667
        %v4855 = vpack.c.b16 %v2749, %v2668
        %v4856 = vpack.c.b16 %v2750, %v2669
        %v4857 = vpack.c.b16 %v2751, %v2670
        %v4858 = vpack.c.b16 %v2752, %v2671
        %v4859 = vpack.c.b16 %v2753, %v2672
        %v4860 = vpack.c.b16 %v2754, %v2673
        %v4861 = vpack.c.b16 %v2755, %v2674
        %v4862 = vpack.c.b16 %v2756, %v2675
        %v4863 = vpack.c.b16 %v2757, %v2676
        %v4864 = vpack.c.b16 %v2758, %v2677
        %v4865 = vpack.c.b16 %v2759, %v2678
        %v4866 = vpack.c.b16 %v2760, %v2679
        %v4867 = vpack.c.b16 %v2761, %v2680
        %v4868 = vpack.c.b16 %v2762, %v2681
        %v4869 = vpack.c.b16 %v2763, %v2682
        %v4870 = vpack.c.b16 %v2764, %v2683
        %v4871 = vpack.c.b16 %v2765, %v2684
        %v4872 = vpack.c.b16 %v2766, %v2685
        %v4873 = vpack.c.b16 %v2767, %v2686
        %v4874 = vpack.c.b16 %v2768, %v2687
        %v4875 = vpack.c.b16 %v2769, %v2688
        %v4876 = vpack.c.b16 %v2770, %v2689
        %v4877 = vpack.c.b16 %v2771, %v2690
        %v4878 = vpack.c.b16 %v2772, %v2691
        %v4879 = vpack.c.b16 %v2773, %v2692
        %v4880 = vpack.c.b16 %v2774, %v2693
        %v4881 = vpack.c.b16 %v2775, %v2694
        %v4882 = vpack.c.b16 %v2776, %v2695
        %v4883 = vpack.c.b16 %v2777, %v2696
        %v4884 = vpack.c.b16 %v2778, %v2697
        %v4885 = vpack.c.b16 %v2779, %v2698
        %v4886 = vpack.c.b16 %v2780, %v2699
        %v4887 = vpack.c.b16 %v2781, %v2700
        %v4888 = vpack.c.b16 %v2782, %v2701
        %v4889 = vpack.c.b16 %v2783, %v2702
        %v4890 = vpack.c.b16 %v2784, %v2703
        %v4891 = vpack.c.b16 %v2785, %v2704
        %v4892 = vpack.c.b16 %v2786, %v2705
        %v4893 = vpack.c.b16 %v2787, %v2706
        %v4894 = vpack.c.b16 %v2788, %v2707
        %v4895 = vpack.c.b16 %v2789, %v2708
        %v4896 = vpack.c.b16 %v2790, %v2709
        %v4897 = vpack.c.b16 %v2791, %v2710
        %v4898 = vpack.c.b16 %v2792, %v2711
        %v4899 = vpack.c.b16 %v2793, %v2712
        %v4900 = vpack.c.b16 %v2794, %v2713
        %v4901 = vpack.c.b16 %v2795, %v2714
        %v4902 = vpack.c.b16 %v2796, %v2715
        %v4903 = vpack.c.b16 %v2797, %v2716
        %v4904 = vpack.c.b16 %v2798, %v2717
        %v4905 = vpack.c.b16 %v2799, %v2718
        %v4906 = vpack.c.b16 %v2800, %v2719
        %v4907 = vpack.c.b16 %v2801, %v2720
        %v4908 = vpack.c.b16 %v2802, %v2721
        %v4909 = vpack.c.b16 %v2803, %v2722
        %v4910 = vpack.c.b16 %v2804, %v2723
        %v4911 = vpack.c.b16 %v2805, %v2724
        %v4912 = vpack.c.b16 %v2806, %v2725
        %v4913 = vpack.c.b16 %v2807, %v2726
        %v4914 = vpack.c.b16 %v2808, %v2727
        %v4915 = vpack.c.b16 %v2809, %v2728
        %v4916 = vpack.c.b16 %v2810, %v2729
        %v4917 = vpack.c.b16 %v2811, %v2730
        %v4918 = vpack.c.b16 %v2893, %v2812
        %v4919 = vpack.c.b16 %v2894, %v2813
        %v4920 = vpack.c.b16 %v2895, %v2814
        %v4921 = vpack.c.b16 %v2896, %v2815
        %v4922 = vpack.c.b16 %v2897, %v2816
        %v4923 = vpack.c.b16 %v2898, %v2817
        %v4924 = vpack.c.b16 %v2899, %v2818
        %v4925 = vpack.c.b16 %v2900, %v2819
        %v4926 = vpack.c.b16 %v2901, %v2820
        %v4927 = vpack.c.b16 %v2902, %v2821
        %v4928 = vpack.c.b16 %v2903, %v2822
        %v4929 = vpack.c.b16 %v2904, %v2823
        %v4930 = vpack.c.b16 %v2905, %v2824
        %v4931 = vpack.c.b16 %v2906, %v2825
        %v4932 = vpack.c.b16 %v2907, %v2826
        %v4933 = vpack.c.b16 %v2908, %v2827
        %v4934 = vpack.c.b16 %v2909, %v2828
        %v4935 = vpack.c.b16 %v2910, %v2829
        %v4936 = vpack.c.b16 %v2911, %v2830
        %v4937 = vpack.c.b16 %v2912, %v2831
        %v4938 = vpack.c.b16 %v2913, %v2832
        %v4939 = vpack.c.b16 %v2914, %v2833
        %v4940 = vpack.c.b16 %v2915, %v2834
        %v4941 = vpack.c.b16 %v2916, %v2835
        %v4942 = vpack.c.b16 %v2917, %v2836
        %v4943 = vpack.c.b16 %v2918, %v2837
        %v4944 = vpack.c.b16 %v2919, %v2838
        %v4945 = vpack.c.b16 %v2920, %v2839
        %v4946 = vpack.c.b16 %v2921, %v2840
        %v4947 = vpack.c.b16 %v2922, %v2841
        %v4948 = vpack.c.b16 %v2923, %v2842
        %v4949 = vpack.c.b16 %v2924, %v2843
        %v4950 = vpack.c.b16 %v2925, %v2844
        %v4951 = vpack.c.b16 %v2926, %v2845
        %v4952 = vpack.c.b16 %v2927, %v2846
        %v4953 = vpack.c.b16 %v2928, %v2847
        %v4954 = vpack.c.b16 %v2929, %v2848
        %v4955 = vpack.c.b16 %v2930, %v2849
        %v4956 = vpack.c.b16 %v2931, %v2850
        %v4957 = vpack.c.b16 %v2932, %v2851
        %v4958 = vpack.c.b16 %v2933, %v2852
        %v4959 = vpack.c.b16 %v2934, %v2853
        %v4960 = vpack.c.b16 %v2935, %v2854
        %v4961 = vpack.c.b16 %v2936, %v2855
        %v4962 = vpack.c.b16 %v2937, %v2856
        %v4963 = vpack.c.b16 %v2938, %v2857
        %v4964 = vpack.c.b16 %v2939, %v2858
        %v4965 = vpack.c.b16 %v2940, %v2859
        %v4966 = vpack.c.b16 %v2941, %v2860
        %v4967 = vpack.c.b16 %v2942, %v2861
        %v4968 = vpack.c.b16 %v2943, %v2862
        %v4969 = vpack.c.b16 %v2944, %v2863
        %v4970 = vpack.c.b16 %v2945, %v2864
        %v4971 = vpack.c.b16 %v2946, %v2865
        %v4972 = vpack.c.b16 %v2947, %v2866
        %v4973 = vpack.c.b16 %v2948, %v2867
        %v4974 = vpack.c.b16 %v2949, %v2868
        %v4975 = vpack.c.b16 %v2950, %v2869
        %v4976 = vpack.c.b16 %v2951, %v2870
        %v4977 = vpack.c.b16 %v2952, %v2871
        %v4978 = vpack.c.b16 %v2953, %v2872
        %v4979 = vpack.c.b16 %v2954, %v2873
        %v4980 = vpack.c.b16 %v2955, %v2874
        %v4981 = vpack.c.b16 %v2956, %v2875
        %v4982 = vpack.c.b16 %v2957, %v2876
        %v4983 = vpack.c.b16 %v2958, %v2877
        %v4984 = vpack.c.b16 %v2959, %v2878
        %v4985 = vpack.c.b16 %v2960, %v2879
        %v4986 = vpack.c.b16 %v2961, %v2880
        %v4987 = vpack.c.b16 %v2962, %v2881
        %v4988 = vpack.c.b16 %v2963, %v2882
        %v4989 = vpack.c.b16 %v2964, %v2883
        %v4990 = vpack.c.b16 %v2965, %v2884
        %v4991 = vpack.c.b16 %v2966, %v2885
        %v4992 = vpack.c.b16 %v2967, %v2886
        %v4993 = vpack.c.b16 %v2968, %v2887
        %v4994 = vpack.c.b16 %v2969, %v2888
        %v4995 = vpack.c.b16 %v2970, %v2889
        %v4996 = vpack.c.b16 %v2971, %v2890
        %v4997 = vpack.c.b16 %v2972, %v2891
        %v4998 = vpack.c.b16 %v2973, %v2892
        %v4999 = vpack.c.b16 %v3055, %v2974
        %v5000 = vpack.c.b16 %v3056, %v2975
        %v5001 = vpack.c.b16 %v3057, %v2976
        %v5002 = vpack.c.b16 %v3058, %v2977
        %v5003 = vpack.c.b16 %v3059, %v2978
        %v5004 = vpack.c.b16 %v3060, %v2979
        %v5005 = vpack.c.b16 %v3061, %v2980
        %v5006 = vpack.c.b16 %v3062, %v2981
        %v5007 = vpack.c.b16 %v3063, %v2982
        %v5008 = vpack.c.b16 %v3064, %v2983
        %v5009 = vpack.c.b16 %v3065, %v2984
        %v5010 = vpack.c.b16 %v3066, %v2985
        %v5011 = vpack.c.b16 %v3067, %v2986
        %v5012 = vpack.c.b16 %v3068, %v2987
        %v5013 = vpack.c.b16 %v3069, %v2988
        %v5014 = vpack.c.b16 %v3070, %v2989
        %v5015 = vpack.c.b16 %v3071, %v2990
        %v5016 = vpack.c.b16 %v3072, %v2991
        %v5017 = vpack.c.b16 %v3073, %v2992
        %v5018 = vpack.c.b16 %v3074, %v2993
        %v5019 = vpack.c.b16 %v3075, %v2994
        %v5020 = vpack.c.b16 %v3076, %v2995
        %v5021 = vpack.c.b16 %v3077, %v2996
        %v5022 = vpack.c.b16 %v3078, %v2997
        %v5023 = vpack.c.b16 %v3079, %v2998
        %v5024 = vpack.c.b16 %v3080, %v2999
        %v5025 = vpack.c.b16 %v3081, %v3000
        %v5026 = vpack.c.b16 %v3082, %v3001
        %v5027 = vpack.c.b16 %v3083, %v3002
        %v5028 = vpack.c.b16 %v3084, %v3003
        %v5029 = vpack.c.b16 %v3085, %v3004
        %v5030 = vpack.c.b16 %v3086, %v3005
        %v5031 = vpack.c.b16 %v3087, %v3006
        %v5032 = vpack.c.b16 %v3088, %v3007
        %v5033 = vpack.c.b16 %v3089, %v3008
        %v5034 = vpack.c.b16 %v3090, %v3009
        %v5035 = vpack.c.b16 %v3091, %v3010
        %v5036 = vpack.c.b16 %v3092, %v3011
        %v5037 = vpack.c.b16 %v3093, %v3012
        %v5038 = vpack.c.b16 %v3094, %v3013
        %v5039 = vpack.c.b16 %v3095, %v3014
        %v5040 = vpack.c.b16 %v3096, %v3015
        %v5041 = vpack.c.b16 %v3097, %v3016
        %v5042 = vpack.c.b16 %v3098, %v3017
        %v5043 = vpack.c.b16 %v3099, %v3018
        %v5044 = vpack.c.b16 %v3100, %v3019
        %v5045 = vpack.c.b16 %v3101, %v3020
        %v5046 = vpack.c.b16 %v3102, %v3021
        %v5047 = vpack.c.b16 %v3103, %v3022
        %v5048 = vpack.c.b16 %v3104, %v3023
        %v5049 = vpack.c.b16 %v3105, %v3024
        %v5050 = vpack.c.b16 %v3106, %v3025
        %v5051 = vpack.c.b16 %v3107, %v3026
        %v5052 = vpack.c.b16 %v3108, %v3027
        %v5053 = vpack.c.b16 %v3109, %v3028
        %v5054 = vpack.c.b16 %v3110, %v3029
        %v5055 = vpack.c.b16 %v3111, %v3030
        %v5056 = vpack.c.b16 %v3112, %v3031
        %v5057 = vpack.c.b16 %v3113, %v3032
        %v5058 = vpack.c.b16 %v3114, %v3033
        %v5059 = vpack.c.b16 %v3115, %v3034
        %v5060 = vpack.c.b16 %v3116, %v3035
        %v5061 = vpack.c.b16 %v3117, %v3036
        %v5062 = vpack.c.b16 %v3118, %v3037
        %v5063 = vpack.c.b16 %v3119, %v3038
        %v5064 = vpack.c.b16 %v3120, %v3039
        %v5065 = vpack.c.b16 %v3121, %v3040
        %v5066 = vpack.c.b16 %v3122, %v3041
        %v5067 = vpack.c.b16 %v3123, %v3042
        %v5068 = vpack.c.b16 %v3124, %v3043
        %v5069 = vpack.c.b16 %v3125, %v3044
        %v5070 = vpack.c.b16 %v3126, %v3045
        %v5071 = vpack.c.b16 %v3127, %v3046
        %v5072 = vpack.c.b16 %v3128, %v3047
        %v5073 = vpack.c.b16 %v3129, %v3048
        %v5074 = vpack.c.b16 %v3130, %v3049
        %v5075 = vpack.c.b16 %v3131, %v3050
        %v5076 = vpack.c.b16 %v3132, %v3051
        %v5077 = vpack.c.b16 %v3133, %v3052
        %v5078 = vpack.c.b16 %v3134, %v3053
        %v5079 = vpack.c.b16 %v3135, %v3054
        %v5080 = vpack.c.b16 %v3217, %v3136
        %v5081 = vpack.c.b16 %v3218, %v3137
        %v5082 = vpack.c.b16 %v3219, %v3138
        %v5083 = vpack.c.b16 %v3220, %v3139
        %v5084 = vpack.c.b16 %v3221, %v3140
        %v5085 = vpack.c.b16 %v3222, %v3141
        %v5086 = vpack.c.b16 %v3223, %v3142
        %v5087 = vpack.c.b16 %v3224, %v3143
        %v5088 = vpack.c.b16 %v3225, %v3144
        %v5089 = vpack.c.b16 %v3226, %v3145
        %v5090 = vpack.c.b16 %v3227, %v3146
        %v5091 = vpack.c.b16 %v3228, %v3147
        %v5092 = vpack.c.b16 %v3229, %v3148
        %v5093 = vpack.c.b16 %v3230, %v3149
        %v5094 = vpack.c.b16 %v3231, %v3150
        %v5095 = vpack.c.b16 %v3232, %v3151
        %v5096 = vpack.c.b16 %v3233, %v3152
        %v5097 = vpack.c.b16 %v3234, %v3153
        %v5098 = vpack.c.b16 %v3235, %v3154
        %v5099 = vpack.c.b16 %v3236, %v3155
        %v5100 = vpack.c.b16 %v3237, %v3156
        %v5101 = vpack.c.b16 %v3238, %v3157
        %v5102 = vpack.c.b16 %v3239, %v3158
        %v5103 = vpack.c.b16 %v3240, %v3159
        %v5104 = vpack.c.b16 %v3241, %v3160
        %v5105 = vpack.c.b16 %v3242, %v3161
        %v5106 = vpack.c.b16 %v3243, %v3162
        %v5107 = vpack.c.b16 %v3244, %v3163
        %v5108 = vpack.c.b16 %v3245, %v3164
        %v5109 = vpack.c.b16 %v3246, %v3165
        %v5110 = vpack.c.b16 %v3247, %v3166
        %v5111 = vpack.c.b16 %v3248, %v3167
        %v5112 = vpack.c.b16 %v3249, %v3168
        %v5113 = vpack.c.b16 %v3250, %v3169
        %v5114 = vpack.c.b16 %v3251, %v3170
        %v5115 = vpack.c.b16 %v3252, %v3171
        %v5116 = vpack.c.b16 %v3253, %v3172
        %v5117 = vpack.c.b16 %v3254, %v3173
        %v5118 = vpack.c.b16 %v3255, %v3174
        %v5119 = vpack.c.b16 %v3256, %v3175
        %v5120 = vpack.c.b16 %v3257, %v3176
        %v5121 = vpack.c.b16 %v3258, %v3177
        %v5122 = vpack.c.b16 %v3259, %v3178
        %v5123 = vpack.c.b16 %v3260, %v3179
        %v5124 = vpack.c.b16 %v3261, %v3180
        %v5125 = vpack.c.b16 %v3262, %v3181
        %v5126 = vpack.c.b16 %v3263, %v3182
        %v5127 = vpack.c.b16 %v3264, %v3183
        %v5128 = vpack.c.b16 %v3265, %v3184
        %v5129 = vpack.c.b16 %v3266, %v3185
        %v5130 = vpack.c.b16 %v3267, %v3186
        %v5131 = vpack.c.b16 %v3268, %v3187
        %v5132 = vpack.c.b16 %v3269, %v3188
        %v5133 = vpack.c.b16 %v3270, %v3189
        %v5134 = vpack.c.b16 %v3271, %v3190
        %v5135 = vpack.c.b16 %v3272, %v3191
        %v5136 = vpack.c.b16 %v3273, %v3192
        %v5137 = vpack.c.b16 %v3274, %v3193
        %v5138 = vpack.c.b16 %v3275, %v3194
        %v5139 = vpack.c.b16 %v3276, %v3195
        %v5140 = vpack.c.b16 %v3277, %v3196
        %v5141 = vpack.c.b16 %v3278, %v3197
        %v5142 = vpack.c.b16 %v3279, %v3198
        %v5143 = vpack.c.b16 %v3280, %v3199
        %v5144 = vpack.c.b16 %v3281, %v3200
        %v5145 = vpack.c.b16 %v3282, %v3201
        %v5146 = vpack.c.b16 %v3283, %v3202
        %v5147 = vpack.c.b16 %v3284, %v3203
        %v5148 = vpack.c.b16 %v3285, %v3204
        %v5149 = vpack.c.b16 %v3286, %v3205
        %v5150 = vpack.c.b16 %v3287, %v3206
        %v5151 = vpack.c.b16 %v3288, %v3207
        %v5152 = vpack.c.b16 %v3289, %v3208
        %v5153 = vpack.c.b16 %v3290, %v3209
        %v5154 = vpack.c.b16 %v3291, %v3210
        %v5155 = vpack.c.b16 %v3292, %v3211
        %v5156 = vpack.c.b16 %v3293, %v3212
        %v5157 = vpack.c.b16 %v3294, %v3213
        %v5158 = vpack.c.b16 %v3295, %v3214
        %v5159 = vpack.c.b16 %v3296, %v3215
        %v5160 = vpack.c.b16 %v3297, %v3216
        %v5161 = vpack.c.b16 %v3379, %v3298
        %v5162 = vpack.c.b16 %v3380, %v3299
        %v5163 = vpack.c.b16 %v3381, %v3300
        %v5164 = vpack.c.b16 %v3382, %v3301
        %v5165 = vpack.c.b16 %v3383, %v3302
        %v5166 = vpack.c.b16 %v3384, %v3303
        %v5167 = vpack.c.b16 %v3385, %v3304
        %v5168 = vpack.c.b16 %v3386, %v3305
        %v5169 = vpack.c.b16 %v3387, %v3306
        %v5170 = vpack.c.b16 %v3388, %v3307
        %v5171 = vpack.c.b16 %v3389, %v3308
        %v5172 = vpack.c.b16 %v3390, %v3309
        %v5173 = vpack.c.b16 %v3391, %v3310
        %v5174 = vpack.c.b16 %v3392, %v3311
        %v5175 = vpack.c.b16 %v3393, %v3312
        %v5176 = vpack.c.b16 %v3394, %v3313
        %v5177 = vpack.c.b16 %v3395, %v3314
        %v5178 = vpack.c.b16 %v3396, %v3315
        %v5179 = vpack.c.b16 %v3397, %v3316
        %v5180 = vpack.c.b16 %v3398, %v3317
        %v5181 = vpack.c.b16 %v3399, %v3318
        %v5182 = vpack.c.b16 %v3400, %v3319
        %v5183 = vpack.c.b16 %v3401, %v3320
        %v5184 = vpack.c.b16 %v3402, %v3321
        %v5185 = vpack.c.b16 %v3403, %v3322
        %v5186 = vpack.c.b16 %v3404, %v3323
        %v5187 = vpack.c.b16 %v3405, %v3324
        %v5188 = vpack.c.b16 %v3406, %v3325
        %v5189 = vpack.c.b16 %v3407, %v3326
        %v5190 = vpack.c.b16 %v3408, %v3327
        %v5191 = vpack.c.b16 %v3409, %v3328
        %v5192 = vpack.c.b16 %v3410, %v3329
        %v5193 = vpack.c.b16 %v3411, %v3330
        %v5194 = vpack.c.b16 %v3412, %v3331
        %v5195 = vpack.c.b16 %v3413, %v3332
        %v5196 = vpack.c.b16 %v3414, %v3333
        %v5197 = vpack.c.b16 %v3415, %v3334
        %v5198 = vpack.c.b16 %v3416, %v3335
        %v5199 = vpack.c.b16 %v3417, %v3336
        %v5200 = vpack.c.b16 %v3418, %v3337
        %v5201 = vpack.c.b16 %v3419, %v3338
        %v5202 = vpack.c.b16 %v3420, %v3339
        %v5203 = vpack.c.b16 %v3421, %v3340
        %v5204 = vpack.c.b16 %v3422, %v3341
        %v5205 = vpack.c.b16 %v3423, %v3342
        %v5206 = vpack.c.b16 %v3424, %v3343
        %v5207 = vpack.c.b16 %v3425, %v3344
        %v5208 = vpack.c.b16 %v3426, %v3345
        %v5209 = vpack.c.b16 %v3427, %v3346
        %v5210 = vpack.c.b16 %v3428, %v3347
        %v5211 = vpack.c.b16 %v3429, %v3348
        %v5212 = vpack.c.b16 %v3430, %v3349
        %v5213 = vpack.c.b16 %v3431, %v3350
        %v5214 = vpack.c.b16 %v3432, %v3351
        %v5215 = vpack.c.b16 %v3433, %v3352
        %v5216 = vpack.c.b16 %v3434, %v3353
        %v5217 = vpack.c.b16 %v3435, %v3354
        %v5218 = vpack.c.b16 %v3436, %v3355
        %v5219 = vpack.c.b16 %v3437, %v3356
        %v5220 = vpack.c.b16 %v3438, %v3357
        %v5221 = vpack.c.b16 %v3439, %v3358
        %v5222 = vpack.c.b16 %v3440, %v3359
        %v5223 = vpack.c.b16 %v3441, %v3360
        %v5224 = vpack.c.b16 %v3442, %v3361
        %v5225 = vpack.c.b16 %v3443, %v3362
        %v5226 = vpack.c.b16 %v3444, %v3363
        %v5227 = vpack.c.b16 %v3445, %v3364
        %v5228 = vpack.c.b16 %v3446, %v3365
        %v5229 = vpack.c.b16 %v3447, %v3366
        %v5230 = vpack.c.b16 %v3448, %v3367
        %v5231 = vpack.c.b16 %v3449, %v3368
        %v5232 = vpack.c.b16 %v3450, %v3369
        %v5233 = vpack.c.b16 %v3451, %v3370
        %v5234 = vpack.c.b16 %v3452, %v3371
        %v5235 = vpack.c.b16 %v3453, %v3372
        %v5236 = vpack.c.b16 %v3454, %v3373
        %v5237 = vpack.c.b16 %v3455, %v3374
        %v5238 = vpack.c.b16 %v3456, %v3375
        %v5239 = vpack.c.b16 %v3457, %v3376
        %v5240 = vpack.c.b16 %v3458, %v3377
        %v5241 = vpack.c.b16 %v3459, %v3378
        %v5242 = vpack.c.b16 %v3541, %v3460
        %v5243 = vpack.c.b16 %v3542, %v3461
        %v5244 = vpack.c.b16 %v3543, %v3462
        %v5245 = vpack.c.b16 %v3544, %v3463
        %v5246 = vpack.c.b16 %v3545, %v3464
        %v5247 = vpack.c.b16 %v3546, %v3465
        %v5248 = vpack.c.b16 %v3547, %v3466
        %v5249 = vpack.c.b16 %v3548, %v3467
        %v5250 = vpack.c.b16 %v3549, %v3468
        %v5251 = vpack.c.b16 %v3550, %v3469
        %v5252 = vpack.c.b16 %v3551, %v3470
        %v5253 = vpack.c.b16 %v3552, %v3471
        %v5254 = vpack.c.b16 %v3553, %v3472
        %v5255 = vpack.c.b16 %v3554, %v3473
        %v5256 = vpack.c.b16 %v3555, %v3474
        %v5257 = vpack.c.b16 %v3556, %v3475
        %v5258 = vpack.c.b16 %v3557, %v3476
        %v5259 = vpack.c.b16 %v3558, %v3477
        %v5260 = vpack.c.b16 %v3559, %v3478
        %v5261 = vpack.c.b16 %v3560, %v3479
        %v5262 = vpack.c.b16 %v3561, %v3480
        %v5263 = vpack.c.b16 %v3562, %v3481
        %v5264 = vpack.c.b16 %v3563, %v3482
        %v5265 = vpack.c.b16 %v3564, %v3483
        %v5266 = vpack.c.b16 %v3565, %v3484
        %v5267 = vpack.c.b16 %v3566, %v3485
        %v5268 = vpack.c.b16 %v3567, %v3486
        %v5269 = vpack.c.b16 %v3568, %v3487
        %v5270 = vpack.c.b16 %v3569, %v3488
        %v5271 = vpack.c.b16 %v3570, %v3489
        %v5272 = vpack.c.b16 %v3571, %v3490
        %v5273 = vpack.c.b16 %v3572, %v3491
        %v5274 = vpack.c.b16 %v3573, %v3492
        %v5275 = vpack.c.b16 %v3574, %v3493
        %v5276 = vpack.c.b16 %v3575, %v3494
        %v5277 = vpack.c.b16 %v3576, %v3495
        %v5278 = vpack.c.b16 %v3577, %v3496
        %v5279 = vpack.c.b16 %v3578, %v3497
        %v5280 = vpack.c.b16 %v3579, %v3498
        %v5281 = vpack.c.b16 %v3580, %v3499
        %v5282 = vpack.c.b16 %v3581, %v3500
        %v5283 = vpack.c.b16 %v3582, %v3501
        %v5284 = vpack.c.b16 %v3583, %v3502
        %v5285 = vpack.c.b16 %v3584, %v3503
        %v5286 = vpack.c.b16 %v3585, %v3504
        %v5287 = vpack.c.b16 %v3586, %v3505
        %v5288 = vpack.c.b16 %v3587, %v3506
        %v5289 = vpack.c.b16 %v3588, %v3507
        %v5290 = vpack.c.b16 %v3589, %v3508
        %v5291 = vpack.c.b16 %v3590, %v3509
        %v5292 = vpack.c.b16 %v3591, %v3510
        %v5293 = vpack.c.b16 %v3592, %v3511
        %v5294 = vpack.c.b16 %v3593, %v3512
        %v5295 = vpack.c.b16 %v3594, %v3513
        %v5296 = vpack.c.b16 %v3595, %v3514
        %v5297 = vpack.c.b16 %v3596, %v3515
        %v5298 = vpack.c.b16 %v3597, %v3516
        %v5299 = vpack.c.b16 %v3598, %v3517
        %v5300 = vpack.c.b16 %v3599, %v3518
        %v5301 = vpack.c.b16 %v3600, %v3519
        %v5302 = vpack.c.b16 %v3601, %v3520
        %v5303 = vpack.c.b16 %v3602, %v3521
        %v5304 = vpack.c.b16 %v3603, %v3522
        %v5305 = vpack.c.b16 %v3604, %v3523
        %v5306 = vpack.c.b16 %v3605, %v3524
        %v5307 = vpack.c.b16 %v3606, %v3525
        %v5308 = vpack.c.b16 %v3607, %v3526
        %v5309 = vpack.c.b16 %v3608, %v3527
        %v5310 = vpack.c.b16 %v3609, %v3528
        %v5311 = vpack.c.b16 %v3610, %v3529
        %v5312 = vpack.c.b16 %v3611, %v3530
        %v5313 = vpack.c.b16 %v3612, %v3531
        %v5314 = vpack.c.b16 %v3613, %v3532
        %v5315 = vpack.c.b16 %v3614, %v3533
        %v5316 = vpack.c.b16 %v3615, %v3534
        %v5317 = vpack.c.b16 %v3616, %v3535
        %v5318 = vpack.c.b16 %v3617, %v3536
        %v5319 = vpack.c.b16 %v3618, %v3537
        %v5320 = vpack.c.b16 %v3619, %v3538
        %v5321 = vpack.c.b16 %v3620, %v3539
        %v5322 = vpack.c.b16 %v3621, %v3540
        %v5323 = vpack.c.b16 %v3703, %v3622
        %v5324 = vpack.c.b16 %v3704, %v3623
        %v5325 = vpack.c.b16 %v3705, %v3624
        %v5326 = vpack.c.b16 %v3706, %v3625
        %v5327 = vpack.c.b16 %v3707, %v3626
        %v5328 = vpack.c.b16 %v3708, %v3627
        %v5329 = vpack.c.b16 %v3709, %v3628
        %v5330 = vpack.c.b16 %v3710, %v3629
        %v5331 = vpack.c.b16 %v3711, %v3630
        %v5332 = vpack.c.b16 %v3712, %v3631
        %v5333 = vpack.c.b16 %v3713, %v3632
        %v5334 = vpack.c.b16 %v3714, %v3633
        %v5335 = vpack.c.b16 %v3715, %v3634
        %v5336 = vpack.c.b16 %v3716, %v3635
        %v5337 = vpack.c.b16 %v3717, %v3636
        %v5338 = vpack.c.b16 %v3718, %v3637
        %v5339 = vpack.c.b16 %v3719, %v3638
        %v5340 = vpack.c.b16 %v3720, %v3639
        %v5341 = vpack.c.b16 %v3721, %v3640
        %v5342 = vpack.c.b16 %v3722, %v3641
        %v5343 = vpack.c.b16 %v3723, %v3642
        %v5344 = vpack.c.b16 %v3724, %v3643
        %v5345 = vpack.c.b16 %v3725, %v3644
        %v5346 = vpack.c.b16 %v3726, %v3645
        %v5347 = vpack.c.b16 %v3727, %v3646
        %v5348 = vpack.c.b16 %v3728, %v3647
        %v5349 = vpack.c.b16 %v3729, %v3648
        %v5350 = vpack.c.b16 %v3730, %v3649
        %v5351 = vpack.c.b16 %v3731, %v3650
        %v5352 = vpack.c.b16 %v3732, %v3651
        %v5353 = vpack.c.b16 %v3733, %v3652
        %v5354 = vpack.c.b16 %v3734, %v3653
        %v5355 = vpack.c.b16 %v3735, %v3654
        %v5356 = vpack.c.b16 %v3736, %v3655
        %v5357 = vpack.c.b16 %v3737, %v3656
        %v5358 = vpack.c.b16 %v3738, %v3657
        %v5359 = vpack.c.b16 %v3739, %v3658
        %v5360 = vpack.c.b16 %v3740, %v3659
        %v5361 = vpack.c.b16 %v3741, %v3660
        %v5362 = vpack.c.b16 %v3742, %v3661
        %v5363 = vpack.c.b16 %v3743, %v3662
        %v5364 = vpack.c.b16 %v3744, %v3663
        %v5365 = vpack.c.b16 %v3745, %v3664
        %v5366 = vpack.c.b16 %v3746, %v3665
        %v5367 = vpack.c.b16 %v3747, %v3666
        %v5368 = vpack.c.b16 %v3748, %v3667
        %v5369 = vpack.c.b16 %v3749, %v3668
        %v5370 = vpack.c.b16 %v3750, %v3669
        %v5371 = vpack.c.b16 %v3751, %v3670
        %v5372 = vpack.c.b16 %v3752, %v3671
        %v5373 = vpack.c.b16 %v3753, %v3672
        %v5374 = vpack.c.b16 %v3754, %v3673
        %v5375 = vpack.c.b16 %v3755, %v3674
        %v5376 = vpack.c.b16 %v3756, %v3675
        %v5377 = vpack.c.b16 %v3757, %v3676
        %v5378 = vpack.c.b16 %v3758, %v3677
        %v5379 = vpack.c.b16 %v3759, %v3678
        %v5380 = vpack.c.b16 %v3760, %v3679
        %v5381 = vpack.c.b16 %v3761, %v3680
        %v5382 = vpack.c.b16 %v3762, %v3681
        %v5383 = vpack.c.b16 %v3763, %v3682
        %v5384 = vpack.c.b16 %v3764, %v3683
        %v5385 = vpack.c.b16 %v3765, %v3684
        %v5386 = vpack.c.b16 %v3766, %v3685
        %v5387 = vpack.c.b16 %v3767, %v3686
        %v5388 = vpack.c.b16 %v3768, %v3687
        %v5389 = vpack.c.b16 %v3769, %v3688
        %v5390 = vpack.c.b16 %v3770, %v3689
        %v5391 = vpack.c.b16 %v3771, %v3690
        %v5392 = vpack.c.b16 %v3772, %v3691
        %v5393 = vpack.c.b16 %v3773, %v3692
        %v5394 = vpack.c.b16 %v3774, %v3693
        %v5395 = vpack.c.b16 %v3775, %v3694
        %v5396 = vpack.c.b16 %v3776, %v3695
        %v5397 = vpack.c.b16 %v3777, %v3696
        %v5398 = vpack.c.b16 %v3778, %v3697
        %v5399 = vpack.c.b16 %v3779, %v3698
        %v5400 = vpack.c.b16 %v3780, %v3699
        %v5401 = vpack.c.b16 %v3781, %v3700
        %v5402 = vpack.c.b16 %v3782, %v3701
        %v5403 = vpack.c.b16 %v3783, %v3702
        %v5404 = vpack.c.b16 %v3865, %v3784
        %v5405 = vpack.c.b16 %v3866, %v3785
        %v5406 = vpack.c.b16 %v3867, %v3786
        %v5407 = vpack.c.b16 %v3868, %v3787
        %v5408 = vpack.c.b16 %v3869, %v3788
        %v5409 = vpack.c.b16 %v3870, %v3789
        %v5410 = vpack.c.b16 %v3871, %v3790
        %v5411 = vpack.c.b16 %v3872, %v3791
        %v5412 = vpack.c.b16 %v3873, %v3792
        %v5413 = vpack.c.b16 %v3874, %v3793
        %v5414 = vpack.c.b16 %v3875, %v3794
        %v5415 = vpack.c.b16 %v3876, %v3795
        %v5416 = vpack.c.b16 %v3877, %v3796
        %v5417 = vpack.c.b16 %v3878, %v3797
        %v5418 = vpack.c.b16 %v3879, %v3798
        %v5419 = vpack.c.b16 %v3880, %v3799
        %v5420 = vpack.c.b16 %v3881, %v3800
        %v5421 = vpack.c.b16 %v3882, %v3801
        %v5422 = vpack.c.b16 %v3883, %v3802
        %v5423 = vpack.c.b16 %v3884, %v3803
        %v5424 = vpack.c.b16 %v3885, %v3804
        %v5425 = vpack.c.b16 %v3886, %v3805
        %v5426 = vpack.c.b16 %v3887, %v3806
        %v5427 = vpack.c.b16 %v3888, %v3807
        %v5428 = vpack.c.b16 %v3889, %v3808
        %v5429 = vpack.c.b16 %v3890, %v3809
        %v5430 = vpack.c.b16 %v3891, %v3810
        %v5431 = vpack.c.b16 %v3892, %v3811
        %v5432 = vpack.c.b16 %v3893, %v3812
        %v5433 = vpack.c.b16 %v3894, %v3813
        %v5434 = vpack.c.b16 %v3895, %v3814
        %v5435 = vpack.c.b16 %v3896, %v3815
        %v5436 = vpack.c.b16 %v3897, %v3816
        %v5437 = vpack.c.b16 %v3898, %v3817
        %v5438 = vpack.c.b16 %v3899, %v3818
        %v5439 = vpack.c.b16 %v3900, %v3819
        %v5440 = vpack.c.b16 %v3901, %v3820
        %v5441 = vpack.c.b16 %v3902, %v3821
        %v5442 = vpack.c.b16 %v3903, %v3822
        %v5443 = vpack.c.b16 %v3904, %v3823
        %v5444 = vpack.c.b16 %v3905, %v3824
        %v5445 = vpack.c.b16 %v3906, %v3825
        %v5446 = vpack.c.b16 %v3907, %v3826
        %v5447 = vpack.c.b16 %v3908, %v3827
        %v5448 = vpack.c.b16 %v3909, %v3828
        %v5449 = vpack.c.b16 %v3910, %v3829
        %v5450 = vpack.c.b16 %v3911, %v3830
        %v5451 = vpack.c.b16 %v3912, %v3831
        %v5452 = vpack.c.b16 %v3913, %v3832
        %v5453 = vpack.c.b16 %v3914, %v3833
        %v5454 = vpack.c.b16 %v3915, %v3834
        %v5455 = vpack.c.b16 %v3916, %v3835
        %v5456 = vpack.c.b16 %v3917, %v3836
        %v5457 = vpack.c.b16 %v3918, %v3837
        %v5458 = vpack.c.b16 %v3919, %v3838
        %v5459 = vpack.c.b16 %v3920, %v3839
        %v5460 = vpack.c.b16 %v3921, %v3840
        %v5461 = vpack.c.b16 %v3922, %v3841
        %v5462 = vpack.c.b16 %v3923, %v3842
        %v5463 = vpack.c.b16 %v3924, %v3843
        %v5464 = vpack.c.b16 %v3925, %v3844
        %v5465 = vpack.c.b16 %v3926, %v3845
        %v5466 = vpack.c.b16 %v3927, %v3846
        %v5467 = vpack.c.b16 %v3928, %v3847
        %v5468 = vpack.c.b16 %v3929, %v3848
        %v5469 = vpack.c.b16 %v3930, %v3849
        %v5470 = vpack.c.b16 %v3931, %v3850
        %v5471 = vpack.c.b16 %v3932, %v3851
        %v5472 = vpack.c.b16 %v3933, %v3852
        %v5473 = vpack.c.b16 %v3934, %v3853
        %v5474 = vpack.c.b16 %v3935, %v3854
        %v5475 = vpack.c.b16 %v3936, %v3855
        %v5476 = vpack.c.b16 %v3937, %v3856
        %v5477 = vpack.c.b16 %v3938, %v3857
        %v5478 = vpack.c.b16 %v3939, %v3858
        %v5479 = vpack.c.b16 %v3940, %v3859
        %v5480 = vpack.c.b16 %v3941, %v3860
        %v5481 = vpack.c.b16 %v3942, %v3861
        %v5482 = vpack.c.b16 %v3943, %v3862
        %v5483 = vpack.c.b16 %v3944, %v3863
        %v5484 = vpack.c.b16 %v3945, %v3864
        %v5485 = vpack.c.b16 %v4027, %v3946
        %v5486 = vpack.c.b16 %v4028, %v3947
        %v5487 = vpack.c.b16 %v4029, %v3948
        %v5488 = vpack.c.b16 %v4030, %v3949
        %v5489 = vpack.c.b16 %v4031, %v3950
        %v5490 = vpack.c.b16 %v4032, %v3951
        %v5491 = vpack.c.b16 %v4033, %v3952
        %v5492 = vpack.c.b16 %v4034, %v3953
        %v5493 = vpack.c.b16 %v4035, %v3954
        %v5494 = vpack.c.b16 %v4036, %v3955
        %v5495 = vpack.c.b16 %v4037, %v3956
        %v5496 = vpack.c.b16 %v4038, %v3957
        %v5497 = vpack.c.b16 %v4039, %v3958
        %v5498 = vpack.c.b16 %v4040, %v3959
        %v5499 = vpack.c.b16 %v4041, %v3960
        %v5500 = vpack.c.b16 %v4042, %v3961
        %v5501 = vpack.c.b16 %v4043, %v3962
        %v5502 = vpack.c.b16 %v4044, %v3963
        %v5503 = vpack.c.b16 %v4045, %v3964
        %v5504 = vpack.c.b16 %v4046, %v3965
        %v5505 = vpack.c.b16 %v4047, %v3966
        %v5506 = vpack.c.b16 %v4048, %v3967
        %v5507 = vpack.c.b16 %v4049, %v3968
        %v5508 = vpack.c.b16 %v4050, %v3969
        %v5509 = vpack.c.b16 %v4051, %v3970
        %v5510 = vpack.c.b16 %v4052, %v3971
        %v5511 = vpack.c.b16 %v4053, %v3972
        %v5512 = vpack.c.b16 %v4054, %v3973
        %v5513 = vpack.c.b16 %v4055, %v3974
        %v5514 = vpack.c.b16 %v4056, %v3975
        %v5515 = vpack.c.b16 %v4057, %v3976
        %v5516 = vpack.c.b16 %v4058, %v3977
        %v5517 = vpack.c.b16 %v4059, %v3978
        %v5518 = vpack.c.b16 %v4060, %v3979
        %v5519 = vpack.c.b16 %v4061, %v3980
        %v5520 = vpack.c.b16 %v4062, %v3981
        %v5521 = vpack.c.b16 %v4063, %v3982
        %v5522 = vpack.c.b16 %v4064, %v3983
        %v5523 = vpack.c.b16 %v4065, %v3984
        %v5524 = vpack.c.b16 %v4066, %v3985
        %v5525 = vpack.c.b16 %v4067, %v3986
        %v5526 = vpack.c.b16 %v4068, %v3987
        %v5527 = vpack.c.b16 %v4069, %v3988
        %v5528 = vpack.c.b16 %v4070, %v3989
        %v5529 = vpack.c.b16 %v4071, %v3990
        %v5530 = vpack.c.b16 %v4072, %v3991
        %v5531 = vpack.c.b16 %v4073, %v3992
        %v5532 = vpack.c.b16 %v4074, %v3993
        %v5533 = vpack.c.b16 %v4075, %v3994
        %v5534 = vpack.c.b16 %v4076, %v3995
        %v5535 = vpack.c.b16 %v4077, %v3996
        %v5536 = vpack.c.b16 %v4078, %v3997
        %v5537 = vpack.c.b16 %v4079, %v3998
        %v5538 = vpack.c.b16 %v4080, %v3999
        %v5539 = vpack.c.b16 %v4081, %v4000
        %v5540 = vpack.c.b16 %v4082, %v4001
        %v5541 = vpack.c.b16 %v4083, %v4002
        %v5542 = vpack.c.b16 %v4084, %v4003
        %v5543 = vpack.c.b16 %v4085, %v4004
        %v5544 = vpack.c.b16 %v4086, %v4005
        %v5545 = vpack.c.b16 %v4087, %v4006
        %v5546 = vpack.c.b16 %v4088, %v4007
        %v5547 = vpack.c.b16 %v4089, %v4008
        %v5548 = vpack.c.b16 %v4090, %v4009
        %v5549 = vpack.c.b16 %v4091, %v4010
        %v5550 = vpack.c.b16 %v4092, %v4011
        %v5551 = vpack.c.b16 %v4093, %v4012
        %v5552 = vpack.c.b16 %v4094, %v4013
        %v5553 = vpack.c.b16 %v4095, %v4014
        %v5554 = vpack.c.b16 %v4096, %v4015
        %v5555 = vpack.c.b16 %v4097, %v4016
        %v5556 = vpack.c.b16 %v4098, %v4017
        %v5557 = vpack.c.b16 %v4099, %v4018
        %v5558 = vpack.c.b16 %v4100, %v4019
        %v5559 = vpack.c.b16 %v4101, %v4020
        %v5560 = vpack.c.b16 %v4102, %v4021
        %v5561 = vpack.c.b16 %v4103, %v4022
        %v5562 = vpack.c.b16 %v4104, %v4023
        %v5563 = vpack.c.b16 %v4105, %v4024
        %v5564 = vpack.c.b16 %v4106, %v4025
        %v5565 = vpack.c.b16 %v4107, %v4026
        %v5566 = vpack.c.b16 %v4189, %v4108
        %v5567 = vpack.c.b16 %v4190, %v4109
        %v5568 = vpack.c.b16 %v4191, %v4110
        %v5569 = vpack.c.b16 %v4192, %v4111
        %v5570 = vpack.c.b16 %v4193, %v4112
        %v5571 = vpack.c.b16 %v4194, %v4113
        %v5572 = vpack.c.b16 %v4195, %v4114
        %v5573 = vpack.c.b16 %v4196, %v4115
        %v5574 = vpack.c.b16 %v4197, %v4116
        %v5575 = vpack.c.b16 %v4198, %v4117
        %v5576 = vpack.c.b16 %v4199, %v4118
        %v5577 = vpack.c.b16 %v4200, %v4119
        %v5578 = vpack.c.b16 %v4201, %v4120
        %v5579 = vpack.c.b16 %v4202, %v4121
        %v5580 = vpack.c.b16 %v4203, %v4122
        %v5581 = vpack.c.b16 %v4204, %v4123
        %v5582 = vpack.c.b16 %v4205, %v4124
        %v5583 = vpack.c.b16 %v4206, %v4125
        %v5584 = vpack.c.b16 %v4207, %v4126
        %v5585 = vpack.c.b16 %v4208, %v4127
        %v5586 = vpack.c.b16 %v4209, %v4128
        %v5587 = vpack.c.b16 %v4210, %v4129
        %v5588 = vpack.c.b16 %v4211, %v4130
        %v5589 = vpack.c.b16 %v4212, %v4131
        %v5590 = vpack.c.b16 %v4213, %v4132
        %v5591 = vpack.c.b16 %v4214, %v4133
        %v5592 = vpack.c.b16 %v4215, %v4134
        %v5593 = vpack.c.b16 %v4216, %v4135
        %v5594 = vpack.c.b16 %v4217, %v4136
        %v5595 = vpack.c.b16 %v4218, %v4137
        %v5596 = vpack.c.b16 %v4219, %v4138
        %v5597 = vpack.c.b16 %v4220, %v4139
        %v5598 = vpack.c.b16 %v4221, %v4140
        %v5599 = vpack.c.b16 %v4222, %v4141
        %v5600 = vpack.c.b16 %v4223, %v4142
        %v5601 = vpack.c.b16 %v4224, %v4143
        %v5602 = vpack.c.b16 %v4225, %v4144
        %v5603 = vpack.c.b16 %v4226, %v4145
        %v5604 = vpack.c.b16 %v4227, %v4146
        %v5605 = vpack.c.b16 %v4228, %v4147
        %v5606 = vpack.c.b16 %v4229, %v4148
        %v5607 = vpack.c.b16 %v4230, %v4149
        %v5608 = vpack.c.b16 %v4231, %v4150
        %v5609 = vpack.c.b16 %v4232, %v4151
        %v5610 = vpack.c.b16 %v4233, %v4152
        %v5611 = vpack.c.b16 %v4234, %v4153
        %v5612 = vpack.c.b16 %v4235, %v4154
        %v5613 = vpack.c.b16 %v4236, %v4155
        %v5614 = vpack.c.b16 %v4237, %v4156
        %v5615 = vpack.c.b16 %v4238, %v4157
        %v5616 = vpack.c.b16 %v4239, %v4158
        %v5617 = vpack.c.b16 %v4240, %v4159
        %v5618 = vpack.c.b16 %v4241, %v4160
        %v5619 = vpack.c.b16 %v4242, %v4161
        %v5620 = vpack.c.b16 %v4243, %v4162
        %v5621 = vpack.c.b16 %v4244, %v4163
        %v5622 = vpack.c.b16 %v4245, %v4164
        %v5623 = vpack.c.b16 %v4246, %v4165
        %v5624 = vpack.c.b16 %v4247, %v4166
        %v5625 = vpack.c.b16 %v4248, %v4167
        %v5626 = vpack.c.b16 %v4249, %v4168
        %v5627 = vpack.c.b16 %v4250, %v4169
        %v5628 = vpack.c.b16 %v4251, %v4170
        %v5629 = vpack.c.b16 %v4252, %v4171
        %v5630 = vpack.c.b16 %v4253, %v4172
        %v5631 = vpack.c.b16 %v4254, %v4173
        %v5632 = vpack.c.b16 %v4255, %v4174
        %v5633 = vpack.c.b16 %v4256, %v4175
        %v5634 = vpack.c.b16 %v4257, %v4176
        %v5635 = vpack.c.b16 %v4258, %v4177
        %v5636 = vpack.c.b16 %v4259, %v4178
        %v5637 = vpack.c.b16 %v4260, %v4179
        %v5638 = vpack.c.b16 %v4261, %v4180
        %v5639 = vpack.c.b16 %v4262, %v4181
        %v5640 = vpack.c.b16 %v4263, %v4182
        %v5641 = vpack.c.b16 %v4264, %v4183
        %v5642 = vpack.c.b16 %v4265, %v4184
        %v5643 = vpack.c.b16 %v4266, %v4185
        %v5644 = vpack.c.b16 %v4267, %v4186
        %v5645 = vpack.c.b16 %v4268, %v4187
        %v5646 = vpack.c.b16 %v4269, %v4188
        %v5647 = vpack.c.b16 %v4351, %v4270
        %v5648 = vpack.c.b16 %v4352, %v4271
        %v5649 = vpack.c.b16 %v4353, %v4272
        %v5650 = vpack.c.b16 %v4354, %v4273
        %v5651 = vpack.c.b16 %v4355, %v4274
        %v5652 = vpack.c.b16 %v4356, %v4275
        %v5653 = vpack.c.b16 %v4357, %v4276
        %v5654 = vpack.c.b16 %v4358, %v4277
        %v5655 = vpack.c.b16 %v4359, %v4278
        %v5656 = vpack.c.b16 %v4360, %v4279
        %v5657 = vpack.c.b16 %v4361, %v4280
        %v5658 = vpack.c.b16 %v4362, %v4281
        %v5659 = vpack.c.b16 %v4363, %v4282
        %v5660 = vpack.c.b16 %v4364, %v4283
        %v5661 = vpack.c.b16 %v4365, %v4284
        %v5662 = vpack.c.b16 %v4366, %v4285
        %v5663 = vpack.c.b16 %v4367, %v4286
        %v5664 = vpack.c.b16 %v4368, %v4287
        %v5665 = vpack.c.b16 %v4369, %v4288
        %v5666 = vpack.c.b16 %v4370, %v4289
        %v5667 = vpack.c.b16 %v4371, %v4290
        %v5668 = vpack.c.b16 %v4372, %v4291
        %v5669 = vpack.c.b16 %v4373, %v4292
        %v5670 = vpack.c.b16 %v4374, %v4293
        %v5671 = vpack.c.b16 %v4375, %v4294
        %v5672 = vpack.c.b16 %v4376, %v4295
        %v5673 = vpack.c.b16 %v4377, %v4296
        %v5674 = vpack.c.b16 %v4378, %v4297
        %v5675 = vpack.c.b16 %v4379, %v4298
        %v5676 = vpack.c.b16 %v4380, %v4299
        %v5677 = vpack.c.b16 %v4381, %v4300
        %v5678 = vpack.c.b16 %v4382, %v4301
        %v5679 = vpack.c.b16 %v4383, %v4302
        %v5680 = vpack.c.b16 %v4384, %v4303
        %v5681 = vpack.c.b16 %v4385, %v4304
        %v5682 = vpack.c.b16 %v4386, %v4305
        %v5683 = vpack.c.b16 %v4387, %v4306
        %v5684 = vpack.c.b16 %v4388, %v4307
        %v5685 = vpack.c.b16 %v4389, %v4308
        %v5686 = vpack.c.b16 %v4390, %v4309
        %v5687 = vpack.c.b16 %v4391, %v4310
        %v5688 = vpack.c.b16 %v4392, %v4311
        %v5689 = vpack.c.b16 %v4393, %v4312
        %v5690 = vpack.c.b16 %v4394, %v4313
        %v5691 = vpack.c.b16 %v4395, %v4314
        %v5692 = vpack.c.b16 %v4396, %v4315
        %v5693 = vpack.c.b16 %v4397, %v4316
        %v5694 = vpack.c.b16 %v4398, %v4317
        %v5695 = vpack.c.b16 %v4399, %v4318
        %v5696 = vpack.c.b16 %v4400, %v4319
        %v5697 = vpack.c.b16 %v4401, %v4320
        %v5698 = vpack.c.b16 %v4402, %v4321
        %v5699 = vpack.c.b16 %v4403, %v4322
        %v5700 = vpack.c.b16 %v4404, %v4323
        %v5701 = vpack.c.b16 %v4405, %v4324
        %v5702 = vpack.c.b16 %v4406, %v4325
        %v5703 = vpack.c.b16 %v4407, %v4326
        %v5704 = vpack.c.b16 %v4408, %v4327
        %v5705 = vpack.c.b16 %v4409, %v4328
        %v5706 = vpack.c.b16 %v4410, %v4329
        %v5707 = vpack.c.b16 %v4411, %v4330
        %v5708 = vpack.c.b16 %v4412, %v4331
        %v5709 = vpack.c.b16 %v4413, %v4332
        %v5710 = vpack.c.b16 %v4414, %v4333
        %v5711 = vpack.c.b16 %v4415, %v4334
        %v5712 = vpack.c.b16 %v4416, %v4335
        %v5713 = vpack.c.b16 %v4417, %v4336
        %v5714 = vpack.c.b16 %v4418, %v4337
        %v5715 = vpack.c.b16 %v4419, %v4338
        %v5716 = vpack.c.b16 %v4420, %v4339
        %v5717 = vpack.c.b16 %v4421, %v4340
        %v5718 = vpack.c.b16 %v4422, %v4341
        %v5719 = vpack.c.b16 %v4423, %v4342
        %v5720 = vpack.c.b16 %v4424, %v4343
        %v5721 = vpack.c.b16 %v4425, %v4344
        %v5722 = vpack.c.b16 %v4426, %v4345
        %v5723 = vpack.c.b16 %v4427, %v4346
        %v5724 = vpack.c.b16 %v4428, %v4347
        %v5725 = vpack.c.b16 %v4429, %v4348
        %v5726 = vpack.c.b16 %v4430, %v4349
        %v5727 = vpack.c.b16 %v4431, %v4350
        %v5728 = vpack.c.b16 %v4513, %v4432
        %v5729 = vpack.c.b16 %v4514, %v4433
        %v5730 = vpack.c.b16 %v4515, %v4434
        %v5731 = vpack.c.b16 %v4516, %v4435
        %v5732 = vpack.c.b16 %v4517, %v4436
        %v5733 = vpack.c.b16 %v4518, %v4437
        %v5734 = vpack.c.b16 %v4519, %v4438
        %v5735 = vpack.c.b16 %v4520, %v4439
        %v5736 = vpack.c.b16 %v4521, %v4440
        %v5737 = vpack.c.b16 %v4522, %v4441
        %v5738 = vpack.c.b16 %v4523, %v4442
        %v5739 = vpack.c.b16 %v4524, %v4443
        %v5740 = vpack.c.b16 %v4525, %v4444
        %v5741 = vpack.c.b16 %v4526, %v4445
        %v5742 = vpack.c.b16 %v4527, %v4446
        %v5743 = vpack.c.b16 %v4528, %v4447
        %v5744 = vpack.c.b16 %v4529, %v4448
        %v5745 = vpack.c.b16 %v4530, %v4449
        %v5746 = vpack.c.b16 %v4531, %v4450
        %v5747 = vpack.c.b16 %v4532, %v4451
        %v5748 = vpack.c.b16 %v4533, %v4452
        %v5749 = vpack.c.b16 %v4534, %v4453
        %v5750 = vpack.c.b16 %v4535, %v4454
        %v5751 = vpack.c.b16 %v4536, %v4455
        %v5752 = vpack.c.b16 %v4537, %v4456
        %v5753 = vpack.c.b16 %v4538, %v4457
        %v5754 = vpack.c.b16 %v4539, %v4458
        %v5755 = vpack.c.b16 %v4540, %v4459
        %v5756 = vpack.c.b16 %v4541, %v4460
        %v5757 = vpack.c.b16 %v4542, %v4461
        %v5758 = vpack.c.b16 %v4543, %v4462
        %v5759 = vpack.c.b16 %v4544, %v4463
        %v5760 = vpack.c.b16 %v4545, %v4464
        %v5761 = vpack.c.b16 %v4546, %v4465
        %v5762 = vpack.c.b16 %v4547, %v4466
        %v5763 = vpack.c.b16 %v4548, %v4467
        %v5764 = vpack.c.b16 %v4549, %v4468
        %v5765 = vpack.c.b16 %v4550, %v4469
        %v5766 = vpack.c.b16 %v4551, %v4470
        %v5767 = vpack.c.b16 %v4552, %v4471
        %v5768 = vpack.c.b16 %v4553, %v4472
        %v5769 = vpack.c.b16 %v4554, %v4473
        %v5770 = vpack.c.b16 %v4555, %v4474
        %v5771 = vpack.c.b16 %v4556, %v4475
        %v5772 = vpack.c.b16 %v4557, %v4476
        %v5773 = vpack.c.b16 %v4558, %v4477
        %v5774 = vpack.c.b16 %v4559, %v4478
        %v5775 = vpack.c.b16 %v4560, %v4479
        %v5776 = vpack.c.b16 %v4561, %v4480
        %v5777 = vpack.c.b16 %v4562, %v4481
        %v5778 = vpack.c.b16 %v4563, %v4482
        %v5779 = vpack.c.b16 %v4564, %v4483
        %v5780 = vpack.c.b16 %v4565, %v4484
        %v5781 = vpack.c.b16 %v4566, %v4485
        %v5782 = vpack.c.b16 %v4567, %v4486
        %v5783 = vpack.c.b16 %v4568, %v4487
        %v5784 = vpack.c.b16 %v4569, %v4488
        %v5785 = vpack.c.b16 %v4570, %v4489
        %v5786 = vpack.c.b16 %v4571, %v4490
        %v5787 = vpack.c.b16 %v4572, %v4491
        %v5788 = vpack.c.b16 %v4573, %v4492
        %v5789 = vpack.c.b16 %v4574, %v4493
        %v5790 = vpack.c.b16 %v4575, %v4494
        %v5791 = vpack.c.b16 %v4576, %v4495
        %v5792 = vpack.c.b16 %v4577, %v4496
        %v5793 = vpack.c.b16 %v4578, %v4497
        %v5794 = vpack.c.b16 %v4579, %v4498
        %v5795 = vpack.c.b16 %v4580, %v4499
        %v5796 = vpack.c.b16 %v4581, %v4500
        %v5797 = vpack.c.b16 %v4582, %v4501
        %v5798 = vpack.c.b16 %v4583, %v4502
        %v5799 = vpack.c.b16 %v4584, %v4503
        %v5800 = vpack.c.b16 %v4585, %v4504
        %v5801 = vpack.c.b16 %v4586, %v4505
        %v5802 = vpack.c.b16 %v4587, %v4506
        %v5803 = vpack.c.b16 %v4588, %v4507
        %v5804 = vpack.c.b16 %v4589, %v4508
        %v5805 = vpack.c.b16 %v4590, %v4509
        %v5806 = vpack.c.b16 %v4591, %v4510
        %v5807 = vpack.c.b16 %v4592, %v4511
        %v5808 = vpack.c.b16 %v4593, %v4512
        %v5809 = vpack.c.b16 %v4675, %v4594
        %v5810 = vpack.c.b16 %v4676, %v4595
        %v5811 = vpack.c.b16 %v4677, %v4596
        %v5812 = vpack.c.b16 %v4678, %v4597
        %v5813 = vpack.c.b16 %v4679, %v4598
        %v5814 = vpack.c.b16 %v4680, %v4599
        %v5815 = vpack.c.b16 %v4681, %v4600
        %v5816 = vpack.c.b16 %v4682, %v4601
        %v5817 = vpack.c.b16 %v4683, %v4602
        %v5818 = vpack.c.b16 %v4684, %v4603
        %v5819 = vpack.c.b16 %v4685, %v4604
        %v5820 = vpack.c.b16 %v4686, %v4605
        %v5821 = vpack.c.b16 %v4687, %v4606
        %v5822 = vpack.c.b16 %v4688, %v4607
        %v5823 = vpack.c.b16 %v4689, %v4608
        %v5824 = vpack.c.b16 %v4690, %v4609
        %v5825 = vpack.c.b16 %v4691, %v4610
        %v5826 = vpack.c.b16 %v4692, %v4611
        %v5827 = vpack.c.b16 %v4693, %v4612
        %v5828 = vpack.c.b16 %v4694, %v4613
        %v5829 = vpack.c.b16 %v4695, %v4614
        %v5830 = vpack.c.b16 %v4696, %v4615
        %v5831 = vpack.c.b16 %v4697, %v4616
        %v5832 = vpack.c.b16 %v4698, %v4617
        %v5833 = vpack.c.b16 %v4699, %v4618
        %v5834 = vpack.c.b16 %v4700, %v4619
        %v5835 = vpack.c.b16 %v4701, %v4620
        %v5836 = vpack.c.b16 %v4702, %v4621
        %v5837 = vpack.c.b16 %v4703, %v4622
        %v5838 = vpack.c.b16 %v4704, %v4623
        %v5839 = vpack.c.b16 %v4705, %v4624
        %v5840 = vpack.c.b16 %v4706, %v4625
        %v5841 = vpack.c.b16 %v4707, %v4626
        %v5842 = vpack.c.b16 %v4708, %v4627
        %v5843 = vpack.c.b16 %v4709, %v4628
        %v5844 = vpack.c.b16 %v4710, %v4629
        %v5845 = vpack.c.b16 %v4711, %v4630
        %v5846 = vpack.c.b16 %v4712, %v4631
        %v5847 = vpack.c.b16 %v4713, %v4632
        %v5848 = vpack.c.b16 %v4714, %v4633
        %v5849 = vpack.c.b16 %v4715, %v4634
        %v5850 = vpack.c.b16 %v4716, %v4635
        %v5851 = vpack.c.b16 %v4717, %v4636
        %v5852 = vpack.c.b16 %v4718, %v4637
        %v5853 = vpack.c.b16 %v4719, %v4638
        %v5854 = vpack.c.b16 %v4720, %v4639
        %v5855 = vpack.c.b16 %v4721, %v4640
        %v5856 = vpack.c.b16 %v4722, %v4641
        %v5857 = vpack.c.b16 %v4723, %v4642
        %v5858 = vpack.c.b16 %v4724, %v4643
        %v5859 = vpack.c.b16 %v4725, %v4644
        %v5860 = vpack.c.b16 %v4726, %v4645
        %v5861 = vpack.c.b16 %v4727, %v4646
        %v5862 = vpack.c.b16 %v4728, %v4647
        %v5863 = vpack.c.b16 %v4729, %v4648
        %v5864 = vpack.c.b16 %v4730, %v4649
        %v5865 = vpack.c.b16 %v4731, %v4650
        %v5866 = vpack.c.b16 %v4732, %v4651
        %v5867 = vpack.c.b16 %v4733, %v4652
        %v5868 = vpack.c.b16 %v4734, %v4653
        %v5869 = vpack.c.b16 %v4735, %v4654
        %v5870 = vpack.c.b16 %v4736, %v4655
        %v5871 = vpack.c.b16 %v4737, %v4656
        %v5872 = vpack.c.b16 %v4738, %v4657
        %v5873 = vpack.c.b16 %v4739, %v4658
        %v5874 = vpack.c.b16 %v4740, %v4659
        %v5875 = vpack.c.b16 %v4741, %v4660
        %v5876 = vpack.c.b16 %v4742, %v4661
        %v5877 = vpack.c.b16 %v4743, %v4662
        %v5878 = vpack.c.b16 %v4744, %v4663
        %v5879 = vpack.c.b16 %v4745, %v4664
        %v5880 = vpack.c.b16 %v4746, %v4665
        %v5881 = vpack.c.b16 %v4747, %v4666
        %v5882 = vpack.c.b16 %v4748, %v4667
        %v5883 = vpack.c.b16 %v4749, %v4668
        %v5884 = vpack.c.b16 %v4750, %v4669
        %v5885 = vpack.c.b16 %v4751, %v4670
        %v5886 = vpack.c.b16 %v4752, %v4671
        %v5887 = vpack.c.b16 %v4753, %v4672
        %v5888 = vpack.c.b16 %v4754, %v4673
        %v5889 = vpack.c.b16 %v4755, %v4674
        %vm7024 = vcmask 785408
        %v7026 = vsel %vm7024, %v1338, 0
        %7028 = vmatprep.subr.bf16.mxu0 %v4757
        %7029 = vmatpush1.bf16.msra.mxu0 %v4756
        %7030 = vmatprep.subr.bf16.mxu0 %v4838
        %7031 = vmatpush1.bf16.msra.mxu0 %v4837
        %7032 = vmatprep.subr.bf16.mxu0 %v4919
        %7033 = vmatpush1.bf16.msra.mxu0 %v4918
        %7034 = vmatprep.subr.bf16.mxu0 %v5000
        %7035 = vmatpush1.bf16.msra.mxu0 %v4999
        %7036 = vmatprep.subr.bf16.mxu0 %v5081
        %7037 = vmatpush1.bf16.msra.mxu0 %v5080
        %7038 = vmatprep.subr.bf16.mxu0 %v5162
        %7039 = vmatpush1.bf16.msra.mxu0 %v5161
        %7040 = vmatprep.subr.bf16.mxu0 %v5243
        %7041 = vmatpush1.bf16.msra.mxu0 %v5242
        %7042 = vmatprep.subr.bf16.mxu0 %v5324
        %7043 = vmatpush1.bf16.msra.mxu0 %v5323
        %7044 = vmatprep.subr.bf16.mxu0 %v5405
        %7045 = vmatpush1.bf16.msra.mxu0 %v5404
        %7046 = vmatprep.subr.bf16.mxu0 %v5486
        %7047 = vmatpush1.bf16.msra.mxu0 %v5485
        %7048 = vmatprep.subr.bf16.mxu0 %v5567
        %7049 = vmatpush1.bf16.msra.mxu0 %v5566
        %7050 = vmatprep.subr.bf16.mxu0 %v5648
        %7051 = vmatpush1.bf16.msra.mxu0 %v5647
        %7052 = vmatprep.subr.bf16.mxu0 %v5729
        %7053 = vmatpush1.bf16.msra.mxu0 %v5728
        %7054 = vmatprep.subr.bf16.mxu0 %v5810
        %7055 = vmatpush1.bf16.msra.mxu0 %v5809
        %7056 = vmatprep.subr.bf16.mxu0 0
        %7057 = vmatpush1.bf16.msra.mxu0 0
        %7058 = vmatprep.subr.bf16.mxu0 0
        %7059 = vmatpush1.bf16.msra.mxu0 0
        %7060 = vmatprep.mubr.bf16.mxu0 %v7026
        %7061 = vmatmul.mubr.bf16.gmra.mrb[0].mxu0 %v1331
        %v7062 = vpop.f32.mrb[0].mxu0
        %v7063 = vadd.f32 0.0, %v7062
        %v7064 = vpop.f32.mrb[0].mxu0
        %v7065 = vadd.f32 0.0, %v7064
        %v7066 = vpop.f32.mrb[0].mxu0
        %v7067 = vpop.f32.mrb[0].mxu0
        %7068 = vdwg.mxu0
        %7069 = vmatprep.subr.bf16.mxu0 %v4759
        %7070 = vmatpush1.bf16.msra.mxu0 %v4758
        %7071 = vmatprep.subr.bf16.mxu0 %v4840
        %7072 = vmatpush1.bf16.msra.mxu0 %v4839
        %7073 = vmatprep.subr.bf16.mxu0 %v4921
        %7074 = vmatpush1.bf16.msra.mxu0 %v4920
        %7075 = vmatprep.subr.bf16.mxu0 %v5002
        %7076 = vmatpush1.bf16.msra.mxu0 %v5001
        %7077 = vmatprep.subr.bf16.mxu0 %v5083
        %7078 = vmatpush1.bf16.msra.mxu0 %v5082
        %7079 = vmatprep.subr.bf16.mxu0 %v5164
        %7080 = vmatpush1.bf16.msra.mxu0 %v5163
        %7081 = vmatprep.subr.bf16.mxu0 %v5245
        %7082 = vmatpush1.bf16.msra.mxu0 %v5244
        %7083 = vmatprep.subr.bf16.mxu0 %v5326
        %7084 = vmatpush1.bf16.msra.mxu0 %v5325
        %7085 = vmatprep.subr.bf16.mxu0 %v5407
        %7086 = vmatpush1.bf16.msra.mxu0 %v5406
        %7087 = vmatprep.subr.bf16.mxu0 %v5488
        %7088 = vmatpush1.bf16.msra.mxu0 %v5487
        %7089 = vmatprep.subr.bf16.mxu0 %v5569
        %7090 = vmatpush1.bf16.msra.mxu0 %v5568
        %7091 = vmatprep.subr.bf16.mxu0 %v5650
        %7092 = vmatpush1.bf16.msra.mxu0 %v5649
        %7093 = vmatprep.subr.bf16.mxu0 %v5731
        %7094 = vmatpush1.bf16.msra.mxu0 %v5730
        %7095 = vmatprep.subr.bf16.mxu0 %v5812
        %7096 = vmatpush1.bf16.msra.mxu0 %v5811
        %7097 = vmatprep.subr.bf16.mxu0 0
        %7098 = vmatpush1.bf16.msra.mxu0 0
        %7099 = vmatprep.subr.bf16.mxu0 0
        %7100 = vmatpush1.bf16.msra.mxu0 0
        %7101 = vmatprep.mubr.bf16.mxu0 %v7026
        %7102 = vmatmul.mubr.bf16.gmra.mrb[0].mxu0 %v1331
        %v7103 = vpop.f32.mrb[0].mxu0
        %v7104 = vadd.f32 0.0, %v7103
        %v7105 = vpop.f32.mrb[0].mxu0
        %v7106 = vadd.f32 0.0, %v7105
        %v7107 = vpop.f32.mrb[0].mxu0
        %v7108 = vpop.f32.mrb[0].mxu0
        %7109 = vdwg.mxu0
        %7110 = vmatprep.subr.bf16.mxu0 %v4761
        %7111 = vmatpush1.bf16.msra.mxu0 %v4760
        %7112 = vmatprep.subr.bf16.mxu0 %v4842
        %7113 = vmatpush1.bf16.msra.mxu0 %v4841
        %7114 = vmatprep.subr.bf16.mxu0 %v4923
        %7115 = vmatpush1.bf16.msra.mxu0 %v4922
        %7116 = vmatprep.subr.bf16.mxu0 %v5004
        %7117 = vmatpush1.bf16.msra.mxu0 %v5003
        %7118 = vmatprep.subr.bf16.mxu0 %v5085
        %7119 = vmatpush1.bf16.msra.mxu0 %v5084
        %7120 = vmatprep.subr.bf16.mxu0 %v5166
        %7121 = vmatpush1.bf16.msra.mxu0 %v5165
        %7122 = vmatprep.subr.bf16.mxu0 %v5247
        %7123 = vmatpush1.bf16.msra.mxu0 %v5246
        %7124 = vmatprep.subr.bf16.mxu0 %v5328
        %7125 = vmatpush1.bf16.msra.mxu0 %v5327
        %7126 = vmatprep.subr.bf16.mxu0 %v5409
        %7127 = vmatpush1.bf16.msra.mxu0 %v5408
        %7128 = vmatprep.subr.bf16.mxu0 %v5490
        %7129 = vmatpush1.bf16.msra.mxu0 %v5489
        %7130 = vmatprep.subr.bf16.mxu0 %v5571
        %7131 = vmatpush1.bf16.msra.mxu0 %v5570
        %7132 = vmatprep.subr.bf16.mxu0 %v5652
        %7133 = vmatpush1.bf16.msra.mxu0 %v5651
        %7134 = vmatprep.subr.bf16.mxu0 %v5733
        %7135 = vmatpush1.bf16.msra.mxu0 %v5732
        %7136 = vmatprep.subr.bf16.mxu0 %v5814
        %7137 = vmatpush1.bf16.msra.mxu0 %v5813
        %7138 = vmatprep.subr.bf16.mxu0 0
        %7139 = vmatpush1.bf16.msra.mxu0 0
        %7140 = vmatprep.subr.bf16.mxu0 0
        %7141 = vmatpush1.bf16.msra.mxu0 0
        %7142 = vmatprep.mubr.bf16.mxu0 %v7026
        %7143 = vmatmul.mubr.bf16.gmra.mrb[0].mxu0 %v1331
        %v7144 = vpop.f32.mrb[0].mxu0
        %v7145 = vadd.f32 0.0, %v7144
        %v7146 = vpop.f32.mrb[0].mxu0
        %v7147 = vadd.f32 0.0, %v7146
        %v7148 = vpop.f32.mrb[0].mxu0
        %v7149 = vpop.f32.mrb[0].mxu0
        %7150 = vdwg.mxu0
        %7151 = vmatprep.subr.bf16.mxu0 %v4763
        %7152 = vmatpush1.bf16.msra.mxu0 %v4762
        %7153 = vmatprep.subr.bf16.mxu0 %v4844
        %7154 = vmatpush1.bf16.msra.mxu0 %v4843
        %7155 = vmatprep.subr.bf16.mxu0 %v4925
        %7156 = vmatpush1.bf16.msra.mxu0 %v4924
        %7157 = vmatprep.subr.bf16.mxu0 %v5006
        %7158 = vmatpush1.bf16.msra.mxu0 %v5005
        %7159 = vmatprep.subr.bf16.mxu0 %v5087
        %7160 = vmatpush1.bf16.msra.mxu0 %v5086
        %7161 = vmatprep.subr.bf16.mxu0 %v5168
        %7162 = vmatpush1.bf16.msra.mxu0 %v5167
        %7163 = vmatprep.subr.bf16.mxu0 %v5249
        %7164 = vmatpush1.bf16.msra.mxu0 %v5248
        %7165 = vmatprep.subr.bf16.mxu0 %v5330
        %7166 = vmatpush1.bf16.msra.mxu0 %v5329
        %7167 = vmatprep.subr.bf16.mxu0 %v5411
        %7168 = vmatpush1.bf16.msra.mxu0 %v5410
        %7169 = vmatprep.subr.bf16.mxu0 %v5492
        %7170 = vmatpush1.bf16.msra.mxu0 %v5491
        %7171 = vmatprep.subr.bf16.mxu0 %v5573
        %7172 = vmatpush1.bf16.msra.mxu0 %v5572
        %7173 = vmatprep.subr.bf16.mxu0 %v5654
        %7174 = vmatpush1.bf16.msra.mxu0 %v5653
        %7175 = vmatprep.subr.bf16.mxu0 %v5735
        %7176 = vmatpush1.bf16.msra.mxu0 %v5734
        %7177 = vmatprep.subr.bf16.mxu0 %v5816
        %7178 = vmatpush1.bf16.msra.mxu0 %v5815
        %7179 = vmatprep.subr.bf16.mxu0 0
        %7180 = vmatpush1.bf16.msra.mxu0 0
        %7181 = vmatprep.subr.bf16.mxu0 0
        %7182 = vmatpush1.bf16.msra.mxu0 0
        %7183 = vmatprep.mubr.bf16.mxu0 %v7026
        %7184 = vmatmul.mubr.bf16.gmra.mrb[0].mxu0 %v1331
        %v7185 = vpop.f32.mrb[0].mxu0
        %v7186 = vadd.f32 0.0, %v7185
        %v7187 = vpop.f32.mrb[0].mxu0
        %v7188 = vadd.f32 0.0, %v7187
        %v7189 = vpop.f32.mrb[0].mxu0
        %v7190 = vpop.f32.mrb[0].mxu0
        %7191 = vdwg.mxu0
        %7192 = vmatprep.subr.bf16.mxu0 %v4765
        %7193 = vmatpush1.bf16.msra.mxu0 %v4764
        %7194 = vmatprep.subr.bf16.mxu0 %v4846
        %7195 = vmatpush1.bf16.msra.mxu0 %v4845
        %7196 = vmatprep.subr.bf16.mxu0 %v4927
        %7197 = vmatpush1.bf16.msra.mxu0 %v4926
        %7198 = vmatprep.subr.bf16.mxu0 %v5008
        %7199 = vmatpush1.bf16.msra.mxu0 %v5007
        %7200 = vmatprep.subr.bf16.mxu0 %v5089
        %7201 = vmatpush1.bf16.msra.mxu0 %v5088
        %7202 = vmatprep.subr.bf16.mxu0 %v5170
        %7203 = vmatpush1.bf16.msra.mxu0 %v5169
        %7204 = vmatprep.subr.bf16.mxu0 %v5251
        %7205 = vmatpush1.bf16.msra.mxu0 %v5250
        %7206 = vmatprep.subr.bf16.mxu0 %v5332
        %7207 = vmatpush1.bf16.msra.mxu0 %v5331
        %7208 = vmatprep.subr.bf16.mxu0 %v5413
        %7209 = vmatpush1.bf16.msra.mxu0 %v5412
        %7210 = vmatprep.subr.bf16.mxu0 %v5494
        %7211 = vmatpush1.bf16.msra.mxu0 %v5493
        %7212 = vmatprep.subr.bf16.mxu0 %v5575
        %7213 = vmatpush1.bf16.msra.mxu0 %v5574
        %7214 = vmatprep.subr.bf16.mxu0 %v5656
        %7215 = vmatpush1.bf16.msra.mxu0 %v5655
        %7216 = vmatprep.subr.bf16.mxu0 %v5737
        %7217 = vmatpush1.bf16.msra.mxu0 %v5736
        %7218 = vmatprep.subr.bf16.mxu0 %v5818
        %7219 = vmatpush1.bf16.msra.mxu0 %v5817
        %7220 = vmatprep.subr.bf16.mxu0 0
        %7221 = vmatpush1.bf16.msra.mxu0 0
        %7222 = vmatprep.subr.bf16.mxu0 0
        %7223 = vmatpush1.bf16.msra.mxu0 0
        %7224 = vmatprep.mubr.bf16.mxu0 %v7026
        %7225 = vmatmul.mubr.bf16.gmra.mrb[0].mxu0 %v1331
        %v7226 = vpop.f32.mrb[0].mxu0
        %v7227 = vadd.f32 0.0, %v7226
        %v7228 = vpop.f32.mrb[0].mxu0
        %v7229 = vadd.f32 0.0, %v7228
        %v7230 = vpop.f32.mrb[0].mxu0
        %v7231 = vpop.f32.mrb[0].mxu0
        %7232 = vdwg.mxu0
        %7233 = vmatprep.subr.bf16.mxu0 %v4767
        %7234 = vmatpush1.bf16.msra.mxu0 %v4766
        %7235 = vmatprep.subr.bf16.mxu0 %v4848
        %7236 = vmatpush1.bf16.msra.mxu0 %v4847
        %7237 = vmatprep.subr.bf16.mxu0 %v4929
        %7238 = vmatpush1.bf16.msra.mxu0 %v4928
        %7239 = vmatprep.subr.bf16.mxu0 %v5010
        %7240 = vmatpush1.bf16.msra.mxu0 %v5009
        %7241 = vmatprep.subr.bf16.mxu0 %v5091
        %7242 = vmatpush1.bf16.msra.mxu0 %v5090
        %7243 = vmatprep.subr.bf16.mxu0 %v5172
        %7244 = vmatpush1.bf16.msra.mxu0 %v5171
        %7245 = vmatprep.subr.bf16.mxu0 %v5253
        %7246 = vmatpush1.bf16.msra.mxu0 %v5252
        %7247 = vmatprep.subr.bf16.mxu0 %v5334
        %7248 = vmatpush1.bf16.msra.mxu0 %v5333
        %7249 = vmatprep.subr.bf16.mxu0 %v5415
        %7250 = vmatpush1.bf16.msra.mxu0 %v5414
        %7251 = vmatprep.subr.bf16.mxu0 %v5496
        %7252 = vmatpush1.bf16.msra.mxu0 %v5495
        %7253 = vmatprep.subr.bf16.mxu0 %v5577
        %7254 = vmatpush1.bf16.msra.mxu0 %v5576
        %7255 = vmatprep.subr.bf16.mxu0 %v5658
        %7256 = vmatpush1.bf16.msra.mxu0 %v5657
        %7257 = vmatprep.subr.bf16.mxu0 %v5739
        %7258 = vmatpush1.bf16.msra.mxu0 %v5738
        %7259 = vmatprep.subr.bf16.mxu0 %v5820
        %7260 = vmatpush1.bf16.msra.mxu0 %v5819
        %7261 = vmatprep.subr.bf16.mxu0 0
        %7262 = vmatpush1.bf16.msra.mxu0 0
        %7263 = vmatprep.subr.bf16.mxu0 0
        %7264 = vmatpush1.bf16.msra.mxu0 0
        %7265 = vmatprep.mubr.bf16.mxu0 %v7026
        %7266 = vmatmul.mubr.bf16.gmra.mrb[0].mxu0 %v1331
        %v7267 = vpop.f32.mrb[0].mxu0
        %v7268 = vadd.f32 0.0, %v7267
        %v7269 = vpop.f32.mrb[0].mxu0
        %v7270 = vadd.f32 0.0, %v7269
        %v7271 = vpop.f32.mrb[0].mxu0
        %v7272 = vpop.f32.mrb[0].mxu0
        %7273 = vdwg.mxu0
        %7274 = vmatprep.subr.bf16.mxu0 %v4769
        %7275 = vmatpush1.bf16.msra.mxu0 %v4768
        %7276 = vmatprep.subr.bf16.mxu0 %v4850
        %7277 = vmatpush1.bf16.msra.mxu0 %v4849
        %7278 = vmatprep.subr.bf16.mxu0 %v4931
        %7279 = vmatpush1.bf16.msra.mxu0 %v4930
        %7280 = vmatprep.subr.bf16.mxu0 %v5012
        %7281 = vmatpush1.bf16.msra.mxu0 %v5011
        %7282 = vmatprep.subr.bf16.mxu0 %v5093
        %7283 = vmatpush1.bf16.msra.mxu0 %v5092
        %7284 = vmatprep.subr.bf16.mxu0 %v5174
        %7285 = vmatpush1.bf16.msra.mxu0 %v5173
        %7286 = vmatprep.subr.bf16.mxu0 %v5255
        %7287 = vmatpush1.bf16.msra.mxu0 %v5254
        %7288 = vmatprep.subr.bf16.mxu0 %v5336
        %7289 = vmatpush1.bf16.msra.mxu0 %v5335
        %7290 = vmatprep.subr.bf16.mxu0 %v5417
        %7291 = vmatpush1.bf16.msra.mxu0 %v5416
        %7292 = vmatprep.subr.bf16.mxu0 %v5498
        %7293 = vmatpush1.bf16.msra.mxu0 %v5497
        %7294 = vmatprep.subr.bf16.mxu0 %v5579
        %7295 = vmatpush1.bf16.msra.mxu0 %v5578
        %7296 = vmatprep.subr.bf16.mxu0 %v5660
        %7297 = vmatpush1.bf16.msra.mxu0 %v5659
        %7298 = vmatprep.subr.bf16.mxu0 %v5741
        %7299 = vmatpush1.bf16.msra.mxu0 %v5740
        %7300 = vmatprep.subr.bf16.mxu0 %v5822
        %7301 = vmatpush1.bf16.msra.mxu0 %v5821
        %7302 = vmatprep.subr.bf16.mxu0 0
        %7303 = vmatpush1.bf16.msra.mxu0 0
        %7304 = vmatprep.subr.bf16.mxu0 0
        %7305 = vmatpush1.bf16.msra.mxu0 0
        %7306 = vmatprep.mubr.bf16.mxu0 %v7026
        %7307 = vmatmul.mubr.bf16.gmra.mrb[0].mxu0 %v1331
        %v7308 = vpop.f32.mrb[0].mxu0
        %v7309 = vadd.f32 0.0, %v7308
        %v7310 = vpop.f32.mrb[0].mxu0
        %v7311 = vadd.f32 0.0, %v7310
        %v7312 = vpop.f32.mrb[0].mxu0
        %v7313 = vpop.f32.mrb[0].mxu0
        %7314 = vdwg.mxu0
        %7315 = vmatprep.subr.bf16.mxu0 %v4771
        %7316 = vmatpush1.bf16.msra.mxu0 %v4770
        %7317 = vmatprep.subr.bf16.mxu0 %v4852
        %7318 = vmatpush1.bf16.msra.mxu0 %v4851
        %7319 = vmatprep.subr.bf16.mxu0 %v4933
        %7320 = vmatpush1.bf16.msra.mxu0 %v4932
        %7321 = vmatprep.subr.bf16.mxu0 %v5014
        %7322 = vmatpush1.bf16.msra.mxu0 %v5013
        %7323 = vmatprep.subr.bf16.mxu0 %v5095
        %7324 = vmatpush1.bf16.msra.mxu0 %v5094
        %7325 = vmatprep.subr.bf16.mxu0 %v5176
        %7326 = vmatpush1.bf16.msra.mxu0 %v5175
        %7327 = vmatprep.subr.bf16.mxu0 %v5257
        %7328 = vmatpush1.bf16.msra.mxu0 %v5256
        %7329 = vmatprep.subr.bf16.mxu0 %v5338
        %7330 = vmatpush1.bf16.msra.mxu0 %v5337
        %7331 = vmatprep.subr.bf16.mxu0 %v5419
        %7332 = vmatpush1.bf16.msra.mxu0 %v5418
        %7333 = vmatprep.subr.bf16.mxu0 %v5500
        %7334 = vmatpush1.bf16.msra.mxu0 %v5499
        %7335 = vmatprep.subr.bf16.mxu0 %v5581
        %7336 = vmatpush1.bf16.msra.mxu0 %v5580
        %7337 = vmatprep.subr.bf16.mxu0 %v5662
        %7338 = vmatpush1.bf16.msra.mxu0 %v5661
        %7339 = vmatprep.subr.bf16.mxu0 %v5743
        %7340 = vmatpush1.bf16.msra.mxu0 %v5742
        %7341 = vmatprep.subr.bf16.mxu0 %v5824
        %7342 = vmatpush1.bf16.msra.mxu0 %v5823
        %7343 = vmatprep.subr.bf16.mxu0 0
        %7344 = vmatpush1.bf16.msra.mxu0 0
        %7345 = vmatprep.subr.bf16.mxu0 0
        %7346 = vmatpush1.bf16.msra.mxu0 0
        %7347 = vmatprep.mubr.bf16.mxu0 %v7026
        %7348 = vmatmul.mubr.bf16.gmra.mrb[0].mxu0 %v1331
        %v7349 = vpop.f32.mrb[0].mxu0
        %v7350 = vadd.f32 0.0, %v7349
        %v7351 = vpop.f32.mrb[0].mxu0
        %v7352 = vadd.f32 0.0, %v7351
        %v7353 = vpop.f32.mrb[0].mxu0
        %v7354 = vpop.f32.mrb[0].mxu0
        %7355 = vdwg.mxu0
        %7356 = vmatprep.subr.bf16.mxu0 %v4773
        %7357 = vmatpush1.bf16.msra.mxu0 %v4772
        %7358 = vmatprep.subr.bf16.mxu0 %v4854
        %7359 = vmatpush1.bf16.msra.mxu0 %v4853
        %7360 = vmatprep.subr.bf16.mxu0 %v4935
        %7361 = vmatpush1.bf16.msra.mxu0 %v4934
        %7362 = vmatprep.subr.bf16.mxu0 %v5016
        %7363 = vmatpush1.bf16.msra.mxu0 %v5015
        %7364 = vmatprep.subr.bf16.mxu0 %v5097
        %7365 = vmatpush1.bf16.msra.mxu0 %v5096
        %7366 = vmatprep.subr.bf16.mxu0 %v5178
        %7367 = vmatpush1.bf16.msra.mxu0 %v5177
        %7368 = vmatprep.subr.bf16.mxu0 %v5259
        %7369 = vmatpush1.bf16.msra.mxu0 %v5258
        %7370 = vmatprep.subr.bf16.mxu0 %v5340
        %7371 = vmatpush1.bf16.msra.mxu0 %v5339
        %7372 = vmatprep.subr.bf16.mxu0 %v5421
        %7373 = vmatpush1.bf16.msra.mxu0 %v5420
        %7374 = vmatprep.subr.bf16.mxu0 %v5502
        %7375 = vmatpush1.bf16.msra.mxu0 %v5501
        %7376 = vmatprep.subr.bf16.mxu0 %v5583
        %7377 = vmatpush1.bf16.msra.mxu0 %v5582
        %7378 = vmatprep.subr.bf16.mxu0 %v5664
        %7379 = vmatpush1.bf16.msra.mxu0 %v5663
        %7380 = vmatprep.subr.bf16.mxu0 %v5745
        %7381 = vmatpush1.bf16.msra.mxu0 %v5744
        %7382 = vmatprep.subr.bf16.mxu0 %v5826
        %7383 = vmatpush1.bf16.msra.mxu0 %v5825
        %7384 = vmatprep.subr.bf16.mxu0 0
        %7385 = vmatpush1.bf16.msra.mxu0 0
        %7386 = vmatprep.subr.bf16.mxu0 0
        %7387 = vmatpush1.bf16.msra.mxu0 0
        %7388 = vmatprep.mubr.bf16.mxu0 %v7026
        %7389 = vmatmul.mubr.bf16.gmra.mrb[0].mxu0 %v1331
        %v7390 = vpop.f32.mrb[0].mxu0
        %v7391 = vadd.f32 0.0, %v7390
        %v7392 = vpop.f32.mrb[0].mxu0
        %v7393 = vadd.f32 0.0, %v7392
        %v7394 = vpop.f32.mrb[0].mxu0
        %v7395 = vpop.f32.mrb[0].mxu0
        %7396 = vdwg.mxu0
        %7397 = vmatprep.subr.bf16.mxu0 %v4775
        %7398 = vmatpush1.bf16.msra.mxu0 %v4774
        %7399 = vmatprep.subr.bf16.mxu0 %v4856
        %7400 = vmatpush1.bf16.msra.mxu0 %v4855
        %7401 = vmatprep.subr.bf16.mxu0 %v4937
        %7402 = vmatpush1.bf16.msra.mxu0 %v4936
        %7403 = vmatprep.subr.bf16.mxu0 %v5018
        %7404 = vmatpush1.bf16.msra.mxu0 %v5017
        %7405 = vmatprep.subr.bf16.mxu0 %v5099
        %7406 = vmatpush1.bf16.msra.mxu0 %v5098
        %7407 = vmatprep.subr.bf16.mxu0 %v5180
        %7408 = vmatpush1.bf16.msra.mxu0 %v5179
        %7409 = vmatprep.subr.bf16.mxu0 %v5261
        %7410 = vmatpush1.bf16.msra.mxu0 %v5260
        %7411 = vmatprep.subr.bf16.mxu0 %v5342
        %7412 = vmatpush1.bf16.msra.mxu0 %v5341
        %7413 = vmatprep.subr.bf16.mxu0 %v5423
        %7414 = vmatpush1.bf16.msra.mxu0 %v5422
        %7415 = vmatprep.subr.bf16.mxu0 %v5504
        %7416 = vmatpush1.bf16.msra.mxu0 %v5503
        %7417 = vmatprep.subr.bf16.mxu0 %v5585
        %7418 = vmatpush1.bf16.msra.mxu0 %v5584
        %7419 = vmatprep.subr.bf16.mxu0 %v5666
        %7420 = vmatpush1.bf16.msra.mxu0 %v5665
        %7421 = vmatprep.subr.bf16.mxu0 %v5747
        %7422 = vmatpush1.bf16.msra.mxu0 %v5746
        %7423 = vmatprep.subr.bf16.mxu0 %v5828
        %7424 = vmatpush1.bf16.msra.mxu0 %v5827
        %7425 = vmatprep.subr.bf16.mxu0 0
        %7426 = vmatpush1.bf16.msra.mxu0 0
        %7427 = vmatprep.subr.bf16.mxu0 0
        %7428 = vmatpush1.bf16.msra.mxu0 0
        %7429 = vmatprep.mubr.bf16.mxu0 %v7026
        %7430 = vmatmul.mubr.bf16.gmra.mrb[0].mxu0 %v1331
        %v7431 = vpop.f32.mrb[0].mxu0
        %v7432 = vadd.f32 0.0, %v7431
        %v7433 = vpop.f32.mrb[0].mxu0
        %v7434 = vadd.f32 0.0, %v7433
        %v7435 = vpop.f32.mrb[0].mxu0
        %v7436 = vpop.f32.mrb[0].mxu0
        %7437 = vdwg.mxu0
        %7438 = vmatprep.subr.bf16.mxu0 %v4777
        %7439 = vmatpush1.bf16.msra.mxu0 %v4776
        %7440 = vmatprep.subr.bf16.mxu0 %v4858
        %7441 = vmatpush1.bf16.msra.mxu0 %v4857
        %7442 = vmatprep.subr.bf16.mxu0 %v4939
        %7443 = vmatpush1.bf16.msra.mxu0 %v4938
        %7444 = vmatprep.subr.bf16.mxu0 %v5020
        %7445 = vmatpush1.bf16.msra.mxu0 %v5019
        %7446 = vmatprep.subr.bf16.mxu0 %v5101
        %7447 = vmatpush1.bf16.msra.mxu0 %v5100
        %7448 = vmatprep.subr.bf16.mxu0 %v5182
        %7449 = vmatpush1.bf16.msra.mxu0 %v5181
        %7450 = vmatprep.subr.bf16.mxu0 %v5263
        %7451 = vmatpush1.bf16.msra.mxu0 %v5262
        %7452 = vmatprep.subr.bf16.mxu0 %v5344
        %7453 = vmatpush1.bf16.msra.mxu0 %v5343
        %7454 = vmatprep.subr.bf16.mxu0 %v5425
        %7455 = vmatpush1.bf16.msra.mxu0 %v5424
        %7456 = vmatprep.subr.bf16.mxu0 %v5506
        %7457 = vmatpush1.bf16.msra.mxu0 %v5505
        %7458 = vmatprep.subr.bf16.mxu0 %v5587
        %7459 = vmatpush1.bf16.msra.mxu0 %v5586
        %7460 = vmatprep.subr.bf16.mxu0 %v5668
        %7461 = vmatpush1.bf16.msra.mxu0 %v5667
        %7462 = vmatprep.subr.bf16.mxu0 %v5749
        %7463 = vmatpush1.bf16.msra.mxu0 %v5748
        %7464 = vmatprep.subr.bf16.mxu0 %v5830
        %7465 = vmatpush1.bf16.msra.mxu0 %v5829
        %7466 = vmatprep.subr.bf16.mxu0 0
        %7467 = vmatpush1.bf16.msra.mxu0 0
        %7468 = vmatprep.subr.bf16.mxu0 0
        %7469 = vmatpush1.bf16.msra.mxu0 0
        %7470 = vmatprep.mubr.bf16.mxu0 %v7026
        %7471 = vmatmul.mubr.bf16.gmra.mrb[0].mxu0 %v1331
        %v7472 = vpop.f32.mrb[0].mxu0
        %v7473 = vadd.f32 0.0, %v7472
        %v7474 = vpop.f32.mrb[0].mxu0
        %v7475 = vadd.f32 0.0, %v7474
        %v7476 = vpop.f32.mrb[0].mxu0
        %v7477 = vpop.f32.mrb[0].mxu0
        %7478 = vdwg.mxu0
        %7479 = vmatprep.subr.bf16.mxu0 %v4779
        %7480 = vmatpush1.bf16.msra.mxu0 %v4778
        %7481 = vmatprep.subr.bf16.mxu0 %v4860
        %7482 = vmatpush1.bf16.msra.mxu0 %v4859
        %7483 = vmatprep.subr.bf16.mxu0 %v4941
        %7484 = vmatpush1.bf16.msra.mxu0 %v4940
        %7485 = vmatprep.subr.bf16.mxu0 %v5022
        %7486 = vmatpush1.bf16.msra.mxu0 %v5021
        %7487 = vmatprep.subr.bf16.mxu0 %v5103
        %7488 = vmatpush1.bf16.msra.mxu0 %v5102
        %7489 = vmatprep.subr.bf16.mxu0 %v5184
        %7490 = vmatpush1.bf16.msra.mxu0 %v5183
        %7491 = vmatprep.subr.bf16.mxu0 %v5265
        %7492 = vmatpush1.bf16.msra.mxu0 %v5264
        %7493 = vmatprep.subr.bf16.mxu0 %v5346
        %7494 = vmatpush1.bf16.msra.mxu0 %v5345
        %7495 = vmatprep.subr.bf16.mxu0 %v5427
        %7496 = vmatpush1.bf16.msra.mxu0 %v5426
        %7497 = vmatprep.subr.bf16.mxu0 %v5508
        %7498 = vmatpush1.bf16.msra.mxu0 %v5507
        %7499 = vmatprep.subr.bf16.mxu0 %v5589
        %7500 = vmatpush1.bf16.msra.mxu0 %v5588
        %7501 = vmatprep.subr.bf16.mxu0 %v5670
        %7502 = vmatpush1.bf16.msra.mxu0 %v5669
        %7503 = vmatprep.subr.bf16.mxu0 %v5751
        %7504 = vmatpush1.bf16.msra.mxu0 %v5750
        %7505 = vmatprep.subr.bf16.mxu0 %v5832
        %7506 = vmatpush1.bf16.msra.mxu0 %v5831
        %7507 = vmatprep.subr.bf16.mxu0 0
        %7508 = vmatpush1.bf16.msra.mxu0 0
        %7509 = vmatprep.subr.bf16.mxu0 0
        %7510 = vmatpush1.bf16.msra.mxu0 0
        %7511 = vmatprep.mubr.bf16.mxu0 %v7026
        %7512 = vmatmul.mubr.bf16.gmra.mrb[0].mxu0 %v1331
        %v7513 = vpop.f32.mrb[0].mxu0
        %v7514 = vadd.f32 0.0, %v7513
        %v7515 = vpop.f32.mrb[0].mxu0
        %v7516 = vadd.f32 0.0, %v7515
        %v7517 = vpop.f32.mrb[0].mxu0
        %v7518 = vpop.f32.mrb[0].mxu0
        %7519 = vdwg.mxu0
        %7520 = vmatprep.subr.bf16.mxu0 %v4781
        %7521 = vmatpush1.bf16.msra.mxu0 %v4780
        %7522 = vmatprep.subr.bf16.mxu0 %v4862
        %7523 = vmatpush1.bf16.msra.mxu0 %v4861
        %7524 = vmatprep.subr.bf16.mxu0 %v4943
        %7525 = vmatpush1.bf16.msra.mxu0 %v4942
        %7526 = vmatprep.subr.bf16.mxu0 %v5024
        %7527 = vmatpush1.bf16.msra.mxu0 %v5023
        %7528 = vmatprep.subr.bf16.mxu0 %v5105
        %7529 = vmatpush1.bf16.msra.mxu0 %v5104
        %7530 = vmatprep.subr.bf16.mxu0 %v5186
        %7531 = vmatpush1.bf16.msra.mxu0 %v5185
        %7532 = vmatprep.subr.bf16.mxu0 %v5267
        %7533 = vmatpush1.bf16.msra.mxu0 %v5266
        %7534 = vmatprep.subr.bf16.mxu0 %v5348
        %7535 = vmatpush1.bf16.msra.mxu0 %v5347
        %7536 = vmatprep.subr.bf16.mxu0 %v5429
        %7537 = vmatpush1.bf16.msra.mxu0 %v5428
        %7538 = vmatprep.subr.bf16.mxu0 %v5510
        %7539 = vmatpush1.bf16.msra.mxu0 %v5509
        %7540 = vmatprep.subr.bf16.mxu0 %v5591
        %7541 = vmatpush1.bf16.msra.mxu0 %v5590
        %7542 = vmatprep.subr.bf16.mxu0 %v5672
        %7543 = vmatpush1.bf16.msra.mxu0 %v5671
        %7544 = vmatprep.subr.bf16.mxu0 %v5753
        %7545 = vmatpush1.bf16.msra.mxu0 %v5752
        %7546 = vmatprep.subr.bf16.mxu0 %v5834
        %7547 = vmatpush1.bf16.msra.mxu0 %v5833
        %7548 = vmatprep.subr.bf16.mxu0 0
        %7549 = vmatpush1.bf16.msra.mxu0 0
        %7550 = vmatprep.subr.bf16.mxu0 0
        %7551 = vmatpush1.bf16.msra.mxu0 0
        %7552 = vmatprep.mubr.bf16.mxu0 %v7026
        %7553 = vmatmul.mubr.bf16.gmra.mrb[0].mxu0 %v1331
        %v7554 = vpop.f32.mrb[0].mxu0
        %v7555 = vadd.f32 0.0, %v7554
        %v7556 = vpop.f32.mrb[0].mxu0
        %v7557 = vadd.f32 0.0, %v7556
        %v7558 = vpop.f32.mrb[0].mxu0
        %v7559 = vpop.f32.mrb[0].mxu0
        %7560 = vdwg.mxu0
        %7561 = vmatprep.subr.bf16.mxu0 %v4783
        %7562 = vmatpush1.bf16.msra.mxu0 %v4782
        %7563 = vmatprep.subr.bf16.mxu0 %v4864
        %7564 = vmatpush1.bf16.msra.mxu0 %v4863
        %7565 = vmatprep.subr.bf16.mxu0 %v4945
        %7566 = vmatpush1.bf16.msra.mxu0 %v4944
        %7567 = vmatprep.subr.bf16.mxu0 %v5026
        %7568 = vmatpush1.bf16.msra.mxu0 %v5025
        %7569 = vmatprep.subr.bf16.mxu0 %v5107
        %7570 = vmatpush1.bf16.msra.mxu0 %v5106
        %7571 = vmatprep.subr.bf16.mxu0 %v5188
        %7572 = vmatpush1.bf16.msra.mxu0 %v5187
        %7573 = vmatprep.subr.bf16.mxu0 %v5269
        %7574 = vmatpush1.bf16.msra.mxu0 %v5268
        %7575 = vmatprep.subr.bf16.mxu0 %v5350
        %7576 = vmatpush1.bf16.msra.mxu0 %v5349
        %7577 = vmatprep.subr.bf16.mxu0 %v5431
        %7578 = vmatpush1.bf16.msra.mxu0 %v5430
        %7579 = vmatprep.subr.bf16.mxu0 %v5512
        %7580 = vmatpush1.bf16.msra.mxu0 %v5511
        %7581 = vmatprep.subr.bf16.mxu0 %v5593
        %7582 = vmatpush1.bf16.msra.mxu0 %v5592
        %7583 = vmatprep.subr.bf16.mxu0 %v5674
        %7584 = vmatpush1.bf16.msra.mxu0 %v5673
        %7585 = vmatprep.subr.bf16.mxu0 %v5755
        %7586 = vmatpush1.bf16.msra.mxu0 %v5754
        %7587 = vmatprep.subr.bf16.mxu0 %v5836
        %7588 = vmatpush1.bf16.msra.mxu0 %v5835
        %7589 = vmatprep.subr.bf16.mxu0 0
        %7590 = vmatpush1.bf16.msra.mxu0 0
        %7591 = vmatprep.subr.bf16.mxu0 0
        %7592 = vmatpush1.bf16.msra.mxu0 0
        %7593 = vmatprep.mubr.bf16.mxu0 %v7026
        %7594 = vmatmul.mubr.bf16.gmra.mrb[0].mxu0 %v1331
        %v7595 = vpop.f32.mrb[0].mxu0
        %v7596 = vadd.f32 0.0, %v7595
        %v7597 = vpop.f32.mrb[0].mxu0
        %v7598 = vadd.f32 0.0, %v7597
        %v7599 = vpop.f32.mrb[0].mxu0
        %v7600 = vpop.f32.mrb[0].mxu0
        %7601 = vdwg.mxu0
        %7602 = vmatprep.subr.bf16.mxu0 %v4785
        %7603 = vmatpush1.bf16.msra.mxu0 %v4784
        %7604 = vmatprep.subr.bf16.mxu0 %v4866
        %7605 = vmatpush1.bf16.msra.mxu0 %v4865
        %7606 = vmatprep.subr.bf16.mxu0 %v4947
        %7607 = vmatpush1.bf16.msra.mxu0 %v4946
        %7608 = vmatprep.subr.bf16.mxu0 %v5028
        %7609 = vmatpush1.bf16.msra.mxu0 %v5027
        %7610 = vmatprep.subr.bf16.mxu0 %v5109
        %7611 = vmatpush1.bf16.msra.mxu0 %v5108
        %7612 = vmatprep.subr.bf16.mxu0 %v5190
        %7613 = vmatpush1.bf16.msra.mxu0 %v5189
        %7614 = vmatprep.subr.bf16.mxu0 %v5271
        %7615 = vmatpush1.bf16.msra.mxu0 %v5270
        %7616 = vmatprep.subr.bf16.mxu0 %v5352
        %7617 = vmatpush1.bf16.msra.mxu0 %v5351
        %7618 = vmatprep.subr.bf16.mxu0 %v5433
        %7619 = vmatpush1.bf16.msra.mxu0 %v5432
        %7620 = vmatprep.subr.bf16.mxu0 %v5514
        %7621 = vmatpush1.bf16.msra.mxu0 %v5513
        %7622 = vmatprep.subr.bf16.mxu0 %v5595
        %7623 = vmatpush1.bf16.msra.mxu0 %v5594
        %7624 = vmatprep.subr.bf16.mxu0 %v5676
        %7625 = vmatpush1.bf16.msra.mxu0 %v5675
        %7626 = vmatprep.subr.bf16.mxu0 %v5757
        %7627 = vmatpush1.bf16.msra.mxu0 %v5756
        %7628 = vmatprep.subr.bf16.mxu0 %v5838
        %7629 = vmatpush1.bf16.msra.mxu0 %v5837
        %7630 = vmatprep.subr.bf16.mxu0 0
        %7631 = vmatpush1.bf16.msra.mxu0 0
        %7632 = vmatprep.subr.bf16.mxu0 0
        %7633 = vmatpush1.bf16.msra.mxu0 0
        %7634 = vmatprep.mubr.bf16.mxu0 %v7026
        %7635 = vmatmul.mubr.bf16.gmra.mrb[0].mxu0 %v1331
        %v7636 = vpop.f32.mrb[0].mxu0
        %v7637 = vadd.f32 0.0, %v7636
        %v7638 = vpop.f32.mrb[0].mxu0
        %v7639 = vadd.f32 0.0, %v7638
        %v7640 = vpop.f32.mrb[0].mxu0
        %v7641 = vpop.f32.mrb[0].mxu0
        %7642 = vdwg.mxu0
        %7643 = vmatprep.subr.bf16.mxu0 %v4787
        %7644 = vmatpush1.bf16.msra.mxu0 %v4786
        %7645 = vmatprep.subr.bf16.mxu0 %v4868
        %7646 = vmatpush1.bf16.msra.mxu0 %v4867
        %7647 = vmatprep.subr.bf16.mxu0 %v4949
        %7648 = vmatpush1.bf16.msra.mxu0 %v4948
        %7649 = vmatprep.subr.bf16.mxu0 %v5030
        %7650 = vmatpush1.bf16.msra.mxu0 %v5029
        %7651 = vmatprep.subr.bf16.mxu0 %v5111
        %7652 = vmatpush1.bf16.msra.mxu0 %v5110
        %7653 = vmatprep.subr.bf16.mxu0 %v5192
        %7654 = vmatpush1.bf16.msra.mxu0 %v5191
        %7655 = vmatprep.subr.bf16.mxu0 %v5273
        %7656 = vmatpush1.bf16.msra.mxu0 %v5272
        %7657 = vmatprep.subr.bf16.mxu0 %v5354
        %7658 = vmatpush1.bf16.msra.mxu0 %v5353
        %7659 = vmatprep.subr.bf16.mxu0 %v5435
        %7660 = vmatpush1.bf16.msra.mxu0 %v5434
        %7661 = vmatprep.subr.bf16.mxu0 %v5516
        %7662 = vmatpush1.bf16.msra.mxu0 %v5515
        %7663 = vmatprep.subr.bf16.mxu0 %v5597
        %7664 = vmatpush1.bf16.msra.mxu0 %v5596
        %7665 = vmatprep.subr.bf16.mxu0 %v5678
        %7666 = vmatpush1.bf16.msra.mxu0 %v5677
        %7667 = vmatprep.subr.bf16.mxu0 %v5759
        %7668 = vmatpush1.bf16.msra.mxu0 %v5758
        %7669 = vmatprep.subr.bf16.mxu0 %v5840
        %7670 = vmatpush1.bf16.msra.mxu0 %v5839
        %7671 = vmatprep.subr.bf16.mxu0 0
        %7672 = vmatpush1.bf16.msra.mxu0 0
        %7673 = vmatprep.subr.bf16.mxu0 0
        %7674 = vmatpush1.bf16.msra.mxu0 0
        %7675 = vmatprep.mubr.bf16.mxu0 %v7026
        %7676 = vmatmul.mubr.bf16.gmra.mrb[0].mxu0 %v1331
        %v7677 = vpop.f32.mrb[0].mxu0
        %v7678 = vadd.f32 0.0, %v7677
        %v7679 = vpop.f32.mrb[0].mxu0
        %v7680 = vadd.f32 0.0, %v7679
        %v7681 = vpop.f32.mrb[0].mxu0
        %v7682 = vpop.f32.mrb[0].mxu0
        %7683 = vdwg.mxu0
        %7684 = vmatprep.subr.bf16.mxu0 %v4789
        %7685 = vmatpush1.bf16.msra.mxu0 %v4788
        %7686 = vmatprep.subr.bf16.mxu0 %v4870
        %7687 = vmatpush1.bf16.msra.mxu0 %v4869
        %7688 = vmatprep.subr.bf16.mxu0 %v4951
        %7689 = vmatpush1.bf16.msra.mxu0 %v4950
        %7690 = vmatprep.subr.bf16.mxu0 %v5032
        %7691 = vmatpush1.bf16.msra.mxu0 %v5031
        %7692 = vmatprep.subr.bf16.mxu0 %v5113
        %7693 = vmatpush1.bf16.msra.mxu0 %v5112
        %7694 = vmatprep.subr.bf16.mxu0 %v5194
        %7695 = vmatpush1.bf16.msra.mxu0 %v5193
        %7696 = vmatprep.subr.bf16.mxu0 %v5275
        %7697 = vmatpush1.bf16.msra.mxu0 %v5274
        %7698 = vmatprep.subr.bf16.mxu0 %v5356
        %7699 = vmatpush1.bf16.msra.mxu0 %v5355
        %7700 = vmatprep.subr.bf16.mxu0 %v5437
        %7701 = vmatpush1.bf16.msra.mxu0 %v5436
        %7702 = vmatprep.subr.bf16.mxu0 %v5518
        %7703 = vmatpush1.bf16.msra.mxu0 %v5517
        %7704 = vmatprep.subr.bf16.mxu0 %v5599
        %7705 = vmatpush1.bf16.msra.mxu0 %v5598
        %7706 = vmatprep.subr.bf16.mxu0 %v5680
        %7707 = vmatpush1.bf16.msra.mxu0 %v5679
        %7708 = vmatprep.subr.bf16.mxu0 %v5761
        %7709 = vmatpush1.bf16.msra.mxu0 %v5760
        %7710 = vmatprep.subr.bf16.mxu0 %v5842
        %7711 = vmatpush1.bf16.msra.mxu0 %v5841
        %7712 = vmatprep.subr.bf16.mxu0 0
        %7713 = vmatpush1.bf16.msra.mxu0 0
        %7714 = vmatprep.subr.bf16.mxu0 0
        %7715 = vmatpush1.bf16.msra.mxu0 0
        %7716 = vmatprep.mubr.bf16.mxu0 %v7026
        %7717 = vmatmul.mubr.bf16.gmra.mrb[0].mxu0 %v1331
        %v7718 = vpop.f32.mrb[0].mxu0
        %v7719 = vadd.f32 0.0, %v7718
        %v7720 = vpop.f32.mrb[0].mxu0
        %v7721 = vadd.f32 0.0, %v7720
        %v7722 = vpop.f32.mrb[0].mxu0
        %v7723 = vpop.f32.mrb[0].mxu0
        %7724 = vdwg.mxu0
        %7725 = vmatprep.subr.bf16.mxu0 %v4791
        %7726 = vmatpush1.bf16.msra.mxu0 %v4790
        %7727 = vmatprep.subr.bf16.mxu0 %v4872
        %7728 = vmatpush1.bf16.msra.mxu0 %v4871
        %7729 = vmatprep.subr.bf16.mxu0 %v4953
        %7730 = vmatpush1.bf16.msra.mxu0 %v4952
        %7731 = vmatprep.subr.bf16.mxu0 %v5034
        %7732 = vmatpush1.bf16.msra.mxu0 %v5033
        %7733 = vmatprep.subr.bf16.mxu0 %v5115
        %7734 = vmatpush1.bf16.msra.mxu0 %v5114
        %7735 = vmatprep.subr.bf16.mxu0 %v5196
        %7736 = vmatpush1.bf16.msra.mxu0 %v5195
        %7737 = vmatprep.subr.bf16.mxu0 %v5277
        %7738 = vmatpush1.bf16.msra.mxu0 %v5276
        %7739 = vmatprep.subr.bf16.mxu0 %v5358
        %7740 = vmatpush1.bf16.msra.mxu0 %v5357
        %7741 = vmatprep.subr.bf16.mxu0 %v5439
        %7742 = vmatpush1.bf16.msra.mxu0 %v5438
        %7743 = vmatprep.subr.bf16.mxu0 %v5520
        %7744 = vmatpush1.bf16.msra.mxu0 %v5519
        %7745 = vmatprep.subr.bf16.mxu0 %v5601
        %7746 = vmatpush1.bf16.msra.mxu0 %v5600
        %7747 = vmatprep.subr.bf16.mxu0 %v5682
        %7748 = vmatpush1.bf16.msra.mxu0 %v5681
        %7749 = vmatprep.subr.bf16.mxu0 %v5763
        %7750 = vmatpush1.bf16.msra.mxu0 %v5762
        %7751 = vmatprep.subr.bf16.mxu0 %v5844
        %7752 = vmatpush1.bf16.msra.mxu0 %v5843
        %7753 = vmatprep.subr.bf16.mxu0 0
        %7754 = vmatpush1.bf16.msra.mxu0 0
        %7755 = vmatprep.subr.bf16.mxu0 0
        %7756 = vmatpush1.bf16.msra.mxu0 0
        %7757 = vmatprep.mubr.bf16.mxu0 %v7026
        %7758 = vmatmul.mubr.bf16.gmra.mrb[0].mxu0 %v1331
        %v7759 = vpop.f32.mrb[0].mxu0
        %v7760 = vadd.f32 0.0, %v7759
        %v7761 = vpop.f32.mrb[0].mxu0
        %v7762 = vadd.f32 0.0, %v7761
        %v7763 = vpop.f32.mrb[0].mxu0
        %v7764 = vpop.f32.mrb[0].mxu0
        %7765 = vdwg.mxu0
        %7766 = vmatprep.subr.bf16.mxu0 %v4793
        %7767 = vmatpush1.bf16.msra.mxu0 %v4792
        %7768 = vmatprep.subr.bf16.mxu0 %v4874
        %7769 = vmatpush1.bf16.msra.mxu0 %v4873
        %7770 = vmatprep.subr.bf16.mxu0 %v4955
        %7771 = vmatpush1.bf16.msra.mxu0 %v4954
        %7772 = vmatprep.subr.bf16.mxu0 %v5036
        %7773 = vmatpush1.bf16.msra.mxu0 %v5035
        %7774 = vmatprep.subr.bf16.mxu0 %v5117
        %7775 = vmatpush1.bf16.msra.mxu0 %v5116
        %7776 = vmatprep.subr.bf16.mxu0 %v5198
        %7777 = vmatpush1.bf16.msra.mxu0 %v5197
        %7778 = vmatprep.subr.bf16.mxu0 %v5279
        %7779 = vmatpush1.bf16.msra.mxu0 %v5278
        %7780 = vmatprep.subr.bf16.mxu0 %v5360
        %7781 = vmatpush1.bf16.msra.mxu0 %v5359
        %7782 = vmatprep.subr.bf16.mxu0 %v5441
        %7783 = vmatpush1.bf16.msra.mxu0 %v5440
        %7784 = vmatprep.subr.bf16.mxu0 %v5522
        %7785 = vmatpush1.bf16.msra.mxu0 %v5521
        %7786 = vmatprep.subr.bf16.mxu0 %v5603
        %7787 = vmatpush1.bf16.msra.mxu0 %v5602
        %7788 = vmatprep.subr.bf16.mxu0 %v5684
        %7789 = vmatpush1.bf16.msra.mxu0 %v5683
        %7790 = vmatprep.subr.bf16.mxu0 %v5765
        %7791 = vmatpush1.bf16.msra.mxu0 %v5764
        %7792 = vmatprep.subr.bf16.mxu0 %v5846
        %7793 = vmatpush1.bf16.msra.mxu0 %v5845
        %7794 = vmatprep.subr.bf16.mxu0 0
        %7795 = vmatpush1.bf16.msra.mxu0 0
        %7796 = vmatprep.subr.bf16.mxu0 0
        %7797 = vmatpush1.bf16.msra.mxu0 0
        %7798 = vmatprep.mubr.bf16.mxu0 %v7026
        %7799 = vmatmul.mubr.bf16.gmra.mrb[0].mxu0 %v1331
        %v7800 = vpop.f32.mrb[0].mxu0
        %v7801 = vadd.f32 0.0, %v7800
        %v7802 = vpop.f32.mrb[0].mxu0
        %v7803 = vadd.f32 0.0, %v7802
        %v7804 = vpop.f32.mrb[0].mxu0
        %v7805 = vpop.f32.mrb[0].mxu0
        %7806 = vdwg.mxu0
        %7807 = vmatprep.subr.bf16.mxu0 %v4795
        %7808 = vmatpush1.bf16.msra.mxu0 %v4794
        %7809 = vmatprep.subr.bf16.mxu0 %v4876
        %7810 = vmatpush1.bf16.msra.mxu0 %v4875
        %7811 = vmatprep.subr.bf16.mxu0 %v4957
        %7812 = vmatpush1.bf16.msra.mxu0 %v4956
        %7813 = vmatprep.subr.bf16.mxu0 %v5038
        %7814 = vmatpush1.bf16.msra.mxu0 %v5037
        %7815 = vmatprep.subr.bf16.mxu0 %v5119
        %7816 = vmatpush1.bf16.msra.mxu0 %v5118
        %7817 = vmatprep.subr.bf16.mxu0 %v5200
        %7818 = vmatpush1.bf16.msra.mxu0 %v5199
        %7819 = vmatprep.subr.bf16.mxu0 %v5281
        %7820 = vmatpush1.bf16.msra.mxu0 %v5280
        %7821 = vmatprep.subr.bf16.mxu0 %v5362
        %7822 = vmatpush1.bf16.msra.mxu0 %v5361
        %7823 = vmatprep.subr.bf16.mxu0 %v5443
        %7824 = vmatpush1.bf16.msra.mxu0 %v5442
        %7825 = vmatprep.subr.bf16.mxu0 %v5524
        %7826 = vmatpush1.bf16.msra.mxu0 %v5523
        %7827 = vmatprep.subr.bf16.mxu0 %v5605
        %7828 = vmatpush1.bf16.msra.mxu0 %v5604
        %7829 = vmatprep.subr.bf16.mxu0 %v5686
        %7830 = vmatpush1.bf16.msra.mxu0 %v5685
        %7831 = vmatprep.subr.bf16.mxu0 %v5767
        %7832 = vmatpush1.bf16.msra.mxu0 %v5766
        %7833 = vmatprep.subr.bf16.mxu0 %v5848
        %7834 = vmatpush1.bf16.msra.mxu0 %v5847
        %7835 = vmatprep.subr.bf16.mxu0 0
        %7836 = vmatpush1.bf16.msra.mxu0 0
        %7837 = vmatprep.subr.bf16.mxu0 0
        %7838 = vmatpush1.bf16.msra.mxu0 0
        %7839 = vmatprep.mubr.bf16.mxu0 %v7026
        %7840 = vmatmul.mubr.bf16.gmra.mrb[0].mxu0 %v1331
        %v7841 = vpop.f32.mrb[0].mxu0
        %v7842 = vadd.f32 0.0, %v7841
        %v7843 = vpop.f32.mrb[0].mxu0
        %v7844 = vadd.f32 0.0, %v7843
        %v7845 = vpop.f32.mrb[0].mxu0
        %v7846 = vpop.f32.mrb[0].mxu0
        %7847 = vdwg.mxu0
        %7848 = vmatprep.subr.bf16.mxu0 %v4797
        %7849 = vmatpush1.bf16.msra.mxu0 %v4796
        %7850 = vmatprep.subr.bf16.mxu0 %v4878
        %7851 = vmatpush1.bf16.msra.mxu0 %v4877
        %7852 = vmatprep.subr.bf16.mxu0 %v4959
        %7853 = vmatpush1.bf16.msra.mxu0 %v4958
        %7854 = vmatprep.subr.bf16.mxu0 %v5040
        %7855 = vmatpush1.bf16.msra.mxu0 %v5039
        %7856 = vmatprep.subr.bf16.mxu0 %v5121
        %7857 = vmatpush1.bf16.msra.mxu0 %v5120
        %7858 = vmatprep.subr.bf16.mxu0 %v5202
        %7859 = vmatpush1.bf16.msra.mxu0 %v5201
        %7860 = vmatprep.subr.bf16.mxu0 %v5283
        %7861 = vmatpush1.bf16.msra.mxu0 %v5282
        %7862 = vmatprep.subr.bf16.mxu0 %v5364
        %7863 = vmatpush1.bf16.msra.mxu0 %v5363
        %7864 = vmatprep.subr.bf16.mxu0 %v5445
        %7865 = vmatpush1.bf16.msra.mxu0 %v5444
        %7866 = vmatprep.subr.bf16.mxu0 %v5526
        %7867 = vmatpush1.bf16.msra.mxu0 %v5525
        %7868 = vmatprep.subr.bf16.mxu0 %v5607
        %7869 = vmatpush1.bf16.msra.mxu0 %v5606
        %7870 = vmatprep.subr.bf16.mxu0 %v5688
        %7871 = vmatpush1.bf16.msra.mxu0 %v5687
        %7872 = vmatprep.subr.bf16.mxu0 %v5769
        %7873 = vmatpush1.bf16.msra.mxu0 %v5768
        %7874 = vmatprep.subr.bf16.mxu0 %v5850
        %7875 = vmatpush1.bf16.msra.mxu0 %v5849
        %7876 = vmatprep.subr.bf16.mxu0 0
        %7877 = vmatpush1.bf16.msra.mxu0 0
        %7878 = vmatprep.subr.bf16.mxu0 0
        %7879 = vmatpush1.bf16.msra.mxu0 0
        %7880 = vmatprep.mubr.bf16.mxu0 %v7026
        %7881 = vmatmul.mubr.bf16.gmra.mrb[0].mxu0 %v1331
        %v7882 = vpop.f32.mrb[0].mxu0
        %v7883 = vadd.f32 0.0, %v7882
        %v7884 = vpop.f32.mrb[0].mxu0
        %v7885 = vadd.f32 0.0, %v7884
        %v7886 = vpop.f32.mrb[0].mxu0
        %v7887 = vpop.f32.mrb[0].mxu0
        %7888 = vdwg.mxu0
        %7889 = vmatprep.subr.bf16.mxu0 %v4799
        %7890 = vmatpush1.bf16.msra.mxu0 %v4798
        %7891 = vmatprep.subr.bf16.mxu0 %v4880
        %7892 = vmatpush1.bf16.msra.mxu0 %v4879
        %7893 = vmatprep.subr.bf16.mxu0 %v4961
        %7894 = vmatpush1.bf16.msra.mxu0 %v4960
        %7895 = vmatprep.subr.bf16.mxu0 %v5042
        %7896 = vmatpush1.bf16.msra.mxu0 %v5041
        %7897 = vmatprep.subr.bf16.mxu0 %v5123
        %7898 = vmatpush1.bf16.msra.mxu0 %v5122
        %7899 = vmatprep.subr.bf16.mxu0 %v5204
        %7900 = vmatpush1.bf16.msra.mxu0 %v5203
        %7901 = vmatprep.subr.bf16.mxu0 %v5285
        %7902 = vmatpush1.bf16.msra.mxu0 %v5284
        %7903 = vmatprep.subr.bf16.mxu0 %v5366
        %7904 = vmatpush1.bf16.msra.mxu0 %v5365
        %7905 = vmatprep.subr.bf16.mxu0 %v5447
        %7906 = vmatpush1.bf16.msra.mxu0 %v5446
        %7907 = vmatprep.subr.bf16.mxu0 %v5528
        %7908 = vmatpush1.bf16.msra.mxu0 %v5527
        %7909 = vmatprep.subr.bf16.mxu0 %v5609
        %7910 = vmatpush1.bf16.msra.mxu0 %v5608
        %7911 = vmatprep.subr.bf16.mxu0 %v5690
        %7912 = vmatpush1.bf16.msra.mxu0 %v5689
        %7913 = vmatprep.subr.bf16.mxu0 %v5771
        %7914 = vmatpush1.bf16.msra.mxu0 %v5770
        %7915 = vmatprep.subr.bf16.mxu0 %v5852
        %7916 = vmatpush1.bf16.msra.mxu0 %v5851
        %7917 = vmatprep.subr.bf16.mxu0 0
        %7918 = vmatpush1.bf16.msra.mxu0 0
        %7919 = vmatprep.subr.bf16.mxu0 0
        %7920 = vmatpush1.bf16.msra.mxu0 0
        %7921 = vmatprep.mubr.bf16.mxu0 %v7026
        %7922 = vmatmul.mubr.bf16.gmra.mrb[0].mxu0 %v1331
        %v7923 = vpop.f32.mrb[0].mxu0
        %v7924 = vadd.f32 0.0, %v7923
        %v7925 = vpop.f32.mrb[0].mxu0
        %v7926 = vadd.f32 0.0, %v7925
        %v7927 = vpop.f32.mrb[0].mxu0
        %v7928 = vpop.f32.mrb[0].mxu0
        %7929 = vdwg.mxu0
        %7930 = vmatprep.subr.bf16.mxu0 %v4801
        %7931 = vmatpush1.bf16.msra.mxu0 %v4800
        %7932 = vmatprep.subr.bf16.mxu0 %v4882
        %7933 = vmatpush1.bf16.msra.mxu0 %v4881
        %7934 = vmatprep.subr.bf16.mxu0 %v4963
        %7935 = vmatpush1.bf16.msra.mxu0 %v4962
        %7936 = vmatprep.subr.bf16.mxu0 %v5044
        %7937 = vmatpush1.bf16.msra.mxu0 %v5043
        %7938 = vmatprep.subr.bf16.mxu0 %v5125
        %7939 = vmatpush1.bf16.msra.mxu0 %v5124
        %7940 = vmatprep.subr.bf16.mxu0 %v5206
        %7941 = vmatpush1.bf16.msra.mxu0 %v5205
        %7942 = vmatprep.subr.bf16.mxu0 %v5287
        %7943 = vmatpush1.bf16.msra.mxu0 %v5286
        %7944 = vmatprep.subr.bf16.mxu0 %v5368
        %7945 = vmatpush1.bf16.msra.mxu0 %v5367
        %7946 = vmatprep.subr.bf16.mxu0 %v5449
        %7947 = vmatpush1.bf16.msra.mxu0 %v5448
        %7948 = vmatprep.subr.bf16.mxu0 %v5530
        %7949 = vmatpush1.bf16.msra.mxu0 %v5529
        %7950 = vmatprep.subr.bf16.mxu0 %v5611
        %7951 = vmatpush1.bf16.msra.mxu0 %v5610
        %7952 = vmatprep.subr.bf16.mxu0 %v5692
        %7953 = vmatpush1.bf16.msra.mxu0 %v5691
        %7954 = vmatprep.subr.bf16.mxu0 %v5773
        %7955 = vmatpush1.bf16.msra.mxu0 %v5772
        %7956 = vmatprep.subr.bf16.mxu0 %v5854
        %7957 = vmatpush1.bf16.msra.mxu0 %v5853
        %7958 = vmatprep.subr.bf16.mxu0 0
        %7959 = vmatpush1.bf16.msra.mxu0 0
        %7960 = vmatprep.subr.bf16.mxu0 0
        %7961 = vmatpush1.bf16.msra.mxu0 0
        %7962 = vmatprep.mubr.bf16.mxu0 %v7026
        %7963 = vmatmul.mubr.bf16.gmra.mrb[0].mxu0 %v1331
        %v7964 = vpop.f32.mrb[0].mxu0
        %v7965 = vadd.f32 0.0, %v7964
        %v7966 = vpop.f32.mrb[0].mxu0
        %v7967 = vadd.f32 0.0, %v7966
        %v7968 = vpop.f32.mrb[0].mxu0
        %v7969 = vpop.f32.mrb[0].mxu0
        %7970 = vdwg.mxu0
        %7971 = vmatprep.subr.bf16.mxu0 %v4803
        %7972 = vmatpush1.bf16.msra.mxu0 %v4802
        %7973 = vmatprep.subr.bf16.mxu0 %v4884
        %7974 = vmatpush1.bf16.msra.mxu0 %v4883
        %7975 = vmatprep.subr.bf16.mxu0 %v4965
        %7976 = vmatpush1.bf16.msra.mxu0 %v4964
        %7977 = vmatprep.subr.bf16.mxu0 %v5046
        %7978 = vmatpush1.bf16.msra.mxu0 %v5045
        %7979 = vmatprep.subr.bf16.mxu0 %v5127
        %7980 = vmatpush1.bf16.msra.mxu0 %v5126
        %7981 = vmatprep.subr.bf16.mxu0 %v5208
        %7982 = vmatpush1.bf16.msra.mxu0 %v5207
        %7983 = vmatprep.subr.bf16.mxu0 %v5289
        %7984 = vmatpush1.bf16.msra.mxu0 %v5288
        %7985 = vmatprep.subr.bf16.mxu0 %v5370
        %7986 = vmatpush1.bf16.msra.mxu0 %v5369
        %7987 = vmatprep.subr.bf16.mxu0 %v5451
        %7988 = vmatpush1.bf16.msra.mxu0 %v5450
        %7989 = vmatprep.subr.bf16.mxu0 %v5532
        %7990 = vmatpush1.bf16.msra.mxu0 %v5531
        %7991 = vmatprep.subr.bf16.mxu0 %v5613
        %7992 = vmatpush1.bf16.msra.mxu0 %v5612
        %7993 = vmatprep.subr.bf16.mxu0 %v5694
        %7994 = vmatpush1.bf16.msra.mxu0 %v5693
        %7995 = vmatprep.subr.bf16.mxu0 %v5775
        %7996 = vmatpush1.bf16.msra.mxu0 %v5774
        %7997 = vmatprep.subr.bf16.mxu0 %v5856
        %7998 = vmatpush1.bf16.msra.mxu0 %v5855
        %7999 = vmatprep.subr.bf16.mxu0 0
        %8000 = vmatpush1.bf16.msra.mxu0 0
        %8001 = vmatprep.subr.bf16.mxu0 0
        %8002 = vmatpush1.bf16.msra.mxu0 0
        %8003 = vmatprep.mubr.bf16.mxu0 %v7026
        %8004 = vmatmul.mubr.bf16.gmra.mrb[0].mxu0 %v1331
        %v8005 = vpop.f32.mrb[0].mxu0
        %v8006 = vadd.f32 0.0, %v8005
        %v8007 = vpop.f32.mrb[0].mxu0
        %v8008 = vadd.f32 0.0, %v8007
        %v8009 = vpop.f32.mrb[0].mxu0
        %v8010 = vpop.f32.mrb[0].mxu0
        %8011 = vdwg.mxu0
        %8012 = vmatprep.subr.bf16.mxu0 %v4805
        %8013 = vmatpush1.bf16.msra.mxu0 %v4804
        %8014 = vmatprep.subr.bf16.mxu0 %v4886
        %8015 = vmatpush1.bf16.msra.mxu0 %v4885
        %8016 = vmatprep.subr.bf16.mxu0 %v4967
        %8017 = vmatpush1.bf16.msra.mxu0 %v4966
        %8018 = vmatprep.subr.bf16.mxu0 %v5048
        %8019 = vmatpush1.bf16.msra.mxu0 %v5047
        %8020 = vmatprep.subr.bf16.mxu0 %v5129
        %8021 = vmatpush1.bf16.msra.mxu0 %v5128
        %8022 = vmatprep.subr.bf16.mxu0 %v5210
        %8023 = vmatpush1.bf16.msra.mxu0 %v5209
        %8024 = vmatprep.subr.bf16.mxu0 %v5291
        %8025 = vmatpush1.bf16.msra.mxu0 %v5290
        %8026 = vmatprep.subr.bf16.mxu0 %v5372
        %8027 = vmatpush1.bf16.msra.mxu0 %v5371
        %8028 = vmatprep.subr.bf16.mxu0 %v5453
        %8029 = vmatpush1.bf16.msra.mxu0 %v5452
        %8030 = vmatprep.subr.bf16.mxu0 %v5534
        %8031 = vmatpush1.bf16.msra.mxu0 %v5533
        %8032 = vmatprep.subr.bf16.mxu0 %v5615
        %8033 = vmatpush1.bf16.msra.mxu0 %v5614
        %8034 = vmatprep.subr.bf16.mxu0 %v5696
        %8035 = vmatpush1.bf16.msra.mxu0 %v5695
        %8036 = vmatprep.subr.bf16.mxu0 %v5777
        %8037 = vmatpush1.bf16.msra.mxu0 %v5776
        %8038 = vmatprep.subr.bf16.mxu0 %v5858
        %8039 = vmatpush1.bf16.msra.mxu0 %v5857
        %8040 = vmatprep.subr.bf16.mxu0 0
        %8041 = vmatpush1.bf16.msra.mxu0 0
        %8042 = vmatprep.subr.bf16.mxu0 0
        %8043 = vmatpush1.bf16.msra.mxu0 0
        %8044 = vmatprep.mubr.bf16.mxu0 %v7026
        %8045 = vmatmul.mubr.bf16.gmra.mrb[0].mxu0 %v1331
        %v8046 = vpop.f32.mrb[0].mxu0
        %v8047 = vadd.f32 0.0, %v8046
        %v8048 = vpop.f32.mrb[0].mxu0
        %v8049 = vadd.f32 0.0, %v8048
        %v8050 = vpop.f32.mrb[0].mxu0
        %v8051 = vpop.f32.mrb[0].mxu0
        %8052 = vdwg.mxu0
        %8053 = vmatprep.subr.bf16.mxu0 %v4807
        %8054 = vmatpush1.bf16.msra.mxu0 %v4806
        %8055 = vmatprep.subr.bf16.mxu0 %v4888
        %8056 = vmatpush1.bf16.msra.mxu0 %v4887
        %8057 = vmatprep.subr.bf16.mxu0 %v4969
        %8058 = vmatpush1.bf16.msra.mxu0 %v4968
        %8059 = vmatprep.subr.bf16.mxu0 %v5050
        %8060 = vmatpush1.bf16.msra.mxu0 %v5049
        %8061 = vmatprep.subr.bf16.mxu0 %v5131
        %8062 = vmatpush1.bf16.msra.mxu0 %v5130
        %8063 = vmatprep.subr.bf16.mxu0 %v5212
        %8064 = vmatpush1.bf16.msra.mxu0 %v5211
        %8065 = vmatprep.subr.bf16.mxu0 %v5293
        %8066 = vmatpush1.bf16.msra.mxu0 %v5292
        %8067 = vmatprep.subr.bf16.mxu0 %v5374
        %8068 = vmatpush1.bf16.msra.mxu0 %v5373
        %8069 = vmatprep.subr.bf16.mxu0 %v5455
        %8070 = vmatpush1.bf16.msra.mxu0 %v5454
        %8071 = vmatprep.subr.bf16.mxu0 %v5536
        %8072 = vmatpush1.bf16.msra.mxu0 %v5535
        %8073 = vmatprep.subr.bf16.mxu0 %v5617
        %8074 = vmatpush1.bf16.msra.mxu0 %v5616
        %8075 = vmatprep.subr.bf16.mxu0 %v5698
        %8076 = vmatpush1.bf16.msra.mxu0 %v5697
        %8077 = vmatprep.subr.bf16.mxu0 %v5779
        %8078 = vmatpush1.bf16.msra.mxu0 %v5778
        %8079 = vmatprep.subr.bf16.mxu0 %v5860
        %8080 = vmatpush1.bf16.msra.mxu0 %v5859
        %8081 = vmatprep.subr.bf16.mxu0 0
        %8082 = vmatpush1.bf16.msra.mxu0 0
        %8083 = vmatprep.subr.bf16.mxu0 0
        %8084 = vmatpush1.bf16.msra.mxu0 0
        %8085 = vmatprep.mubr.bf16.mxu0 %v7026
        %8086 = vmatmul.mubr.bf16.gmra.mrb[0].mxu0 %v1331
        %v8087 = vpop.f32.mrb[0].mxu0
        %v8088 = vadd.f32 0.0, %v8087
        %v8089 = vpop.f32.mrb[0].mxu0
        %v8090 = vadd.f32 0.0, %v8089
        %v8091 = vpop.f32.mrb[0].mxu0
        %v8092 = vpop.f32.mrb[0].mxu0
        %8093 = vdwg.mxu0
        %8094 = vmatprep.subr.bf16.mxu0 %v4809
        %8095 = vmatpush1.bf16.msra.mxu0 %v4808
        %8096 = vmatprep.subr.bf16.mxu0 %v4890
        %8097 = vmatpush1.bf16.msra.mxu0 %v4889
        %8098 = vmatprep.subr.bf16.mxu0 %v4971
        %8099 = vmatpush1.bf16.msra.mxu0 %v4970
        %8100 = vmatprep.subr.bf16.mxu0 %v5052
        %8101 = vmatpush1.bf16.msra.mxu0 %v5051
        %8102 = vmatprep.subr.bf16.mxu0 %v5133
        %8103 = vmatpush1.bf16.msra.mxu0 %v5132
        %8104 = vmatprep.subr.bf16.mxu0 %v5214
        %8105 = vmatpush1.bf16.msra.mxu0 %v5213
        %8106 = vmatprep.subr.bf16.mxu0 %v5295
        %8107 = vmatpush1.bf16.msra.mxu0 %v5294
        %8108 = vmatprep.subr.bf16.mxu0 %v5376
        %8109 = vmatpush1.bf16.msra.mxu0 %v5375
        %8110 = vmatprep.subr.bf16.mxu0 %v5457
        %8111 = vmatpush1.bf16.msra.mxu0 %v5456
        %8112 = vmatprep.subr.bf16.mxu0 %v5538
        %8113 = vmatpush1.bf16.msra.mxu0 %v5537
        %8114 = vmatprep.subr.bf16.mxu0 %v5619
        %8115 = vmatpush1.bf16.msra.mxu0 %v5618
        %8116 = vmatprep.subr.bf16.mxu0 %v5700
        %8117 = vmatpush1.bf16.msra.mxu0 %v5699
        %8118 = vmatprep.subr.bf16.mxu0 %v5781
        %8119 = vmatpush1.bf16.msra.mxu0 %v5780
        %8120 = vmatprep.subr.bf16.mxu0 %v5862
        %8121 = vmatpush1.bf16.msra.mxu0 %v5861
        %8122 = vmatprep.subr.bf16.mxu0 0
        %8123 = vmatpush1.bf16.msra.mxu0 0
        %8124 = vmatprep.subr.bf16.mxu0 0
        %8125 = vmatpush1.bf16.msra.mxu0 0
        %8126 = vmatprep.mubr.bf16.mxu0 %v7026
        %8127 = vmatmul.mubr.bf16.gmra.mrb[0].mxu0 %v1331
        %v8128 = vpop.f32.mrb[0].mxu0
        %v8129 = vadd.f32 0.0, %v8128
        %v8130 = vpop.f32.mrb[0].mxu0
        %v8131 = vadd.f32 0.0, %v8130
        %v8132 = vpop.f32.mrb[0].mxu0
        %v8133 = vpop.f32.mrb[0].mxu0
        %8134 = vdwg.mxu0
        %8135 = vmatprep.subr.bf16.mxu0 %v4811
        %8136 = vmatpush1.bf16.msra.mxu0 %v4810
        %8137 = vmatprep.subr.bf16.mxu0 %v4892
        %8138 = vmatpush1.bf16.msra.mxu0 %v4891
        %8139 = vmatprep.subr.bf16.mxu0 %v4973
        %8140 = vmatpush1.bf16.msra.mxu0 %v4972
        %8141 = vmatprep.subr.bf16.mxu0 %v5054
        %8142 = vmatpush1.bf16.msra.mxu0 %v5053
        %8143 = vmatprep.subr.bf16.mxu0 %v5135
        %8144 = vmatpush1.bf16.msra.mxu0 %v5134
        %8145 = vmatprep.subr.bf16.mxu0 %v5216
        %8146 = vmatpush1.bf16.msra.mxu0 %v5215
        %8147 = vmatprep.subr.bf16.mxu0 %v5297
        %8148 = vmatpush1.bf16.msra.mxu0 %v5296
        %8149 = vmatprep.subr.bf16.mxu0 %v5378
        %8150 = vmatpush1.bf16.msra.mxu0 %v5377
        %8151 = vmatprep.subr.bf16.mxu0 %v5459
        %8152 = vmatpush1.bf16.msra.mxu0 %v5458
        %8153 = vmatprep.subr.bf16.mxu0 %v5540
        %8154 = vmatpush1.bf16.msra.mxu0 %v5539
        %8155 = vmatprep.subr.bf16.mxu0 %v5621
        %8156 = vmatpush1.bf16.msra.mxu0 %v5620
        %8157 = vmatprep.subr.bf16.mxu0 %v5702
        %8158 = vmatpush1.bf16.msra.mxu0 %v5701
        %8159 = vmatprep.subr.bf16.mxu0 %v5783
        %8160 = vmatpush1.bf16.msra.mxu0 %v5782
        %8161 = vmatprep.subr.bf16.mxu0 %v5864
        %8162 = vmatpush1.bf16.msra.mxu0 %v5863
        %8163 = vmatprep.subr.bf16.mxu0 0
        %8164 = vmatpush1.bf16.msra.mxu0 0
        %8165 = vmatprep.subr.bf16.mxu0 0
        %8166 = vmatpush1.bf16.msra.mxu0 0
        %8167 = vmatprep.mubr.bf16.mxu0 %v7026
        %8168 = vmatmul.mubr.bf16.gmra.mrb[0].mxu0 %v1331
        %v8169 = vpop.f32.mrb[0].mxu0
        %v8170 = vadd.f32 0.0, %v8169
        %v8171 = vpop.f32.mrb[0].mxu0
        %v8172 = vadd.f32 0.0, %v8171
        %v8173 = vpop.f32.mrb[0].mxu0
        %v8174 = vpop.f32.mrb[0].mxu0
        %8175 = vdwg.mxu0
        %8176 = vmatprep.subr.bf16.mxu0 %v4813
        %8177 = vmatpush1.bf16.msra.mxu0 %v4812
        %8178 = vmatprep.subr.bf16.mxu0 %v4894
        %8179 = vmatpush1.bf16.msra.mxu0 %v4893
        %8180 = vmatprep.subr.bf16.mxu0 %v4975
        %8181 = vmatpush1.bf16.msra.mxu0 %v4974
        %8182 = vmatprep.subr.bf16.mxu0 %v5056
        %8183 = vmatpush1.bf16.msra.mxu0 %v5055
        %8184 = vmatprep.subr.bf16.mxu0 %v5137
        %8185 = vmatpush1.bf16.msra.mxu0 %v5136
        %8186 = vmatprep.subr.bf16.mxu0 %v5218
        %8187 = vmatpush1.bf16.msra.mxu0 %v5217
        %8188 = vmatprep.subr.bf16.mxu0 %v5299
        %8189 = vmatpush1.bf16.msra.mxu0 %v5298
        %8190 = vmatprep.subr.bf16.mxu0 %v5380
        %8191 = vmatpush1.bf16.msra.mxu0 %v5379
        %8192 = vmatprep.subr.bf16.mxu0 %v5461
        %8193 = vmatpush1.bf16.msra.mxu0 %v5460
        %8194 = vmatprep.subr.bf16.mxu0 %v5542
        %8195 = vmatpush1.bf16.msra.mxu0 %v5541
        %8196 = vmatprep.subr.bf16.mxu0 %v5623
        %8197 = vmatpush1.bf16.msra.mxu0 %v5622
        %8198 = vmatprep.subr.bf16.mxu0 %v5704
        %8199 = vmatpush1.bf16.msra.mxu0 %v5703
        %8200 = vmatprep.subr.bf16.mxu0 %v5785
        %8201 = vmatpush1.bf16.msra.mxu0 %v5784
        %8202 = vmatprep.subr.bf16.mxu0 %v5866
        %8203 = vmatpush1.bf16.msra.mxu0 %v5865
        %8204 = vmatprep.subr.bf16.mxu0 0
        %8205 = vmatpush1.bf16.msra.mxu0 0
        %8206 = vmatprep.subr.bf16.mxu0 0
        %8207 = vmatpush1.bf16.msra.mxu0 0
        %8208 = vmatprep.mubr.bf16.mxu0 %v7026
        %8209 = vmatmul.mubr.bf16.gmra.mrb[0].mxu0 %v1331
        %v8210 = vpop.f32.mrb[0].mxu0
        %v8211 = vadd.f32 0.0, %v8210
        %v8212 = vpop.f32.mrb[0].mxu0
        %v8213 = vadd.f32 0.0, %v8212
        %v8214 = vpop.f32.mrb[0].mxu0
        %v8215 = vpop.f32.mrb[0].mxu0
        %8216 = vdwg.mxu0
        %8217 = vmatprep.subr.bf16.mxu0 %v4815
        %8218 = vmatpush1.bf16.msra.mxu0 %v4814
        %8219 = vmatprep.subr.bf16.mxu0 %v4896
        %8220 = vmatpush1.bf16.msra.mxu0 %v4895
        %8221 = vmatprep.subr.bf16.mxu0 %v4977
        %8222 = vmatpush1.bf16.msra.mxu0 %v4976
        %8223 = vmatprep.subr.bf16.mxu0 %v5058
        %8224 = vmatpush1.bf16.msra.mxu0 %v5057
        %8225 = vmatprep.subr.bf16.mxu0 %v5139
        %8226 = vmatpush1.bf16.msra.mxu0 %v5138
        %8227 = vmatprep.subr.bf16.mxu0 %v5220
        %8228 = vmatpush1.bf16.msra.mxu0 %v5219
        %8229 = vmatprep.subr.bf16.mxu0 %v5301
        %8230 = vmatpush1.bf16.msra.mxu0 %v5300
        %8231 = vmatprep.subr.bf16.mxu0 %v5382
        %8232 = vmatpush1.bf16.msra.mxu0 %v5381
        %8233 = vmatprep.subr.bf16.mxu0 %v5463
        %8234 = vmatpush1.bf16.msra.mxu0 %v5462
        %8235 = vmatprep.subr.bf16.mxu0 %v5544
        %8236 = vmatpush1.bf16.msra.mxu0 %v5543
        %8237 = vmatprep.subr.bf16.mxu0 %v5625
        %8238 = vmatpush1.bf16.msra.mxu0 %v5624
        %8239 = vmatprep.subr.bf16.mxu0 %v5706
        %8240 = vmatpush1.bf16.msra.mxu0 %v5705
        %8241 = vmatprep.subr.bf16.mxu0 %v5787
        %8242 = vmatpush1.bf16.msra.mxu0 %v5786
        %8243 = vmatprep.subr.bf16.mxu0 %v5868
        %8244 = vmatpush1.bf16.msra.mxu0 %v5867
        %8245 = vmatprep.subr.bf16.mxu0 0
        %8246 = vmatpush1.bf16.msra.mxu0 0
        %8247 = vmatprep.subr.bf16.mxu0 0
        %8248 = vmatpush1.bf16.msra.mxu0 0
        %8249 = vmatprep.mubr.bf16.mxu0 %v7026
        %8250 = vmatmul.mubr.bf16.gmra.mrb[0].mxu0 %v1331
        %v8251 = vpop.f32.mrb[0].mxu0
        %v8252 = vadd.f32 0.0, %v8251
        %v8253 = vpop.f32.mrb[0].mxu0
        %v8254 = vadd.f32 0.0, %v8253
        %v8255 = vpop.f32.mrb[0].mxu0
        %v8256 = vpop.f32.mrb[0].mxu0
        %8257 = vdwg.mxu0
        %8258 = vmatprep.subr.bf16.mxu0 %v4817
        %8259 = vmatpush1.bf16.msra.mxu0 %v4816
        %8260 = vmatprep.subr.bf16.mxu0 %v4898
        %8261 = vmatpush1.bf16.msra.mxu0 %v4897
        %8262 = vmatprep.subr.bf16.mxu0 %v4979
        %8263 = vmatpush1.bf16.msra.mxu0 %v4978
        %8264 = vmatprep.subr.bf16.mxu0 %v5060
        %8265 = vmatpush1.bf16.msra.mxu0 %v5059
        %8266 = vmatprep.subr.bf16.mxu0 %v5141
        %8267 = vmatpush1.bf16.msra.mxu0 %v5140
        %8268 = vmatprep.subr.bf16.mxu0 %v5222
        %8269 = vmatpush1.bf16.msra.mxu0 %v5221
        %8270 = vmatprep.subr.bf16.mxu0 %v5303
        %8271 = vmatpush1.bf16.msra.mxu0 %v5302
        %8272 = vmatprep.subr.bf16.mxu0 %v5384
        %8273 = vmatpush1.bf16.msra.mxu0 %v5383
        %8274 = vmatprep.subr.bf16.mxu0 %v5465
        %8275 = vmatpush1.bf16.msra.mxu0 %v5464
        %8276 = vmatprep.subr.bf16.mxu0 %v5546
        %8277 = vmatpush1.bf16.msra.mxu0 %v5545
        %8278 = vmatprep.subr.bf16.mxu0 %v5627
        %8279 = vmatpush1.bf16.msra.mxu0 %v5626
        %8280 = vmatprep.subr.bf16.mxu0 %v5708
        %8281 = vmatpush1.bf16.msra.mxu0 %v5707
        %8282 = vmatprep.subr.bf16.mxu0 %v5789
        %8283 = vmatpush1.bf16.msra.mxu0 %v5788
        %8284 = vmatprep.subr.bf16.mxu0 %v5870
        %8285 = vmatpush1.bf16.msra.mxu0 %v5869
        %8286 = vmatprep.subr.bf16.mxu0 0
        %8287 = vmatpush1.bf16.msra.mxu0 0
        %8288 = vmatprep.subr.bf16.mxu0 0
        %8289 = vmatpush1.bf16.msra.mxu0 0
        %8290 = vmatprep.mubr.bf16.mxu0 %v7026
        %8291 = vmatmul.mubr.bf16.gmra.mrb[0].mxu0 %v1331
        %v8292 = vpop.f32.mrb[0].mxu0
        %v8293 = vadd.f32 0.0, %v8292
        %v8294 = vpop.f32.mrb[0].mxu0
        %v8295 = vadd.f32 0.0, %v8294
        %v8296 = vpop.f32.mrb[0].mxu0
        %v8297 = vpop.f32.mrb[0].mxu0
        %8298 = vdwg.mxu0
        %8299 = vmatprep.subr.bf16.mxu0 %v4819
        %8300 = vmatpush1.bf16.msra.mxu0 %v4818
        %8301 = vmatprep.subr.bf16.mxu0 %v4900
        %8302 = vmatpush1.bf16.msra.mxu0 %v4899
        %8303 = vmatprep.subr.bf16.mxu0 %v4981
        %8304 = vmatpush1.bf16.msra.mxu0 %v4980
        %8305 = vmatprep.subr.bf16.mxu0 %v5062
        %8306 = vmatpush1.bf16.msra.mxu0 %v5061
        %8307 = vmatprep.subr.bf16.mxu0 %v5143
        %8308 = vmatpush1.bf16.msra.mxu0 %v5142
        %8309 = vmatprep.subr.bf16.mxu0 %v5224
        %8310 = vmatpush1.bf16.msra.mxu0 %v5223
        %8311 = vmatprep.subr.bf16.mxu0 %v5305
        %8312 = vmatpush1.bf16.msra.mxu0 %v5304
        %8313 = vmatprep.subr.bf16.mxu0 %v5386
        %8314 = vmatpush1.bf16.msra.mxu0 %v5385
        %8315 = vmatprep.subr.bf16.mxu0 %v5467
        %8316 = vmatpush1.bf16.msra.mxu0 %v5466
        %8317 = vmatprep.subr.bf16.mxu0 %v5548
        %8318 = vmatpush1.bf16.msra.mxu0 %v5547
        %8319 = vmatprep.subr.bf16.mxu0 %v5629
        %8320 = vmatpush1.bf16.msra.mxu0 %v5628
        %8321 = vmatprep.subr.bf16.mxu0 %v5710
        %8322 = vmatpush1.bf16.msra.mxu0 %v5709
        %8323 = vmatprep.subr.bf16.mxu0 %v5791
        %8324 = vmatpush1.bf16.msra.mxu0 %v5790
        %8325 = vmatprep.subr.bf16.mxu0 %v5872
        %8326 = vmatpush1.bf16.msra.mxu0 %v5871
        %8327 = vmatprep.subr.bf16.mxu0 0
        %8328 = vmatpush1.bf16.msra.mxu0 0
        %8329 = vmatprep.subr.bf16.mxu0 0
        %8330 = vmatpush1.bf16.msra.mxu0 0
        %8331 = vmatprep.mubr.bf16.mxu0 %v7026
        %8332 = vmatmul.mubr.bf16.gmra.mrb[0].mxu0 %v1331
        %v8333 = vpop.f32.mrb[0].mxu0
        %v8334 = vadd.f32 0.0, %v8333
        %v8335 = vpop.f32.mrb[0].mxu0
        %v8336 = vadd.f32 0.0, %v8335
        %v8337 = vpop.f32.mrb[0].mxu0
        %v8338 = vpop.f32.mrb[0].mxu0
        %8339 = vdwg.mxu0
        %8340 = vmatprep.subr.bf16.mxu0 %v4821
        %8341 = vmatpush1.bf16.msra.mxu0 %v4820
        %8342 = vmatprep.subr.bf16.mxu0 %v4902
        %8343 = vmatpush1.bf16.msra.mxu0 %v4901
        %8344 = vmatprep.subr.bf16.mxu0 %v4983
        %8345 = vmatpush1.bf16.msra.mxu0 %v4982
        %8346 = vmatprep.subr.bf16.mxu0 %v5064
        %8347 = vmatpush1.bf16.msra.mxu0 %v5063
        %8348 = vmatprep.subr.bf16.mxu0 %v5145
        %8349 = vmatpush1.bf16.msra.mxu0 %v5144
        %8350 = vmatprep.subr.bf16.mxu0 %v5226
        %8351 = vmatpush1.bf16.msra.mxu0 %v5225
        %8352 = vmatprep.subr.bf16.mxu0 %v5307
        %8353 = vmatpush1.bf16.msra.mxu0 %v5306
        %8354 = vmatprep.subr.bf16.mxu0 %v5388
        %8355 = vmatpush1.bf16.msra.mxu0 %v5387
        %8356 = vmatprep.subr.bf16.mxu0 %v5469
        %8357 = vmatpush1.bf16.msra.mxu0 %v5468
        %8358 = vmatprep.subr.bf16.mxu0 %v5550
        %8359 = vmatpush1.bf16.msra.mxu0 %v5549
        %8360 = vmatprep.subr.bf16.mxu0 %v5631
        %8361 = vmatpush1.bf16.msra.mxu0 %v5630
        %8362 = vmatprep.subr.bf16.mxu0 %v5712
        %8363 = vmatpush1.bf16.msra.mxu0 %v5711
        %8364 = vmatprep.subr.bf16.mxu0 %v5793
        %8365 = vmatpush1.bf16.msra.mxu0 %v5792
        %8366 = vmatprep.subr.bf16.mxu0 %v5874
        %8367 = vmatpush1.bf16.msra.mxu0 %v5873
        %8368 = vmatprep.subr.bf16.mxu0 0
        %8369 = vmatpush1.bf16.msra.mxu0 0
        %8370 = vmatprep.subr.bf16.mxu0 0
        %8371 = vmatpush1.bf16.msra.mxu0 0
        %8372 = vmatprep.mubr.bf16.mxu0 %v7026
        %8373 = vmatmul.mubr.bf16.gmra.mrb[0].mxu0 %v1331
        %v8374 = vpop.f32.mrb[0].mxu0
        %v8375 = vadd.f32 0.0, %v8374
        %v8376 = vpop.f32.mrb[0].mxu0
        %v8377 = vadd.f32 0.0, %v8376
        %v8378 = vpop.f32.mrb[0].mxu0
        %v8379 = vpop.f32.mrb[0].mxu0
        %8380 = vdwg.mxu0
        %8381 = vmatprep.subr.bf16.mxu0 %v4823
        %8382 = vmatpush1.bf16.msra.mxu0 %v4822
        %8383 = vmatprep.subr.bf16.mxu0 %v4904
        %8384 = vmatpush1.bf16.msra.mxu0 %v4903
        %8385 = vmatprep.subr.bf16.mxu0 %v4985
        %8386 = vmatpush1.bf16.msra.mxu0 %v4984
        %8387 = vmatprep.subr.bf16.mxu0 %v5066
        %8388 = vmatpush1.bf16.msra.mxu0 %v5065
        %8389 = vmatprep.subr.bf16.mxu0 %v5147
        %8390 = vmatpush1.bf16.msra.mxu0 %v5146
        %8391 = vmatprep.subr.bf16.mxu0 %v5228
        %8392 = vmatpush1.bf16.msra.mxu0 %v5227
        %8393 = vmatprep.subr.bf16.mxu0 %v5309
        %8394 = vmatpush1.bf16.msra.mxu0 %v5308
        %8395 = vmatprep.subr.bf16.mxu0 %v5390
        %8396 = vmatpush1.bf16.msra.mxu0 %v5389
        %8397 = vmatprep.subr.bf16.mxu0 %v5471
        %8398 = vmatpush1.bf16.msra.mxu0 %v5470
        %8399 = vmatprep.subr.bf16.mxu0 %v5552
        %8400 = vmatpush1.bf16.msra.mxu0 %v5551
        %8401 = vmatprep.subr.bf16.mxu0 %v5633
        %8402 = vmatpush1.bf16.msra.mxu0 %v5632
        %8403 = vmatprep.subr.bf16.mxu0 %v5714
        %8404 = vmatpush1.bf16.msra.mxu0 %v5713
        %8405 = vmatprep.subr.bf16.mxu0 %v5795
        %8406 = vmatpush1.bf16.msra.mxu0 %v5794
        %8407 = vmatprep.subr.bf16.mxu0 %v5876
        %8408 = vmatpush1.bf16.msra.mxu0 %v5875
        %8409 = vmatprep.subr.bf16.mxu0 0
        %8410 = vmatpush1.bf16.msra.mxu0 0
        %8411 = vmatprep.subr.bf16.mxu0 0
        %8412 = vmatpush1.bf16.msra.mxu0 0
        %8413 = vmatprep.mubr.bf16.mxu0 %v7026
        %8414 = vmatmul.mubr.bf16.gmra.mrb[0].mxu0 %v1331
        %v8415 = vpop.f32.mrb[0].mxu0
        %v8416 = vadd.f32 0.0, %v8415
        %v8417 = vpop.f32.mrb[0].mxu0
        %v8418 = vadd.f32 0.0, %v8417
        %v8419 = vpop.f32.mrb[0].mxu0
        %v8420 = vpop.f32.mrb[0].mxu0
        %8421 = vdwg.mxu0
        %8422 = vmatprep.subr.bf16.mxu0 %v4825
        %8423 = vmatpush1.bf16.msra.mxu0 %v4824
        %8424 = vmatprep.subr.bf16.mxu0 %v4906
        %8425 = vmatpush1.bf16.msra.mxu0 %v4905
        %8426 = vmatprep.subr.bf16.mxu0 %v4987
        %8427 = vmatpush1.bf16.msra.mxu0 %v4986
        %8428 = vmatprep.subr.bf16.mxu0 %v5068
        %8429 = vmatpush1.bf16.msra.mxu0 %v5067
        %8430 = vmatprep.subr.bf16.mxu0 %v5149
        %8431 = vmatpush1.bf16.msra.mxu0 %v5148
        %8432 = vmatprep.subr.bf16.mxu0 %v5230
        %8433 = vmatpush1.bf16.msra.mxu0 %v5229
        %8434 = vmatprep.subr.bf16.mxu0 %v5311
        %8435 = vmatpush1.bf16.msra.mxu0 %v5310
        %8436 = vmatprep.subr.bf16.mxu0 %v5392
        %8437 = vmatpush1.bf16.msra.mxu0 %v5391
        %8438 = vmatprep.subr.bf16.mxu0 %v5473
        %8439 = vmatpush1.bf16.msra.mxu0 %v5472
        %8440 = vmatprep.subr.bf16.mxu0 %v5554
        %8441 = vmatpush1.bf16.msra.mxu0 %v5553
        %8442 = vmatprep.subr.bf16.mxu0 %v5635
        %8443 = vmatpush1.bf16.msra.mxu0 %v5634
        %8444 = vmatprep.subr.bf16.mxu0 %v5716
        %8445 = vmatpush1.bf16.msra.mxu0 %v5715
        %8446 = vmatprep.subr.bf16.mxu0 %v5797
        %8447 = vmatpush1.bf16.msra.mxu0 %v5796
        %8448 = vmatprep.subr.bf16.mxu0 %v5878
        %8449 = vmatpush1.bf16.msra.mxu0 %v5877
        %8450 = vmatprep.subr.bf16.mxu0 0
        %8451 = vmatpush1.bf16.msra.mxu0 0
        %8452 = vmatprep.subr.bf16.mxu0 0
        %8453 = vmatpush1.bf16.msra.mxu0 0
        %8454 = vmatprep.mubr.bf16.mxu0 %v7026
        %8455 = vmatmul.mubr.bf16.gmra.mrb[0].mxu0 %v1331
        %v8456 = vpop.f32.mrb[0].mxu0
        %v8457 = vadd.f32 0.0, %v8456
        %v8458 = vpop.f32.mrb[0].mxu0
        %v8459 = vadd.f32 0.0, %v8458
        %v8460 = vpop.f32.mrb[0].mxu0
        %v8461 = vpop.f32.mrb[0].mxu0
        %8462 = vdwg.mxu0
        %8463 = vmatprep.subr.bf16.mxu0 %v4827
        %8464 = vmatpush1.bf16.msra.mxu0 %v4826
        %8465 = vmatprep.subr.bf16.mxu0 %v4908
        %8466 = vmatpush1.bf16.msra.mxu0 %v4907
        %8467 = vmatprep.subr.bf16.mxu0 %v4989
        %8468 = vmatpush1.bf16.msra.mxu0 %v4988
        %8469 = vmatprep.subr.bf16.mxu0 %v5070
        %8470 = vmatpush1.bf16.msra.mxu0 %v5069
        %8471 = vmatprep.subr.bf16.mxu0 %v5151
        %8472 = vmatpush1.bf16.msra.mxu0 %v5150
        %8473 = vmatprep.subr.bf16.mxu0 %v5232
        %8474 = vmatpush1.bf16.msra.mxu0 %v5231
        %8475 = vmatprep.subr.bf16.mxu0 %v5313
        %8476 = vmatpush1.bf16.msra.mxu0 %v5312
        %8477 = vmatprep.subr.bf16.mxu0 %v5394
        %8478 = vmatpush1.bf16.msra.mxu0 %v5393
        %8479 = vmatprep.subr.bf16.mxu0 %v5475
        %8480 = vmatpush1.bf16.msra.mxu0 %v5474
        %8481 = vmatprep.subr.bf16.mxu0 %v5556
        %8482 = vmatpush1.bf16.msra.mxu0 %v5555
        %8483 = vmatprep.subr.bf16.mxu0 %v5637
        %8484 = vmatpush1.bf16.msra.mxu0 %v5636
        %8485 = vmatprep.subr.bf16.mxu0 %v5718
        %8486 = vmatpush1.bf16.msra.mxu0 %v5717
        %8487 = vmatprep.subr.bf16.mxu0 %v5799
        %8488 = vmatpush1.bf16.msra.mxu0 %v5798
        %8489 = vmatprep.subr.bf16.mxu0 %v5880
        %8490 = vmatpush1.bf16.msra.mxu0 %v5879
        %8491 = vmatprep.subr.bf16.mxu0 0
        %8492 = vmatpush1.bf16.msra.mxu0 0
        %8493 = vmatprep.subr.bf16.mxu0 0
        %8494 = vmatpush1.bf16.msra.mxu0 0
        %8495 = vmatprep.mubr.bf16.mxu0 %v7026
        %8496 = vmatmul.mubr.bf16.gmra.mrb[0].mxu0 %v1331
        %v8497 = vpop.f32.mrb[0].mxu0
        %v8498 = vadd.f32 0.0, %v8497
        %v8499 = vpop.f32.mrb[0].mxu0
        %v8500 = vadd.f32 0.0, %v8499
        %v8501 = vpop.f32.mrb[0].mxu0
        %v8502 = vpop.f32.mrb[0].mxu0
        %8503 = vdwg.mxu0
        %8504 = vmatprep.subr.bf16.mxu0 %v4829
        %8505 = vmatpush1.bf16.msra.mxu0 %v4828
        %8506 = vmatprep.subr.bf16.mxu0 %v4910
        %8507 = vmatpush1.bf16.msra.mxu0 %v4909
        %8508 = vmatprep.subr.bf16.mxu0 %v4991
        %8509 = vmatpush1.bf16.msra.mxu0 %v4990
        %8510 = vmatprep.subr.bf16.mxu0 %v5072
        %8511 = vmatpush1.bf16.msra.mxu0 %v5071
        %8512 = vmatprep.subr.bf16.mxu0 %v5153
        %8513 = vmatpush1.bf16.msra.mxu0 %v5152
        %8514 = vmatprep.subr.bf16.mxu0 %v5234
        %8515 = vmatpush1.bf16.msra.mxu0 %v5233
        %8516 = vmatprep.subr.bf16.mxu0 %v5315
        %8517 = vmatpush1.bf16.msra.mxu0 %v5314
        %8518 = vmatprep.subr.bf16.mxu0 %v5396
        %8519 = vmatpush1.bf16.msra.mxu0 %v5395
        %8520 = vmatprep.subr.bf16.mxu0 %v5477
        %8521 = vmatpush1.bf16.msra.mxu0 %v5476
        %8522 = vmatprep.subr.bf16.mxu0 %v5558
        %8523 = vmatpush1.bf16.msra.mxu0 %v5557
        %8524 = vmatprep.subr.bf16.mxu0 %v5639
        %8525 = vmatpush1.bf16.msra.mxu0 %v5638
        %8526 = vmatprep.subr.bf16.mxu0 %v5720
        %8527 = vmatpush1.bf16.msra.mxu0 %v5719
        %8528 = vmatprep.subr.bf16.mxu0 %v5801
        %8529 = vmatpush1.bf16.msra.mxu0 %v5800
        %8530 = vmatprep.subr.bf16.mxu0 %v5882
        %8531 = vmatpush1.bf16.msra.mxu0 %v5881
        %8532 = vmatprep.subr.bf16.mxu0 0
        %8533 = vmatpush1.bf16.msra.mxu0 0
        %8534 = vmatprep.subr.bf16.mxu0 0
        %8535 = vmatpush1.bf16.msra.mxu0 0
        %8536 = vmatprep.mubr.bf16.mxu0 %v7026
        %8537 = vmatmul.mubr.bf16.gmra.mrb[0].mxu0 %v1331
        %v8538 = vpop.f32.mrb[0].mxu0
        %v8539 = vadd.f32 0.0, %v8538
        %v8540 = vpop.f32.mrb[0].mxu0
        %v8541 = vadd.f32 0.0, %v8540
        %v8542 = vpop.f32.mrb[0].mxu0
        %v8543 = vpop.f32.mrb[0].mxu0
        %8544 = vdwg.mxu0
        %8545 = vmatprep.subr.bf16.mxu0 %v4831
        %8546 = vmatpush1.bf16.msra.mxu0 %v4830
        %8547 = vmatprep.subr.bf16.mxu0 %v4912
        %8548 = vmatpush1.bf16.msra.mxu0 %v4911
        %8549 = vmatprep.subr.bf16.mxu0 %v4993
        %8550 = vmatpush1.bf16.msra.mxu0 %v4992
        %8551 = vmatprep.subr.bf16.mxu0 %v5074
        %8552 = vmatpush1.bf16.msra.mxu0 %v5073
        %8553 = vmatprep.subr.bf16.mxu0 %v5155
        %8554 = vmatpush1.bf16.msra.mxu0 %v5154
        %8555 = vmatprep.subr.bf16.mxu0 %v5236
        %8556 = vmatpush1.bf16.msra.mxu0 %v5235
        %8557 = vmatprep.subr.bf16.mxu0 %v5317
        %8558 = vmatpush1.bf16.msra.mxu0 %v5316
        %8559 = vmatprep.subr.bf16.mxu0 %v5398
        %8560 = vmatpush1.bf16.msra.mxu0 %v5397
        %8561 = vmatprep.subr.bf16.mxu0 %v5479
        %8562 = vmatpush1.bf16.msra.mxu0 %v5478
        %8563 = vmatprep.subr.bf16.mxu0 %v5560
        %8564 = vmatpush1.bf16.msra.mxu0 %v5559
        %8565 = vmatprep.subr.bf16.mxu0 %v5641
        %8566 = vmatpush1.bf16.msra.mxu0 %v5640
        %8567 = vmatprep.subr.bf16.mxu0 %v5722
        %8568 = vmatpush1.bf16.msra.mxu0 %v5721
        %8569 = vmatprep.subr.bf16.mxu0 %v5803
        %8570 = vmatpush1.bf16.msra.mxu0 %v5802
        %8571 = vmatprep.subr.bf16.mxu0 %v5884
        %8572 = vmatpush1.bf16.msra.mxu0 %v5883
        %8573 = vmatprep.subr.bf16.mxu0 0
        %8574 = vmatpush1.bf16.msra.mxu0 0
        %8575 = vmatprep.subr.bf16.mxu0 0
        %8576 = vmatpush1.bf16.msra.mxu0 0
        %8577 = vmatprep.mubr.bf16.mxu0 %v7026
        %8578 = vmatmul.mubr.bf16.gmra.mrb[0].mxu0 %v1331
        %v8579 = vpop.f32.mrb[0].mxu0
        %v8580 = vadd.f32 0.0, %v8579
        %v8581 = vpop.f32.mrb[0].mxu0
        %v8582 = vadd.f32 0.0, %v8581
        %v8583 = vpop.f32.mrb[0].mxu0
        %v8584 = vpop.f32.mrb[0].mxu0
        %8585 = vdwg.mxu0
        %8586 = vmatprep.subr.bf16.mxu0 %v4833
        %8587 = vmatpush1.bf16.msra.mxu0 %v4832
        %8588 = vmatprep.subr.bf16.mxu0 %v4914
        %8589 = vmatpush1.bf16.msra.mxu0 %v4913
        %8590 = vmatprep.subr.bf16.mxu0 %v4995
        %8591 = vmatpush1.bf16.msra.mxu0 %v4994
        %8592 = vmatprep.subr.bf16.mxu0 %v5076
        %8593 = vmatpush1.bf16.msra.mxu0 %v5075
        %8594 = vmatprep.subr.bf16.mxu0 %v5157
        %8595 = vmatpush1.bf16.msra.mxu0 %v5156
        %8596 = vmatprep.subr.bf16.mxu0 %v5238
        %8597 = vmatpush1.bf16.msra.mxu0 %v5237
        %8598 = vmatprep.subr.bf16.mxu0 %v5319
        %8599 = vmatpush1.bf16.msra.mxu0 %v5318
        %8600 = vmatprep.subr.bf16.mxu0 %v5400
        %8601 = vmatpush1.bf16.msra.mxu0 %v5399
        %8602 = vmatprep.subr.bf16.mxu0 %v5481
        %8603 = vmatpush1.bf16.msra.mxu0 %v5480
        %8604 = vmatprep.subr.bf16.mxu0 %v5562
        %8605 = vmatpush1.bf16.msra.mxu0 %v5561
        %8606 = vmatprep.subr.bf16.mxu0 %v5643
        %8607 = vmatpush1.bf16.msra.mxu0 %v5642
        %8608 = vmatprep.subr.bf16.mxu0 %v5724
        %8609 = vmatpush1.bf16.msra.mxu0 %v5723
        %8610 = vmatprep.subr.bf16.mxu0 %v5805
        %8611 = vmatpush1.bf16.msra.mxu0 %v5804
        %8612 = vmatprep.subr.bf16.mxu0 %v5886
        %8613 = vmatpush1.bf16.msra.mxu0 %v5885
        %8614 = vmatprep.subr.bf16.mxu0 0
        %8615 = vmatpush1.bf16.msra.mxu0 0
        %8616 = vmatprep.subr.bf16.mxu0 0
        %8617 = vmatpush1.bf16.msra.mxu0 0
        %8618 = vmatprep.mubr.bf16.mxu0 %v7026
        %8619 = vmatmul.mubr.bf16.gmra.mrb[0].mxu0 %v1331
        %v8620 = vpop.f32.mrb[0].mxu0
        %v8621 = vadd.f32 0.0, %v8620
        %v8622 = vpop.f32.mrb[0].mxu0
        %v8623 = vadd.f32 0.0, %v8622
        %v8624 = vpop.f32.mrb[0].mxu0
        %v8625 = vpop.f32.mrb[0].mxu0
        %8626 = vdwg.mxu0
        %8627 = vmatprep.subr.bf16.mxu0 %v4835
        %8628 = vmatpush1.bf16.msra.mxu0 %v4834
        %8629 = vmatprep.subr.bf16.mxu0 %v4916
        %8630 = vmatpush1.bf16.msra.mxu0 %v4915
        %8631 = vmatprep.subr.bf16.mxu0 %v4997
        %8632 = vmatpush1.bf16.msra.mxu0 %v4996
        %8633 = vmatprep.subr.bf16.mxu0 %v5078
        %8634 = vmatpush1.bf16.msra.mxu0 %v5077
        %8635 = vmatprep.subr.bf16.mxu0 %v5159
        %8636 = vmatpush1.bf16.msra.mxu0 %v5158
        %8637 = vmatprep.subr.bf16.mxu0 %v5240
        %8638 = vmatpush1.bf16.msra.mxu0 %v5239
        %8639 = vmatprep.subr.bf16.mxu0 %v5321
        %8640 = vmatpush1.bf16.msra.mxu0 %v5320
        %8641 = vmatprep.subr.bf16.mxu0 %v5402
        %8642 = vmatpush1.bf16.msra.mxu0 %v5401
        %8643 = vmatprep.subr.bf16.mxu0 %v5483
        %8644 = vmatpush1.bf16.msra.mxu0 %v5482
        %8645 = vmatprep.subr.bf16.mxu0 %v5564
        %8646 = vmatpush1.bf16.msra.mxu0 %v5563
        %8647 = vmatprep.subr.bf16.mxu0 %v5645
        %8648 = vmatpush1.bf16.msra.mxu0 %v5644
        %8649 = vmatprep.subr.bf16.mxu0 %v5726
        %8650 = vmatpush1.bf16.msra.mxu0 %v5725
        %8651 = vmatprep.subr.bf16.mxu0 %v5807
        %8652 = vmatpush1.bf16.msra.mxu0 %v5806
        %8653 = vmatprep.subr.bf16.mxu0 %v5888
        %8654 = vmatpush1.bf16.msra.mxu0 %v5887
        %8655 = vmatprep.subr.bf16.mxu0 0
        %8656 = vmatpush1.bf16.msra.mxu0 0
        %8657 = vmatprep.subr.bf16.mxu0 0
        %8658 = vmatpush1.bf16.msra.mxu0 0
        %8659 = vmatprep.mubr.bf16.mxu0 %v7026
        %8660 = vmatmul.mubr.bf16.gmra.mrb[0].mxu0 %v1331
        %v8661 = vpop.f32.mrb[0].mxu0
        %v8662 = vadd.f32 0.0, %v8661
        %v8663 = vpop.f32.mrb[0].mxu0
        %v8664 = vadd.f32 0.0, %v8663
        %v8665 = vpop.f32.mrb[0].mxu0
        %v8666 = vpop.f32.mrb[0].mxu0
        %8667 = vdwg.mxu0
        %8668 = vmatprep.subr.bf16.mxu0 0
        %8669 = vmatpush1.bf16.msra.mxu0 %v4836
        %8670 = vmatprep.subr.bf16.mxu0 0
        %8671 = vmatpush1.bf16.msra.mxu0 %v4917
        %8672 = vmatprep.subr.bf16.mxu0 0
        %8673 = vmatpush1.bf16.msra.mxu0 %v4998
        %8674 = vmatprep.subr.bf16.mxu0 0
        %8675 = vmatpush1.bf16.msra.mxu0 %v5079
        %8676 = vmatprep.subr.bf16.mxu0 0
        %8677 = vmatpush1.bf16.msra.mxu0 %v5160
        %8678 = vmatprep.subr.bf16.mxu0 0
        %8679 = vmatpush1.bf16.msra.mxu0 %v5241
        %8680 = vmatprep.subr.bf16.mxu0 0
        %8681 = vmatpush1.bf16.msra.mxu0 %v5322
        %8682 = vmatprep.subr.bf16.mxu0 0
        %8683 = vmatpush1.bf16.msra.mxu0 %v5403
        %8684 = vmatprep.subr.bf16.mxu0 0
        %8685 = vmatpush1.bf16.msra.mxu0 %v5484
        %8686 = vmatprep.subr.bf16.mxu0 0
        %8687 = vmatpush1.bf16.msra.mxu0 %v5565
        %8688 = vmatprep.subr.bf16.mxu0 0
        %8689 = vmatpush1.bf16.msra.mxu0 %v5646
        %8690 = vmatprep.subr.bf16.mxu0 0
        %8691 = vmatpush1.bf16.msra.mxu0 %v5727
        %8692 = vmatprep.subr.bf16.mxu0 0
        %8693 = vmatpush1.bf16.msra.mxu0 %v5808
        %8694 = vmatprep.subr.bf16.mxu0 0
        %8695 = vmatpush1.bf16.msra.mxu0 %v5889
        %8696 = vmatprep.subr.bf16.mxu0 0
        %8697 = vmatpush1.bf16.msra.mxu0 0
        %8698 = vmatprep.subr.bf16.mxu0 0
        %8699 = vmatpush1.bf16.msra.mxu0 0
        %8700 = vmatprep.mubr.bf16.mxu0 %v7026
        %8701 = vmatmul.mubr.bf16.gmra.mrb[0].mxu0 %v1331
        %v8702 = vpop.f32.mrb[0].mxu0
        %v8703 = vadd.f32 0.0, %v8702
        %v8704 = vpop.f32.mrb[0].mxu0
        %v8705 = vpop.f32.mrb[0].mxu0
        %v8706 = vpop.f32.mrb[0].mxu0
        %8707 = vdwg.mxu0
        %v8789 = vcombine.low %v7063, %v7065
        %v8790 = vcombine.low %v7104, %v7106
        %v8792 = vunpack.c.l.s4 1983009808
        %v8793 = vunpack.c.0.s8 %v8792
        %v8794 = vlaneseq
        %v8795 = vshrl.u32 %v8794, 7
        %v8796 = vsub.s32 %v8793, %v8795
        %v8797 = vrot.slane %v8789, %v8796
        %v8799 = vunpack.c.l.s4 1983009808
        %v8800 = vunpack.c.0.s8 %v8799
        %v8801 = vlaneseq
        %v8802 = vshrl.u32 %v8801, 7
        %v8803 = vsub.s32 %v8800, %v8802
        %v8804 = vrot.slane %v8790, %v8803
        %v8805 = vcombine.low %v8797, %v8804
        %v8806 = vcombine.low %v7145, %v7147
        %v8807 = vcombine.low %v7186, %v7188
        %v8809 = vunpack.c.l.s4 1983009808
        %v8810 = vunpack.c.0.s8 %v8809
        %v8811 = vlaneseq
        %v8812 = vshrl.u32 %v8811, 7
        %v8813 = vsub.s32 %v8810, %v8812
        %v8814 = vrot.slane %v8806, %v8813
        %v8816 = vunpack.c.l.s4 1983009808
        %v8817 = vunpack.c.0.s8 %v8816
        %v8818 = vlaneseq
        %v8819 = vshrl.u32 %v8818, 7
        %v8820 = vsub.s32 %v8817, %v8819
        %v8821 = vrot.slane %v8807, %v8820
        %v8822 = vcombine.low %v8814, %v8821
        %v8823 = vcombine.low %v7227, %v7229
        %v8824 = vcombine.low %v7268, %v7270
        %v8826 = vunpack.c.l.s4 1983009808
        %v8827 = vunpack.c.0.s8 %v8826
        %v8828 = vlaneseq
        %v8829 = vshrl.u32 %v8828, 7
        %v8830 = vsub.s32 %v8827, %v8829
        %v8831 = vrot.slane %v8823, %v8830
        %v8833 = vunpack.c.l.s4 1983009808
        %v8834 = vunpack.c.0.s8 %v8833
        %v8835 = vlaneseq
        %v8836 = vshrl.u32 %v8835, 7
        %v8837 = vsub.s32 %v8834, %v8836
        %v8838 = vrot.slane %v8824, %v8837
        %v8839 = vcombine.low %v8831, %v8838
        %v8840 = vcombine.low %v7309, %v7311
        %v8841 = vcombine.low %v7350, %v7352
        %v8843 = vunpack.c.l.s4 1983009808
        %v8844 = vunpack.c.0.s8 %v8843
        %v8845 = vlaneseq
        %v8846 = vshrl.u32 %v8845, 7
        %v8847 = vsub.s32 %v8844, %v8846
        %v8848 = vrot.slane %v8840, %v8847
        %v8850 = vunpack.c.l.s4 1983009808
        %v8851 = vunpack.c.0.s8 %v8850
        %v8852 = vlaneseq
        %v8853 = vshrl.u32 %v8852, 7
        %v8854 = vsub.s32 %v8851, %v8853
        %v8855 = vrot.slane %v8841, %v8854
        %v8856 = vcombine.low %v8848, %v8855
        %v8857 = vcombine.low %v7391, %v7393
        %v8858 = vcombine.low %v7432, %v7434
        %v8860 = vunpack.c.l.s4 1983009808
        %v8861 = vunpack.c.0.s8 %v8860
        %v8862 = vlaneseq
        %v8863 = vshrl.u32 %v8862, 7
        %v8864 = vsub.s32 %v8861, %v8863
        %v8865 = vrot.slane %v8857, %v8864
        %v8867 = vunpack.c.l.s4 1983009808
        %v8868 = vunpack.c.0.s8 %v8867
        %v8869 = vlaneseq
        %v8870 = vshrl.u32 %v8869, 7
        %v8871 = vsub.s32 %v8868, %v8870
        %v8872 = vrot.slane %v8858, %v8871
        %v8873 = vcombine.low %v8865, %v8872
        %v8874 = vcombine.low %v7473, %v7475
        %v8875 = vcombine.low %v7514, %v7516
        %v8877 = vunpack.c.l.s4 1983009808
        %v8878 = vunpack.c.0.s8 %v8877
        %v8879 = vlaneseq
        %v8880 = vshrl.u32 %v8879, 7
        %v8881 = vsub.s32 %v8878, %v8880
        %v8882 = vrot.slane %v8874, %v8881
        %v8884 = vunpack.c.l.s4 1983009808
        %v8885 = vunpack.c.0.s8 %v8884
        %v8886 = vlaneseq
        %v8887 = vshrl.u32 %v8886, 7
        %v8888 = vsub.s32 %v8885, %v8887
        %v8889 = vrot.slane %v8875, %v8888
        %v8890 = vcombine.low %v8882, %v8889
        %v8891 = vcombine.low %v7555, %v7557
        %v8892 = vcombine.low %v7596, %v7598
        %v8894 = vunpack.c.l.s4 1983009808
        %v8895 = vunpack.c.0.s8 %v8894
        %v8896 = vlaneseq
        %v8897 = vshrl.u32 %v8896, 7
        %v8898 = vsub.s32 %v8895, %v8897
        %v8899 = vrot.slane %v8891, %v8898
        %v8901 = vunpack.c.l.s4 1983009808
        %v8902 = vunpack.c.0.s8 %v8901
        %v8903 = vlaneseq
        %v8904 = vshrl.u32 %v8903, 7
        %v8905 = vsub.s32 %v8902, %v8904
        %v8906 = vrot.slane %v8892, %v8905
        %v8907 = vcombine.low %v8899, %v8906
        %v8908 = vcombine.low %v7637, %v7639
        %v8909 = vcombine.low %v7678, %v7680
        %v8911 = vunpack.c.l.s4 1983009808
        %v8912 = vunpack.c.0.s8 %v8911
        %v8913 = vlaneseq
        %v8914 = vshrl.u32 %v8913, 7
        %v8915 = vsub.s32 %v8912, %v8914
        %v8916 = vrot.slane %v8908, %v8915
        %v8918 = vunpack.c.l.s4 1983009808
        %v8919 = vunpack.c.0.s8 %v8918
        %v8920 = vlaneseq
        %v8921 = vshrl.u32 %v8920, 7
        %v8922 = vsub.s32 %v8919, %v8921
        %v8923 = vrot.slane %v8909, %v8922
        %v8924 = vcombine.low %v8916, %v8923
        %v8925 = vcombine.low %v7719, %v7721
        %v8926 = vcombine.low %v7760, %v7762
        %v8928 = vunpack.c.l.s4 1983009808
        %v8929 = vunpack.c.0.s8 %v8928
        %v8930 = vlaneseq
        %v8931 = vshrl.u32 %v8930, 7
        %v8932 = vsub.s32 %v8929, %v8931
        %v8933 = vrot.slane %v8925, %v8932
        %v8935 = vunpack.c.l.s4 1983009808
        %v8936 = vunpack.c.0.s8 %v8935
        %v8937 = vlaneseq
        %v8938 = vshrl.u32 %v8937, 7
        %v8939 = vsub.s32 %v8936, %v8938
        %v8940 = vrot.slane %v8926, %v8939
        %v8941 = vcombine.low %v8933, %v8940
        %v8942 = vcombine.low %v7801, %v7803
        %v8943 = vcombine.low %v7842, %v7844
        %v8945 = vunpack.c.l.s4 1983009808
        %v8946 = vunpack.c.0.s8 %v8945
        %v8947 = vlaneseq
        %v8948 = vshrl.u32 %v8947, 7
        %v8949 = vsub.s32 %v8946, %v8948
        %v8950 = vrot.slane %v8942, %v8949
        %v8952 = vunpack.c.l.s4 1983009808
        %v8953 = vunpack.c.0.s8 %v8952
        %v8954 = vlaneseq
        %v8955 = vshrl.u32 %v8954, 7
        %v8956 = vsub.s32 %v8953, %v8955
        %v8957 = vrot.slane %v8943, %v8956
        %v8958 = vcombine.low %v8950, %v8957
        %v8959 = vcombine.low %v7883, %v7885
        %v8960 = vcombine.low %v7924, %v7926
        %v8962 = vunpack.c.l.s4 1983009808
        %v8963 = vunpack.c.0.s8 %v8962
        %v8964 = vlaneseq
        %v8965 = vshrl.u32 %v8964, 7
        %v8966 = vsub.s32 %v8963, %v8965
        %v8967 = vrot.slane %v8959, %v8966
        %v8969 = vunpack.c.l.s4 1983009808
        %v8970 = vunpack.c.0.s8 %v8969
        %v8971 = vlaneseq
        %v8972 = vshrl.u32 %v8971, 7
        %v8973 = vsub.s32 %v8970, %v8972
        %v8974 = vrot.slane %v8960, %v8973
        %v8975 = vcombine.low %v8967, %v8974
        %v8976 = vcombine.low %v7965, %v7967
        %v8977 = vcombine.low %v8006, %v8008
        %v8979 = vunpack.c.l.s4 1983009808
        %v8980 = vunpack.c.0.s8 %v8979
        %v8981 = vlaneseq
        %v8982 = vshrl.u32 %v8981, 7
        %v8983 = vsub.s32 %v8980, %v8982
        %v8984 = vrot.slane %v8976, %v8983
        %v8986 = vunpack.c.l.s4 1983009808
        %v8987 = vunpack.c.0.s8 %v8986
        %v8988 = vlaneseq
        %v8989 = vshrl.u32 %v8988, 7
        %v8990 = vsub.s32 %v8987, %v8989
        %v8991 = vrot.slane %v8977, %v8990
        %v8992 = vcombine.low %v8984, %v8991
        %v8993 = vcombine.low %v8047, %v8049
        %v8994 = vcombine.low %v8088, %v8090
        %v8996 = vunpack.c.l.s4 1983009808
        %v8997 = vunpack.c.0.s8 %v8996
        %v8998 = vlaneseq
        %v8999 = vshrl.u32 %v8998, 7
        %v9000 = vsub.s32 %v8997, %v8999
        %v9001 = vrot.slane %v8993, %v9000
        %v9003 = vunpack.c.l.s4 1983009808
        %v9004 = vunpack.c.0.s8 %v9003
        %v9005 = vlaneseq
        %v9006 = vshrl.u32 %v9005, 7
        %v9007 = vsub.s32 %v9004, %v9006
        %v9008 = vrot.slane %v8994, %v9007
        %v9009 = vcombine.low %v9001, %v9008
        %v9010 = vcombine.low %v8129, %v8131
        %v9011 = vcombine.low %v8170, %v8172
        %v9013 = vunpack.c.l.s4 1983009808
        %v9014 = vunpack.c.0.s8 %v9013
        %v9015 = vlaneseq
        %v9016 = vshrl.u32 %v9015, 7
        %v9017 = vsub.s32 %v9014, %v9016
        %v9018 = vrot.slane %v9010, %v9017
        %v9020 = vunpack.c.l.s4 1983009808
        %v9021 = vunpack.c.0.s8 %v9020
        %v9022 = vlaneseq
        %v9023 = vshrl.u32 %v9022, 7
        %v9024 = vsub.s32 %v9021, %v9023
        %v9025 = vrot.slane %v9011, %v9024
        %v9026 = vcombine.low %v9018, %v9025
        %v9027 = vcombine.low %v8211, %v8213
        %v9028 = vcombine.low %v8252, %v8254
        %v9030 = vunpack.c.l.s4 1983009808
        %v9031 = vunpack.c.0.s8 %v9030
        %v9032 = vlaneseq
        %v9033 = vshrl.u32 %v9032, 7
        %v9034 = vsub.s32 %v9031, %v9033
        %v9035 = vrot.slane %v9027, %v9034
        %v9037 = vunpack.c.l.s4 1983009808
        %v9038 = vunpack.c.0.s8 %v9037
        %v9039 = vlaneseq
        %v9040 = vshrl.u32 %v9039, 7
        %v9041 = vsub.s32 %v9038, %v9040
        %v9042 = vrot.slane %v9028, %v9041
        %v9043 = vcombine.low %v9035, %v9042
        %v9044 = vcombine.low %v8293, %v8295
        %v9045 = vcombine.low %v8334, %v8336
        %v9047 = vunpack.c.l.s4 1983009808
        %v9048 = vunpack.c.0.s8 %v9047
        %v9049 = vlaneseq
        %v9050 = vshrl.u32 %v9049, 7
        %v9051 = vsub.s32 %v9048, %v9050
        %v9052 = vrot.slane %v9044, %v9051
        %v9054 = vunpack.c.l.s4 1983009808
        %v9055 = vunpack.c.0.s8 %v9054
        %v9056 = vlaneseq
        %v9057 = vshrl.u32 %v9056, 7
        %v9058 = vsub.s32 %v9055, %v9057
        %v9059 = vrot.slane %v9045, %v9058
        %v9060 = vcombine.low %v9052, %v9059
        %v9061 = vcombine.low %v8375, %v8377
        %v9062 = vcombine.low %v8416, %v8418
        %v9064 = vunpack.c.l.s4 1983009808
        %v9065 = vunpack.c.0.s8 %v9064
        %v9066 = vlaneseq
        %v9067 = vshrl.u32 %v9066, 7
        %v9068 = vsub.s32 %v9065, %v9067
        %v9069 = vrot.slane %v9061, %v9068
        %v9071 = vunpack.c.l.s4 1983009808
        %v9072 = vunpack.c.0.s8 %v9071
        %v9073 = vlaneseq
        %v9074 = vshrl.u32 %v9073, 7
        %v9075 = vsub.s32 %v9072, %v9074
        %v9076 = vrot.slane %v9062, %v9075
        %v9077 = vcombine.low %v9069, %v9076
        %v9078 = vcombine.low %v8457, %v8459
        %v9079 = vcombine.low %v8498, %v8500
        %v9081 = vunpack.c.l.s4 1983009808
        %v9082 = vunpack.c.0.s8 %v9081
        %v9083 = vlaneseq
        %v9084 = vshrl.u32 %v9083, 7
        %v9085 = vsub.s32 %v9082, %v9084
        %v9086 = vrot.slane %v9078, %v9085
        %v9088 = vunpack.c.l.s4 1983009808
        %v9089 = vunpack.c.0.s8 %v9088
        %v9090 = vlaneseq
        %v9091 = vshrl.u32 %v9090, 7
        %v9092 = vsub.s32 %v9089, %v9091
        %v9093 = vrot.slane %v9079, %v9092
        %v9094 = vcombine.low %v9086, %v9093
        %v9095 = vcombine.low %v8539, %v8541
        %v9096 = vcombine.low %v8580, %v8582
        %v9098 = vunpack.c.l.s4 1983009808
        %v9099 = vunpack.c.0.s8 %v9098
        %v9100 = vlaneseq
        %v9101 = vshrl.u32 %v9100, 7
        %v9102 = vsub.s32 %v9099, %v9101
        %v9103 = vrot.slane %v9095, %v9102
        %v9105 = vunpack.c.l.s4 1983009808
        %v9106 = vunpack.c.0.s8 %v9105
        %v9107 = vlaneseq
        %v9108 = vshrl.u32 %v9107, 7
        %v9109 = vsub.s32 %v9106, %v9108
        %v9110 = vrot.slane %v9096, %v9109
        %v9111 = vcombine.low %v9103, %v9110
        %v9112 = vcombine.low %v8621, %v8623
        %v9113 = vcombine.low %v8662, %v8664
        %v9115 = vunpack.c.l.s4 1983009808
        %v9116 = vunpack.c.0.s8 %v9115
        %v9117 = vlaneseq
        %v9118 = vshrl.u32 %v9117, 7
        %v9119 = vsub.s32 %v9116, %v9118
        %v9120 = vrot.slane %v9112, %v9119
        %v9122 = vunpack.c.l.s4 1983009808
        %v9123 = vunpack.c.0.s8 %v9122
        %v9124 = vlaneseq
        %v9125 = vshrl.u32 %v9124, 7
        %v9126 = vsub.s32 %v9123, %v9125
        %v9127 = vrot.slane %v9113, %v9126
        %v9128 = vcombine.low %v9120, %v9127
        %v9130 = vunpack.c.l.s4 1983009808
        %v9131 = vunpack.c.0.s8 %v9130
        %v9132 = vlaneseq
        %v9133 = vshrl.u32 %v9132, 7
        %v9134 = vsub.s32 %v9131, %v9133
        %v9135 = vrot.slane %v8703, %v9134
        %9157 = vst [vmem:[%s164] sm:$0xff] %v8805
        %9158 = vst [vmem:[%s164 + $0x8] sm:$0xff] %v8822
        %9159 = vst [vmem:[%s164 + $0x10] sm:$0xff] %v8839
        %9160 = vst [vmem:[%s164 + $0x18] sm:$0xff] %v8856
        %9161 = vst [vmem:[%s164 + $0x20] sm:$0xff] %v8873
        %9162 = vst [vmem:[%s164 + $0x28] sm:$0xff] %v8890
        %9163 = vst [vmem:[%s164 + $0x30] sm:$0xff] %v8907
        %9164 = vst [vmem:[%s164 + $0x38] sm:$0xff] %v8924
        %9165 = vst [vmem:[%s164 + $0x40] sm:$0xff] %v8941
        %9166 = vst [vmem:[%s164 + $0x48] sm:$0xff] %v8958
        %9167 = vst [vmem:[%s164 + $0x50] sm:$0xff] %v8975
        %9168 = vst [vmem:[%s164 + $0x58] sm:$0xff] %v8992
        %9169 = vst [vmem:[%s164 + $0x60] sm:$0xff] %v9009
        %9170 = vst [vmem:[%s164 + $0x68] sm:$0xff] %v9026
        %9171 = vst [vmem:[%s164 + $0x70] sm:$0xff] %v9043
        %9172 = vst [vmem:[%s164 + $0x78] sm:$0xff] %v9060
        %9173 = vst [vmem:[%s164 + $0x80] sm:$0xff] %v9077
        %9174 = vst [vmem:[%s164 + $0x88] sm:$0xff] %v9094
        %9175 = vst [vmem:[%s164 + $0x90] sm:$0xff] %v9111
        %9176 = vst [vmem:[%s164 + $0x98] sm:$0xff] %v9128
        %9177 = vst [vmem:[%s164 + $0xa0] sm:$0x3] %v9135
        %s9178 = smul.u32 81, %s16
        %p9179 = scmp.lt.s32.totalorder %s9178, 161
        %s9180 = scalar_select %p9179, %s9178, 161
        %s9181 = smul.addr %s9180, 2
        %s9182 = scalar_lea.vmem %s2, %s9181
        // Predicated region
        $region33: #{smpl_forward.2} parent=27 // pred_check
          %p9183 = pneg %p81
        $region34: #{smpl_forward.2} parent=27 // pred_check_branch
          %9185 = sbr.rel (%p9183) target = $region36
        $region35: #{smpl_forward.2} parent=27 // pred_region
          %s9186 = smul.u32 81, %s16
        $region36: #{smpl_forward.2} parent=27 // pred_fallthru
          _
      $region28: #{smpl_forward.2} parent=5 // pred_fallthru
        _
      %p9187 = scmp.le.s32.totalorder 2, %s11
      // Predicated region
      $region37: #{smpl_forward.2} parent=5 // pred_check
        %p9188 = pneg %p9187
      $region38: #{smpl_forward.2} parent=5 // pred_check_branch
        %9190 = sbr.rel (%p9188) target = $region40
      $region39: #{smpl_forward.2} parent=5 // pred_region
        %s9191 = ssub.s32 %s11, 2
        // Predicated region
        $region41: #{smpl_forward.2} parent=39 // pred_check
          %p9192 = pneg %p87
        $region42: #{smpl_forward.2} parent=39 // pred_check_branch
          %9194 = sbr.rel (%p9192) target = $region44
        $region43: #{smpl_forward.2} parent=39 // pred_region
          %s9195 = smul.u32 81, %s17
          %p9196 = scmp.lt.s32.totalorder %s9195, 161
          %s9197 = scalar_select %p9196, %s9195, 161
          %s9198 = smul.addr %s9197, 2
          %s9199 = scalar_lea.vmem %s2, %s9198
        $region44: #{smpl_forward.2} parent=39 // pred_fallthru
          _
      $region40: #{smpl_forward.2} parent=5 // pred_fallthru
        _
    $region6: #{smpl_forward.2} parent=1 // loop_footer
      %s15 = sadd.s32 1, %s11
    $region7: #{smpl_forward.2} parent=1 // loop_footer_branch
      %10 = sbr.rel target = $region3
    $region8: #{smpl_forward.2} parent=1 // loop_exit
      _
    %9200 = vsyncpa [#allocation3], 1
    %s9201 = scalar_lea.sflag [#allocation3], 1
    %9202 = vsyncpa %s9201, 1

</llo_original>
